<compile_context>
chip_gen: v7x
topology: tpu7x:2x2x1
jax: 0.10.0
libtpu: 0.0.40
codegen_flags: <defaults>
</compile_context>

<pallas_src>
from dataclasses import dataclass, field
from typing import List

import numpy as np
import jax
import jax.numpy as jnp
from jax.experimental import pallas as pl
from jax.experimental.pallas import tpu as pltpu

_VMEM = pltpu.MemorySpace.VMEM


# --------------------------------------------------------------------------------------
# Config (mirrors the PyTorch ConvConfig the module expects)
# --------------------------------------------------------------------------------------
@dataclass
class ConvConfig:
    input_channels: int = 4
    input_size: int = 16
    num_layers: int = 2
    channels: List[int] = field(default_factory=lambda: [8, 16])
    kernel_size: List[int] = field(default_factory=lambda: [3, 3])
    padding: List[int] = field(default_factory=lambda: [1, 1])
    stride: List[int] = field(default_factory=lambda: [1, 1])
    apply_batchnorm: bool = True
    conv_activation_function: str = "ReLU"
    apply_maxpool: bool = True
    maxpool_kernel_size: int = 2
    maxpool_padding: int = 0
    maxpool_stride: int = 2
    feedforward_dim: int = 32
    feedforward_activation_function: str = "ReLU"
    dropout_p: float = 0.1
    num_classes: int = 10
    label_smoothing: float = 0.0


def _round_up(x, m):
    return (x + m - 1) // m * m


def _layer_geometry(cfg: ConvConfig):
    """Static per-layer shapes for the fused kernel (flattened padded layout)."""
    assert cfg.apply_maxpool, "TODO(synk): apply_maxpool=False path not implemented"
    assert (cfg.maxpool_kernel_size, cfg.maxpool_stride, cfg.maxpool_padding) == (2, 2, 0)
    chans = [cfg.input_channels] + list(cfg.channels)
    H = W = cfg.input_size
    geo = []
    for i in range(cfg.num_layers):
        k, p, s = cfg.kernel_size[i], cfg.padding[i], cfg.stride[i]
        assert s == 1, "TODO(synk): conv stride > 1 not implemented in fused kernel"
        assert k % 2 == 1, "even kernel_size would leak garbage columns into the fused pool"
        Hp, Wp = H + 2 * p, W + 2 * p
        assert Wp % 2 == 0, "padded width must be even for the fused pooling path"
        Ho, Wo = Hp - k + 1, Wp - k + 1          # conv output on the extended domain
        Hq, Wq = Ho // 2, Wo // 2                # after 2x2/2 maxpool (floor)
        mrow = _round_up(Ho * Wp, 8)             # conv-slab rows per image (8-aligned)
        rows = _round_up(max(Hp * Wp, (k - 1) * (Wp + 1) + mrow), 8)
        geo.append(dict(cin=chans[i], cout=chans[i + 1], k=k, p=p,
                        H=H, W=W, Hp=Hp, Wp=Wp, Ho=Ho, Wo=Wo, Hq=Hq, Wq=Wq,
                        mrow=mrow, in_rows=rows))
        H, W = Hq, Wq
    return geo, H, W


# --------------------------------------------------------------------------------------
# Kernel A: fused conv tower (conv + folded-BN + ReLU + 2x2 maxpool, all layers)
# --------------------------------------------------------------------------------------
def _build_conv_tower(cfg: ConvConfig, geo, NB: int, Nblk: int):
    L = cfg.num_layers
    Rf = geo[-1]["Hq"] * geo[-1]["Wq"]
    Cf = geo[-1]["cout"]

    def kernel(*refs):
        x_ref = refs[0]                                   # (NB*in_rows0, Cin0) block
        w_refs = [refs[1 + 2 * l] for l in range(L)]      # (k*k, Cin, Cout)  BN-scale folded
        s_refs = [refs[2 + 2 * l] for l in range(L)]      # (1, Cout)         folded BN shift
        feat_ref = refs[1 + 2 * L]                        # (NB*Rf, Cf) output block
        scr = refs[2 + 2 * L:]
        co_refs = list(scr[:L])                           # conv slabs ((NB-1)*inr+mrow, Cout)
        pad_refs = list(scr[L:])                          # next-layer padded inputs

        for l in range(L):
            g = geo[l]
            k, Wp, inr = g["k"], g["Wp"], g["in_rows"]
            slab_len = (NB - 1) * inr + g["mrow"]
            src = x_ref if l == 0 else pad_refs[l - 1]

            # ---- conv: k*k shifted-slab MXU matmuls, accumulated as a value ----
            # (no scratch read-modify-write; one store below — review item 1)
            acc = None
            for t in range(k * k):
                di, dj = divmod(t, k)
                slab = src[pl.ds(di * Wp + dj, slab_len), :]           # (slab_len, Cin)
                contrib = jnp.dot(slab, w_refs[l][t],
                                  preferred_element_type=jnp.float32)  # (slab_len, Cout)
                acc = contrib if acc is None else acc + contrib
            # folded BatchNorm shift + ReLU epilogue, single store of the conv slab
            co = co_refs[l]
            co[...] = jnp.maximum(acc + s_refs[l][...], 0.0)

            # ---- fused 2x2 stride-2 maxpool read straight from the conv slab ----
            Hq, Wq = g["Hq"], g["Wq"]
            last = (l == L - 1)
            if not last:
                nxt = geo[l + 1]
                dst = pad_refs[l]
                # per-step re-zero of the pad border (scratch is per-core, so a
                # program_id==0 zero-once would break under "parallel" sharding)
                dst[...] = jnp.zeros_like(dst)
            for b in range(NB):
                base = b * inr
                for pq in range(Hq):
                    r0 = base + (2 * pq) * Wp
                    r1 = base + (2 * pq + 1) * Wp
                    p00 = co[pl.ds(r0, Wq, 2), :]
                    p01 = co[pl.ds(r0 + 1, Wq, 2), :]
                    p10 = co[pl.ds(r1, Wq, 2), :]
                    p11 = co[pl.ds(r1 + 1, Wq, 2), :]
                    plane = jnp.maximum(jnp.maximum(p00, p01),
                                        jnp.maximum(p10, p11))          # (Wq, Cout)
                    if last:
                        feat_ref[pl.ds(b * Rf + pq * Wq, Wq), :] = plane
                    else:
                        row0 = b * nxt["in_rows"] + (pq + nxt["p"]) * nxt["Wp"] + nxt["p"]
                        dst[pl.ds(row0, Wq), :] = plane                  # interior of next pad

    g0 = geo[0]
    in_specs = [pl.BlockSpec((NB * g0["in_rows"], g0["cin"]), lambda g: (g, 0))]
    for l in range(L):
        gl = geo[l]
        in_specs.append(pl.BlockSpec((gl["k"] * gl["k"], gl["cin"], gl["cout"]),
                                     lambda g: (0, 0, 0)))
        in_specs.append(pl.BlockSpec((1, gl["cout"]), lambda g: (0, 0)))

    scratch = [pltpu.VMEM(((NB - 1) * geo[l]["in_rows"] + geo[l]["mrow"], geo[l]["cout"]),
                          jnp.float32) for l in range(L)]
    scratch += [pltpu.VMEM((NB * geo[l]["in_rows"], geo[l]["cin"]), jnp.float32)
                for l in range(1, L)]

    return pl.pallas_call(
        kernel,
        out_shape=jax.ShapeDtypeStruct((Nblk * NB * Rf, Cf), jnp.float32),
        grid_spec=pltpu.PrefetchScalarGridSpec(
            num_scalar_prefetch=0,
            grid=(Nblk,),
            in_specs=in_specs,
            out_specs=pl.BlockSpec((NB * Rf, Cf), lambda g: (g, 0)),
            scratch_shapes=scratch,
        ),
        compiler_params=pltpu.CompilerParams(
            dimension_semantics=("parallel",),
            vmem_limit_bytes=32 * 1024 * 1024,
        ),
    )


# --------------------------------------------------------------------------------------
# Kernel B: fc1 + ReLU + fc2 + label-smoothed CE loss, accuracy, argmax (one call)
# --------------------------------------------------------------------------------------
def _build_head(cfg: ConvConfig, B: int, Bpad: int):
    NC = cfg.num_classes
    ls = float(cfg.label_smoothing)

    def kernel(feat_ref, w1_ref, b1_ref, w2_ref, b2_ref, y_ref,
               logits_ref, stats_ref, pred_ref):
        # fc1: single lane-dense (Bpad, Rf*Cf) @ (Rf*Cf, F) MXU matmul; weight rows were
        # permuted at init so the NHWC-flattened feature is consumed directly.
        h = jnp.dot(feat_ref[...], w1_ref[...], preferred_element_type=jnp.float32)
        h = jnp.maximum(h + b1_ref[...], 0.0)
        # TODO(synk): nn.Dropout(p) omitted — eval-mode no-op.
        logits = jnp.dot(h, w2_ref[...], preferred_element_type=jnp.float32) + b2_ref[...]
        logits_ref[...] = logits

        labels = y_ref[...]                                             # (Bpad, 1) int32
        col = jax.lax.broadcasted_iota(jnp.int32, (Bpad, NC), 1)
        onehot = (col == labels).astype(jnp.float32)
        m = jnp.max(logits, axis=-1, keepdims=True)
        lse = m + jnp.log(jnp.sum(jnp.exp(logits - m), axis=-1, keepdims=True))
        nll = lse - jnp.sum(logits * onehot, axis=-1, keepdims=True)
        smooth = jnp.mean(lse - logits, axis=-1, keepdims=True)
        per_ex = (1.0 - ls) * nll + ls * smooth
        rows = jax.lax.broadcasted_iota(jnp.int32, (Bpad, 1), 0)
        valid = (rows < B).astype(jnp.float32)                          # mask padded examples
        loss = jnp.sum(per_ex * valid, keepdims=True) / B               # (1, 1)
        # first-occurrence argmax (matches torch.argmax)
        idx = jnp.where(logits == m, col, NC)
        pred = jnp.min(idx, axis=-1, keepdims=True)                     # (Bpad, 1)
        acc = jnp.sum((pred == labels).astype(jnp.float32) * valid, keepdims=True) / B
        pred_ref[...] = pred
        stats_ref[...] = jnp.concatenate([loss, acc], axis=1)           # merged (1, 2)

    return pl.pallas_call(
        kernel,
        out_shape=(jax.ShapeDtypeStruct((Bpad, NC), jnp.float32),
                   jax.ShapeDtypeStruct((1, 2), jnp.float32),
                   jax.ShapeDtypeStruct((Bpad, 1), jnp.int32)),
        in_specs=[pl.BlockSpec(memory_space=_VMEM)] * 6,
        out_specs=(pl.BlockSpec(memory_space=_VMEM),) * 3,
    )


# --------------------------------------------------------------------------------------
# Parameters
# --------------------------------------------------------------------------------------
def init_params(cfg: ConvConfig, key):
    chans = [cfg.input_channels] + list(cfg.channels)
    raw = {}
    for i in range(cfg.num_layers):
        key, k1, k2, k3, k4, k5, k6 = jax.random.split(key, 7)
        k = cfg.kernel_size[i]
        cin, cout = chans[i], chans[i + 1]
        layer = {
            "w_hwio": jax.random.normal(k1, (k, k, cin, cout), jnp.float32) / np.sqrt(k * k * cin),
            "b": 0.05 * jax.random.normal(k2, (cout,), jnp.float32),
        }
        if cfg.apply_batchnorm:
            layer["gamma"] = 1.0 + 0.1 * jax.random.normal(k3, (cout,), jnp.float32)
            layer["beta"] = 0.1 * jax.random.normal(k4, (cout,), jnp.float32)
            layer["mean"] = 0.05 * jax.random.normal(k5, (cout,), jnp.float32)
            layer["var"] = 1.0 + 0.1 * jnp.abs(jax.random.normal(k6, (cout,), jnp.float32))
        raw[f"conv{i}"] = layer

    geo, Hf, Wf = _layer_geometry(cfg)
    flat_dim = cfg.channels[-1] * Hf * Wf
    key, k1, k2, k3, k4 = jax.random.split(key, 5)
    raw["fc1"] = {"w": jax.random.normal(k1, (flat_dim, cfg.feedforward_dim), jnp.float32) / np.sqrt(flat_dim),
                  "b": 0.05 * jax.random.normal(k2, (cfg.feedforward_dim,), jnp.float32)}
    raw["fc2"] = {"w": jax.random.normal(k3, (cfg.feedforward_dim, cfg.num_classes), jnp.float32) / np.sqrt(cfg.feedforward_dim),
                  "b": 0.05 * jax.random.normal(k4, (cfg.num_classes,), jnp.float32)}
    return raw


def _derive_kernel_params(cfg: ConvConfig, geo, raw):
    """One-time: fold BN scale into conv weights, permute fc1 rows to NHWC order."""
    eps = 1e-5
    kp = {}
    for i in range(cfg.num_layers):
        g = geo[i]
        layer = raw[f"conv{i}"]
        w, b = layer["w_hwio"], layer["b"]
        if cfg.apply_batchnorm:
            scale = layer["gamma"] / jnp.sqrt(layer["var"] + eps)
            shift = (b - layer["mean"]) * scale + layer["beta"]
        else:
            scale = jnp.ones_like(b)
            shift = b
        k, cin, cout = g["k"], g["cin"], g["cout"]
        kp[f"conv{i}"] = {
            "w_taps": (w * scale[None, None, None, :]).reshape(k * k, cin, cout),
            "shift": shift.reshape(1, cout),
        }
    Hf, Wf, Cf = geo[-1]["Hq"], geo[-1]["Wq"], geo[-1]["cout"]
    R = Hf * Wf
    w1 = raw["fc1"]["w"]                                   # rows in torch NCHW-flatten order
    w1_perm = w1.reshape(Cf, R, -1).transpose(1, 0, 2).reshape(R * Cf, -1)
    kp["fc1"] = {"w": w1_perm, "b": raw["fc1"]["b"].reshape(1, -1)}
    kp["fc2"] = {"w": raw["fc2"]["w"], "b": raw["fc2"]["b"].reshape(1, -1)}
    return kp


# --------------------------------------------------------------------------------------
# Forward passes
# --------------------------------------------------------------------------------------
def forward_pallas(raw_params, x_nchw, y, cfg: ConvConfig, batch_block: int = 8):
    assert cfg.conv_activation_function == "ReLU"          # TODO(synk): other activations
    assert cfg.feedforward_activation_function == "ReLU"
    geo, Hf, Wf = _layer_geometry(cfg)
    B = x_nchw.shape[0]
    # Batch block per grid step: 8 keeps per-core VMEM well inside the v5e/v7x scoped
    # defaults; on v6e (128 MiB VMEM, single TC) it can be raised to 16-32.
    NB = max(1, min(B, batch_block))
    Nblk = -(-B // NB)
    Bpad = Nblk * NB
    Rf, Cf = Hf * Wf, geo[-1]["cout"]
    kp = _derive_kernel_params(cfg, geo, raw_params)

    # tiny host-side layout prep for the raw input only: NCHW->NHWC, spatial pad, flatten
    g0 = geo[0]
    x = jnp.transpose(x_nchw, (0, 2, 3, 1)).astype(jnp.float32)
    x = jnp.pad(x, ((0, Bpad - B), (g0["p"], g0["p"]), (g0["p"], g0["p"]), (0, 0)))
    x = x.reshape(Bpad, g0["Hp"] * g0["Wp"], g0["cin"])
    x = jnp.pad(x, ((0, 0), (0, g0["in_rows"] - g0["Hp"] * g0["Wp"]), (0, 0)))
    x = x.reshape(Bpad * g0["in_rows"], g0["cin"])

    conv_tower = _build_conv_tower(cfg, geo, NB, Nblk)
    args = [x]
    for i in range(cfg.num_layers):
        args += [kp[f"conv{i}"]["w_taps"], kp[f"conv{i}"]["shift"]]
    feat = conv_tower(*args)                                # (Bpad*Rf, Cf) — only HBM intermediate
    feat = feat.reshape(Bpad, Rf * Cf)                      # free reshape -> lane-dense (B, 256)

    y_pad = jnp.pad(y.astype(jnp.int32), (0, Bpad - B)).reshape(Bpad, 1)
    head = _build_head(cfg, B, Bpad)
    logits, stats, pred = head(feat, kp["fc1"]["w"], kp["fc1"]["b"],
                               kp["fc2"]["w"], kp["fc2"]["b"], y_pad)
    return (stats[0, 0], stats[0, 1], pred[:B, 0]), logits[:B]


def forward_reference(raw_params, x_nchw, y, cfg: ConvConfig):
    """Pure-JAX/XLA reference of the same (eval-mode) forward."""
    eps = 1e-5
    B = x_nchw.shape[0]
    x = jnp.transpose(x_nchw, (0, 2, 3, 1)).astype(jnp.float32)
    for i in range(cfg.num_layers):
        layer = raw_params[f"conv{i}"]
        p, s = cfg.padding[i], cfg.stride[i]
        x = jax.lax.conv_general_dilated(
            x, layer["w_hwio"], window_strides=(s, s), padding=((p, p), (p, p)),
            dimension_numbers=("NHWC", "HWIO", "NHWC")) + layer["b"]
        if cfg.apply_batchnorm:
            x = (x - layer["mean"]) / jnp.sqrt(layer["var"] + eps) * layer["gamma"] + layer["beta"]
        x = jnp.maximum(x, 0.0)
        if cfg.apply_maxpool:
            x = jax.lax.reduce_window(
                x, -jnp.inf, jax.lax.max,
                (1, cfg.maxpool_kernel_size, cfg.maxpool_kernel_size, 1),
                (1, cfg.maxpool_stride, cfg.maxpool_stride, 1), "VALID")
    feat = jnp.transpose(x, (0, 3, 1, 2)).reshape(B, -1)     # torch-style NCHW flatten
    h = jnp.maximum(feat @ raw_params["fc1"]["w"] + raw_params["fc1"]["b"], 0.0)
    logits = h @ raw_params["fc2"]["w"] + raw_params["fc2"]["b"]
    logp = jax.nn.log_softmax(logits, axis=-1)
    NC = cfg.num_classes
    onehot = jax.nn.one_hot(y, NC, dtype=jnp.float32)
    target = (1.0 - cfg.label_smoothing) * onehot + cfg.label_smoothing / NC
    loss = jnp.mean(-jnp.sum(target * logp, axis=-1))
    pred = jnp.argmax(logits, axis=-1)
    acc = jnp.mean((pred == y).astype(jnp.float32))
    return (loss, acc, pred), logits


# --------------------------------------------------------------------------------------
if __name__ == "__main__":
    cfg = ConvConfig()
    key = jax.random.PRNGKey(0)
    kparam, kx, ky = jax.random.split(key, 3)

    params = init_params(cfg, kparam)
    x = jax.random.normal(kx, (2, cfg.input_channels, cfg.input_size, cfg.input_size), jnp.float32)
    y = jax.random.randint(ky, (2,), 0, cfg.num_classes, dtype=jnp.int32)

    (loss, acc, pred), logits = forward_pallas(params, x, y, cfg)
    jax.block_until_ready((loss, acc, pred, logits))

    (rloss, racc, rpred), rlogits = forward_reference(params, x, y, cfg)
    np.testing.assert_allclose(np.asarray(logits), np.asarray(rlogits), rtol=1e-3, atol=1e-3)
    np.testing.assert_allclose(float(loss), float(rloss), rtol=1e-3, atol=1e-3)
    np.testing.assert_allclose(float(acc), float(racc), rtol=1e-6, atol=1e-6)
    assert np.array_equal(np.asarray(pred), np.asarray(rpred))

    print("KERNEL_OK")
</pallas_src>

<mosaic_0001>
module attributes {stable_mosaic.version = 11 : i64} {
  func.func @kernel(%arg0: i32, %arg1: memref<656x4xf32, #tpu.memory_space<vmem>>, %arg2: memref<9x4x8xf32, #tpu.memory_space<vmem>>, %arg3: memref<1x8xf32, #tpu.memory_space<vmem>>, %arg4: memref<9x8x16xf32, #tpu.memory_space<vmem>>, %arg5: memref<1x16xf32, #tpu.memory_space<vmem>>, %arg6: memref<32x16xf32, #tpu.memory_space<vmem>>, %arg7: memref<616x8xf32, #tpu.memory_space<vmem>>, %arg8: memref<184x16xf32, #tpu.memory_space<vmem>>, %arg9: memref<208x8xf32, #tpu.memory_space<vmem>>) attributes {dimension_semantics = [#tpu.dimension_semantics<parallel>], iteration_bounds = array<i64: 1>, scalar_prefetch = 0 : i64, scratch_operands = 3 : i64, tpu.core_type = #tpu.core_type<tc>, window_params = [{transform_indices = @transform_0, window_bounds = array<i64: 656, 4>}, {pipeline_mode = #tpu.pipeline_mode<synchronous>, transform_indices = @transform_1, window_bounds = array<i64: 9, 4, 8>}, {pipeline_mode = #tpu.pipeline_mode<synchronous>, transform_indices = @transform_2, window_bounds = array<i64: 1, 8>}, {pipeline_mode = #tpu.pipeline_mode<synchronous>, transform_indices = @transform_3, window_bounds = array<i64: 9, 8, 16>}, {pipeline_mode = #tpu.pipeline_mode<synchronous>, transform_indices = @transform_4, window_bounds = array<i64: 1, 16>}, {transform_indices = @transform_5, window_bounds = array<i64: 32, 16>}]} {
    %c0 = arith.constant 0 : index
    %c0_0 = arith.constant 0 : index
    %0 = vector.load %arg1[%c0, %c0_0] : memref<656x4xf32, #tpu.memory_space<vmem>>, vector<616x4xf32>
    %c0_1 = arith.constant 0 : index
    %c0_2 = arith.constant 0 : index
    %c0_3 = arith.constant 0 : index
    %1 = vector.load %arg2[%c0_1, %c0_2, %c0_3] : memref<9x4x8xf32, #tpu.memory_space<vmem>>, vector<1x4x8xf32>
    %2 = vector.shape_cast %1 : vector<1x4x8xf32> to vector<4x8xf32>
    %cst = arith.constant dense<0.000000e+00> : vector<616x8xf32>
    %3 = tpu.matmul %0, %2, %cst {dimension_numbers = #tpu.dot_dimension_numbers<[1], [0], [0], [1], [0, 0, 1, 1], [], []>} : vector<616x4xf32>, vector<4x8xf32>, vector<616x8xf32> -> vector<616x8xf32>
    %c1 = arith.constant 1 : index
    %c0_4 = arith.constant 0 : index
    %4 = vector.load %arg1[%c1, %c0_4] : memref<656x4xf32, #tpu.memory_space<vmem>>, vector<616x4xf32>
    %c1_5 = arith.constant 1 : index
    %c0_6 = arith.constant 0 : index
    %c0_7 = arith.constant 0 : index
    %5 = vector.load %arg2[%c1_5, %c0_6, %c0_7] : memref<9x4x8xf32, #tpu.memory_space<vmem>>, vector<1x4x8xf32>
    %6 = vector.shape_cast %5 : vector<1x4x8xf32> to vector<4x8xf32>
    %cst_8 = arith.constant dense<0.000000e+00> : vector<616x8xf32>
    %7 = tpu.matmul %4, %6, %cst_8 {dimension_numbers = #tpu.dot_dimension_numbers<[1], [0], [0], [1], [0, 0, 1, 1], [], []>} : vector<616x4xf32>, vector<4x8xf32>, vector<616x8xf32> -> vector<616x8xf32>
    %8 = arith.addf %3, %7 : vector<616x8xf32>
    %c2 = arith.constant 2 : index
    %c0_9 = arith.constant 0 : index
    %9 = vector.load %arg1[%c2, %c0_9] : memref<656x4xf32, #tpu.memory_space<vmem>>, vector<616x4xf32>
    %c2_10 = arith.constant 2 : index
    %c0_11 = arith.constant 0 : index
    %c0_12 = arith.constant 0 : index
    %10 = vector.load %arg2[%c2_10, %c0_11, %c0_12] : memref<9x4x8xf32, #tpu.memory_space<vmem>>, vector<1x4x8xf32>
    %11 = vector.shape_cast %10 : vector<1x4x8xf32> to vector<4x8xf32>
    %cst_13 = arith.constant dense<0.000000e+00> : vector<616x8xf32>
    %12 = tpu.matmul %9, %11, %cst_13 {dimension_numbers = #tpu.dot_dimension_numbers<[1], [0], [0], [1], [0, 0, 1, 1], [], []>} : vector<616x4xf32>, vector<4x8xf32>, vector<616x8xf32> -> vector<616x8xf32>
    %13 = arith.addf %8, %12 : vector<616x8xf32>
    %c18 = arith.constant 18 : index
    %c0_14 = arith.constant 0 : index
    %14 = vector.load %arg1[%c18, %c0_14] : memref<656x4xf32, #tpu.memory_space<vmem>>, vector<616x4xf32>
    %c3 = arith.constant 3 : index
    %c0_15 = arith.constant 0 : index
    %c0_16 = arith.constant 0 : index
    %15 = vector.load %arg2[%c3, %c0_15, %c0_16] : memref<9x4x8xf32, #tpu.memory_space<vmem>>, vector<1x4x8xf32>
    %16 = vector.shape_cast %15 : vector<1x4x8xf32> to vector<4x8xf32>
    %cst_17 = arith.constant dense<0.000000e+00> : vector<616x8xf32>
    %17 = tpu.matmul %14, %16, %cst_17 {dimension_numbers = #tpu.dot_dimension_numbers<[1], [0], [0], [1], [0, 0, 1, 1], [], []>} : vector<616x4xf32>, vector<4x8xf32>, vector<616x8xf32> -> vector<616x8xf32>
    %18 = arith.addf %13, %17 : vector<616x8xf32>
    %c19 = arith.constant 19 : index
    %c0_18 = arith.constant 0 : index
    %19 = vector.load %arg1[%c19, %c0_18] : memref<656x4xf32, #tpu.memory_space<vmem>>, vector<616x4xf32>
    %c4 = arith.constant 4 : index
    %c0_19 = arith.constant 0 : index
    %c0_20 = arith.constant 0 : index
    %20 = vector.load %arg2[%c4, %c0_19, %c0_20] : memref<9x4x8xf32, #tpu.memory_space<vmem>>, vector<1x4x8xf32>
    %21 = vector.shape_cast %20 : vector<1x4x8xf32> to vector<4x8xf32>
    %cst_21 = arith.constant dense<0.000000e+00> : vector<616x8xf32>
    %22 = tpu.matmul %19, %21, %cst_21 {dimension_numbers = #tpu.dot_dimension_numbers<[1], [0], [0], [1], [0, 0, 1, 1], [], []>} : vector<616x4xf32>, vector<4x8xf32>, vector<616x8xf32> -> vector<616x8xf32>
    %23 = arith.addf %18, %22 : vector<616x8xf32>
    %c20 = arith.constant 20 : index
    %c0_22 = arith.constant 0 : index
    %24 = vector.load %arg1[%c20, %c0_22] : memref<656x4xf32, #tpu.memory_space<vmem>>, vector<616x4xf32>
    %c5 = arith.constant 5 : index
    %c0_23 = arith.constant 0 : index
    %c0_24 = arith.constant 0 : index
    %25 = vector.load %arg2[%c5, %c0_23, %c0_24] : memref<9x4x8xf32, #tpu.memory_space<vmem>>, vector<1x4x8xf32>
    %26 = vector.shape_cast %25 : vector<1x4x8xf32> to vector<4x8xf32>
    %cst_25 = arith.constant dense<0.000000e+00> : vector<616x8xf32>
    %27 = tpu.matmul %24, %26, %cst_25 {dimension_numbers = #tpu.dot_dimension_numbers<[1], [0], [0], [1], [0, 0, 1, 1], [], []>} : vector<616x4xf32>, vector<4x8xf32>, vector<616x8xf32> -> vector<616x8xf32>
    %28 = arith.addf %23, %27 : vector<616x8xf32>
    %c36 = arith.constant 36 : index
    %c0_26 = arith.constant 0 : index
    %29 = vector.load %arg1[%c36, %c0_26] : memref<656x4xf32, #tpu.memory_space<vmem>>, vector<616x4xf32>
    %c6 = arith.constant 6 : index
    %c0_27 = arith.constant 0 : index
    %c0_28 = arith.constant 0 : index
    %30 = vector.load %arg2[%c6, %c0_27, %c0_28] : memref<9x4x8xf32, #tpu.memory_space<vmem>>, vector<1x4x8xf32>
    %31 = vector.shape_cast %30 : vector<1x4x8xf32> to vector<4x8xf32>
    %cst_29 = arith.constant dense<0.000000e+00> : vector<616x8xf32>
    %32 = tpu.matmul %29, %31, %cst_29 {dimension_numbers = #tpu.dot_dimension_numbers<[1], [0], [0], [1], [0, 0, 1, 1], [], []>} : vector<616x4xf32>, vector<4x8xf32>, vector<616x8xf32> -> vector<616x8xf32>
    %33 = arith.addf %28, %32 : vector<616x8xf32>
    %c37 = arith.constant 37 : index
    %c0_30 = arith.constant 0 : index
    %34 = vector.load %arg1[%c37, %c0_30] : memref<656x4xf32, #tpu.memory_space<vmem>>, vector<616x4xf32>
    %c7 = arith.constant 7 : index
    %c0_31 = arith.constant 0 : index
    %c0_32 = arith.constant 0 : index
    %35 = vector.load %arg2[%c7, %c0_31, %c0_32] : memref<9x4x8xf32, #tpu.memory_space<vmem>>, vector<1x4x8xf32>
    %36 = vector.shape_cast %35 : vector<1x4x8xf32> to vector<4x8xf32>
    %cst_33 = arith.constant dense<0.000000e+00> : vector<616x8xf32>
    %37 = tpu.matmul %34, %36, %cst_33 {dimension_numbers = #tpu.dot_dimension_numbers<[1], [0], [0], [1], [0, 0, 1, 1], [], []>} : vector<616x4xf32>, vector<4x8xf32>, vector<616x8xf32> -> vector<616x8xf32>
    %38 = arith.addf %33, %37 : vector<616x8xf32>
    %c38 = arith.constant 38 : index
    %c0_34 = arith.constant 0 : index
    %39 = vector.load %arg1[%c38, %c0_34] : memref<656x4xf32, #tpu.memory_space<vmem>>, vector<616x4xf32>
    %c8 = arith.constant 8 : index
    %c0_35 = arith.constant 0 : index
    %c0_36 = arith.constant 0 : index
    %40 = vector.load %arg2[%c8, %c0_35, %c0_36] : memref<9x4x8xf32, #tpu.memory_space<vmem>>, vector<1x4x8xf32>
    %41 = vector.shape_cast %40 : vector<1x4x8xf32> to vector<4x8xf32>
    %cst_37 = arith.constant dense<0.000000e+00> : vector<616x8xf32>
    %42 = tpu.matmul %39, %41, %cst_37 {dimension_numbers = #tpu.dot_dimension_numbers<[1], [0], [0], [1], [0, 0, 1, 1], [], []>} : vector<616x4xf32>, vector<4x8xf32>, vector<616x8xf32> -> vector<616x8xf32>
    %43 = arith.addf %38, %42 : vector<616x8xf32>
    %c0_38 = arith.constant 0 : index
    %c0_39 = arith.constant 0 : index
    %44 = vector.load %arg3[%c0_38, %c0_39] : memref<1x8xf32, #tpu.memory_space<vmem>>, vector<1x8xf32>
    %45 = vector.broadcast %44 : vector<1x8xf32> to vector<616x8xf32>
    %46 = arith.addf %43, %45 : vector<616x8xf32>
    %cst_40 = arith.constant 0.000000e+00 : f32
    %47 = vector.broadcast %cst_40 : f32 to vector<616x8xf32>
    %48 = arith.maximumf %46, %47 : vector<616x8xf32>
    %c0_41 = arith.constant 0 : index
    %c0_42 = arith.constant 0 : index
    %49 = vector.load %arg7[%c0_41, %c0_42] : memref<616x8xf32, #tpu.memory_space<vmem>>, vector<616x8xf32>
    tpu.vector_store %arg7[%c0_41, %c0_42], %48 {strides = array<i32>} : memref<616x8xf32, #tpu.memory_space<vmem>>, vector<616x8xf32>,
    %cst_43 = arith.constant 0.000000e+00 : f32
    %50 = vector.broadcast %cst_43 : f32 to vector<208x8xf32>
    %c0_44 = arith.constant 0 : index
    %c0_45 = arith.constant 0 : index
    %51 = vector.load %arg9[%c0_44, %c0_45] : memref<208x8xf32, #tpu.memory_space<vmem>>, vector<208x8xf32>
    tpu.vector_store %arg9[%c0_44, %c0_45], %50 {strides = array<i32>} : memref<208x8xf32, #tpu.memory_space<vmem>>, vector<208x8xf32>,
    %c0_46 = arith.constant 0 : index
    %c0_47 = arith.constant 0 : index
    %52 = tpu.strided_load %arg7[%c0_46, %c0_47] {strides = array<i32: 2, 1>} : memref<616x8xf32, #tpu.memory_space<vmem>>, vector<8x8xf32>
    %c1_48 = arith.constant 1 : index
    %c0_49 = arith.constant 0 : index
    %53 = tpu.strided_load %arg7[%c1_48, %c0_49] {strides = array<i32: 2, 1>} : memref<616x8xf32, #tpu.memory_space<vmem>>, vector<8x8xf32>
    %c18_50 = arith.constant 18 : index
    %c0_51 = arith.constant 0 : index
    %54 = tpu.strided_load %arg7[%c18_50, %c0_51] {strides = array<i32: 2, 1>} : memref<616x8xf32, #tpu.memory_space<vmem>>, vector<8x8xf32>
    %c19_52 = arith.constant 19 : index
    %c0_53 = arith.constant 0 : index
    %55 = tpu.strided_load %arg7[%c19_52, %c0_53] {strides = array<i32: 2, 1>} : memref<616x8xf32, #tpu.memory_space<vmem>>, vector<8x8xf32>
    %56 = arith.maximumf %52, %53 : vector<8x8xf32>
    %57 = arith.maximumf %54, %55 : vector<8x8xf32>
    %58 = arith.maximumf %56, %57 : vector<8x8xf32>
    %c11 = arith.constant 11 : index
    %c0_54 = arith.constant 0 : index
    %59 = vector.load %arg9[%c11, %c0_54] : memref<208x8xf32, #tpu.memory_space<vmem>>, vector<8x8xf32>
    tpu.vector_store %arg9[%c11, %c0_54], %58 {strides = array<i32>} : memref<208x8xf32, #tpu.memory_space<vmem>>, vector<8x8xf32>,
    %c36_55 = arith.constant 36 : index
    %c0_56 = arith.constant 0 : index
    %60 = tpu.strided_load %arg7[%c36_55, %c0_56] {strides = array<i32: 2, 1>} : memref<616x8xf32, #tpu.memory_space<vmem>>, vector<8x8xf32>
    %c37_57 = arith.constant 37 : index
    %c0_58 = arith.constant 0 : index
    %61 = tpu.strided_load %arg7[%c37_57, %c0_58] {strides = array<i32: 2, 1>} : memref<616x8xf32, #tpu.memory_space<vmem>>, vector<8x8xf32>
    %c54 = arith.constant 54 : index
    %c0_59 = arith.constant 0 : index
    %62 = tpu.strided_load %arg7[%c54, %c0_59] {strides = array<i32: 2, 1>} : memref<616x8xf32, #tpu.memory_space<vmem>>, vector<8x8xf32>
    %c55 = arith.constant 55 : index
    %c0_60 = arith.constant 0 : index
    %63 = tpu.strided_load %arg7[%c55, %c0_60] {strides = array<i32: 2, 1>} : memref<616x8xf32, #tpu.memory_space<vmem>>, vector<8x8xf32>
    %64 = arith.maximumf %60, %61 : vector<8x8xf32>
    %65 = arith.maximumf %62, %63 : vector<8x8xf32>
    %66 = arith.maximumf %64, %65 : vector<8x8xf32>
    %c21 = arith.constant 21 : index
    %c0_61 = arith.constant 0 : index
    %67 = vector.load %arg9[%c21, %c0_61] : memref<208x8xf32, #tpu.memory_space<vmem>>, vector<8x8xf32>
    tpu.vector_store %arg9[%c21, %c0_61], %66 {strides = array<i32>} : memref<208x8xf32, #tpu.memory_space<vmem>>, vector<8x8xf32>,
    %c72 = arith.constant 72 : index
    %c0_62 = arith.constant 0 : index
    %68 = tpu.strided_load %arg7[%c72, %c0_62] {strides = array<i32: 2, 1>} : memref<616x8xf32, #tpu.memory_space<vmem>>, vector<8x8xf32>
    %c73 = arith.constant 73 : index
    %c0_63 = arith.constant 0 : index
    %69 = tpu.strided_load %arg7[%c73, %c0_63] {strides = array<i32: 2, 1>} : memref<616x8xf32, #tpu.memory_space<vmem>>, vector<8x8xf32>
    %c90 = arith.constant 90 : index
    %c0_64 = arith.constant 0 : index
    %70 = tpu.strided_load %arg7[%c90, %c0_64] {strides = array<i32: 2, 1>} : memref<616x8xf32, #tpu.memory_space<vmem>>, vector<8x8xf32>
    %c91 = arith.constant 91 : index
    %c0_65 = arith.constant 0 : index
    %71 = tpu.strided_load %arg7[%c91, %c0_65] {strides = array<i32: 2, 1>} : memref<616x8xf32, #tpu.memory_space<vmem>>, vector<8x8xf32>
    %72 = arith.maximumf %68, %69 : vector<8x8xf32>
    %73 = arith.maximumf %70, %71 : vector<8x8xf32>
    %74 = arith.maximumf %72, %73 : vector<8x8xf32>
    %c31 = arith.constant 31 : index
    %c0_66 = arith.constant 0 : index
    %75 = vector.load %arg9[%c31, %c0_66] : memref<208x8xf32, #tpu.memory_space<vmem>>, vector<8x8xf32>
    tpu.vector_store %arg9[%c31, %c0_66], %74 {strides = array<i32>} : memref<208x8xf32, #tpu.memory_space<vmem>>, vector<8x8xf32>,
    %c108 = arith.constant 108 : index
    %c0_67 = arith.constant 0 : index
    %76 = tpu.strided_load %arg7[%c108, %c0_67] {strides = array<i32: 2, 1>} : memref<616x8xf32, #tpu.memory_space<vmem>>, vector<8x8xf32>
    %c109 = arith.constant 109 : index
    %c0_68 = arith.constant 0 : index
    %77 = tpu.strided_load %arg7[%c109, %c0_68] {strides = array<i32: 2, 1>} : memref<616x8xf32, #tpu.memory_space<vmem>>, vector<8x8xf32>
    %c126 = arith.constant 126 : index
    %c0_69 = arith.constant 0 : index
    %78 = tpu.strided_load %arg7[%c126, %c0_69] {strides = array<i32: 2, 1>} : memref<616x8xf32, #tpu.memory_space<vmem>>, vector<8x8xf32>
    %c127 = arith.constant 127 : index
    %c0_70 = arith.constant 0 : index
    %79 = tpu.strided_load %arg7[%c127, %c0_70] {strides = array<i32: 2, 1>} : memref<616x8xf32, #tpu.memory_space<vmem>>, vector<8x8xf32>
    %80 = arith.maximumf %76, %77 : vector<8x8xf32>
    %81 = arith.maximumf %78, %79 : vector<8x8xf32>
    %82 = arith.maximumf %80, %81 : vector<8x8xf32>
    %c41 = arith.constant 41 : index
    %c0_71 = arith.constant 0 : index
    %83 = vector.load %arg9[%c41, %c0_71] : memref<208x8xf32, #tpu.memory_space<vmem>>, vector<8x8xf32>
    tpu.vector_store %arg9[%c41, %c0_71], %82 {strides = array<i32>} : memref<208x8xf32, #tpu.memory_space<vmem>>, vector<8x8xf32>,
    %c144 = arith.constant 144 : index
    %c0_72 = arith.constant 0 : index
    %84 = tpu.strided_load %arg7[%c144, %c0_72] {strides = array<i32: 2, 1>} : memref<616x8xf32, #tpu.memory_space<vmem>>, vector<8x8xf32>
    %c145 = arith.constant 145 : index
    %c0_73 = arith.constant 0 : index
    %85 = tpu.strided_load %arg7[%c145, %c0_73] {strides = array<i32: 2, 1>} : memref<616x8xf32, #tpu.memory_space<vmem>>, vector<8x8xf32>
    %c162 = arith.constant 162 : index
    %c0_74 = arith.constant 0 : index
    %86 = tpu.strided_load %arg7[%c162, %c0_74] {strides = array<i32: 2, 1>} : memref<616x8xf32, #tpu.memory_space<vmem>>, vector<8x8xf32>
    %c163 = arith.constant 163 : index
    %c0_75 = arith.constant 0 : index
    %87 = tpu.strided_load %arg7[%c163, %c0_75] {strides = array<i32: 2, 1>} : memref<616x8xf32, #tpu.memory_space<vmem>>, vector<8x8xf32>
    %88 = arith.maximumf %84, %85 : vector<8x8xf32>
    %89 = arith.maximumf %86, %87 : vector<8x8xf32>
    %90 = arith.maximumf %88, %89 : vector<8x8xf32>
    %c51 = arith.constant 51 : index
    %c0_76 = arith.constant 0 : index
    %91 = vector.load %arg9[%c51, %c0_76] : memref<208x8xf32, #tpu.memory_space<vmem>>, vector<8x8xf32>
    tpu.vector_store %arg9[%c51, %c0_76], %90 {strides = array<i32>} : memref<208x8xf32, #tpu.memory_space<vmem>>, vector<8x8xf32>,
    %c180 = arith.constant 180 : index
    %c0_77 = arith.constant 0 : index
    %92 = tpu.strided_load %arg7[%c180, %c0_77] {strides = array<i32: 2, 1>} : memref<616x8xf32, #tpu.memory_space<vmem>>, vector<8x8xf32>
    %c181 = arith.constant 181 : index
    %c0_78 = arith.constant 0 : index
    %93 = tpu.strided_load %arg7[%c181, %c0_78] {strides = array<i32: 2, 1>} : memref<616x8xf32, #tpu.memory_space<vmem>>, vector<8x8xf32>
    %c198 = arith.constant 198 : index
    %c0_79 = arith.constant 0 : index
    %94 = tpu.strided_load %arg7[%c198, %c0_79] {strides = array<i32: 2, 1>} : memref<616x8xf32, #tpu.memory_space<vmem>>, vector<8x8xf32>
    %c199 = arith.constant 199 : index
    %c0_80 = arith.constant 0 : index
    %95 = tpu.strided_load %arg7[%c199, %c0_80] {strides = array<i32: 2, 1>} : memref<616x8xf32, #tpu.memory_space<vmem>>, vector<8x8xf32>
    %96 = arith.maximumf %92, %93 : vector<8x8xf32>
    %97 = arith.maximumf %94, %95 : vector<8x8xf32>
    %98 = arith.maximumf %96, %97 : vector<8x8xf32>
    %c61 = arith.constant 61 : index
    %c0_81 = arith.constant 0 : index
    %99 = vector.load %arg9[%c61, %c0_81] : memref<208x8xf32, #tpu.memory_space<vmem>>, vector<8x8xf32>
    tpu.vector_store %arg9[%c61, %c0_81], %98 {strides = array<i32>} : memref<208x8xf32, #tpu.memory_space<vmem>>, vector<8x8xf32>,
    %c216 = arith.constant 216 : index
    %c0_82 = arith.constant 0 : index
    %100 = tpu.strided_load %arg7[%c216, %c0_82] {strides = array<i32: 2, 1>} : memref<616x8xf32, #tpu.memory_space<vmem>>, vector<8x8xf32>
    %c217 = arith.constant 217 : index
    %c0_83 = arith.constant 0 : index
    %101 = tpu.strided_load %arg7[%c217, %c0_83] {strides = array<i32: 2, 1>} : memref<616x8xf32, #tpu.memory_space<vmem>>, vector<8x8xf32>
    %c234 = arith.constant 234 : index
    %c0_84 = arith.constant 0 : index
    %102 = tpu.strided_load %arg7[%c234, %c0_84] {strides = array<i32: 2, 1>} : memref<616x8xf32, #tpu.memory_space<vmem>>, vector<8x8xf32>
    %c235 = arith.constant 235 : index
    %c0_85 = arith.constant 0 : index
    %103 = tpu.strided_load %arg7[%c235, %c0_85] {strides = array<i32: 2, 1>} : memref<616x8xf32, #tpu.memory_space<vmem>>, vector<8x8xf32>
    %104 = arith.maximumf %100, %101 : vector<8x8xf32>
    %105 = arith.maximumf %102, %103 : vector<8x8xf32>
    %106 = arith.maximumf %104, %105 : vector<8x8xf32>
    %c71 = arith.constant 71 : index
    %c0_86 = arith.constant 0 : index
    %107 = vector.load %arg9[%c71, %c0_86] : memref<208x8xf32, #tpu.memory_space<vmem>>, vector<8x8xf32>
    tpu.vector_store %arg9[%c71, %c0_86], %106 {strides = array<i32>} : memref<208x8xf32, #tpu.memory_space<vmem>>, vector<8x8xf32>,
    %c252 = arith.constant 252 : index
    %c0_87 = arith.constant 0 : index
    %108 = tpu.strided_load %arg7[%c252, %c0_87] {strides = array<i32: 2, 1>} : memref<616x8xf32, #tpu.memory_space<vmem>>, vector<8x8xf32>
    %c253 = arith.constant 253 : index
    %c0_88 = arith.constant 0 : index
    %109 = tpu.strided_load %arg7[%c253, %c0_88] {strides = array<i32: 2, 1>} : memref<616x8xf32, #tpu.memory_space<vmem>>, vector<8x8xf32>
    %c270 = arith.constant 270 : index
    %c0_89 = arith.constant 0 : index
    %110 = tpu.strided_load %arg7[%c270, %c0_89] {strides = array<i32: 2, 1>} : memref<616x8xf32, #tpu.memory_space<vmem>>, vector<8x8xf32>
    %c271 = arith.constant 271 : index
    %c0_90 = arith.constant 0 : index
    %111 = tpu.strided_load %arg7[%c271, %c0_90] {strides = array<i32: 2, 1>} : memref<616x8xf32, #tpu.memory_space<vmem>>, vector<8x8xf32>
    %112 = arith.maximumf %108, %109 : vector<8x8xf32>
    %113 = arith.maximumf %110, %111 : vector<8x8xf32>
    %114 = arith.maximumf %112, %113 : vector<8x8xf32>
    %c81 = arith.constant 81 : index
    %c0_91 = arith.constant 0 : index
    %115 = vector.load %arg9[%c81, %c0_91] : memref<208x8xf32, #tpu.memory_space<vmem>>, vector<8x8xf32>
    tpu.vector_store %arg9[%c81, %c0_91], %114 {strides = array<i32>} : memref<208x8xf32, #tpu.memory_space<vmem>>, vector<8x8xf32>,
    %c328 = arith.constant 328 : index
    %c0_92 = arith.constant 0 : index
    %116 = tpu.strided_load %arg7[%c328, %c0_92] {strides = array<i32: 2, 1>} : memref<616x8xf32, #tpu.memory_space<vmem>>, vector<8x8xf32>
    %c329 = arith.constant 329 : index
    %c0_93 = arith.constant 0 : index
    %117 = tpu.strided_load %arg7[%c329, %c0_93] {strides = array<i32: 2, 1>} : memref<616x8xf32, #tpu.memory_space<vmem>>, vector<8x8xf32>
    %c346 = arith.constant 346 : index
    %c0_94 = arith.constant 0 : index
    %118 = tpu.strided_load %arg7[%c346, %c0_94] {strides = array<i32: 2, 1>} : memref<616x8xf32, #tpu.memory_space<vmem>>, vector<8x8xf32>
    %c347 = arith.constant 347 : index
    %c0_95 = arith.constant 0 : index
    %119 = tpu.strided_load %arg7[%c347, %c0_95] {strides = array<i32: 2, 1>} : memref<616x8xf32, #tpu.memory_space<vmem>>, vector<8x8xf32>
    %120 = arith.maximumf %116, %117 : vector<8x8xf32>
    %121 = arith.maximumf %118, %119 : vector<8x8xf32>
    %122 = arith.maximumf %120, %121 : vector<8x8xf32>
    %c115 = arith.constant 115 : index
    %c0_96 = arith.constant 0 : index
    %123 = vector.load %arg9[%c115, %c0_96] : memref<208x8xf32, #tpu.memory_space<vmem>>, vector<8x8xf32>
    tpu.vector_store %arg9[%c115, %c0_96], %122 {strides = array<i32>} : memref<208x8xf32, #tpu.memory_space<vmem>>, vector<8x8xf32>,
    %c364 = arith.constant 364 : index
    %c0_97 = arith.constant 0 : index
    %124 = tpu.strided_load %arg7[%c364, %c0_97] {strides = array<i32: 2, 1>} : memref<616x8xf32, #tpu.memory_space<vmem>>, vector<8x8xf32>
    %c365 = arith.constant 365 : index
    %c0_98 = arith.constant 0 : index
    %125 = tpu.strided_load %arg7[%c365, %c0_98] {strides = array<i32: 2, 1>} : memref<616x8xf32, #tpu.memory_space<vmem>>, vector<8x8xf32>
    %c382 = arith.constant 382 : index
    %c0_99 = arith.constant 0 : index
    %126 = tpu.strided_load %arg7[%c382, %c0_99] {strides = array<i32: 2, 1>} : memref<616x8xf32, #tpu.memory_space<vmem>>, vector<8x8xf32>
    %c383 = arith.constant 383 : index
    %c0_100 = arith.constant 0 : index
    %127 = tpu.strided_load %arg7[%c383, %c0_100] {strides = array<i32: 2, 1>} : memref<616x8xf32, #tpu.memory_space<vmem>>, vector<8x8xf32>
    %128 = arith.maximumf %124, %125 : vector<8x8xf32>
    %129 = arith.maximumf %126, %127 : vector<8x8xf32>
    %130 = arith.maximumf %128, %129 : vector<8x8xf32>
    %c125 = arith.constant 125 : index
    %c0_101 = arith.constant 0 : index
    %131 = vector.load %arg9[%c125, %c0_101] : memref<208x8xf32, #tpu.memory_space<vmem>>, vector<8x8xf32>
    tpu.vector_store %arg9[%c125, %c0_101], %130 {strides = array<i32>} : memref<208x8xf32, #tpu.memory_space<vmem>>, vector<8x8xf32>,
    %c400 = arith.constant 400 : index
    %c0_102 = arith.constant 0 : index
    %132 = tpu.strided_load %arg7[%c400, %c0_102] {strides = array<i32: 2, 1>} : memref<616x8xf32, #tpu.memory_space<vmem>>, vector<8x8xf32>
    %c401 = arith.constant 401 : index
    %c0_103 = arith.constant 0 : index
    %133 = tpu.strided_load %arg7[%c401, %c0_103] {strides = array<i32: 2, 1>} : memref<616x8xf32, #tpu.memory_space<vmem>>, vector<8x8xf32>
    %c418 = arith.constant 418 : index
    %c0_104 = arith.constant 0 : index
    %134 = tpu.strided_load %arg7[%c418, %c0_104] {strides = array<i32: 2, 1>} : memref<616x8xf32, #tpu.memory_space<vmem>>, vector<8x8xf32>
    %c419 = arith.constant 419 : index
    %c0_105 = arith.constant 0 : index
    %135 = tpu.strided_load %arg7[%c419, %c0_105] {strides = array<i32: 2, 1>} : memref<616x8xf32, #tpu.memory_space<vmem>>, vector<8x8xf32>
    %136 = arith.maximumf %132, %133 : vector<8x8xf32>
    %137 = arith.maximumf %134, %135 : vector<8x8xf32>
    %138 = arith.maximumf %136, %137 : vector<8x8xf32>
    %c135 = arith.constant 135 : index
    %c0_106 = arith.constant 0 : index
    %139 = vector.load %arg9[%c135, %c0_106] : memref<208x8xf32, #tpu.memory_space<vmem>>, vector<8x8xf32>
    tpu.vector_store %arg9[%c135, %c0_106], %138 {strides = array<i32>} : memref<208x8xf32, #tpu.memory_space<vmem>>, vector<8x8xf32>,
    %c436 = arith.constant 436 : index
    %c0_107 = arith.constant 0 : index
    %140 = tpu.strided_load %arg7[%c436, %c0_107] {strides = array<i32: 2, 1>} : memref<616x8xf32, #tpu.memory_space<vmem>>, vector<8x8xf32>
    %c437 = arith.constant 437 : index
    %c0_108 = arith.constant 0 : index
    %141 = tpu.strided_load %arg7[%c437, %c0_108] {strides = array<i32: 2, 1>} : memref<616x8xf32, #tpu.memory_space<vmem>>, vector<8x8xf32>
    %c454 = arith.constant 454 : index
    %c0_109 = arith.constant 0 : index
    %142 = tpu.strided_load %arg7[%c454, %c0_109] {strides = array<i32: 2, 1>} : memref<616x8xf32, #tpu.memory_space<vmem>>, vector<8x8xf32>
    %c455 = arith.constant 455 : index
    %c0_110 = arith.constant 0 : index
    %143 = tpu.strided_load %arg7[%c455, %c0_110] {strides = array<i32: 2, 1>} : memref<616x8xf32, #tpu.memory_space<vmem>>, vector<8x8xf32>
    %144 = arith.maximumf %140, %141 : vector<8x8xf32>
    %145 = arith.maximumf %142, %143 : vector<8x8xf32>
    %146 = arith.maximumf %144, %145 : vector<8x8xf32>
    %c145_111 = arith.constant 145 : index
    %c0_112 = arith.constant 0 : index
    %147 = vector.load %arg9[%c145_111, %c0_112] : memref<208x8xf32, #tpu.memory_space<vmem>>, vector<8x8xf32>
    tpu.vector_store %arg9[%c145_111, %c0_112], %146 {strides = array<i32>} : memref<208x8xf32, #tpu.memory_space<vmem>>, vector<8x8xf32>,
    %c472 = arith.constant 472 : index
    %c0_113 = arith.constant 0 : index
    %148 = tpu.strided_load %arg7[%c472, %c0_113] {strides = array<i32: 2, 1>} : memref<616x8xf32, #tpu.memory_space<vmem>>, vector<8x8xf32>
    %c473 = arith.constant 473 : index
    %c0_114 = arith.constant 0 : index
    %149 = tpu.strided_load %arg7[%c473, %c0_114] {strides = array<i32: 2, 1>} : memref<616x8xf32, #tpu.memory_space<vmem>>, vector<8x8xf32>
    %c490 = arith.constant 490 : index
    %c0_115 = arith.constant 0 : index
    %150 = tpu.strided_load %arg7[%c490, %c0_115] {strides = array<i32: 2, 1>} : memref<616x8xf32, #tpu.memory_space<vmem>>, vector<8x8xf32>
    %c491 = arith.constant 491 : index
    %c0_116 = arith.constant 0 : index
    %151 = tpu.strided_load %arg7[%c491, %c0_116] {strides = array<i32: 2, 1>} : memref<616x8xf32, #tpu.memory_space<vmem>>, vector<8x8xf32>
    %152 = arith.maximumf %148, %149 : vector<8x8xf32>
    %153 = arith.maximumf %150, %151 : vector<8x8xf32>
    %154 = arith.maximumf %152, %153 : vector<8x8xf32>
    %c155 = arith.constant 155 : index
    %c0_117 = arith.constant 0 : index
    %155 = vector.load %arg9[%c155, %c0_117] : memref<208x8xf32, #tpu.memory_space<vmem>>, vector<8x8xf32>
    tpu.vector_store %arg9[%c155, %c0_117], %154 {strides = array<i32>} : memref<208x8xf32, #tpu.memory_space<vmem>>, vector<8x8xf32>,
    %c508 = arith.constant 508 : index
    %c0_118 = arith.constant 0 : index
    %156 = tpu.strided_load %arg7[%c508, %c0_118] {strides = array<i32: 2, 1>} : memref<616x8xf32, #tpu.memory_space<vmem>>, vector<8x8xf32>
    %c509 = arith.constant 509 : index
    %c0_119 = arith.constant 0 : index
    %157 = tpu.strided_load %arg7[%c509, %c0_119] {strides = array<i32: 2, 1>} : memref<616x8xf32, #tpu.memory_space<vmem>>, vector<8x8xf32>
    %c526 = arith.constant 526 : index
    %c0_120 = arith.constant 0 : index
    %158 = tpu.strided_load %arg7[%c526, %c0_120] {strides = array<i32: 2, 1>} : memref<616x8xf32, #tpu.memory_space<vmem>>, vector<8x8xf32>
    %c527 = arith.constant 527 : index
    %c0_121 = arith.constant 0 : index
    %159 = tpu.strided_load %arg7[%c527, %c0_121] {strides = array<i32: 2, 1>} : memref<616x8xf32, #tpu.memory_space<vmem>>, vector<8x8xf32>
    %160 = arith.maximumf %156, %157 : vector<8x8xf32>
    %161 = arith.maximumf %158, %159 : vector<8x8xf32>
    %162 = arith.maximumf %160, %161 : vector<8x8xf32>
    %c165 = arith.constant 165 : index
    %c0_122 = arith.constant 0 : index
    %163 = vector.load %arg9[%c165, %c0_122] : memref<208x8xf32, #tpu.memory_space<vmem>>, vector<8x8xf32>
    tpu.vector_store %arg9[%c165, %c0_122], %162 {strides = array<i32>} : memref<208x8xf32, #tpu.memory_space<vmem>>, vector<8x8xf32>,
    %c544 = arith.constant 544 : index
    %c0_123 = arith.constant 0 : index
    %164 = tpu.strided_load %arg7[%c544, %c0_123] {strides = array<i32: 2, 1>} : memref<616x8xf32, #tpu.memory_space<vmem>>, vector<8x8xf32>
    %c545 = arith.constant 545 : index
    %c0_124 = arith.constant 0 : index
    %165 = tpu.strided_load %arg7[%c545, %c0_124] {strides = array<i32: 2, 1>} : memref<616x8xf32, #tpu.memory_space<vmem>>, vector<8x8xf32>
    %c562 = arith.constant 562 : index
    %c0_125 = arith.constant 0 : index
    %166 = tpu.strided_load %arg7[%c562, %c0_125] {strides = array<i32: 2, 1>} : memref<616x8xf32, #tpu.memory_space<vmem>>, vector<8x8xf32>
    %c563 = arith.constant 563 : index
    %c0_126 = arith.constant 0 : index
    %167 = tpu.strided_load %arg7[%c563, %c0_126] {strides = array<i32: 2, 1>} : memref<616x8xf32, #tpu.memory_space<vmem>>, vector<8x8xf32>
    %168 = arith.maximumf %164, %165 : vector<8x8xf32>
    %169 = arith.maximumf %166, %167 : vector<8x8xf32>
    %170 = arith.maximumf %168, %169 : vector<8x8xf32>
    %c175 = arith.constant 175 : index
    %c0_127 = arith.constant 0 : index
    %171 = vector.load %arg9[%c175, %c0_127] : memref<208x8xf32, #tpu.memory_space<vmem>>, vector<8x8xf32>
    tpu.vector_store %arg9[%c175, %c0_127], %170 {strides = array<i32>} : memref<208x8xf32, #tpu.memory_space<vmem>>, vector<8x8xf32>,
    %c580 = arith.constant 580 : index
    %c0_128 = arith.constant 0 : index
    %172 = tpu.strided_load %arg7[%c580, %c0_128] {strides = array<i32: 2, 1>} : memref<616x8xf32, #tpu.memory_space<vmem>>, vector<8x8xf32>
    %c581 = arith.constant 581 : index
    %c0_129 = arith.constant 0 : index
    %173 = tpu.strided_load %arg7[%c581, %c0_129] {strides = array<i32: 2, 1>} : memref<616x8xf32, #tpu.memory_space<vmem>>, vector<8x8xf32>
    %c598 = arith.constant 598 : index
    %c0_130 = arith.constant 0 : index
    %174 = tpu.strided_load %arg7[%c598, %c0_130] {strides = array<i32: 2, 1>} : memref<616x8xf32, #tpu.memory_space<vmem>>, vector<8x8xf32>
    %c599 = arith.constant 599 : index
    %c0_131 = arith.constant 0 : index
    %175 = tpu.strided_load %arg7[%c599, %c0_131] {strides = array<i32: 2, 1>} : memref<616x8xf32, #tpu.memory_space<vmem>>, vector<8x8xf32>
    %176 = arith.maximumf %172, %173 : vector<8x8xf32>
    %177 = arith.maximumf %174, %175 : vector<8x8xf32>
    %178 = arith.maximumf %176, %177 : vector<8x8xf32>
    %c185 = arith.constant 185 : index
    %c0_132 = arith.constant 0 : index
    %179 = vector.load %arg9[%c185, %c0_132] : memref<208x8xf32, #tpu.memory_space<vmem>>, vector<8x8xf32>
    tpu.vector_store %arg9[%c185, %c0_132], %178 {strides = array<i32>} : memref<208x8xf32, #tpu.memory_space<vmem>>, vector<8x8xf32>,
    %c0_133 = arith.constant 0 : index
    %c0_134 = arith.constant 0 : index
    %180 = vector.load %arg9[%c0_133, %c0_134] : memref<208x8xf32, #tpu.memory_space<vmem>>, vector<184x8xf32>
    %c0_135 = arith.constant 0 : index
    %c0_136 = arith.constant 0 : index
    %c0_137 = arith.constant 0 : index
    %181 = vector.load %arg4[%c0_135, %c0_136, %c0_137] : memref<9x8x16xf32, #tpu.memory_space<vmem>>, vector<1x8x16xf32>
    %182 = vector.shape_cast %181 : vector<1x8x16xf32> to vector<8x16xf32>
    %cst_138 = arith.constant dense<0.000000e+00> : vector<184x16xf32>
    %183 = tpu.matmul %180, %182, %cst_138 {dimension_numbers = #tpu.dot_dimension_numbers<[1], [0], [0], [1], [0, 0, 1, 1], [], []>} : vector<184x8xf32>, vector<8x16xf32>, vector<184x16xf32> -> vector<184x16xf32>
    %c1_139 = arith.constant 1 : index
    %c0_140 = arith.constant 0 : index
    %184 = vector.load %arg9[%c1_139, %c0_140] : memref<208x8xf32, #tpu.memory_space<vmem>>, vector<184x8xf32>
    %c1_141 = arith.constant 1 : index
    %c0_142 = arith.constant 0 : index
    %c0_143 = arith.constant 0 : index
    %185 = vector.load %arg4[%c1_141, %c0_142, %c0_143] : memref<9x8x16xf32, #tpu.memory_space<vmem>>, vector<1x8x16xf32>
    %186 = vector.shape_cast %185 : vector<1x8x16xf32> to vector<8x16xf32>
    %cst_144 = arith.constant dense<0.000000e+00> : vector<184x16xf32>
    %187 = tpu.matmul %184, %186, %cst_144 {dimension_numbers = #tpu.dot_dimension_numbers<[1], [0], [0], [1], [0, 0, 1, 1], [], []>} : vector<184x8xf32>, vector<8x16xf32>, vector<184x16xf32> -> vector<184x16xf32>
    %188 = arith.addf %183, %187 : vector<184x16xf32>
    %c2_145 = arith.constant 2 : index
    %c0_146 = arith.constant 0 : index
    %189 = vector.load %arg9[%c2_145, %c0_146] : memref<208x8xf32, #tpu.memory_space<vmem>>, vector<184x8xf32>
    %c2_147 = arith.constant 2 : index
    %c0_148 = arith.constant 0 : index
    %c0_149 = arith.constant 0 : index
    %190 = vector.load %arg4[%c2_147, %c0_148, %c0_149] : memref<9x8x16xf32, #tpu.memory_space<vmem>>, vector<1x8x16xf32>
    %191 = vector.shape_cast %190 : vector<1x8x16xf32> to vector<8x16xf32>
    %cst_150 = arith.constant dense<0.000000e+00> : vector<184x16xf32>
    %192 = tpu.matmul %189, %191, %cst_150 {dimension_numbers = #tpu.dot_dimension_numbers<[1], [0], [0], [1], [0, 0, 1, 1], [], []>} : vector<184x8xf32>, vector<8x16xf32>, vector<184x16xf32> -> vector<184x16xf32>
    %193 = arith.addf %188, %192 : vector<184x16xf32>
    %c10 = arith.constant 10 : index
    %c0_151 = arith.constant 0 : index
    %194 = vector.load %arg9[%c10, %c0_151] : memref<208x8xf32, #tpu.memory_space<vmem>>, vector<184x8xf32>
    %c3_152 = arith.constant 3 : index
    %c0_153 = arith.constant 0 : index
    %c0_154 = arith.constant 0 : index
    %195 = vector.load %arg4[%c3_152, %c0_153, %c0_154] : memref<9x8x16xf32, #tpu.memory_space<vmem>>, vector<1x8x16xf32>
    %196 = vector.shape_cast %195 : vector<1x8x16xf32> to vector<8x16xf32>
    %cst_155 = arith.constant dense<0.000000e+00> : vector<184x16xf32>
    %197 = tpu.matmul %194, %196, %cst_155 {dimension_numbers = #tpu.dot_dimension_numbers<[1], [0], [0], [1], [0, 0, 1, 1], [], []>} : vector<184x8xf32>, vector<8x16xf32>, vector<184x16xf32> -> vector<184x16xf32>
    %198 = arith.addf %193, %197 : vector<184x16xf32>
    %c11_156 = arith.constant 11 : index
    %c0_157 = arith.constant 0 : index
    %199 = vector.load %arg9[%c11_156, %c0_157] : memref<208x8xf32, #tpu.memory_space<vmem>>, vector<184x8xf32>
    %c4_158 = arith.constant 4 : index
    %c0_159 = arith.constant 0 : index
    %c0_160 = arith.constant 0 : index
    %200 = vector.load %arg4[%c4_158, %c0_159, %c0_160] : memref<9x8x16xf32, #tpu.memory_space<vmem>>, vector<1x8x16xf32>
    %201 = vector.shape_cast %200 : vector<1x8x16xf32> to vector<8x16xf32>
    %cst_161 = arith.constant dense<0.000000e+00> : vector<184x16xf32>
    %202 = tpu.matmul %199, %201, %cst_161 {dimension_numbers = #tpu.dot_dimension_numbers<[1], [0], [0], [1], [0, 0, 1, 1], [], []>} : vector<184x8xf32>, vector<8x16xf32>, vector<184x16xf32> -> vector<184x16xf32>
    %203 = arith.addf %198, %202 : vector<184x16xf32>
    %c12 = arith.constant 12 : index
    %c0_162 = arith.constant 0 : index
    %204 = vector.load %arg9[%c12, %c0_162] : memref<208x8xf32, #tpu.memory_space<vmem>>, vector<184x8xf32>
    %c5_163 = arith.constant 5 : index
    %c0_164 = arith.constant 0 : index
    %c0_165 = arith.constant 0 : index
    %205 = vector.load %arg4[%c5_163, %c0_164, %c0_165] : memref<9x8x16xf32, #tpu.memory_space<vmem>>, vector<1x8x16xf32>
    %206 = vector.shape_cast %205 : vector<1x8x16xf32> to vector<8x16xf32>
    %cst_166 = arith.constant dense<0.000000e+00> : vector<184x16xf32>
    %207 = tpu.matmul %204, %206, %cst_166 {dimension_numbers = #tpu.dot_dimension_numbers<[1], [0], [0], [1], [0, 0, 1, 1], [], []>} : vector<184x8xf32>, vector<8x16xf32>, vector<184x16xf32> -> vector<184x16xf32>
    %208 = arith.addf %203, %207 : vector<184x16xf32>
    %c20_167 = arith.constant 20 : index
    %c0_168 = arith.constant 0 : index
    %209 = vector.load %arg9[%c20_167, %c0_168] : memref<208x8xf32, #tpu.memory_space<vmem>>, vector<184x8xf32>
    %c6_169 = arith.constant 6 : index
    %c0_170 = arith.constant 0 : index
    %c0_171 = arith.constant 0 : index
    %210 = vector.load %arg4[%c6_169, %c0_170, %c0_171] : memref<9x8x16xf32, #tpu.memory_space<vmem>>, vector<1x8x16xf32>
    %211 = vector.shape_cast %210 : vector<1x8x16xf32> to vector<8x16xf32>
    %cst_172 = arith.constant dense<0.000000e+00> : vector<184x16xf32>
    %212 = tpu.matmul %209, %211, %cst_172 {dimension_numbers = #tpu.dot_dimension_numbers<[1], [0], [0], [1], [0, 0, 1, 1], [], []>} : vector<184x8xf32>, vector<8x16xf32>, vector<184x16xf32> -> vector<184x16xf32>
    %213 = arith.addf %208, %212 : vector<184x16xf32>
    %c21_173 = arith.constant 21 : index
    %c0_174 = arith.constant 0 : index
    %214 = vector.load %arg9[%c21_173, %c0_174] : memref<208x8xf32, #tpu.memory_space<vmem>>, vector<184x8xf32>
    %c7_175 = arith.constant 7 : index
    %c0_176 = arith.constant 0 : index
    %c0_177 = arith.constant 0 : index
    %215 = vector.load %arg4[%c7_175, %c0_176, %c0_177] : memref<9x8x16xf32, #tpu.memory_space<vmem>>, vector<1x8x16xf32>
    %216 = vector.shape_cast %215 : vector<1x8x16xf32> to vector<8x16xf32>
    %cst_178 = arith.constant dense<0.000000e+00> : vector<184x16xf32>
    %217 = tpu.matmul %214, %216, %cst_178 {dimension_numbers = #tpu.dot_dimension_numbers<[1], [0], [0], [1], [0, 0, 1, 1], [], []>} : vector<184x8xf32>, vector<8x16xf32>, vector<184x16xf32> -> vector<184x16xf32>
    %218 = arith.addf %213, %217 : vector<184x16xf32>
    %c22 = arith.constant 22 : index
    %c0_179 = arith.constant 0 : index
    %219 = vector.load %arg9[%c22, %c0_179] : memref<208x8xf32, #tpu.memory_space<vmem>>, vector<184x8xf32>
    %c8_180 = arith.constant 8 : index
    %c0_181 = arith.constant 0 : index
    %c0_182 = arith.constant 0 : index
    %220 = vector.load %arg4[%c8_180, %c0_181, %c0_182] : memref<9x8x16xf32, #tpu.memory_space<vmem>>, vector<1x8x16xf32>
    %221 = vector.shape_cast %220 : vector<1x8x16xf32> to vector<8x16xf32>
    %cst_183 = arith.constant dense<0.000000e+00> : vector<184x16xf32>
    %222 = tpu.matmul %219, %221, %cst_183 {dimension_numbers = #tpu.dot_dimension_numbers<[1], [0], [0], [1], [0, 0, 1, 1], [], []>} : vector<184x8xf32>, vector<8x16xf32>, vector<184x16xf32> -> vector<184x16xf32>
    %223 = arith.addf %218, %222 : vector<184x16xf32>
    %c0_184 = arith.constant 0 : index
    %c0_185 = arith.constant 0 : index
    %224 = vector.load %arg5[%c0_184, %c0_185] : memref<1x16xf32, #tpu.memory_space<vmem>>, vector<1x16xf32>
    %225 = vector.broadcast %224 : vector<1x16xf32> to vector<184x16xf32>
    %226 = arith.addf %223, %225 : vector<184x16xf32>
    %cst_186 = arith.constant 0.000000e+00 : f32
    %227 = vector.broadcast %cst_186 : f32 to vector<184x16xf32>
    %228 = arith.maximumf %226, %227 : vector<184x16xf32>
    %c0_187 = arith.constant 0 : index
    %c0_188 = arith.constant 0 : index
    %229 = vector.load %arg8[%c0_187, %c0_188] : memref<184x16xf32, #tpu.memory_space<vmem>>, vector<184x16xf32>
    tpu.vector_store %arg8[%c0_187, %c0_188], %228 {strides = array<i32>} : memref<184x16xf32, #tpu.memory_space<vmem>>, vector<184x16xf32>,
    %c0_189 = arith.constant 0 : index
    %c0_190 = arith.constant 0 : index
    %230 = tpu.strided_load %arg8[%c0_189, %c0_190] {strides = array<i32: 2, 1>} : memref<184x16xf32, #tpu.memory_space<vmem>>, vector<4x16xf32>
    %c1_191 = arith.constant 1 : index
    %c0_192 = arith.constant 0 : index
    %231 = tpu.strided_load %arg8[%c1_191, %c0_192] {strides = array<i32: 2, 1>} : memref<184x16xf32, #tpu.memory_space<vmem>>, vector<4x16xf32>
    %c10_193 = arith.constant 10 : index
    %c0_194 = arith.constant 0 : index
    %232 = tpu.strided_load %arg8[%c10_193, %c0_194] {strides = array<i32: 2, 1>} : memref<184x16xf32, #tpu.memory_space<vmem>>, vector<4x16xf32>
    %c11_195 = arith.constant 11 : index
    %c0_196 = arith.constant 0 : index
    %233 = tpu.strided_load %arg8[%c11_195, %c0_196] {strides = array<i32: 2, 1>} : memref<184x16xf32, #tpu.memory_space<vmem>>, vector<4x16xf32>
    %234 = arith.maximumf %230, %231 : vector<4x16xf32>
    %235 = arith.maximumf %232, %233 : vector<4x16xf32>
    %236 = arith.maximumf %234, %235 : vector<4x16xf32>
    %c0_197 = arith.constant 0 : index
    %c0_198 = arith.constant 0 : index
    %237 = vector.load %arg6[%c0_197, %c0_198] : memref<32x16xf32, #tpu.memory_space<vmem>>, vector<4x16xf32>
    tpu.vector_store %arg6[%c0_197, %c0_198], %236 {strides = array<i32>} : memref<32x16xf32, #tpu.memory_space<vmem>>, vector<4x16xf32>,
    %c20_199 = arith.constant 20 : index
    %c0_200 = arith.constant 0 : index
    %238 = tpu.strided_load %arg8[%c20_199, %c0_200] {strides = array<i32: 2, 1>} : memref<184x16xf32, #tpu.memory_space<vmem>>, vector<4x16xf32>
    %c21_201 = arith.constant 21 : index
    %c0_202 = arith.constant 0 : index
    %239 = tpu.strided_load %arg8[%c21_201, %c0_202] {strides = array<i32: 2, 1>} : memref<184x16xf32, #tpu.memory_space<vmem>>, vector<4x16xf32>
    %c30 = arith.constant 30 : index
    %c0_203 = arith.constant 0 : index
    %240 = tpu.strided_load %arg8[%c30, %c0_203] {strides = array<i32: 2, 1>} : memref<184x16xf32, #tpu.memory_space<vmem>>, vector<4x16xf32>
    %c31_204 = arith.constant 31 : index
    %c0_205 = arith.constant 0 : index
    %241 = tpu.strided_load %arg8[%c31_204, %c0_205] {strides = array<i32: 2, 1>} : memref<184x16xf32, #tpu.memory_space<vmem>>, vector<4x16xf32>
    %242 = arith.maximumf %238, %239 : vector<4x16xf32>
    %243 = arith.maximumf %240, %241 : vector<4x16xf32>
    %244 = arith.maximumf %242, %243 : vector<4x16xf32>
    %c4_206 = arith.constant 4 : index
    %c0_207 = arith.constant 0 : index
    %245 = vector.load %arg6[%c4_206, %c0_207] : memref<32x16xf32, #tpu.memory_space<vmem>>, vector<4x16xf32>
    tpu.vector_store %arg6[%c4_206, %c0_207], %244 {strides = array<i32>} : memref<32x16xf32, #tpu.memory_space<vmem>>, vector<4x16xf32>,
    %c40 = arith.constant 40 : index
    %c0_208 = arith.constant 0 : index
    %246 = tpu.strided_load %arg8[%c40, %c0_208] {strides = array<i32: 2, 1>} : memref<184x16xf32, #tpu.memory_space<vmem>>, vector<4x16xf32>
    %c41_209 = arith.constant 41 : index
    %c0_210 = arith.constant 0 : index
    %247 = tpu.strided_load %arg8[%c41_209, %c0_210] {strides = array<i32: 2, 1>} : memref<184x16xf32, #tpu.memory_space<vmem>>, vector<4x16xf32>
    %c50 = arith.constant 50 : index
    %c0_211 = arith.constant 0 : index
    %248 = tpu.strided_load %arg8[%c50, %c0_211] {strides = array<i32: 2, 1>} : memref<184x16xf32, #tpu.memory_space<vmem>>, vector<4x16xf32>
    %c51_212 = arith.constant 51 : index
    %c0_213 = arith.constant 0 : index
    %249 = tpu.strided_load %arg8[%c51_212, %c0_213] {strides = array<i32: 2, 1>} : memref<184x16xf32, #tpu.memory_space<vmem>>, vector<4x16xf32>
    %250 = arith.maximumf %246, %247 : vector<4x16xf32>
    %251 = arith.maximumf %248, %249 : vector<4x16xf32>
    %252 = arith.maximumf %250, %251 : vector<4x16xf32>
    %c8_214 = arith.constant 8 : index
    %c0_215 = arith.constant 0 : index
    %253 = vector.load %arg6[%c8_214, %c0_215] : memref<32x16xf32, #tpu.memory_space<vmem>>, vector<4x16xf32>
    tpu.vector_store %arg6[%c8_214, %c0_215], %252 {strides = array<i32>} : memref<32x16xf32, #tpu.memory_space<vmem>>, vector<4x16xf32>,
    %c60 = arith.constant 60 : index
    %c0_216 = arith.constant 0 : index
    %254 = tpu.strided_load %arg8[%c60, %c0_216] {strides = array<i32: 2, 1>} : memref<184x16xf32, #tpu.memory_space<vmem>>, vector<4x16xf32>
    %c61_217 = arith.constant 61 : index
    %c0_218 = arith.constant 0 : index
    %255 = tpu.strided_load %arg8[%c61_217, %c0_218] {strides = array<i32: 2, 1>} : memref<184x16xf32, #tpu.memory_space<vmem>>, vector<4x16xf32>
    %c70 = arith.constant 70 : index
    %c0_219 = arith.constant 0 : index
    %256 = tpu.strided_load %arg8[%c70, %c0_219] {strides = array<i32: 2, 1>} : memref<184x16xf32, #tpu.memory_space<vmem>>, vector<4x16xf32>
    %c71_220 = arith.constant 71 : index
    %c0_221 = arith.constant 0 : index
    %257 = tpu.strided_load %arg8[%c71_220, %c0_221] {strides = array<i32: 2, 1>} : memref<184x16xf32, #tpu.memory_space<vmem>>, vector<4x16xf32>
    %258 = arith.maximumf %254, %255 : vector<4x16xf32>
    %259 = arith.maximumf %256, %257 : vector<4x16xf32>
    %260 = arith.maximumf %258, %259 : vector<4x16xf32>
    %c12_222 = arith.constant 12 : index
    %c0_223 = arith.constant 0 : index
    %261 = vector.load %arg6[%c12_222, %c0_223] : memref<32x16xf32, #tpu.memory_space<vmem>>, vector<4x16xf32>
    tpu.vector_store %arg6[%c12_222, %c0_223], %260 {strides = array<i32>} : memref<32x16xf32, #tpu.memory_space<vmem>>, vector<4x16xf32>,
    %c104 = arith.constant 104 : index
    %c0_224 = arith.constant 0 : index
    %262 = tpu.strided_load %arg8[%c104, %c0_224] {strides = array<i32: 2, 1>} : memref<184x16xf32, #tpu.memory_space<vmem>>, vector<4x16xf32>
    %c105 = arith.constant 105 : index
    %c0_225 = arith.constant 0 : index
    %263 = tpu.strided_load %arg8[%c105, %c0_225] {strides = array<i32: 2, 1>} : memref<184x16xf32, #tpu.memory_space<vmem>>, vector<4x16xf32>
    %c114 = arith.constant 114 : index
    %c0_226 = arith.constant 0 : index
    %264 = tpu.strided_load %arg8[%c114, %c0_226] {strides = array<i32: 2, 1>} : memref<184x16xf32, #tpu.memory_space<vmem>>, vector<4x16xf32>
    %c115_227 = arith.constant 115 : index
    %c0_228 = arith.constant 0 : index
    %265 = tpu.strided_load %arg8[%c115_227, %c0_228] {strides = array<i32: 2, 1>} : memref<184x16xf32, #tpu.memory_space<vmem>>, vector<4x16xf32>
    %266 = arith.maximumf %262, %263 : vector<4x16xf32>
    %267 = arith.maximumf %264, %265 : vector<4x16xf32>
    %268 = arith.maximumf %266, %267 : vector<4x16xf32>
    %c16 = arith.constant 16 : index
    %c0_229 = arith.constant 0 : index
    %269 = vector.load %arg6[%c16, %c0_229] : memref<32x16xf32, #tpu.memory_space<vmem>>, vector<4x16xf32>
    tpu.vector_store %arg6[%c16, %c0_229], %268 {strides = array<i32>} : memref<32x16xf32, #tpu.memory_space<vmem>>, vector<4x16xf32>,
    %c124 = arith.constant 124 : index
    %c0_230 = arith.constant 0 : index
    %270 = tpu.strided_load %arg8[%c124, %c0_230] {strides = array<i32: 2, 1>} : memref<184x16xf32, #tpu.memory_space<vmem>>, vector<4x16xf32>
    %c125_231 = arith.constant 125 : index
    %c0_232 = arith.constant 0 : index
    %271 = tpu.strided_load %arg8[%c125_231, %c0_232] {strides = array<i32: 2, 1>} : memref<184x16xf32, #tpu.memory_space<vmem>>, vector<4x16xf32>
    %c134 = arith.constant 134 : index
    %c0_233 = arith.constant 0 : index
    %272 = tpu.strided_load %arg8[%c134, %c0_233] {strides = array<i32: 2, 1>} : memref<184x16xf32, #tpu.memory_space<vmem>>, vector<4x16xf32>
    %c135_234 = arith.constant 135 : index
    %c0_235 = arith.constant 0 : index
    %273 = tpu.strided_load %arg8[%c135_234, %c0_235] {strides = array<i32: 2, 1>} : memref<184x16xf32, #tpu.memory_space<vmem>>, vector<4x16xf32>
    %274 = arith.maximumf %270, %271 : vector<4x16xf32>
    %275 = arith.maximumf %272, %273 : vector<4x16xf32>
    %276 = arith.maximumf %274, %275 : vector<4x16xf32>
    %c20_236 = arith.constant 20 : index
    %c0_237 = arith.constant 0 : index
    %277 = vector.load %arg6[%c20_236, %c0_237] : memref<32x16xf32, #tpu.memory_space<vmem>>, vector<4x16xf32>
    tpu.vector_store %arg6[%c20_236, %c0_237], %276 {strides = array<i32>} : memref<32x16xf32, #tpu.memory_space<vmem>>, vector<4x16xf32>,
    %c144_238 = arith.constant 144 : index
    %c0_239 = arith.constant 0 : index
    %278 = tpu.strided_load %arg8[%c144_238, %c0_239] {strides = array<i32: 2, 1>} : memref<184x16xf32, #tpu.memory_space<vmem>>, vector<4x16xf32>
    %c145_240 = arith.constant 145 : index
    %c0_241 = arith.constant 0 : index
    %279 = tpu.strided_load %arg8[%c145_240, %c0_241] {strides = array<i32: 2, 1>} : memref<184x16xf32, #tpu.memory_space<vmem>>, vector<4x16xf32>
    %c154 = arith.constant 154 : index
    %c0_242 = arith.constant 0 : index
    %280 = tpu.strided_load %arg8[%c154, %c0_242] {strides = array<i32: 2, 1>} : memref<184x16xf32, #tpu.memory_space<vmem>>, vector<4x16xf32>
    %c155_243 = arith.constant 155 : index
    %c0_244 = arith.constant 0 : index
    %281 = tpu.strided_load %arg8[%c155_243, %c0_244] {strides = array<i32: 2, 1>} : memref<184x16xf32, #tpu.memory_space<vmem>>, vector<4x16xf32>
    %282 = arith.maximumf %278, %279 : vector<4x16xf32>
    %283 = arith.maximumf %280, %281 : vector<4x16xf32>
    %284 = arith.maximumf %282, %283 : vector<4x16xf32>
    %c24 = arith.constant 24 : index
    %c0_245 = arith.constant 0 : index
    %285 = vector.load %arg6[%c24, %c0_245] : memref<32x16xf32, #tpu.memory_space<vmem>>, vector<4x16xf32>
    tpu.vector_store %arg6[%c24, %c0_245], %284 {strides = array<i32>} : memref<32x16xf32, #tpu.memory_space<vmem>>, vector<4x16xf32>,
    %c164 = arith.constant 164 : index
    %c0_246 = arith.constant 0 : index
    %286 = tpu.strided_load %arg8[%c164, %c0_246] {strides = array<i32: 2, 1>} : memref<184x16xf32, #tpu.memory_space<vmem>>, vector<4x16xf32>
    %c165_247 = arith.constant 165 : index
    %c0_248 = arith.constant 0 : index
    %287 = tpu.strided_load %arg8[%c165_247, %c0_248] {strides = array<i32: 2, 1>} : memref<184x16xf32, #tpu.memory_space<vmem>>, vector<4x16xf32>
    %c174 = arith.constant 174 : index
    %c0_249 = arith.constant 0 : index
    %288 = tpu.strided_load %arg8[%c174, %c0_249] {strides = array<i32: 2, 1>} : memref<184x16xf32, #tpu.memory_space<vmem>>, vector<4x16xf32>
    %c175_250 = arith.constant 175 : index
    %c0_251 = arith.constant 0 : index
    %289 = tpu.strided_load %arg8[%c175_250, %c0_251] {strides = array<i32: 2, 1>} : memref<184x16xf32, #tpu.memory_space<vmem>>, vector<4x16xf32>
    %290 = arith.maximumf %286, %287 : vector<4x16xf32>
    %291 = arith.maximumf %288, %289 : vector<4x16xf32>
    %292 = arith.maximumf %290, %291 : vector<4x16xf32>
    %c28 = arith.constant 28 : index
    %c0_252 = arith.constant 0 : index
    %293 = vector.load %arg6[%c28, %c0_252] : memref<32x16xf32, #tpu.memory_space<vmem>>, vector<4x16xf32>
    tpu.vector_store %arg6[%c28, %c0_252], %292 {strides = array<i32>} : memref<32x16xf32, #tpu.memory_space<vmem>>, vector<4x16xf32>,
    return
  }
  func.func @transform_0(%arg0: i32) -> (i32, i32) {
    %c0_i32 = arith.constant 0 : i32
    %c0_i32_0 = arith.constant 0 : i32
    return %arg0, %c0_i32 : i32, i32
  }
  func.func @transform_1(%arg0: i32) -> (i32, i32, i32) {
    %c0_i32 = arith.constant 0 : i32
    %c0_i32_0 = arith.constant 0 : i32
    %c0_i32_1 = arith.constant 0 : i32
    %c0_i32_2 = arith.constant 0 : i32
    return %c0_i32, %c0_i32_0, %c0_i32_1 : i32, i32, i32
  }
  func.func @transform_2(%arg0: i32) -> (i32, i32) {
    %c0_i32 = arith.constant 0 : i32
    %c0_i32_0 = arith.constant 0 : i32
    %c0_i32_1 = arith.constant 0 : i32
    return %c0_i32, %c0_i32_0 : i32, i32
  }
  func.func @transform_3(%arg0: i32) -> (i32, i32, i32) {
    %c0_i32 = arith.constant 0 : i32
    %c0_i32_0 = arith.constant 0 : i32
    %c0_i32_1 = arith.constant 0 : i32
    %c0_i32_2 = arith.constant 0 : i32
    return %c0_i32, %c0_i32_0, %c0_i32_1 : i32, i32, i32
  }
  func.func @transform_4(%arg0: i32) -> (i32, i32) {
    %c0_i32 = arith.constant 0 : i32
    %c0_i32_0 = arith.constant 0 : i32
    %c0_i32_1 = arith.constant 0 : i32
    return %c0_i32, %c0_i32_0 : i32, i32
  }
  func.func @transform_5(%arg0: i32) -> (i32, i32) {
    %c0_i32 = arith.constant 0 : i32
    %c0_i32_0 = arith.constant 0 : i32
    return %arg0, %c0_i32 : i32, i32
  }
}

</mosaic_0001>

<llo_original>
// kernel: tpu_custom_call.1
$region0: #{tpu_custom_call.1}
  #allocation0 [shape = 'u32[]', space=smem, size = 0x4, offset = 0x4, fixed_abs, tag = 'smem constant byte address 0x4 - core index']
  #allocation1 [shape = 'u32[144,128]{1,0:T(1,128)}', space=vmem, size = 0x12000, scoped, tag = 'internal scratch']
  #allocation2 [shape = 'f32[616,8]{1,0:T(8,128)}', space=vmem, size = 0x4d000, scoped, tag = 'scratch operand']
  #allocation3 [shape = 'f32[184,16]{1,0:T(8,128)}', space=vmem, size = 0x17000, scoped, tag = 'scratch operand']
  #allocation4 [shape = 'f32[208,8]{1,0:T(8,128)}', space=vmem, size = 0x1a000, scoped, tag = 'scratch operand']
  %s0 = inlined_call_operand.vmem [shape: f32[656,4], index: 0, kind: input, shape index: {}]
  %s1 = inlined_call_operand.vmem [shape: f32[9,4,8], index: 1, kind: input, shape index: {}]
  %s2 = inlined_call_operand.vmem [shape: f32[1,8], index: 2, kind: input, shape index: {}]
  %s3 = inlined_call_operand.vmem [shape: f32[9,8,16], index: 3, kind: input, shape index: {}]
  %s4 = inlined_call_operand.vmem [shape: f32[1,16], index: 4, kind: input, shape index: {}]
  %s5 = inlined_call_operand.vmem [shape: f32[32,16], index: 5, kind: output, shape index: {}]
  %s6 = sld [smem:[#allocation0]]
  $region30: #{tpu_custom_call.1} parent=0
    _
  %s8 = ssub.s32 1, %s6
  %s9 = scalar_select 0, %s8, %s6
  // Predicated region
  $region2: #{tpu_custom_call.1} parent=0 // pred_check
    _
  $region3: #{tpu_custom_call.1} parent=0 // pred_check_branch
    %11 = sbr.rel (0) target = $region5
  $region4: #{tpu_custom_call.1} parent=0 // pred_region
    _
  $region5: #{tpu_custom_call.1} parent=0 // pred_fallthru
    _
  // Predicated region
  $region6: #{tpu_custom_call.1} parent=0 // pred_check
    _
  $region7: #{tpu_custom_call.1} parent=0 // pred_check_branch
    %13 = sbr.rel (0) target = $region9
  $region8: #{tpu_custom_call.1} parent=0 // pred_region
    _
  $region9: #{tpu_custom_call.1} parent=0 // pred_fallthru
    _
  // Predicated region
  $region10: #{tpu_custom_call.1} parent=0 // pred_check
    _
  $region11: #{tpu_custom_call.1} parent=0 // pred_check_branch
    %15 = sbr.rel (0) target = $region13
  $region12: #{tpu_custom_call.1} parent=0 // pred_region
    _
  $region13: #{tpu_custom_call.1} parent=0 // pred_fallthru
    _
  // Predicated region
  $region14: #{tpu_custom_call.1} parent=0 // pred_check
    _
  $region15: #{tpu_custom_call.1} parent=0 // pred_check_branch
    %17 = sbr.rel (0) target = $region17
  $region16: #{tpu_custom_call.1} parent=0 // pred_region
    _
  $region17: #{tpu_custom_call.1} parent=0 // pred_fallthru
    _
  // Predicated region
  $region18: #{tpu_custom_call.1} parent=0 // pred_check
    _
  $region19: #{tpu_custom_call.1} parent=0 // pred_check_branch
    %19 = sbr.rel (0) target = $region21
  $region20: #{tpu_custom_call.1} parent=0 // pred_region
    _
  $region21: #{tpu_custom_call.1} parent=0 // pred_fallthru
    _
  %v20 = vld [vmem:[%s0] sm:$0xff]
  %v21 = vld [vmem:[%s0 + $0x8] sm:$0xff]
  %v22 = vld [vmem:[%s0 + $0x10] sm:$0xff]
  %v23 = vld [vmem:[%s0 + $0x18] sm:$0xff]
  %v24 = vld [vmem:[%s0 + $0x20] sm:$0xff]
  %v25 = vld [vmem:[%s0 + $0x28] sm:$0xff]
  %v26 = vld [vmem:[%s0 + $0x30] sm:$0xff]
  %v27 = vld [vmem:[%s0 + $0x38] sm:$0xff]
  %v28 = vld [vmem:[%s0 + $0x40] sm:$0xff]
  %v29 = vld [vmem:[%s0 + $0x48] sm:$0xff]
  %v30 = vld [vmem:[%s0 + $0x50] sm:$0xff]
  %v31 = vld [vmem:[%s0 + $0x58] sm:$0xff]
  %v32 = vld [vmem:[%s0 + $0x60] sm:$0xff]
  %v33 = vld [vmem:[%s0 + $0x68] sm:$0xff]
  %v34 = vld [vmem:[%s0 + $0x70] sm:$0xff]
  %v35 = vld [vmem:[%s0 + $0x78] sm:$0xff]
  %v36 = vld [vmem:[%s0 + $0x80] sm:$0xff]
  %v37 = vld [vmem:[%s0 + $0x88] sm:$0xff]
  %v38 = vld [vmem:[%s0 + $0x90] sm:$0xff]
  %v39 = vld [vmem:[%s0 + $0x98] sm:$0xff]
  %v40 = vld [vmem:[%s0 + $0xa0] sm:$0xff]
  %v41 = vld [vmem:[%s0 + $0xa8] sm:$0xff]
  %v42 = vld [vmem:[%s0 + $0xb0] sm:$0xff]
  %v43 = vld [vmem:[%s0 + $0xb8] sm:$0xff]
  %v44 = vld [vmem:[%s0 + $0xc0] sm:$0xff]
  %v45 = vld [vmem:[%s0 + $0xc8] sm:$0xff]
  %v46 = vld [vmem:[%s0 + $0xd0] sm:$0xff]
  %v47 = vld [vmem:[%s0 + $0xd8] sm:$0xff]
  %v48 = vld [vmem:[%s0 + $0xe0] sm:$0xff]
  %v49 = vld [vmem:[%s0 + $0xe8] sm:$0xff]
  %v50 = vld [vmem:[%s0 + $0xf0] sm:$0xff]
  %v51 = vld [vmem:[%s0 + $0xf8] sm:$0xff]
  %v52 = vld [vmem:[%s0 + $0x100] sm:$0xff]
  %v53 = vld [vmem:[%s0 + $0x108] sm:$0xff]
  %v54 = vld [vmem:[%s0 + $0x110] sm:$0xff]
  %v55 = vld [vmem:[%s0 + $0x118] sm:$0xff]
  %v56 = vld [vmem:[%s0 + $0x120] sm:$0xff]
  %v57 = vld [vmem:[%s0 + $0x128] sm:$0xff]
  %v58 = vld [vmem:[%s0 + $0x130] sm:$0xff]
  %v59 = vld [vmem:[%s0 + $0x138] sm:$0xff]
  %v60 = vld [vmem:[%s0 + $0x140] sm:$0xff]
  %v61 = vld [vmem:[%s0 + $0x148] sm:$0xff]
  %v62 = vld [vmem:[%s0 + $0x150] sm:$0xff]
  %v63 = vld [vmem:[%s0 + $0x158] sm:$0xff]
  %v64 = vld [vmem:[%s0 + $0x160] sm:$0xff]
  %v65 = vld [vmem:[%s0 + $0x168] sm:$0xff]
  %v66 = vld [vmem:[%s0 + $0x170] sm:$0xff]
  %v67 = vld [vmem:[%s0 + $0x178] sm:$0xff]
  %v68 = vld [vmem:[%s0 + $0x180] sm:$0xff]
  %v69 = vld [vmem:[%s0 + $0x188] sm:$0xff]
  %v70 = vld [vmem:[%s0 + $0x190] sm:$0xff]
  %v71 = vld [vmem:[%s0 + $0x198] sm:$0xff]
  %v72 = vld [vmem:[%s0 + $0x1a0] sm:$0xff]
  %v73 = vld [vmem:[%s0 + $0x1a8] sm:$0xff]
  %v74 = vld [vmem:[%s0 + $0x1b0] sm:$0xff]
  %v75 = vld [vmem:[%s0 + $0x1b8] sm:$0xff]
  %v76 = vld [vmem:[%s0 + $0x1c0] sm:$0xff]
  %v77 = vld [vmem:[%s0 + $0x1c8] sm:$0xff]
  %v78 = vld [vmem:[%s0 + $0x1d0] sm:$0xff]
  %v79 = vld [vmem:[%s0 + $0x1d8] sm:$0xff]
  %v80 = vld [vmem:[%s0 + $0x1e0] sm:$0xff]
  %v81 = vld [vmem:[%s0 + $0x1e8] sm:$0xff]
  %v82 = vld [vmem:[%s0 + $0x1f0] sm:$0xff]
  %v83 = vld [vmem:[%s0 + $0x1f8] sm:$0xff]
  %v84 = vld [vmem:[%s0 + $0x200] sm:$0xff]
  %v85 = vld [vmem:[%s0 + $0x208] sm:$0xff]
  %v86 = vld [vmem:[%s0 + $0x210] sm:$0xff]
  %v87 = vld [vmem:[%s0 + $0x218] sm:$0xff]
  %v88 = vld [vmem:[%s0 + $0x220] sm:$0xff]
  %v89 = vld [vmem:[%s0 + $0x228] sm:$0xff]
  %v90 = vld [vmem:[%s0 + $0x230] sm:$0xff]
  %v91 = vld [vmem:[%s0 + $0x238] sm:$0xff]
  %v92 = vld [vmem:[%s0 + $0x240] sm:$0xff]
  %v93 = vld [vmem:[%s0 + $0x248] sm:$0xff]
  %v94 = vld [vmem:[%s0 + $0x250] sm:$0xff]
  %v95 = vld [vmem:[%s0 + $0x258] sm:$0xff]
  %v96 = vld [vmem:[%s0 + $0x260] sm:$0xff]
  %v97 = vld [vmem:[%s1] sm:$0xf]
  %v98 = vld [vmem:[%s0 + $0x1] sm:$0xff]
  %v99 = vld [vmem:[%s0 + $0x9] sm:$0xff]
  %v100 = vld [vmem:[%s0 + $0x11] sm:$0xff]
  %v101 = vld [vmem:[%s0 + $0x19] sm:$0xff]
  %v102 = vld [vmem:[%s0 + $0x21] sm:$0xff]
  %v103 = vld [vmem:[%s0 + $0x29] sm:$0xff]
  %v104 = vld [vmem:[%s0 + $0x31] sm:$0xff]
  %v105 = vld [vmem:[%s0 + $0x39] sm:$0xff]
  %v106 = vld [vmem:[%s0 + $0x41] sm:$0xff]
  %v107 = vld [vmem:[%s0 + $0x49] sm:$0xff]
  %v108 = vld [vmem:[%s0 + $0x51] sm:$0xff]
  %v109 = vld [vmem:[%s0 + $0x59] sm:$0xff]
  %v110 = vld [vmem:[%s0 + $0x61] sm:$0xff]
  %v111 = vld [vmem:[%s0 + $0x69] sm:$0xff]
  %v112 = vld [vmem:[%s0 + $0x71] sm:$0xff]
  %v113 = vld [vmem:[%s0 + $0x79] sm:$0xff]
  %v114 = vld [vmem:[%s0 + $0x81] sm:$0xff]
  %v115 = vld [vmem:[%s0 + $0x89] sm:$0xff]
  %v116 = vld [vmem:[%s0 + $0x91] sm:$0xff]
  %v117 = vld [vmem:[%s0 + $0x99] sm:$0xff]
  %v118 = vld [vmem:[%s0 + $0xa1] sm:$0xff]
  %v119 = vld [vmem:[%s0 + $0xa9] sm:$0xff]
  %v120 = vld [vmem:[%s0 + $0xb1] sm:$0xff]
  %v121 = vld [vmem:[%s0 + $0xb9] sm:$0xff]
  %v122 = vld [vmem:[%s0 + $0xc1] sm:$0xff]
  %v123 = vld [vmem:[%s0 + $0xc9] sm:$0xff]
  %v124 = vld [vmem:[%s0 + $0xd1] sm:$0xff]
  %v125 = vld [vmem:[%s0 + $0xd9] sm:$0xff]
  %v126 = vld [vmem:[%s0 + $0xe1] sm:$0xff]
  %v127 = vld [vmem:[%s0 + $0xe9] sm:$0xff]
  %v128 = vld [vmem:[%s0 + $0xf1] sm:$0xff]
  %v129 = vld [vmem:[%s0 + $0xf9] sm:$0xff]
  %v130 = vld [vmem:[%s0 + $0x101] sm:$0xff]
  %v131 = vld [vmem:[%s0 + $0x109] sm:$0xff]
  %v132 = vld [vmem:[%s0 + $0x111] sm:$0xff]
  %v133 = vld [vmem:[%s0 + $0x119] sm:$0xff]
  %v134 = vld [vmem:[%s0 + $0x121] sm:$0xff]
  %v135 = vld [vmem:[%s0 + $0x129] sm:$0xff]
  %v136 = vld [vmem:[%s0 + $0x131] sm:$0xff]
  %v137 = vld [vmem:[%s0 + $0x139] sm:$0xff]
  %v138 = vld [vmem:[%s0 + $0x141] sm:$0xff]
  %v139 = vld [vmem:[%s0 + $0x149] sm:$0xff]
  %v140 = vld [vmem:[%s0 + $0x151] sm:$0xff]
  %v141 = vld [vmem:[%s0 + $0x159] sm:$0xff]
  %v142 = vld [vmem:[%s0 + $0x161] sm:$0xff]
  %v143 = vld [vmem:[%s0 + $0x169] sm:$0xff]
  %v144 = vld [vmem:[%s0 + $0x171] sm:$0xff]
  %v145 = vld [vmem:[%s0 + $0x179] sm:$0xff]
  %v146 = vld [vmem:[%s0 + $0x181] sm:$0xff]
  %v147 = vld [vmem:[%s0 + $0x189] sm:$0xff]
  %v148 = vld [vmem:[%s0 + $0x191] sm:$0xff]
  %v149 = vld [vmem:[%s0 + $0x199] sm:$0xff]
  %v150 = vld [vmem:[%s0 + $0x1a1] sm:$0xff]
  %v151 = vld [vmem:[%s0 + $0x1a9] sm:$0xff]
  %v152 = vld [vmem:[%s0 + $0x1b1] sm:$0xff]
  %v153 = vld [vmem:[%s0 + $0x1b9] sm:$0xff]
  %v154 = vld [vmem:[%s0 + $0x1c1] sm:$0xff]
  %v155 = vld [vmem:[%s0 + $0x1c9] sm:$0xff]
  %v156 = vld [vmem:[%s0 + $0x1d1] sm:$0xff]
  %v157 = vld [vmem:[%s0 + $0x1d9] sm:$0xff]
  %v158 = vld [vmem:[%s0 + $0x1e1] sm:$0xff]
  %v159 = vld [vmem:[%s0 + $0x1e9] sm:$0xff]
  %v160 = vld [vmem:[%s0 + $0x1f1] sm:$0xff]
  %v161 = vld [vmem:[%s0 + $0x1f9] sm:$0xff]
  %v162 = vld [vmem:[%s0 + $0x201] sm:$0xff]
  %v163 = vld [vmem:[%s0 + $0x209] sm:$0xff]
  %v164 = vld [vmem:[%s0 + $0x211] sm:$0xff]
  %v165 = vld [vmem:[%s0 + $0x219] sm:$0xff]
  %v166 = vld [vmem:[%s0 + $0x221] sm:$0xff]
  %v167 = vld [vmem:[%s0 + $0x229] sm:$0xff]
  %v168 = vld [vmem:[%s0 + $0x231] sm:$0xff]
  %v169 = vld [vmem:[%s0 + $0x239] sm:$0xff]
  %v170 = vld [vmem:[%s0 + $0x241] sm:$0xff]
  %v171 = vld [vmem:[%s0 + $0x249] sm:$0xff]
  %v172 = vld [vmem:[%s0 + $0x251] sm:$0xff]
  %v173 = vld [vmem:[%s0 + $0x259] sm:$0xff]
  %v174 = vld [vmem:[%s0 + $0x261] sm:$0xff]
  %s175 = scalar_lea.vmem %s1, 4
  %v176 = vld [vmem:[%s175] sm:$0xf]
  %vm177 = vcmask 31744
  %v179 = vsel %vm177, %v98, 0
  %v182 = vsel %vm177, %v99, 0
  %v185 = vsel %vm177, %v100, 0
  %v188 = vsel %vm177, %v101, 0
  %v191 = vsel %vm177, %v102, 0
  %v194 = vsel %vm177, %v103, 0
  %v197 = vsel %vm177, %v104, 0
  %v200 = vsel %vm177, %v105, 0
  %v203 = vsel %vm177, %v106, 0
  %v206 = vsel %vm177, %v107, 0
  %v209 = vsel %vm177, %v108, 0
  %v212 = vsel %vm177, %v109, 0
  %v215 = vsel %vm177, %v110, 0
  %v218 = vsel %vm177, %v111, 0
  %v221 = vsel %vm177, %v112, 0
  %v224 = vsel %vm177, %v113, 0
  %v227 = vsel %vm177, %v114, 0
  %v230 = vsel %vm177, %v115, 0
  %v233 = vsel %vm177, %v116, 0
  %v236 = vsel %vm177, %v117, 0
  %v239 = vsel %vm177, %v118, 0
  %v242 = vsel %vm177, %v119, 0
  %v245 = vsel %vm177, %v120, 0
  %v248 = vsel %vm177, %v121, 0
  %v251 = vsel %vm177, %v122, 0
  %v254 = vsel %vm177, %v123, 0
  %v257 = vsel %vm177, %v124, 0
  %v260 = vsel %vm177, %v125, 0
  %v263 = vsel %vm177, %v126, 0
  %v266 = vsel %vm177, %v127, 0
  %v269 = vsel %vm177, %v128, 0
  %v272 = vsel %vm177, %v129, 0
  %v275 = vsel %vm177, %v130, 0
  %v278 = vsel %vm177, %v131, 0
  %v281 = vsel %vm177, %v132, 0
  %v284 = vsel %vm177, %v133, 0
  %v287 = vsel %vm177, %v134, 0
  %v290 = vsel %vm177, %v135, 0
  %v293 = vsel %vm177, %v136, 0
  %v296 = vsel %vm177, %v137, 0
  %v299 = vsel %vm177, %v138, 0
  %v302 = vsel %vm177, %v139, 0
  %v305 = vsel %vm177, %v140, 0
  %v308 = vsel %vm177, %v141, 0
  %v311 = vsel %vm177, %v142, 0
  %v314 = vsel %vm177, %v143, 0
  %v317 = vsel %vm177, %v144, 0
  %v320 = vsel %vm177, %v145, 0
  %v323 = vsel %vm177, %v146, 0
  %v326 = vsel %vm177, %v147, 0
  %v329 = vsel %vm177, %v148, 0
  %v332 = vsel %vm177, %v149, 0
  %v335 = vsel %vm177, %v150, 0
  %v338 = vsel %vm177, %v151, 0
  %v341 = vsel %vm177, %v152, 0
  %v344 = vsel %vm177, %v153, 0
  %v347 = vsel %vm177, %v154, 0
  %v350 = vsel %vm177, %v155, 0
  %v353 = vsel %vm177, %v156, 0
  %v356 = vsel %vm177, %v157, 0
  %v359 = vsel %vm177, %v158, 0
  %v362 = vsel %vm177, %v159, 0
  %v365 = vsel %vm177, %v160, 0
  %v368 = vsel %vm177, %v161, 0
  %v371 = vsel %vm177, %v162, 0
  %v374 = vsel %vm177, %v163, 0
  %v377 = vsel %vm177, %v164, 0
  %v380 = vsel %vm177, %v165, 0
  %v383 = vsel %vm177, %v166, 0
  %v386 = vsel %vm177, %v167, 0
  %v389 = vsel %vm177, %v168, 0
  %v392 = vsel %vm177, %v169, 0
  %v395 = vsel %vm177, %v170, 0
  %v398 = vsel %vm177, %v171, 0
  %v401 = vsel %vm177, %v172, 0
  %v404 = vsel %vm177, %v173, 0
  %v407 = vsel %vm177, %v174, 0
  %vm409 = vcmask 1043456
  %v411 = vsel %vm409, %v176, 0
  %413 = vmatprep.subr.mxu0 0.0
  %414 = vmatpush1.msra.mxu0 %v411
  %415 = vmatprep.subr.mxu0 0.0
  %416 = vmatpush1.msra.mxu0 0.0
  %417 = vmatprep.subr.mxu0 0.0
  %418 = vmatpush1.msra.mxu0 0.0
  %419 = vmatprep.subr.mxu0 0.0
  %420 = vmatpush1.msra.mxu0 0.0
  %421 = vmatprep.subr.mxu0 0.0
  %422 = vmatpush1.msra.mxu0 0.0
  %423 = vmatprep.subr.mxu0 0.0
  %424 = vmatpush1.msra.mxu0 0.0
  %425 = vmatprep.subr.mxu0 0.0
  %426 = vmatpush1.msra.mxu0 0.0
  %427 = vmatprep.subr.mxu0 0.0
  %428 = vmatpush1.msra.mxu0 0.0
  %429 = vmatprep.subr.mxu0 0.0
  %430 = vmatpush1.msra.mxu0 0.0
  %431 = vmatprep.subr.mxu0 0.0
  %432 = vmatpush1.msra.mxu0 0.0
  %433 = vmatprep.subr.mxu0 0.0
  %434 = vmatpush1.msra.mxu0 0.0
  %435 = vmatprep.subr.mxu0 0.0
  %436 = vmatpush1.msra.mxu0 0.0
  %437 = vmatprep.subr.mxu0 0.0
  %438 = vmatpush1.msra.mxu0 0.0
  %439 = vmatprep.subr.mxu0 0.0
  %440 = vmatpush1.msra.mxu0 0.0
  %441 = vmatprep.subr.mxu0 0.0
  %442 = vmatpush1.msra.mxu0 0.0
  %443 = vmatprep.subr.mxu0 0.0
  %444 = vmatpush1.msra.mxu0 0.0
  %445 = vmatprep.subr.mxu0 0.0
  %446 = vmatpush1.msra.mxu0 0.0
  %447 = vmatprep.subr.mxu0 0.0
  %448 = vmatpush1.msra.mxu0 0.0
  %449 = vmatprep.subr.mxu0 0.0
  %450 = vmatpush1.msra.mxu0 0.0
  %451 = vmatprep.subr.mxu0 0.0
  %452 = vmatpush1.msra.mxu0 0.0
  %453 = vmatprep.subr.mxu0 0.0
  %454 = vmatpush1.msra.mxu0 0.0
  %455 = vmatprep.subr.mxu0 0.0
  %456 = vmatpush1.msra.mxu0 0.0
  %457 = vmatprep.subr.mxu0 0.0
  %458 = vmatpush1.msra.mxu0 0.0
  %459 = vmatprep.subr.mxu0 0.0
  %460 = vmatpush1.msra.mxu0 0.0
  %461 = vmatprep.subr.mxu0 0.0
  %462 = vmatpush1.msra.mxu0 0.0
  %463 = vmatprep.subr.mxu0 0.0
  %464 = vmatpush1.msra.mxu0 0.0
  %465 = vmatprep.subr.mxu0 0.0
  %466 = vmatpush1.msra.mxu0 0.0
  %467 = vmatprep.subr.mxu0 0.0
  %468 = vmatpush1.msra.mxu0 0.0
  %469 = vmatprep.subr.mxu0 0.0
  %470 = vmatpush1.msra.mxu0 0.0
  %471 = vmatprep.subr.mxu0 0.0
  %472 = vmatpush1.msra.mxu0 0.0
  %473 = vmatprep.subr.mxu0 0.0
  %474 = vmatpush1.msra.mxu0 0.0
  %475 = vmatprep.subr.mxu0 0.0
  %476 = vmatpush1.msra.mxu0 0.0
  %477 = vmatprep.mubr.f32.mxu0 0.0
  %478 = vmatmul.mubr.f32.gmra.mrb[0].mxu0 %v179
  %v479 = vpop.f32.mrb[0].mxu0
  %v480 = vadd.f32 0.0, %v479
  %v481 = vpop.f32.mrb[0].mxu0
  %482 = vmatprep.mubr.f32.mxu0 0.0
  %483 = vmatmul.mubr.f32.gmra.mrb[0].mxu0 %v182
  %v484 = vpop.f32.mrb[0].mxu0
  %v485 = vadd.f32 0.0, %v484
  %v486 = vpop.f32.mrb[0].mxu0
  %487 = vmatprep.mubr.f32.mxu0 0.0
  %488 = vmatmul.mubr.f32.gmra.mrb[0].mxu0 %v185
  %v489 = vpop.f32.mrb[0].mxu0
  %v490 = vadd.f32 0.0, %v489
  %v491 = vpop.f32.mrb[0].mxu0
  %492 = vmatprep.mubr.f32.mxu0 0.0
  %493 = vmatmul.mubr.f32.gmra.mrb[0].mxu0 %v188
  %v494 = vpop.f32.mrb[0].mxu0
  %v495 = vadd.f32 0.0, %v494
  %v496 = vpop.f32.mrb[0].mxu0
  %497 = vmatprep.mubr.f32.mxu0 0.0
  %498 = vmatmul.mubr.f32.gmra.mrb[0].mxu0 %v191
  %v499 = vpop.f32.mrb[0].mxu0
  %v500 = vadd.f32 0.0, %v499
  %v501 = vpop.f32.mrb[0].mxu0
  %502 = vmatprep.mubr.f32.mxu0 0.0
  %503 = vmatmul.mubr.f32.gmra.mrb[0].mxu0 %v194
  %v504 = vpop.f32.mrb[0].mxu0
  %v505 = vadd.f32 0.0, %v504
  %v506 = vpop.f32.mrb[0].mxu0
  %507 = vmatprep.mubr.f32.mxu0 0.0
  %508 = vmatmul.mubr.f32.gmra.mrb[0].mxu0 %v197
  %v509 = vpop.f32.mrb[0].mxu0
  %v510 = vadd.f32 0.0, %v509
  %v511 = vpop.f32.mrb[0].mxu0
  %512 = vmatprep.mubr.f32.mxu0 0.0
  %513 = vmatmul.mubr.f32.gmra.mrb[0].mxu0 %v200
  %v514 = vpop.f32.mrb[0].mxu0
  %v515 = vadd.f32 0.0, %v514
  %v516 = vpop.f32.mrb[0].mxu0
  %517 = vmatprep.mubr.f32.mxu0 0.0
  %518 = vmatmul.mubr.f32.gmra.mrb[0].mxu0 %v203
  %v519 = vpop.f32.mrb[0].mxu0
  %v520 = vadd.f32 0.0, %v519
  %v521 = vpop.f32.mrb[0].mxu0
  %522 = vmatprep.mubr.f32.mxu0 0.0
  %523 = vmatmul.mubr.f32.gmra.mrb[0].mxu0 %v206
  %v524 = vpop.f32.mrb[0].mxu0
  %v525 = vadd.f32 0.0, %v524
  %v526 = vpop.f32.mrb[0].mxu0
  %527 = vmatprep.mubr.f32.mxu0 0.0
  %528 = vmatmul.mubr.f32.gmra.mrb[0].mxu0 %v209
  %v529 = vpop.f32.mrb[0].mxu0
  %v530 = vadd.f32 0.0, %v529
  %v531 = vpop.f32.mrb[0].mxu0
  %532 = vmatprep.mubr.f32.mxu0 0.0
  %533 = vmatmul.mubr.f32.gmra.mrb[0].mxu0 %v212
  %v534 = vpop.f32.mrb[0].mxu0
  %v535 = vadd.f32 0.0, %v534
  %v536 = vpop.f32.mrb[0].mxu0
  %537 = vmatprep.mubr.f32.mxu0 0.0
  %538 = vmatmul.mubr.f32.gmra.mrb[0].mxu0 %v215
  %v539 = vpop.f32.mrb[0].mxu0
  %v540 = vadd.f32 0.0, %v539
  %v541 = vpop.f32.mrb[0].mxu0
  %542 = vmatprep.mubr.f32.mxu0 0.0
  %543 = vmatmul.mubr.f32.gmra.mrb[0].mxu0 %v218
  %v544 = vpop.f32.mrb[0].mxu0
  %v545 = vadd.f32 0.0, %v544
  %v546 = vpop.f32.mrb[0].mxu0
  %547 = vmatprep.mubr.f32.mxu0 0.0
  %548 = vmatmul.mubr.f32.gmra.mrb[0].mxu0 %v221
  %v549 = vpop.f32.mrb[0].mxu0
  %v550 = vadd.f32 0.0, %v549
  %v551 = vpop.f32.mrb[0].mxu0
  %552 = vmatprep.mubr.f32.mxu0 0.0
  %553 = vmatmul.mubr.f32.gmra.mrb[0].mxu0 %v224
  %v554 = vpop.f32.mrb[0].mxu0
  %v555 = vadd.f32 0.0, %v554
  %v556 = vpop.f32.mrb[0].mxu0
  %557 = vmatprep.mubr.f32.mxu0 0.0
  %558 = vmatmul.mubr.f32.gmra.mrb[0].mxu0 %v227
  %v559 = vpop.f32.mrb[0].mxu0
  %v560 = vadd.f32 0.0, %v559
  %v561 = vpop.f32.mrb[0].mxu0
  %562 = vmatprep.mubr.f32.mxu0 0.0
  %563 = vmatmul.mubr.f32.gmra.mrb[0].mxu0 %v230
  %v564 = vpop.f32.mrb[0].mxu0
  %v565 = vadd.f32 0.0, %v564
  %v566 = vpop.f32.mrb[0].mxu0
  %567 = vmatprep.mubr.f32.mxu0 0.0
  %568 = vmatmul.mubr.f32.gmra.mrb[0].mxu0 %v233
  %v569 = vpop.f32.mrb[0].mxu0
  %v570 = vadd.f32 0.0, %v569
  %v571 = vpop.f32.mrb[0].mxu0
  %572 = vmatprep.mubr.f32.mxu0 0.0
  %573 = vmatmul.mubr.f32.gmra.mrb[0].mxu0 %v236
  %v574 = vpop.f32.mrb[0].mxu0
  %v575 = vadd.f32 0.0, %v574
  %v576 = vpop.f32.mrb[0].mxu0
  %577 = vmatprep.mubr.f32.mxu0 0.0
  %578 = vmatmul.mubr.f32.gmra.mrb[0].mxu0 %v239
  %v579 = vpop.f32.mrb[0].mxu0
  %v580 = vadd.f32 0.0, %v579
  %v581 = vpop.f32.mrb[0].mxu0
  %582 = vmatprep.mubr.f32.mxu0 0.0
  %583 = vmatmul.mubr.f32.gmra.mrb[0].mxu0 %v242
  %v584 = vpop.f32.mrb[0].mxu0
  %v585 = vadd.f32 0.0, %v584
  %v586 = vpop.f32.mrb[0].mxu0
  %587 = vmatprep.mubr.f32.mxu0 0.0
  %588 = vmatmul.mubr.f32.gmra.mrb[0].mxu0 %v245
  %v589 = vpop.f32.mrb[0].mxu0
  %v590 = vadd.f32 0.0, %v589
  %v591 = vpop.f32.mrb[0].mxu0
  %592 = vmatprep.mubr.f32.mxu0 0.0
  %593 = vmatmul.mubr.f32.gmra.mrb[0].mxu0 %v248
  %v594 = vpop.f32.mrb[0].mxu0
  %v595 = vadd.f32 0.0, %v594
  %v596 = vpop.f32.mrb[0].mxu0
  %597 = vmatprep.mubr.f32.mxu0 0.0
  %598 = vmatmul.mubr.f32.gmra.mrb[0].mxu0 %v251
  %v599 = vpop.f32.mrb[0].mxu0
  %v600 = vadd.f32 0.0, %v599
  %v601 = vpop.f32.mrb[0].mxu0
  %602 = vmatprep.mubr.f32.mxu0 0.0
  %603 = vmatmul.mubr.f32.gmra.mrb[0].mxu0 %v254
  %v604 = vpop.f32.mrb[0].mxu0
  %v605 = vadd.f32 0.0, %v604
  %v606 = vpop.f32.mrb[0].mxu0
  %607 = vmatprep.mubr.f32.mxu0 0.0
  %608 = vmatmul.mubr.f32.gmra.mrb[0].mxu0 %v257
  %v609 = vpop.f32.mrb[0].mxu0
  %v610 = vadd.f32 0.0, %v609
  %v611 = vpop.f32.mrb[0].mxu0
  %612 = vmatprep.mubr.f32.mxu0 0.0
  %613 = vmatmul.mubr.f32.gmra.mrb[0].mxu0 %v260
  %v614 = vpop.f32.mrb[0].mxu0
  %v615 = vadd.f32 0.0, %v614
  %v616 = vpop.f32.mrb[0].mxu0
  %617 = vmatprep.mubr.f32.mxu0 0.0
  %618 = vmatmul.mubr.f32.gmra.mrb[0].mxu0 %v263
  %v619 = vpop.f32.mrb[0].mxu0
  %v620 = vadd.f32 0.0, %v619
  %v621 = vpop.f32.mrb[0].mxu0
  %622 = vmatprep.mubr.f32.mxu0 0.0
  %623 = vmatmul.mubr.f32.gmra.mrb[0].mxu0 %v266
  %v624 = vpop.f32.mrb[0].mxu0
  %v625 = vadd.f32 0.0, %v624
  %v626 = vpop.f32.mrb[0].mxu0
  %627 = vmatprep.mubr.f32.mxu0 0.0
  %628 = vmatmul.mubr.f32.gmra.mrb[0].mxu0 %v269
  %v629 = vpop.f32.mrb[0].mxu0
  %v630 = vadd.f32 0.0, %v629
  %v631 = vpop.f32.mrb[0].mxu0
  %632 = vmatprep.mubr.f32.mxu0 0.0
  %633 = vmatmul.mubr.f32.gmra.mrb[0].mxu0 %v272
  %v634 = vpop.f32.mrb[0].mxu0
  %v635 = vadd.f32 0.0, %v634
  %v636 = vpop.f32.mrb[0].mxu0
  %637 = vmatprep.mubr.f32.mxu0 0.0
  %638 = vmatmul.mubr.f32.gmra.mrb[0].mxu0 %v275
  %v639 = vpop.f32.mrb[0].mxu0
  %v640 = vadd.f32 0.0, %v639
  %v641 = vpop.f32.mrb[0].mxu0
  %642 = vmatprep.mubr.f32.mxu0 0.0
  %643 = vmatmul.mubr.f32.gmra.mrb[0].mxu0 %v278
  %v644 = vpop.f32.mrb[0].mxu0
  %v645 = vadd.f32 0.0, %v644
  %v646 = vpop.f32.mrb[0].mxu0
  %647 = vmatprep.mubr.f32.mxu0 0.0
  %648 = vmatmul.mubr.f32.gmra.mrb[0].mxu0 %v281
  %v649 = vpop.f32.mrb[0].mxu0
  %v650 = vadd.f32 0.0, %v649
  %v651 = vpop.f32.mrb[0].mxu0
  %652 = vmatprep.mubr.f32.mxu0 0.0
  %653 = vmatmul.mubr.f32.gmra.mrb[0].mxu0 %v284
  %v654 = vpop.f32.mrb[0].mxu0
  %v655 = vadd.f32 0.0, %v654
  %v656 = vpop.f32.mrb[0].mxu0
  %657 = vmatprep.mubr.f32.mxu0 0.0
  %658 = vmatmul.mubr.f32.gmra.mrb[0].mxu0 %v287
  %v659 = vpop.f32.mrb[0].mxu0
  %v660 = vadd.f32 0.0, %v659
  %v661 = vpop.f32.mrb[0].mxu0
  %662 = vmatprep.mubr.f32.mxu0 0.0
  %663 = vmatmul.mubr.f32.gmra.mrb[0].mxu0 %v290
  %v664 = vpop.f32.mrb[0].mxu0
  %v665 = vadd.f32 0.0, %v664
  %v666 = vpop.f32.mrb[0].mxu0
  %667 = vmatprep.mubr.f32.mxu0 0.0
  %668 = vmatmul.mubr.f32.gmra.mrb[0].mxu0 %v293
  %v669 = vpop.f32.mrb[0].mxu0
  %v670 = vadd.f32 0.0, %v669
  %v671 = vpop.f32.mrb[0].mxu0
  %672 = vmatprep.mubr.f32.mxu0 0.0
  %673 = vmatmul.mubr.f32.gmra.mrb[0].mxu0 %v296
  %v674 = vpop.f32.mrb[0].mxu0
  %v675 = vadd.f32 0.0, %v674
  %v676 = vpop.f32.mrb[0].mxu0
  %677 = vmatprep.mubr.f32.mxu0 0.0
  %678 = vmatmul.mubr.f32.gmra.mrb[0].mxu0 %v299
  %v679 = vpop.f32.mrb[0].mxu0
  %v680 = vadd.f32 0.0, %v679
  %v681 = vpop.f32.mrb[0].mxu0
  %682 = vmatprep.mubr.f32.mxu0 0.0
  %683 = vmatmul.mubr.f32.gmra.mrb[0].mxu0 %v302
  %v684 = vpop.f32.mrb[0].mxu0
  %v685 = vadd.f32 0.0, %v684
  %v686 = vpop.f32.mrb[0].mxu0
  %687 = vmatprep.mubr.f32.mxu0 0.0
  %688 = vmatmul.mubr.f32.gmra.mrb[0].mxu0 %v305
  %v689 = vpop.f32.mrb[0].mxu0
  %v690 = vadd.f32 0.0, %v689
  %v691 = vpop.f32.mrb[0].mxu0
  %692 = vmatprep.mubr.f32.mxu0 0.0
  %693 = vmatmul.mubr.f32.gmra.mrb[0].mxu0 %v308
  %v694 = vpop.f32.mrb[0].mxu0
  %v695 = vadd.f32 0.0, %v694
  %v696 = vpop.f32.mrb[0].mxu0
  %697 = vmatprep.mubr.f32.mxu0 0.0
  %698 = vmatmul.mubr.f32.gmra.mrb[0].mxu0 %v311
  %v699 = vpop.f32.mrb[0].mxu0
  %v700 = vadd.f32 0.0, %v699
  %v701 = vpop.f32.mrb[0].mxu0
  %702 = vmatprep.mubr.f32.mxu0 0.0
  %703 = vmatmul.mubr.f32.gmra.mrb[0].mxu0 %v314
  %v704 = vpop.f32.mrb[0].mxu0
  %v705 = vadd.f32 0.0, %v704
  %v706 = vpop.f32.mrb[0].mxu0
  %707 = vmatprep.mubr.f32.mxu0 0.0
  %708 = vmatmul.mubr.f32.gmra.mrb[0].mxu0 %v317
  %v709 = vpop.f32.mrb[0].mxu0
  %v710 = vadd.f32 0.0, %v709
  %v711 = vpop.f32.mrb[0].mxu0
  %712 = vmatprep.mubr.f32.mxu0 0.0
  %713 = vmatmul.mubr.f32.gmra.mrb[0].mxu0 %v320
  %v714 = vpop.f32.mrb[0].mxu0
  %v715 = vadd.f32 0.0, %v714
  %v716 = vpop.f32.mrb[0].mxu0
  %717 = vmatprep.mubr.f32.mxu0 0.0
  %718 = vmatmul.mubr.f32.gmra.mrb[0].mxu0 %v323
  %v719 = vpop.f32.mrb[0].mxu0
  %v720 = vadd.f32 0.0, %v719
  %v721 = vpop.f32.mrb[0].mxu0
  %722 = vmatprep.mubr.f32.mxu0 0.0
  %723 = vmatmul.mubr.f32.gmra.mrb[0].mxu0 %v326
  %v724 = vpop.f32.mrb[0].mxu0
  %v725 = vadd.f32 0.0, %v724
  %v726 = vpop.f32.mrb[0].mxu0
  %727 = vmatprep.mubr.f32.mxu0 0.0
  %728 = vmatmul.mubr.f32.gmra.mrb[0].mxu0 %v329
  %v729 = vpop.f32.mrb[0].mxu0
  %v730 = vadd.f32 0.0, %v729
  %v731 = vpop.f32.mrb[0].mxu0
  %732 = vmatprep.mubr.f32.mxu0 0.0
  %733 = vmatmul.mubr.f32.gmra.mrb[0].mxu0 %v332
  %v734 = vpop.f32.mrb[0].mxu0
  %v735 = vadd.f32 0.0, %v734
  %v736 = vpop.f32.mrb[0].mxu0
  %737 = vmatprep.mubr.f32.mxu0 0.0
  %738 = vmatmul.mubr.f32.gmra.mrb[0].mxu0 %v335
  %v739 = vpop.f32.mrb[0].mxu0
  %v740 = vadd.f32 0.0, %v739
  %v741 = vpop.f32.mrb[0].mxu0
  %742 = vmatprep.mubr.f32.mxu0 0.0
  %743 = vmatmul.mubr.f32.gmra.mrb[0].mxu0 %v338
  %v744 = vpop.f32.mrb[0].mxu0
  %v745 = vadd.f32 0.0, %v744
  %v746 = vpop.f32.mrb[0].mxu0
  %747 = vmatprep.mubr.f32.mxu0 0.0
  %748 = vmatmul.mubr.f32.gmra.mrb[0].mxu0 %v341
  %v749 = vpop.f32.mrb[0].mxu0
  %v750 = vadd.f32 0.0, %v749
  %v751 = vpop.f32.mrb[0].mxu0
  %752 = vmatprep.mubr.f32.mxu0 0.0
  %753 = vmatmul.mubr.f32.gmra.mrb[0].mxu0 %v344
  %v754 = vpop.f32.mrb[0].mxu0
  %v755 = vadd.f32 0.0, %v754
  %v756 = vpop.f32.mrb[0].mxu0
  %757 = vmatprep.mubr.f32.mxu0 0.0
  %758 = vmatmul.mubr.f32.gmra.mrb[0].mxu0 %v347
  %v759 = vpop.f32.mrb[0].mxu0
  %v760 = vadd.f32 0.0, %v759
  %v761 = vpop.f32.mrb[0].mxu0
  %762 = vmatprep.mubr.f32.mxu0 0.0
  %763 = vmatmul.mubr.f32.gmra.mrb[0].mxu0 %v350
  %v764 = vpop.f32.mrb[0].mxu0
  %v765 = vadd.f32 0.0, %v764
  %v766 = vpop.f32.mrb[0].mxu0
  %767 = vmatprep.mubr.f32.mxu0 0.0
  %768 = vmatmul.mubr.f32.gmra.mrb[0].mxu0 %v353
  %v769 = vpop.f32.mrb[0].mxu0
  %v770 = vadd.f32 0.0, %v769
  %v771 = vpop.f32.mrb[0].mxu0
  %772 = vmatprep.mubr.f32.mxu0 0.0
  %773 = vmatmul.mubr.f32.gmra.mrb[0].mxu0 %v356
  %v774 = vpop.f32.mrb[0].mxu0
  %v775 = vadd.f32 0.0, %v774
  %v776 = vpop.f32.mrb[0].mxu0
  %777 = vmatprep.mubr.f32.mxu0 0.0
  %778 = vmatmul.mubr.f32.gmra.mrb[0].mxu0 %v359
  %v779 = vpop.f32.mrb[0].mxu0
  %v780 = vadd.f32 0.0, %v779
  %v781 = vpop.f32.mrb[0].mxu0
  %782 = vmatprep.mubr.f32.mxu0 0.0
  %783 = vmatmul.mubr.f32.gmra.mrb[0].mxu0 %v362
  %v784 = vpop.f32.mrb[0].mxu0
  %v785 = vadd.f32 0.0, %v784
  %v786 = vpop.f32.mrb[0].mxu0
  %787 = vmatprep.mubr.f32.mxu0 0.0
  %788 = vmatmul.mubr.f32.gmra.mrb[0].mxu0 %v365
  %v789 = vpop.f32.mrb[0].mxu0
  %v790 = vadd.f32 0.0, %v789
  %v791 = vpop.f32.mrb[0].mxu0
  %792 = vmatprep.mubr.f32.mxu0 0.0
  %793 = vmatmul.mubr.f32.gmra.mrb[0].mxu0 %v368
  %v794 = vpop.f32.mrb[0].mxu0
  %v795 = vadd.f32 0.0, %v794
  %v796 = vpop.f32.mrb[0].mxu0
  %797 = vmatprep.mubr.f32.mxu0 0.0
  %798 = vmatmul.mubr.f32.gmra.mrb[0].mxu0 %v371
  %v799 = vpop.f32.mrb[0].mxu0
  %v800 = vadd.f32 0.0, %v799
  %v801 = vpop.f32.mrb[0].mxu0
  %802 = vmatprep.mubr.f32.mxu0 0.0
  %803 = vmatmul.mubr.f32.gmra.mrb[0].mxu0 %v374
  %v804 = vpop.f32.mrb[0].mxu0
  %v805 = vadd.f32 0.0, %v804
  %v806 = vpop.f32.mrb[0].mxu0
  %807 = vmatprep.mubr.f32.mxu0 0.0
  %808 = vmatmul.mubr.f32.gmra.mrb[0].mxu0 %v377
  %v809 = vpop.f32.mrb[0].mxu0
  %v810 = vadd.f32 0.0, %v809
  %v811 = vpop.f32.mrb[0].mxu0
  %812 = vmatprep.mubr.f32.mxu0 0.0
  %813 = vmatmul.mubr.f32.gmra.mrb[0].mxu0 %v380
  %v814 = vpop.f32.mrb[0].mxu0
  %v815 = vadd.f32 0.0, %v814
  %v816 = vpop.f32.mrb[0].mxu0
  %817 = vmatprep.mubr.f32.mxu0 0.0
  %818 = vmatmul.mubr.f32.gmra.mrb[0].mxu0 %v383
  %v819 = vpop.f32.mrb[0].mxu0
  %v820 = vadd.f32 0.0, %v819
  %v821 = vpop.f32.mrb[0].mxu0
  %822 = vmatprep.mubr.f32.mxu0 0.0
  %823 = vmatmul.mubr.f32.gmra.mrb[0].mxu0 %v386
  %v824 = vpop.f32.mrb[0].mxu0
  %v825 = vadd.f32 0.0, %v824
  %v826 = vpop.f32.mrb[0].mxu0
  %827 = vmatprep.mubr.f32.mxu0 0.0
  %828 = vmatmul.mubr.f32.gmra.mrb[0].mxu0 %v389
  %v829 = vpop.f32.mrb[0].mxu0
  %v830 = vadd.f32 0.0, %v829
  %v831 = vpop.f32.mrb[0].mxu0
  %832 = vmatprep.mubr.f32.mxu0 0.0
  %833 = vmatmul.mubr.f32.gmra.mrb[0].mxu0 %v392
  %v834 = vpop.f32.mrb[0].mxu0
  %v835 = vadd.f32 0.0, %v834
  %v836 = vpop.f32.mrb[0].mxu0
  %837 = vmatprep.mubr.f32.mxu0 0.0
  %838 = vmatmul.mubr.f32.gmra.mrb[0].mxu0 %v395
  %v839 = vpop.f32.mrb[0].mxu0
  %v840 = vadd.f32 0.0, %v839
  %v841 = vpop.f32.mrb[0].mxu0
  %842 = vmatprep.mubr.f32.mxu0 0.0
  %843 = vmatmul.mubr.f32.gmra.mrb[0].mxu0 %v398
  %v844 = vpop.f32.mrb[0].mxu0
  %v845 = vadd.f32 0.0, %v844
  %v846 = vpop.f32.mrb[0].mxu0
  %847 = vmatprep.mubr.f32.mxu0 0.0
  %848 = vmatmul.mubr.f32.gmra.mrb[0].mxu0 %v401
  %v849 = vpop.f32.mrb[0].mxu0
  %v850 = vadd.f32 0.0, %v849
  %v851 = vpop.f32.mrb[0].mxu0
  %852 = vmatprep.mubr.f32.mxu0 0.0
  %853 = vmatmul.mubr.f32.gmra.mrb[0].mxu0 %v404
  %v854 = vpop.f32.mrb[0].mxu0
  %v855 = vadd.f32 0.0, %v854
  %v856 = vpop.f32.mrb[0].mxu0
  %857 = vmatprep.mubr.f32.mxu0 0.0
  %858 = vmatmul.mubr.f32.gmra.mrb[0].mxu0 %v407
  %v859 = vpop.f32.mrb[0].mxu0
  %v860 = vadd.f32 0.0, %v859
  %v861 = vpop.f32.mrb[0].mxu0
  %862 = vdwg.mxu0
  %v864 = vsel %vm177, %v20, 0
  %v867 = vsel %vm177, %v21, 0
  %v870 = vsel %vm177, %v22, 0
  %v873 = vsel %vm177, %v23, 0
  %v876 = vsel %vm177, %v24, 0
  %v879 = vsel %vm177, %v25, 0
  %v882 = vsel %vm177, %v26, 0
  %v885 = vsel %vm177, %v27, 0
  %v888 = vsel %vm177, %v28, 0
  %v891 = vsel %vm177, %v29, 0
  %v894 = vsel %vm177, %v30, 0
  %v897 = vsel %vm177, %v31, 0
  %v900 = vsel %vm177, %v32, 0
  %v903 = vsel %vm177, %v33, 0
  %v906 = vsel %vm177, %v34, 0
  %v909 = vsel %vm177, %v35, 0
  %v912 = vsel %vm177, %v36, 0
  %v915 = vsel %vm177, %v37, 0
  %v918 = vsel %vm177, %v38, 0
  %v921 = vsel %vm177, %v39, 0
  %v924 = vsel %vm177, %v40, 0
  %v927 = vsel %vm177, %v41, 0
  %v930 = vsel %vm177, %v42, 0
  %v933 = vsel %vm177, %v43, 0
  %v936 = vsel %vm177, %v44, 0
  %v939 = vsel %vm177, %v45, 0
  %v942 = vsel %vm177, %v46, 0
  %v945 = vsel %vm177, %v47, 0
  %v948 = vsel %vm177, %v48, 0
  %v951 = vsel %vm177, %v49, 0
  %v954 = vsel %vm177, %v50, 0
  %v957 = vsel %vm177, %v51, 0
  %v960 = vsel %vm177, %v52, 0
  %v963 = vsel %vm177, %v53, 0
  %v966 = vsel %vm177, %v54, 0
  %v969 = vsel %vm177, %v55, 0
  %v972 = vsel %vm177, %v56, 0
  %v975 = vsel %vm177, %v57, 0
  %v978 = vsel %vm177, %v58, 0
  %v981 = vsel %vm177, %v59, 0
  %v984 = vsel %vm177, %v60, 0
  %v987 = vsel %vm177, %v61, 0
  %v990 = vsel %vm177, %v62, 0
  %v993 = vsel %vm177, %v63, 0
  %v996 = vsel %vm177, %v64, 0
  %v999 = vsel %vm177, %v65, 0
  %v1002 = vsel %vm177, %v66, 0
  %v1005 = vsel %vm177, %v67, 0
  %v1008 = vsel %vm177, %v68, 0
  %v1011 = vsel %vm177, %v69, 0
  %v1014 = vsel %vm177, %v70, 0
  %v1017 = vsel %vm177, %v71, 0
  %v1020 = vsel %vm177, %v72, 0
  %v1023 = vsel %vm177, %v73, 0
  %v1026 = vsel %vm177, %v74, 0
  %v1029 = vsel %vm177, %v75, 0
  %v1032 = vsel %vm177, %v76, 0
  %v1035 = vsel %vm177, %v77, 0
  %v1038 = vsel %vm177, %v78, 0
  %v1041 = vsel %vm177, %v79, 0
  %v1044 = vsel %vm177, %v80, 0
  %v1047 = vsel %vm177, %v81, 0
  %v1050 = vsel %vm177, %v82, 0
  %v1053 = vsel %vm177, %v83, 0
  %v1056 = vsel %vm177, %v84, 0
  %v1059 = vsel %vm177, %v85, 0
  %v1062 = vsel %vm177, %v86, 0
  %v1065 = vsel %vm177, %v87, 0
  %v1068 = vsel %vm177, %v88, 0
  %v1071 = vsel %vm177, %v89, 0
  %v1074 = vsel %vm177, %v90, 0
  %v1077 = vsel %vm177, %v91, 0
  %v1080 = vsel %vm177, %v92, 0
  %v1083 = vsel %vm177, %v93, 0
  %v1086 = vsel %vm177, %v94, 0
  %v1089 = vsel %vm177, %v95, 0
  %v1092 = vsel %vm177, %v96, 0
  %v1095 = vsel %vm409, %v97, 0
  %1097 = vmatprep.subr.mxu0 0.0
  %1098 = vmatpush1.msra.mxu0 %v1095
  %1099 = vmatprep.subr.mxu0 0.0
  %1100 = vmatpush1.msra.mxu0 0.0
  %1101 = vmatprep.subr.mxu0 0.0
  %1102 = vmatpush1.msra.mxu0 0.0
  %1103 = vmatprep.subr.mxu0 0.0
  %1104 = vmatpush1.msra.mxu0 0.0
  %1105 = vmatprep.subr.mxu0 0.0
  %1106 = vmatpush1.msra.mxu0 0.0
  %1107 = vmatprep.subr.mxu0 0.0
  %1108 = vmatpush1.msra.mxu0 0.0
  %1109 = vmatprep.subr.mxu0 0.0
  %1110 = vmatpush1.msra.mxu0 0.0
  %1111 = vmatprep.subr.mxu0 0.0
  %1112 = vmatpush1.msra.mxu0 0.0
  %1113 = vmatprep.subr.mxu0 0.0
  %1114 = vmatpush1.msra.mxu0 0.0
  %1115 = vmatprep.subr.mxu0 0.0
  %1116 = vmatpush1.msra.mxu0 0.0
  %1117 = vmatprep.subr.mxu0 0.0
  %1118 = vmatpush1.msra.mxu0 0.0
  %1119 = vmatprep.subr.mxu0 0.0
  %1120 = vmatpush1.msra.mxu0 0.0
  %1121 = vmatprep.subr.mxu0 0.0
  %1122 = vmatpush1.msra.mxu0 0.0
  %1123 = vmatprep.subr.mxu0 0.0
  %1124 = vmatpush1.msra.mxu0 0.0
  %1125 = vmatprep.subr.mxu0 0.0
  %1126 = vmatpush1.msra.mxu0 0.0
  %1127 = vmatprep.subr.mxu0 0.0
  %1128 = vmatpush1.msra.mxu0 0.0
  %1129 = vmatprep.subr.mxu0 0.0
  %1130 = vmatpush1.msra.mxu0 0.0
  %1131 = vmatprep.subr.mxu0 0.0
  %1132 = vmatpush1.msra.mxu0 0.0
  %1133 = vmatprep.subr.mxu0 0.0
  %1134 = vmatpush1.msra.mxu0 0.0
  %1135 = vmatprep.subr.mxu0 0.0
  %1136 = vmatpush1.msra.mxu0 0.0
  %1137 = vmatprep.subr.mxu0 0.0
  %1138 = vmatpush1.msra.mxu0 0.0
  %1139 = vmatprep.subr.mxu0 0.0
  %1140 = vmatpush1.msra.mxu0 0.0
  %1141 = vmatprep.subr.mxu0 0.0
  %1142 = vmatpush1.msra.mxu0 0.0
  %1143 = vmatprep.subr.mxu0 0.0
  %1144 = vmatpush1.msra.mxu0 0.0
  %1145 = vmatprep.subr.mxu0 0.0
  %1146 = vmatpush1.msra.mxu0 0.0
  %1147 = vmatprep.subr.mxu0 0.0
  %1148 = vmatpush1.msra.mxu0 0.0
  %1149 = vmatprep.subr.mxu0 0.0
  %1150 = vmatpush1.msra.mxu0 0.0
  %1151 = vmatprep.subr.mxu0 0.0
  %1152 = vmatpush1.msra.mxu0 0.0
  %1153 = vmatprep.subr.mxu0 0.0
  %1154 = vmatpush1.msra.mxu0 0.0
  %1155 = vmatprep.subr.mxu0 0.0
  %1156 = vmatpush1.msra.mxu0 0.0
  %1157 = vmatprep.subr.mxu0 0.0
  %1158 = vmatpush1.msra.mxu0 0.0
  %1159 = vmatprep.subr.mxu0 0.0
  %1160 = vmatpush1.msra.mxu0 0.0
  %1161 = vmatprep.mubr.f32.mxu0 0.0
  %1162 = vmatmul.mubr.f32.gmra.mrb[0].mxu0 %v864
  %v1163 = vpop.f32.mrb[0].mxu0
  %v1164 = vadd.f32 %v480, %v1163
  %v1165 = vpop.f32.mrb[0].mxu0
  %1166 = vmatprep.mubr.f32.mxu0 0.0
  %1167 = vmatmul.mubr.f32.gmra.mrb[0].mxu0 %v867
  %v1168 = vpop.f32.mrb[0].mxu0
  %v1169 = vadd.f32 %v485, %v1168
  %v1170 = vpop.f32.mrb[0].mxu0
  %1171 = vmatprep.mubr.f32.mxu0 0.0
  %1172 = vmatmul.mubr.f32.gmra.mrb[0].mxu0 %v870
  %v1173 = vpop.f32.mrb[0].mxu0
  %v1174 = vadd.f32 %v490, %v1173
  %v1175 = vpop.f32.mrb[0].mxu0
  %1176 = vmatprep.mubr.f32.mxu0 0.0
  %1177 = vmatmul.mubr.f32.gmra.mrb[0].mxu0 %v873
  %v1178 = vpop.f32.mrb[0].mxu0
  %v1179 = vadd.f32 %v495, %v1178
  %v1180 = vpop.f32.mrb[0].mxu0
  %1181 = vmatprep.mubr.f32.mxu0 0.0
  %1182 = vmatmul.mubr.f32.gmra.mrb[0].mxu0 %v876
  %v1183 = vpop.f32.mrb[0].mxu0
  %v1184 = vadd.f32 %v500, %v1183
  %v1185 = vpop.f32.mrb[0].mxu0
  %1186 = vmatprep.mubr.f32.mxu0 0.0
  %1187 = vmatmul.mubr.f32.gmra.mrb[0].mxu0 %v879
  %v1188 = vpop.f32.mrb[0].mxu0
  %v1189 = vadd.f32 %v505, %v1188
  %v1190 = vpop.f32.mrb[0].mxu0
  %1191 = vmatprep.mubr.f32.mxu0 0.0
  %1192 = vmatmul.mubr.f32.gmra.mrb[0].mxu0 %v882
  %v1193 = vpop.f32.mrb[0].mxu0
  %v1194 = vadd.f32 %v510, %v1193
  %v1195 = vpop.f32.mrb[0].mxu0
  %1196 = vmatprep.mubr.f32.mxu0 0.0
  %1197 = vmatmul.mubr.f32.gmra.mrb[0].mxu0 %v885
  %v1198 = vpop.f32.mrb[0].mxu0
  %v1199 = vadd.f32 %v515, %v1198
  %v1200 = vpop.f32.mrb[0].mxu0
  %1201 = vmatprep.mubr.f32.mxu0 0.0
  %1202 = vmatmul.mubr.f32.gmra.mrb[0].mxu0 %v888
  %v1203 = vpop.f32.mrb[0].mxu0
  %v1204 = vadd.f32 %v520, %v1203
  %v1205 = vpop.f32.mrb[0].mxu0
  %1206 = vmatprep.mubr.f32.mxu0 0.0
  %1207 = vmatmul.mubr.f32.gmra.mrb[0].mxu0 %v891
  %v1208 = vpop.f32.mrb[0].mxu0
  %v1209 = vadd.f32 %v525, %v1208
  %v1210 = vpop.f32.mrb[0].mxu0
  %1211 = vmatprep.mubr.f32.mxu0 0.0
  %1212 = vmatmul.mubr.f32.gmra.mrb[0].mxu0 %v894
  %v1213 = vpop.f32.mrb[0].mxu0
  %v1214 = vadd.f32 %v530, %v1213
  %v1215 = vpop.f32.mrb[0].mxu0
  %1216 = vmatprep.mubr.f32.mxu0 0.0
  %1217 = vmatmul.mubr.f32.gmra.mrb[0].mxu0 %v897
  %v1218 = vpop.f32.mrb[0].mxu0
  %v1219 = vadd.f32 %v535, %v1218
  %v1220 = vpop.f32.mrb[0].mxu0
  %1221 = vmatprep.mubr.f32.mxu0 0.0
  %1222 = vmatmul.mubr.f32.gmra.mrb[0].mxu0 %v900
  %v1223 = vpop.f32.mrb[0].mxu0
  %v1224 = vadd.f32 %v540, %v1223
  %v1225 = vpop.f32.mrb[0].mxu0
  %1226 = vmatprep.mubr.f32.mxu0 0.0
  %1227 = vmatmul.mubr.f32.gmra.mrb[0].mxu0 %v903
  %v1228 = vpop.f32.mrb[0].mxu0
  %v1229 = vadd.f32 %v545, %v1228
  %v1230 = vpop.f32.mrb[0].mxu0
  %1231 = vmatprep.mubr.f32.mxu0 0.0
  %1232 = vmatmul.mubr.f32.gmra.mrb[0].mxu0 %v906
  %v1233 = vpop.f32.mrb[0].mxu0
  %v1234 = vadd.f32 %v550, %v1233
  %v1235 = vpop.f32.mrb[0].mxu0
  %1236 = vmatprep.mubr.f32.mxu0 0.0
  %1237 = vmatmul.mubr.f32.gmra.mrb[0].mxu0 %v909
  %v1238 = vpop.f32.mrb[0].mxu0
  %v1239 = vadd.f32 %v555, %v1238
  %v1240 = vpop.f32.mrb[0].mxu0
  %1241 = vmatprep.mubr.f32.mxu0 0.0
  %1242 = vmatmul.mubr.f32.gmra.mrb[0].mxu0 %v912
  %v1243 = vpop.f32.mrb[0].mxu0
  %v1244 = vadd.f32 %v560, %v1243
  %v1245 = vpop.f32.mrb[0].mxu0
  %1246 = vmatprep.mubr.f32.mxu0 0.0
  %1247 = vmatmul.mubr.f32.gmra.mrb[0].mxu0 %v915
  %v1248 = vpop.f32.mrb[0].mxu0
  %v1249 = vadd.f32 %v565, %v1248
  %v1250 = vpop.f32.mrb[0].mxu0
  %1251 = vmatprep.mubr.f32.mxu0 0.0
  %1252 = vmatmul.mubr.f32.gmra.mrb[0].mxu0 %v918
  %v1253 = vpop.f32.mrb[0].mxu0
  %v1254 = vadd.f32 %v570, %v1253
  %v1255 = vpop.f32.mrb[0].mxu0
  %1256 = vmatprep.mubr.f32.mxu0 0.0
  %1257 = vmatmul.mubr.f32.gmra.mrb[0].mxu0 %v921
  %v1258 = vpop.f32.mrb[0].mxu0
  %v1259 = vadd.f32 %v575, %v1258
  %v1260 = vpop.f32.mrb[0].mxu0
  %1261 = vmatprep.mubr.f32.mxu0 0.0
  %1262 = vmatmul.mubr.f32.gmra.mrb[0].mxu0 %v924
  %v1263 = vpop.f32.mrb[0].mxu0
  %v1264 = vadd.f32 %v580, %v1263
  %v1265 = vpop.f32.mrb[0].mxu0
  %1266 = vmatprep.mubr.f32.mxu0 0.0
  %1267 = vmatmul.mubr.f32.gmra.mrb[0].mxu0 %v927
  %v1268 = vpop.f32.mrb[0].mxu0
  %v1269 = vadd.f32 %v585, %v1268
  %v1270 = vpop.f32.mrb[0].mxu0
  %1271 = vmatprep.mubr.f32.mxu0 0.0
  %1272 = vmatmul.mubr.f32.gmra.mrb[0].mxu0 %v930
  %v1273 = vpop.f32.mrb[0].mxu0
  %v1274 = vadd.f32 %v590, %v1273
  %v1275 = vpop.f32.mrb[0].mxu0
  %1276 = vmatprep.mubr.f32.mxu0 0.0
  %1277 = vmatmul.mubr.f32.gmra.mrb[0].mxu0 %v933
  %v1278 = vpop.f32.mrb[0].mxu0
  %v1279 = vadd.f32 %v595, %v1278
  %v1280 = vpop.f32.mrb[0].mxu0
  %1281 = vmatprep.mubr.f32.mxu0 0.0
  %1282 = vmatmul.mubr.f32.gmra.mrb[0].mxu0 %v936
  %v1283 = vpop.f32.mrb[0].mxu0
  %v1284 = vadd.f32 %v600, %v1283
  %v1285 = vpop.f32.mrb[0].mxu0
  %1286 = vmatprep.mubr.f32.mxu0 0.0
  %1287 = vmatmul.mubr.f32.gmra.mrb[0].mxu0 %v939
  %v1288 = vpop.f32.mrb[0].mxu0
  %v1289 = vadd.f32 %v605, %v1288
  %v1290 = vpop.f32.mrb[0].mxu0
  %1291 = vmatprep.mubr.f32.mxu0 0.0
  %1292 = vmatmul.mubr.f32.gmra.mrb[0].mxu0 %v942
  %v1293 = vpop.f32.mrb[0].mxu0
  %v1294 = vadd.f32 %v610, %v1293
  %v1295 = vpop.f32.mrb[0].mxu0
  %1296 = vmatprep.mubr.f32.mxu0 0.0
  %1297 = vmatmul.mubr.f32.gmra.mrb[0].mxu0 %v945
  %v1298 = vpop.f32.mrb[0].mxu0
  %v1299 = vadd.f32 %v615, %v1298
  %v1300 = vpop.f32.mrb[0].mxu0
  %1301 = vmatprep.mubr.f32.mxu0 0.0
  %1302 = vmatmul.mubr.f32.gmra.mrb[0].mxu0 %v948
  %v1303 = vpop.f32.mrb[0].mxu0
  %v1304 = vadd.f32 %v620, %v1303
  %v1305 = vpop.f32.mrb[0].mxu0
  %1306 = vmatprep.mubr.f32.mxu0 0.0
  %1307 = vmatmul.mubr.f32.gmra.mrb[0].mxu0 %v951
  %v1308 = vpop.f32.mrb[0].mxu0
  %v1309 = vadd.f32 %v625, %v1308
  %v1310 = vpop.f32.mrb[0].mxu0
  %1311 = vmatprep.mubr.f32.mxu0 0.0
  %1312 = vmatmul.mubr.f32.gmra.mrb[0].mxu0 %v954
  %v1313 = vpop.f32.mrb[0].mxu0
  %v1314 = vadd.f32 %v630, %v1313
  %v1315 = vpop.f32.mrb[0].mxu0
  %1316 = vmatprep.mubr.f32.mxu0 0.0
  %1317 = vmatmul.mubr.f32.gmra.mrb[0].mxu0 %v957
  %v1318 = vpop.f32.mrb[0].mxu0
  %v1319 = vadd.f32 %v635, %v1318
  %v1320 = vpop.f32.mrb[0].mxu0
  %1321 = vmatprep.mubr.f32.mxu0 0.0
  %1322 = vmatmul.mubr.f32.gmra.mrb[0].mxu0 %v960
  %v1323 = vpop.f32.mrb[0].mxu0
  %v1324 = vadd.f32 %v640, %v1323
  %v1325 = vpop.f32.mrb[0].mxu0
  %1326 = vmatprep.mubr.f32.mxu0 0.0
  %1327 = vmatmul.mubr.f32.gmra.mrb[0].mxu0 %v963
  %v1328 = vpop.f32.mrb[0].mxu0
  %v1329 = vadd.f32 %v645, %v1328
  %v1330 = vpop.f32.mrb[0].mxu0
  %1331 = vmatprep.mubr.f32.mxu0 0.0
  %1332 = vmatmul.mubr.f32.gmra.mrb[0].mxu0 %v966
  %v1333 = vpop.f32.mrb[0].mxu0
  %v1334 = vadd.f32 %v650, %v1333
  %v1335 = vpop.f32.mrb[0].mxu0
  %1336 = vmatprep.mubr.f32.mxu0 0.0
  %1337 = vmatmul.mubr.f32.gmra.mrb[0].mxu0 %v969
  %v1338 = vpop.f32.mrb[0].mxu0
  %v1339 = vadd.f32 %v655, %v1338
  %v1340 = vpop.f32.mrb[0].mxu0
  %1341 = vmatprep.mubr.f32.mxu0 0.0
  %1342 = vmatmul.mubr.f32.gmra.mrb[0].mxu0 %v972
  %v1343 = vpop.f32.mrb[0].mxu0
  %v1344 = vadd.f32 %v660, %v1343
  %v1345 = vpop.f32.mrb[0].mxu0
  %1346 = vmatprep.mubr.f32.mxu0 0.0
  %1347 = vmatmul.mubr.f32.gmra.mrb[0].mxu0 %v975
  %v1348 = vpop.f32.mrb[0].mxu0
  %v1349 = vadd.f32 %v665, %v1348
  %v1350 = vpop.f32.mrb[0].mxu0
  %1351 = vmatprep.mubr.f32.mxu0 0.0
  %1352 = vmatmul.mubr.f32.gmra.mrb[0].mxu0 %v978
  %v1353 = vpop.f32.mrb[0].mxu0
  %v1354 = vadd.f32 %v670, %v1353
  %v1355 = vpop.f32.mrb[0].mxu0
  %1356 = vmatprep.mubr.f32.mxu0 0.0
  %1357 = vmatmul.mubr.f32.gmra.mrb[0].mxu0 %v981
  %v1358 = vpop.f32.mrb[0].mxu0
  %v1359 = vadd.f32 %v675, %v1358
  %v1360 = vpop.f32.mrb[0].mxu0
  %1361 = vmatprep.mubr.f32.mxu0 0.0
  %1362 = vmatmul.mubr.f32.gmra.mrb[0].mxu0 %v984
  %v1363 = vpop.f32.mrb[0].mxu0
  %v1364 = vadd.f32 %v680, %v1363
  %v1365 = vpop.f32.mrb[0].mxu0
  %1366 = vmatprep.mubr.f32.mxu0 0.0
  %1367 = vmatmul.mubr.f32.gmra.mrb[0].mxu0 %v987
  %v1368 = vpop.f32.mrb[0].mxu0
  %v1369 = vadd.f32 %v685, %v1368
  %v1370 = vpop.f32.mrb[0].mxu0
  %1371 = vmatprep.mubr.f32.mxu0 0.0
  %1372 = vmatmul.mubr.f32.gmra.mrb[0].mxu0 %v990
  %v1373 = vpop.f32.mrb[0].mxu0
  %v1374 = vadd.f32 %v690, %v1373
  %v1375 = vpop.f32.mrb[0].mxu0
  %1376 = vmatprep.mubr.f32.mxu0 0.0
  %1377 = vmatmul.mubr.f32.gmra.mrb[0].mxu0 %v993
  %v1378 = vpop.f32.mrb[0].mxu0
  %v1379 = vadd.f32 %v695, %v1378
  %v1380 = vpop.f32.mrb[0].mxu0
  %1381 = vmatprep.mubr.f32.mxu0 0.0
  %1382 = vmatmul.mubr.f32.gmra.mrb[0].mxu0 %v996
  %v1383 = vpop.f32.mrb[0].mxu0
  %v1384 = vadd.f32 %v700, %v1383
  %v1385 = vpop.f32.mrb[0].mxu0
  %1386 = vmatprep.mubr.f32.mxu0 0.0
  %1387 = vmatmul.mubr.f32.gmra.mrb[0].mxu0 %v999
  %v1388 = vpop.f32.mrb[0].mxu0
  %v1389 = vadd.f32 %v705, %v1388
  %v1390 = vpop.f32.mrb[0].mxu0
  %1391 = vmatprep.mubr.f32.mxu0 0.0
  %1392 = vmatmul.mubr.f32.gmra.mrb[0].mxu0 %v1002
  %v1393 = vpop.f32.mrb[0].mxu0
  %v1394 = vadd.f32 %v710, %v1393
  %v1395 = vpop.f32.mrb[0].mxu0
  %1396 = vmatprep.mubr.f32.mxu0 0.0
  %1397 = vmatmul.mubr.f32.gmra.mrb[0].mxu0 %v1005
  %v1398 = vpop.f32.mrb[0].mxu0
  %v1399 = vadd.f32 %v715, %v1398
  %v1400 = vpop.f32.mrb[0].mxu0
  %1401 = vmatprep.mubr.f32.mxu0 0.0
  %1402 = vmatmul.mubr.f32.gmra.mrb[0].mxu0 %v1008
  %v1403 = vpop.f32.mrb[0].mxu0
  %v1404 = vadd.f32 %v720, %v1403
  %v1405 = vpop.f32.mrb[0].mxu0
  %1406 = vmatprep.mubr.f32.mxu0 0.0
  %1407 = vmatmul.mubr.f32.gmra.mrb[0].mxu0 %v1011
  %v1408 = vpop.f32.mrb[0].mxu0
  %v1409 = vadd.f32 %v725, %v1408
  %v1410 = vpop.f32.mrb[0].mxu0
  %1411 = vmatprep.mubr.f32.mxu0 0.0
  %1412 = vmatmul.mubr.f32.gmra.mrb[0].mxu0 %v1014
  %v1413 = vpop.f32.mrb[0].mxu0
  %v1414 = vadd.f32 %v730, %v1413
  %v1415 = vpop.f32.mrb[0].mxu0
  %1416 = vmatprep.mubr.f32.mxu0 0.0
  %1417 = vmatmul.mubr.f32.gmra.mrb[0].mxu0 %v1017
  %v1418 = vpop.f32.mrb[0].mxu0
  %v1419 = vadd.f32 %v735, %v1418
  %v1420 = vpop.f32.mrb[0].mxu0
  %1421 = vmatprep.mubr.f32.mxu0 0.0
  %1422 = vmatmul.mubr.f32.gmra.mrb[0].mxu0 %v1020
  %v1423 = vpop.f32.mrb[0].mxu0
  %v1424 = vadd.f32 %v740, %v1423
  %v1425 = vpop.f32.mrb[0].mxu0
  %1426 = vmatprep.mubr.f32.mxu0 0.0
  %1427 = vmatmul.mubr.f32.gmra.mrb[0].mxu0 %v1023
  %v1428 = vpop.f32.mrb[0].mxu0
  %v1429 = vadd.f32 %v745, %v1428
  %v1430 = vpop.f32.mrb[0].mxu0
  %1431 = vmatprep.mubr.f32.mxu0 0.0
  %1432 = vmatmul.mubr.f32.gmra.mrb[0].mxu0 %v1026
  %v1433 = vpop.f32.mrb[0].mxu0
  %v1434 = vadd.f32 %v750, %v1433
  %v1435 = vpop.f32.mrb[0].mxu0
  %1436 = vmatprep.mubr.f32.mxu0 0.0
  %1437 = vmatmul.mubr.f32.gmra.mrb[0].mxu0 %v1029
  %v1438 = vpop.f32.mrb[0].mxu0
  %v1439 = vadd.f32 %v755, %v1438
  %v1440 = vpop.f32.mrb[0].mxu0
  %1441 = vmatprep.mubr.f32.mxu0 0.0
  %1442 = vmatmul.mubr.f32.gmra.mrb[0].mxu0 %v1032
  %v1443 = vpop.f32.mrb[0].mxu0
  %v1444 = vadd.f32 %v760, %v1443
  %v1445 = vpop.f32.mrb[0].mxu0
  %1446 = vmatprep.mubr.f32.mxu0 0.0
  %1447 = vmatmul.mubr.f32.gmra.mrb[0].mxu0 %v1035
  %v1448 = vpop.f32.mrb[0].mxu0
  %v1449 = vadd.f32 %v765, %v1448
  %v1450 = vpop.f32.mrb[0].mxu0
  %1451 = vmatprep.mubr.f32.mxu0 0.0
  %1452 = vmatmul.mubr.f32.gmra.mrb[0].mxu0 %v1038
  %v1453 = vpop.f32.mrb[0].mxu0
  %v1454 = vadd.f32 %v770, %v1453
  %v1455 = vpop.f32.mrb[0].mxu0
  %1456 = vmatprep.mubr.f32.mxu0 0.0
  %1457 = vmatmul.mubr.f32.gmra.mrb[0].mxu0 %v1041
  %v1458 = vpop.f32.mrb[0].mxu0
  %v1459 = vadd.f32 %v775, %v1458
  %v1460 = vpop.f32.mrb[0].mxu0
  %1461 = vmatprep.mubr.f32.mxu0 0.0
  %1462 = vmatmul.mubr.f32.gmra.mrb[0].mxu0 %v1044
  %v1463 = vpop.f32.mrb[0].mxu0
  %v1464 = vadd.f32 %v780, %v1463
  %v1465 = vpop.f32.mrb[0].mxu0
  %1466 = vmatprep.mubr.f32.mxu0 0.0
  %1467 = vmatmul.mubr.f32.gmra.mrb[0].mxu0 %v1047
  %v1468 = vpop.f32.mrb[0].mxu0
  %v1469 = vadd.f32 %v785, %v1468
  %v1470 = vpop.f32.mrb[0].mxu0
  %1471 = vmatprep.mubr.f32.mxu0 0.0
  %1472 = vmatmul.mubr.f32.gmra.mrb[0].mxu0 %v1050
  %v1473 = vpop.f32.mrb[0].mxu0
  %v1474 = vadd.f32 %v790, %v1473
  %v1475 = vpop.f32.mrb[0].mxu0
  %1476 = vmatprep.mubr.f32.mxu0 0.0
  %1477 = vmatmul.mubr.f32.gmra.mrb[0].mxu0 %v1053
  %v1478 = vpop.f32.mrb[0].mxu0
  %v1479 = vadd.f32 %v795, %v1478
  %v1480 = vpop.f32.mrb[0].mxu0
  %1481 = vmatprep.mubr.f32.mxu0 0.0
  %1482 = vmatmul.mubr.f32.gmra.mrb[0].mxu0 %v1056
  %v1483 = vpop.f32.mrb[0].mxu0
  %v1484 = vadd.f32 %v800, %v1483
  %v1485 = vpop.f32.mrb[0].mxu0
  %1486 = vmatprep.mubr.f32.mxu0 0.0
  %1487 = vmatmul.mubr.f32.gmra.mrb[0].mxu0 %v1059
  %v1488 = vpop.f32.mrb[0].mxu0
  %v1489 = vadd.f32 %v805, %v1488
  %v1490 = vpop.f32.mrb[0].mxu0
  %1491 = vmatprep.mubr.f32.mxu0 0.0
  %1492 = vmatmul.mubr.f32.gmra.mrb[0].mxu0 %v1062
  %v1493 = vpop.f32.mrb[0].mxu0
  %v1494 = vadd.f32 %v810, %v1493
  %v1495 = vpop.f32.mrb[0].mxu0
  %1496 = vmatprep.mubr.f32.mxu0 0.0
  %1497 = vmatmul.mubr.f32.gmra.mrb[0].mxu0 %v1065
  %v1498 = vpop.f32.mrb[0].mxu0
  %v1499 = vadd.f32 %v815, %v1498
  %v1500 = vpop.f32.mrb[0].mxu0
  %1501 = vmatprep.mubr.f32.mxu0 0.0
  %1502 = vmatmul.mubr.f32.gmra.mrb[0].mxu0 %v1068
  %v1503 = vpop.f32.mrb[0].mxu0
  %v1504 = vadd.f32 %v820, %v1503
  %v1505 = vpop.f32.mrb[0].mxu0
  %1506 = vmatprep.mubr.f32.mxu0 0.0
  %1507 = vmatmul.mubr.f32.gmra.mrb[0].mxu0 %v1071
  %v1508 = vpop.f32.mrb[0].mxu0
  %v1509 = vadd.f32 %v825, %v1508
  %v1510 = vpop.f32.mrb[0].mxu0
  %1511 = vmatprep.mubr.f32.mxu0 0.0
  %1512 = vmatmul.mubr.f32.gmra.mrb[0].mxu0 %v1074
  %v1513 = vpop.f32.mrb[0].mxu0
  %v1514 = vadd.f32 %v830, %v1513
  %v1515 = vpop.f32.mrb[0].mxu0
  %1516 = vmatprep.mubr.f32.mxu0 0.0
  %1517 = vmatmul.mubr.f32.gmra.mrb[0].mxu0 %v1077
  %v1518 = vpop.f32.mrb[0].mxu0
  %v1519 = vadd.f32 %v835, %v1518
  %v1520 = vpop.f32.mrb[0].mxu0
  %1521 = vmatprep.mubr.f32.mxu0 0.0
  %1522 = vmatmul.mubr.f32.gmra.mrb[0].mxu0 %v1080
  %v1523 = vpop.f32.mrb[0].mxu0
  %v1524 = vadd.f32 %v840, %v1523
  %v1525 = vpop.f32.mrb[0].mxu0
  %1526 = vmatprep.mubr.f32.mxu0 0.0
  %1527 = vmatmul.mubr.f32.gmra.mrb[0].mxu0 %v1083
  %v1528 = vpop.f32.mrb[0].mxu0
  %v1529 = vadd.f32 %v845, %v1528
  %v1530 = vpop.f32.mrb[0].mxu0
  %1531 = vmatprep.mubr.f32.mxu0 0.0
  %1532 = vmatmul.mubr.f32.gmra.mrb[0].mxu0 %v1086
  %v1533 = vpop.f32.mrb[0].mxu0
  %v1534 = vadd.f32 %v850, %v1533
  %v1535 = vpop.f32.mrb[0].mxu0
  %1536 = vmatprep.mubr.f32.mxu0 0.0
  %1537 = vmatmul.mubr.f32.gmra.mrb[0].mxu0 %v1089
  %v1538 = vpop.f32.mrb[0].mxu0
  %v1539 = vadd.f32 %v855, %v1538
  %v1540 = vpop.f32.mrb[0].mxu0
  %1541 = vmatprep.mubr.f32.mxu0 0.0
  %1542 = vmatmul.mubr.f32.gmra.mrb[0].mxu0 %v1092
  %v1543 = vpop.f32.mrb[0].mxu0
  %v1544 = vadd.f32 %v860, %v1543
  %v1545 = vpop.f32.mrb[0].mxu0
  %1546 = vdwg.mxu0
  %v1547 = vld [vmem:[%s0 + $0x2] sm:$0xff]
  %v1548 = vld [vmem:[%s0 + $0xa] sm:$0xff]
  %v1549 = vld [vmem:[%s0 + $0x12] sm:$0xff]
  %v1550 = vld [vmem:[%s0 + $0x1a] sm:$0xff]
  %v1551 = vld [vmem:[%s0 + $0x22] sm:$0xff]
  %v1552 = vld [vmem:[%s0 + $0x2a] sm:$0xff]
  %v1553 = vld [vmem:[%s0 + $0x32] sm:$0xff]
  %v1554 = vld [vmem:[%s0 + $0x3a] sm:$0xff]
  %v1555 = vld [vmem:[%s0 + $0x42] sm:$0xff]
  %v1556 = vld [vmem:[%s0 + $0x4a] sm:$0xff]
  %v1557 = vld [vmem:[%s0 + $0x52] sm:$0xff]
  %v1558 = vld [vmem:[%s0 + $0x5a] sm:$0xff]
  %v1559 = vld [vmem:[%s0 + $0x62] sm:$0xff]
  %v1560 = vld [vmem:[%s0 + $0x6a] sm:$0xff]
  %v1561 = vld [vmem:[%s0 + $0x72] sm:$0xff]
  %v1562 = vld [vmem:[%s0 + $0x7a] sm:$0xff]
  %v1563 = vld [vmem:[%s0 + $0x82] sm:$0xff]
  %v1564 = vld [vmem:[%s0 + $0x8a] sm:$0xff]
  %v1565 = vld [vmem:[%s0 + $0x92] sm:$0xff]
  %v1566 = vld [vmem:[%s0 + $0x9a] sm:$0xff]
  %v1567 = vld [vmem:[%s0 + $0xa2] sm:$0xff]
  %v1568 = vld [vmem:[%s0 + $0xaa] sm:$0xff]
  %v1569 = vld [vmem:[%s0 + $0xb2] sm:$0xff]
  %v1570 = vld [vmem:[%s0 + $0xba] sm:$0xff]
  %v1571 = vld [vmem:[%s0 + $0xc2] sm:$0xff]
  %v1572 = vld [vmem:[%s0 + $0xca] sm:$0xff]
  %v1573 = vld [vmem:[%s0 + $0xd2] sm:$0xff]
  %v1574 = vld [vmem:[%s0 + $0xda] sm:$0xff]
  %v1575 = vld [vmem:[%s0 + $0xe2] sm:$0xff]
  %v1576 = vld [vmem:[%s0 + $0xea] sm:$0xff]
  %v1577 = vld [vmem:[%s0 + $0xf2] sm:$0xff]
  %v1578 = vld [vmem:[%s0 + $0xfa] sm:$0xff]
  %v1579 = vld [vmem:[%s0 + $0x102] sm:$0xff]
  %v1580 = vld [vmem:[%s0 + $0x10a] sm:$0xff]
  %v1581 = vld [vmem:[%s0 + $0x112] sm:$0xff]
  %v1582 = vld [vmem:[%s0 + $0x11a] sm:$0xff]
  %v1583 = vld [vmem:[%s0 + $0x122] sm:$0xff]
  %v1584 = vld [vmem:[%s0 + $0x12a] sm:$0xff]
  %v1585 = vld [vmem:[%s0 + $0x132] sm:$0xff]
  %v1586 = vld [vmem:[%s0 + $0x13a] sm:$0xff]
  %v1587 = vld [vmem:[%s0 + $0x142] sm:$0xff]
  %v1588 = vld [vmem:[%s0 + $0x14a] sm:$0xff]
  %v1589 = vld [vmem:[%s0 + $0x152] sm:$0xff]
  %v1590 = vld [vmem:[%s0 + $0x15a] sm:$0xff]
  %v1591 = vld [vmem:[%s0 + $0x162] sm:$0xff]
  %v1592 = vld [vmem:[%s0 + $0x16a] sm:$0xff]
  %v1593 = vld [vmem:[%s0 + $0x172] sm:$0xff]
  %v1594 = vld [vmem:[%s0 + $0x17a] sm:$0xff]
  %v1595 = vld [vmem:[%s0 + $0x182] sm:$0xff]
  %v1596 = vld [vmem:[%s0 + $0x18a] sm:$0xff]
  %v1597 = vld [vmem:[%s0 + $0x192] sm:$0xff]
  %v1598 = vld [vmem:[%s0 + $0x19a] sm:$0xff]
  %v1599 = vld [vmem:[%s0 + $0x1a2] sm:$0xff]
  %v1600 = vld [vmem:[%s0 + $0x1aa] sm:$0xff]
  %v1601 = vld [vmem:[%s0 + $0x1b2] sm:$0xff]
  %v1602 = vld [vmem:[%s0 + $0x1ba] sm:$0xff]
  %v1603 = vld [vmem:[%s0 + $0x1c2] sm:$0xff]
  %v1604 = vld [vmem:[%s0 + $0x1ca] sm:$0xff]
  %v1605 = vld [vmem:[%s0 + $0x1d2] sm:$0xff]
  %v1606 = vld [vmem:[%s0 + $0x1da] sm:$0xff]
  %v1607 = vld [vmem:[%s0 + $0x1e2] sm:$0xff]
  %v1608 = vld [vmem:[%s0 + $0x1ea] sm:$0xff]
  %v1609 = vld [vmem:[%s0 + $0x1f2] sm:$0xff]
  %v1610 = vld [vmem:[%s0 + $0x1fa] sm:$0xff]
  %v1611 = vld [vmem:[%s0 + $0x202] sm:$0xff]
  %v1612 = vld [vmem:[%s0 + $0x20a] sm:$0xff]
  %v1613 = vld [vmem:[%s0 + $0x212] sm:$0xff]
  %v1614 = vld [vmem:[%s0 + $0x21a] sm:$0xff]
  %v1615 = vld [vmem:[%s0 + $0x222] sm:$0xff]
  %v1616 = vld [vmem:[%s0 + $0x22a] sm:$0xff]
  %v1617 = vld [vmem:[%s0 + $0x232] sm:$0xff]
  %v1618 = vld [vmem:[%s0 + $0x23a] sm:$0xff]
  %v1619 = vld [vmem:[%s0 + $0x242] sm:$0xff]
  %v1620 = vld [vmem:[%s0 + $0x24a] sm:$0xff]
  %v1621 = vld [vmem:[%s0 + $0x252] sm:$0xff]
  %v1622 = vld [vmem:[%s0 + $0x25a] sm:$0xff]
  %v1623 = vld [vmem:[%s0 + $0x262] sm:$0xff]
  %s1624 = scalar_lea.vmem %s1, 8
  %v1625 = vld [vmem:[%s1624] sm:$0xf]
  %v1627 = vsel %vm177, %v1547, 0
  %v1630 = vsel %vm177, %v1548, 0
  %v1633 = vsel %vm177, %v1549, 0
  %v1636 = vsel %vm177, %v1550, 0
  %v1639 = vsel %vm177, %v1551, 0
  %v1642 = vsel %vm177, %v1552, 0
  %v1645 = vsel %vm177, %v1553, 0
  %v1648 = vsel %vm177, %v1554, 0
  %v1651 = vsel %vm177, %v1555, 0
  %v1654 = vsel %vm177, %v1556, 0
  %v1657 = vsel %vm177, %v1557, 0
  %v1660 = vsel %vm177, %v1558, 0
  %v1663 = vsel %vm177, %v1559, 0
  %v1666 = vsel %vm177, %v1560, 0
  %v1669 = vsel %vm177, %v1561, 0
  %v1672 = vsel %vm177, %v1562, 0
  %v1675 = vsel %vm177, %v1563, 0
  %v1678 = vsel %vm177, %v1564, 0
  %v1681 = vsel %vm177, %v1565, 0
  %v1684 = vsel %vm177, %v1566, 0
  %v1687 = vsel %vm177, %v1567, 0
  %v1690 = vsel %vm177, %v1568, 0
  %v1693 = vsel %vm177, %v1569, 0
  %v1696 = vsel %vm177, %v1570, 0
  %v1699 = vsel %vm177, %v1571, 0
  %v1702 = vsel %vm177, %v1572, 0
  %v1705 = vsel %vm177, %v1573, 0
  %v1708 = vsel %vm177, %v1574, 0
  %v1711 = vsel %vm177, %v1575, 0
  %v1714 = vsel %vm177, %v1576, 0
  %v1717 = vsel %vm177, %v1577, 0
  %v1720 = vsel %vm177, %v1578, 0
  %v1723 = vsel %vm177, %v1579, 0
  %v1726 = vsel %vm177, %v1580, 0
  %v1729 = vsel %vm177, %v1581, 0
  %v1732 = vsel %vm177, %v1582, 0
  %v1735 = vsel %vm177, %v1583, 0
  %v1738 = vsel %vm177, %v1584, 0
  %v1741 = vsel %vm177, %v1585, 0
  %v1744 = vsel %vm177, %v1586, 0
  %v1747 = vsel %vm177, %v1587, 0
  %v1750 = vsel %vm177, %v1588, 0
  %v1753 = vsel %vm177, %v1589, 0
  %v1756 = vsel %vm177, %v1590, 0
  %v1759 = vsel %vm177, %v1591, 0
  %v1762 = vsel %vm177, %v1592, 0
  %v1765 = vsel %vm177, %v1593, 0
  %v1768 = vsel %vm177, %v1594, 0
  %v1771 = vsel %vm177, %v1595, 0
  %v1774 = vsel %vm177, %v1596, 0
  %v1777 = vsel %vm177, %v1597, 0
  %v1780 = vsel %vm177, %v1598, 0
  %v1783 = vsel %vm177, %v1599, 0
  %v1786 = vsel %vm177, %v1600, 0
  %v1789 = vsel %vm177, %v1601, 0
  %v1792 = vsel %vm177, %v1602, 0
  %v1795 = vsel %vm177, %v1603, 0
  %v1798 = vsel %vm177, %v1604, 0
  %v1801 = vsel %vm177, %v1605, 0
  %v1804 = vsel %vm177, %v1606, 0
  %v1807 = vsel %vm177, %v1607, 0
  %v1810 = vsel %vm177, %v1608, 0
  %v1813 = vsel %vm177, %v1609, 0
  %v1816 = vsel %vm177, %v1610, 0
  %v1819 = vsel %vm177, %v1611, 0
  %v1822 = vsel %vm177, %v1612, 0
  %v1825 = vsel %vm177, %v1613, 0
  %v1828 = vsel %vm177, %v1614, 0
  %v1831 = vsel %vm177, %v1615, 0
  %v1834 = vsel %vm177, %v1616, 0
  %v1837 = vsel %vm177, %v1617, 0
  %v1840 = vsel %vm177, %v1618, 0
  %v1843 = vsel %vm177, %v1619, 0
  %v1846 = vsel %vm177, %v1620, 0
  %v1849 = vsel %vm177, %v1621, 0
  %v1852 = vsel %vm177, %v1622, 0
  %v1855 = vsel %vm177, %v1623, 0
  %v1858 = vsel %vm409, %v1625, 0
  %1860 = vmatprep.subr.mxu0 0.0
  %1861 = vmatpush1.msra.mxu0 %v1858
  %1862 = vmatprep.subr.mxu0 0.0
  %1863 = vmatpush1.msra.mxu0 0.0
  %1864 = vmatprep.subr.mxu0 0.0
  %1865 = vmatpush1.msra.mxu0 0.0
  %1866 = vmatprep.subr.mxu0 0.0
  %1867 = vmatpush1.msra.mxu0 0.0
  %1868 = vmatprep.subr.mxu0 0.0
  %1869 = vmatpush1.msra.mxu0 0.0
  %1870 = vmatprep.subr.mxu0 0.0
  %1871 = vmatpush1.msra.mxu0 0.0
  %1872 = vmatprep.subr.mxu0 0.0
  %1873 = vmatpush1.msra.mxu0 0.0
  %1874 = vmatprep.subr.mxu0 0.0
  %1875 = vmatpush1.msra.mxu0 0.0
  %1876 = vmatprep.subr.mxu0 0.0
  %1877 = vmatpush1.msra.mxu0 0.0
  %1878 = vmatprep.subr.mxu0 0.0
  %1879 = vmatpush1.msra.mxu0 0.0
  %1880 = vmatprep.subr.mxu0 0.0
  %1881 = vmatpush1.msra.mxu0 0.0
  %1882 = vmatprep.subr.mxu0 0.0
  %1883 = vmatpush1.msra.mxu0 0.0
  %1884 = vmatprep.subr.mxu0 0.0
  %1885 = vmatpush1.msra.mxu0 0.0
  %1886 = vmatprep.subr.mxu0 0.0
  %1887 = vmatpush1.msra.mxu0 0.0
  %1888 = vmatprep.subr.mxu0 0.0
  %1889 = vmatpush1.msra.mxu0 0.0
  %1890 = vmatprep.subr.mxu0 0.0
  %1891 = vmatpush1.msra.mxu0 0.0
  %1892 = vmatprep.subr.mxu0 0.0
  %1893 = vmatpush1.msra.mxu0 0.0
  %1894 = vmatprep.subr.mxu0 0.0
  %1895 = vmatpush1.msra.mxu0 0.0
  %1896 = vmatprep.subr.mxu0 0.0
  %1897 = vmatpush1.msra.mxu0 0.0
  %1898 = vmatprep.subr.mxu0 0.0
  %1899 = vmatpush1.msra.mxu0 0.0
  %1900 = vmatprep.subr.mxu0 0.0
  %1901 = vmatpush1.msra.mxu0 0.0
  %1902 = vmatprep.subr.mxu0 0.0
  %1903 = vmatpush1.msra.mxu0 0.0
  %1904 = vmatprep.subr.mxu0 0.0
  %1905 = vmatpush1.msra.mxu0 0.0
  %1906 = vmatprep.subr.mxu0 0.0
  %1907 = vmatpush1.msra.mxu0 0.0
  %1908 = vmatprep.subr.mxu0 0.0
  %1909 = vmatpush1.msra.mxu0 0.0
  %1910 = vmatprep.subr.mxu0 0.0
  %1911 = vmatpush1.msra.mxu0 0.0
  %1912 = vmatprep.subr.mxu0 0.0
  %1913 = vmatpush1.msra.mxu0 0.0
  %1914 = vmatprep.subr.mxu0 0.0
  %1915 = vmatpush1.msra.mxu0 0.0
  %1916 = vmatprep.subr.mxu0 0.0
  %1917 = vmatpush1.msra.mxu0 0.0
  %1918 = vmatprep.subr.mxu0 0.0
  %1919 = vmatpush1.msra.mxu0 0.0
  %1920 = vmatprep.subr.mxu0 0.0
  %1921 = vmatpush1.msra.mxu0 0.0
  %1922 = vmatprep.subr.mxu0 0.0
  %1923 = vmatpush1.msra.mxu0 0.0
  %1924 = vmatprep.mubr.f32.mxu0 0.0
  %1925 = vmatmul.mubr.f32.gmra.mrb[0].mxu0 %v1627
  %v1926 = vpop.f32.mrb[0].mxu0
  %v1927 = vadd.f32 0.0, %v1926
  %v1928 = vpop.f32.mrb[0].mxu0
  %1929 = vmatprep.mubr.f32.mxu0 0.0
  %1930 = vmatmul.mubr.f32.gmra.mrb[0].mxu0 %v1630
  %v1931 = vpop.f32.mrb[0].mxu0
  %v1932 = vadd.f32 0.0, %v1931
  %v1933 = vpop.f32.mrb[0].mxu0
  %1934 = vmatprep.mubr.f32.mxu0 0.0
  %1935 = vmatmul.mubr.f32.gmra.mrb[0].mxu0 %v1633
  %v1936 = vpop.f32.mrb[0].mxu0
  %v1937 = vadd.f32 0.0, %v1936
  %v1938 = vpop.f32.mrb[0].mxu0
  %1939 = vmatprep.mubr.f32.mxu0 0.0
  %1940 = vmatmul.mubr.f32.gmra.mrb[0].mxu0 %v1636
  %v1941 = vpop.f32.mrb[0].mxu0
  %v1942 = vadd.f32 0.0, %v1941
  %v1943 = vpop.f32.mrb[0].mxu0
  %1944 = vmatprep.mubr.f32.mxu0 0.0
  %1945 = vmatmul.mubr.f32.gmra.mrb[0].mxu0 %v1639
  %v1946 = vpop.f32.mrb[0].mxu0
  %v1947 = vadd.f32 0.0, %v1946
  %v1948 = vpop.f32.mrb[0].mxu0
  %1949 = vmatprep.mubr.f32.mxu0 0.0
  %1950 = vmatmul.mubr.f32.gmra.mrb[0].mxu0 %v1642
  %v1951 = vpop.f32.mrb[0].mxu0
  %v1952 = vadd.f32 0.0, %v1951
  %v1953 = vpop.f32.mrb[0].mxu0
  %1954 = vmatprep.mubr.f32.mxu0 0.0
  %1955 = vmatmul.mubr.f32.gmra.mrb[0].mxu0 %v1645
  %v1956 = vpop.f32.mrb[0].mxu0
  %v1957 = vadd.f32 0.0, %v1956
  %v1958 = vpop.f32.mrb[0].mxu0
  %1959 = vmatprep.mubr.f32.mxu0 0.0
  %1960 = vmatmul.mubr.f32.gmra.mrb[0].mxu0 %v1648
  %v1961 = vpop.f32.mrb[0].mxu0
  %v1962 = vadd.f32 0.0, %v1961
  %v1963 = vpop.f32.mrb[0].mxu0
  %1964 = vmatprep.mubr.f32.mxu0 0.0
  %1965 = vmatmul.mubr.f32.gmra.mrb[0].mxu0 %v1651
  %v1966 = vpop.f32.mrb[0].mxu0
  %v1967 = vadd.f32 0.0, %v1966
  %v1968 = vpop.f32.mrb[0].mxu0
  %1969 = vmatprep.mubr.f32.mxu0 0.0
  %1970 = vmatmul.mubr.f32.gmra.mrb[0].mxu0 %v1654
  %v1971 = vpop.f32.mrb[0].mxu0
  %v1972 = vadd.f32 0.0, %v1971
  %v1973 = vpop.f32.mrb[0].mxu0
  %1974 = vmatprep.mubr.f32.mxu0 0.0
  %1975 = vmatmul.mubr.f32.gmra.mrb[0].mxu0 %v1657
  %v1976 = vpop.f32.mrb[0].mxu0
  %v1977 = vadd.f32 0.0, %v1976
  %v1978 = vpop.f32.mrb[0].mxu0
  %1979 = vmatprep.mubr.f32.mxu0 0.0
  %1980 = vmatmul.mubr.f32.gmra.mrb[0].mxu0 %v1660
  %v1981 = vpop.f32.mrb[0].mxu0
  %v1982 = vadd.f32 0.0, %v1981
  %v1983 = vpop.f32.mrb[0].mxu0
  %1984 = vmatprep.mubr.f32.mxu0 0.0
  %1985 = vmatmul.mubr.f32.gmra.mrb[0].mxu0 %v1663
  %v1986 = vpop.f32.mrb[0].mxu0
  %v1987 = vadd.f32 0.0, %v1986
  %v1988 = vpop.f32.mrb[0].mxu0
  %1989 = vmatprep.mubr.f32.mxu0 0.0
  %1990 = vmatmul.mubr.f32.gmra.mrb[0].mxu0 %v1666
  %v1991 = vpop.f32.mrb[0].mxu0
  %v1992 = vadd.f32 0.0, %v1991
  %v1993 = vpop.f32.mrb[0].mxu0
  %1994 = vmatprep.mubr.f32.mxu0 0.0
  %1995 = vmatmul.mubr.f32.gmra.mrb[0].mxu0 %v1669
  %v1996 = vpop.f32.mrb[0].mxu0
  %v1997 = vadd.f32 0.0, %v1996
  %v1998 = vpop.f32.mrb[0].mxu0
  %1999 = vmatprep.mubr.f32.mxu0 0.0
  %2000 = vmatmul.mubr.f32.gmra.mrb[0].mxu0 %v1672
  %v2001 = vpop.f32.mrb[0].mxu0
  %v2002 = vadd.f32 0.0, %v2001
  %v2003 = vpop.f32.mrb[0].mxu0
  %2004 = vmatprep.mubr.f32.mxu0 0.0
  %2005 = vmatmul.mubr.f32.gmra.mrb[0].mxu0 %v1675
  %v2006 = vpop.f32.mrb[0].mxu0
  %v2007 = vadd.f32 0.0, %v2006
  %v2008 = vpop.f32.mrb[0].mxu0
  %2009 = vmatprep.mubr.f32.mxu0 0.0
  %2010 = vmatmul.mubr.f32.gmra.mrb[0].mxu0 %v1678
  %v2011 = vpop.f32.mrb[0].mxu0
  %v2012 = vadd.f32 0.0, %v2011
  %v2013 = vpop.f32.mrb[0].mxu0
  %2014 = vmatprep.mubr.f32.mxu0 0.0
  %2015 = vmatmul.mubr.f32.gmra.mrb[0].mxu0 %v1681
  %v2016 = vpop.f32.mrb[0].mxu0
  %v2017 = vadd.f32 0.0, %v2016
  %v2018 = vpop.f32.mrb[0].mxu0
  %2019 = vmatprep.mubr.f32.mxu0 0.0
  %2020 = vmatmul.mubr.f32.gmra.mrb[0].mxu0 %v1684
  %v2021 = vpop.f32.mrb[0].mxu0
  %v2022 = vadd.f32 0.0, %v2021
  %v2023 = vpop.f32.mrb[0].mxu0
  %2024 = vmatprep.mubr.f32.mxu0 0.0
  %2025 = vmatmul.mubr.f32.gmra.mrb[0].mxu0 %v1687
  %v2026 = vpop.f32.mrb[0].mxu0
  %v2027 = vadd.f32 0.0, %v2026
  %v2028 = vpop.f32.mrb[0].mxu0
  %2029 = vmatprep.mubr.f32.mxu0 0.0
  %2030 = vmatmul.mubr.f32.gmra.mrb[0].mxu0 %v1690
  %v2031 = vpop.f32.mrb[0].mxu0
  %v2032 = vadd.f32 0.0, %v2031
  %v2033 = vpop.f32.mrb[0].mxu0
  %2034 = vmatprep.mubr.f32.mxu0 0.0
  %2035 = vmatmul.mubr.f32.gmra.mrb[0].mxu0 %v1693
  %v2036 = vpop.f32.mrb[0].mxu0
  %v2037 = vadd.f32 0.0, %v2036
  %v2038 = vpop.f32.mrb[0].mxu0
  %2039 = vmatprep.mubr.f32.mxu0 0.0
  %2040 = vmatmul.mubr.f32.gmra.mrb[0].mxu0 %v1696
  %v2041 = vpop.f32.mrb[0].mxu0
  %v2042 = vadd.f32 0.0, %v2041
  %v2043 = vpop.f32.mrb[0].mxu0
  %2044 = vmatprep.mubr.f32.mxu0 0.0
  %2045 = vmatmul.mubr.f32.gmra.mrb[0].mxu0 %v1699
  %v2046 = vpop.f32.mrb[0].mxu0
  %v2047 = vadd.f32 0.0, %v2046
  %v2048 = vpop.f32.mrb[0].mxu0
  %2049 = vmatprep.mubr.f32.mxu0 0.0
  %2050 = vmatmul.mubr.f32.gmra.mrb[0].mxu0 %v1702
  %v2051 = vpop.f32.mrb[0].mxu0
  %v2052 = vadd.f32 0.0, %v2051
  %v2053 = vpop.f32.mrb[0].mxu0
  %2054 = vmatprep.mubr.f32.mxu0 0.0
  %2055 = vmatmul.mubr.f32.gmra.mrb[0].mxu0 %v1705
  %v2056 = vpop.f32.mrb[0].mxu0
  %v2057 = vadd.f32 0.0, %v2056
  %v2058 = vpop.f32.mrb[0].mxu0
  %2059 = vmatprep.mubr.f32.mxu0 0.0
  %2060 = vmatmul.mubr.f32.gmra.mrb[0].mxu0 %v1708
  %v2061 = vpop.f32.mrb[0].mxu0
  %v2062 = vadd.f32 0.0, %v2061
  %v2063 = vpop.f32.mrb[0].mxu0
  %2064 = vmatprep.mubr.f32.mxu0 0.0
  %2065 = vmatmul.mubr.f32.gmra.mrb[0].mxu0 %v1711
  %v2066 = vpop.f32.mrb[0].mxu0
  %v2067 = vadd.f32 0.0, %v2066
  %v2068 = vpop.f32.mrb[0].mxu0
  %2069 = vmatprep.mubr.f32.mxu0 0.0
  %2070 = vmatmul.mubr.f32.gmra.mrb[0].mxu0 %v1714
  %v2071 = vpop.f32.mrb[0].mxu0
  %v2072 = vadd.f32 0.0, %v2071
  %v2073 = vpop.f32.mrb[0].mxu0
  %2074 = vmatprep.mubr.f32.mxu0 0.0
  %2075 = vmatmul.mubr.f32.gmra.mrb[0].mxu0 %v1717
  %v2076 = vpop.f32.mrb[0].mxu0
  %v2077 = vadd.f32 0.0, %v2076
  %v2078 = vpop.f32.mrb[0].mxu0
  %2079 = vmatprep.mubr.f32.mxu0 0.0
  %2080 = vmatmul.mubr.f32.gmra.mrb[0].mxu0 %v1720
  %v2081 = vpop.f32.mrb[0].mxu0
  %v2082 = vadd.f32 0.0, %v2081
  %v2083 = vpop.f32.mrb[0].mxu0
  %2084 = vmatprep.mubr.f32.mxu0 0.0
  %2085 = vmatmul.mubr.f32.gmra.mrb[0].mxu0 %v1723
  %v2086 = vpop.f32.mrb[0].mxu0
  %v2087 = vadd.f32 0.0, %v2086
  %v2088 = vpop.f32.mrb[0].mxu0
  %2089 = vmatprep.mubr.f32.mxu0 0.0
  %2090 = vmatmul.mubr.f32.gmra.mrb[0].mxu0 %v1726
  %v2091 = vpop.f32.mrb[0].mxu0
  %v2092 = vadd.f32 0.0, %v2091
  %v2093 = vpop.f32.mrb[0].mxu0
  %2094 = vmatprep.mubr.f32.mxu0 0.0
  %2095 = vmatmul.mubr.f32.gmra.mrb[0].mxu0 %v1729
  %v2096 = vpop.f32.mrb[0].mxu0
  %v2097 = vadd.f32 0.0, %v2096
  %v2098 = vpop.f32.mrb[0].mxu0
  %2099 = vmatprep.mubr.f32.mxu0 0.0
  %2100 = vmatmul.mubr.f32.gmra.mrb[0].mxu0 %v1732
  %v2101 = vpop.f32.mrb[0].mxu0
  %v2102 = vadd.f32 0.0, %v2101
  %v2103 = vpop.f32.mrb[0].mxu0
  %2104 = vmatprep.mubr.f32.mxu0 0.0
  %2105 = vmatmul.mubr.f32.gmra.mrb[0].mxu0 %v1735
  %v2106 = vpop.f32.mrb[0].mxu0
  %v2107 = vadd.f32 0.0, %v2106
  %v2108 = vpop.f32.mrb[0].mxu0
  %2109 = vmatprep.mubr.f32.mxu0 0.0
  %2110 = vmatmul.mubr.f32.gmra.mrb[0].mxu0 %v1738
  %v2111 = vpop.f32.mrb[0].mxu0
  %v2112 = vadd.f32 0.0, %v2111
  %v2113 = vpop.f32.mrb[0].mxu0
  %2114 = vmatprep.mubr.f32.mxu0 0.0
  %2115 = vmatmul.mubr.f32.gmra.mrb[0].mxu0 %v1741
  %v2116 = vpop.f32.mrb[0].mxu0
  %v2117 = vadd.f32 0.0, %v2116
  %v2118 = vpop.f32.mrb[0].mxu0
  %2119 = vmatprep.mubr.f32.mxu0 0.0
  %2120 = vmatmul.mubr.f32.gmra.mrb[0].mxu0 %v1744
  %v2121 = vpop.f32.mrb[0].mxu0
  %v2122 = vadd.f32 0.0, %v2121
  %v2123 = vpop.f32.mrb[0].mxu0
  %2124 = vmatprep.mubr.f32.mxu0 0.0
  %2125 = vmatmul.mubr.f32.gmra.mrb[0].mxu0 %v1747
  %v2126 = vpop.f32.mrb[0].mxu0
  %v2127 = vadd.f32 0.0, %v2126
  %v2128 = vpop.f32.mrb[0].mxu0
  %2129 = vmatprep.mubr.f32.mxu0 0.0
  %2130 = vmatmul.mubr.f32.gmra.mrb[0].mxu0 %v1750
  %v2131 = vpop.f32.mrb[0].mxu0
  %v2132 = vadd.f32 0.0, %v2131
  %v2133 = vpop.f32.mrb[0].mxu0
  %2134 = vmatprep.mubr.f32.mxu0 0.0
  %2135 = vmatmul.mubr.f32.gmra.mrb[0].mxu0 %v1753
  %v2136 = vpop.f32.mrb[0].mxu0
  %v2137 = vadd.f32 0.0, %v2136
  %v2138 = vpop.f32.mrb[0].mxu0
  %2139 = vmatprep.mubr.f32.mxu0 0.0
  %2140 = vmatmul.mubr.f32.gmra.mrb[0].mxu0 %v1756
  %v2141 = vpop.f32.mrb[0].mxu0
  %v2142 = vadd.f32 0.0, %v2141
  %v2143 = vpop.f32.mrb[0].mxu0
  %2144 = vmatprep.mubr.f32.mxu0 0.0
  %2145 = vmatmul.mubr.f32.gmra.mrb[0].mxu0 %v1759
  %v2146 = vpop.f32.mrb[0].mxu0
  %v2147 = vadd.f32 0.0, %v2146
  %v2148 = vpop.f32.mrb[0].mxu0
  %2149 = vmatprep.mubr.f32.mxu0 0.0
  %2150 = vmatmul.mubr.f32.gmra.mrb[0].mxu0 %v1762
  %v2151 = vpop.f32.mrb[0].mxu0
  %v2152 = vadd.f32 0.0, %v2151
  %v2153 = vpop.f32.mrb[0].mxu0
  %2154 = vmatprep.mubr.f32.mxu0 0.0
  %2155 = vmatmul.mubr.f32.gmra.mrb[0].mxu0 %v1765
  %v2156 = vpop.f32.mrb[0].mxu0
  %v2157 = vadd.f32 0.0, %v2156
  %v2158 = vpop.f32.mrb[0].mxu0
  %2159 = vmatprep.mubr.f32.mxu0 0.0
  %2160 = vmatmul.mubr.f32.gmra.mrb[0].mxu0 %v1768
  %v2161 = vpop.f32.mrb[0].mxu0
  %v2162 = vadd.f32 0.0, %v2161
  %v2163 = vpop.f32.mrb[0].mxu0
  %2164 = vmatprep.mubr.f32.mxu0 0.0
  %2165 = vmatmul.mubr.f32.gmra.mrb[0].mxu0 %v1771
  %v2166 = vpop.f32.mrb[0].mxu0
  %v2167 = vadd.f32 0.0, %v2166
  %v2168 = vpop.f32.mrb[0].mxu0
  %2169 = vmatprep.mubr.f32.mxu0 0.0
  %2170 = vmatmul.mubr.f32.gmra.mrb[0].mxu0 %v1774
  %v2171 = vpop.f32.mrb[0].mxu0
  %v2172 = vadd.f32 0.0, %v2171
  %v2173 = vpop.f32.mrb[0].mxu0
  %2174 = vmatprep.mubr.f32.mxu0 0.0
  %2175 = vmatmul.mubr.f32.gmra.mrb[0].mxu0 %v1777
  %v2176 = vpop.f32.mrb[0].mxu0
  %v2177 = vadd.f32 0.0, %v2176
  %v2178 = vpop.f32.mrb[0].mxu0
  %2179 = vmatprep.mubr.f32.mxu0 0.0
  %2180 = vmatmul.mubr.f32.gmra.mrb[0].mxu0 %v1780
  %v2181 = vpop.f32.mrb[0].mxu0
  %v2182 = vadd.f32 0.0, %v2181
  %v2183 = vpop.f32.mrb[0].mxu0
  %2184 = vmatprep.mubr.f32.mxu0 0.0
  %2185 = vmatmul.mubr.f32.gmra.mrb[0].mxu0 %v1783
  %v2186 = vpop.f32.mrb[0].mxu0
  %v2187 = vadd.f32 0.0, %v2186
  %v2188 = vpop.f32.mrb[0].mxu0
  %2189 = vmatprep.mubr.f32.mxu0 0.0
  %2190 = vmatmul.mubr.f32.gmra.mrb[0].mxu0 %v1786
  %v2191 = vpop.f32.mrb[0].mxu0
  %v2192 = vadd.f32 0.0, %v2191
  %v2193 = vpop.f32.mrb[0].mxu0
  %2194 = vmatprep.mubr.f32.mxu0 0.0
  %2195 = vmatmul.mubr.f32.gmra.mrb[0].mxu0 %v1789
  %v2196 = vpop.f32.mrb[0].mxu0
  %v2197 = vadd.f32 0.0, %v2196
  %v2198 = vpop.f32.mrb[0].mxu0
  %2199 = vmatprep.mubr.f32.mxu0 0.0
  %2200 = vmatmul.mubr.f32.gmra.mrb[0].mxu0 %v1792
  %v2201 = vpop.f32.mrb[0].mxu0
  %v2202 = vadd.f32 0.0, %v2201
  %v2203 = vpop.f32.mrb[0].mxu0
  %2204 = vmatprep.mubr.f32.mxu0 0.0
  %2205 = vmatmul.mubr.f32.gmra.mrb[0].mxu0 %v1795
  %v2206 = vpop.f32.mrb[0].mxu0
  %v2207 = vadd.f32 0.0, %v2206
  %v2208 = vpop.f32.mrb[0].mxu0
  %2209 = vmatprep.mubr.f32.mxu0 0.0
  %2210 = vmatmul.mubr.f32.gmra.mrb[0].mxu0 %v1798
  %v2211 = vpop.f32.mrb[0].mxu0
  %v2212 = vadd.f32 0.0, %v2211
  %v2213 = vpop.f32.mrb[0].mxu0
  %2214 = vmatprep.mubr.f32.mxu0 0.0
  %2215 = vmatmul.mubr.f32.gmra.mrb[0].mxu0 %v1801
  %v2216 = vpop.f32.mrb[0].mxu0
  %v2217 = vadd.f32 0.0, %v2216
  %v2218 = vpop.f32.mrb[0].mxu0
  %2219 = vmatprep.mubr.f32.mxu0 0.0
  %2220 = vmatmul.mubr.f32.gmra.mrb[0].mxu0 %v1804
  %v2221 = vpop.f32.mrb[0].mxu0
  %v2222 = vadd.f32 0.0, %v2221
  %v2223 = vpop.f32.mrb[0].mxu0
  %2224 = vmatprep.mubr.f32.mxu0 0.0
  %2225 = vmatmul.mubr.f32.gmra.mrb[0].mxu0 %v1807
  %v2226 = vpop.f32.mrb[0].mxu0
  %v2227 = vadd.f32 0.0, %v2226
  %v2228 = vpop.f32.mrb[0].mxu0
  %2229 = vmatprep.mubr.f32.mxu0 0.0
  %2230 = vmatmul.mubr.f32.gmra.mrb[0].mxu0 %v1810
  %v2231 = vpop.f32.mrb[0].mxu0
  %v2232 = vadd.f32 0.0, %v2231
  %v2233 = vpop.f32.mrb[0].mxu0
  %2234 = vmatprep.mubr.f32.mxu0 0.0
  %2235 = vmatmul.mubr.f32.gmra.mrb[0].mxu0 %v1813
  %v2236 = vpop.f32.mrb[0].mxu0
  %v2237 = vadd.f32 0.0, %v2236
  %v2238 = vpop.f32.mrb[0].mxu0
  %2239 = vmatprep.mubr.f32.mxu0 0.0
  %2240 = vmatmul.mubr.f32.gmra.mrb[0].mxu0 %v1816
  %v2241 = vpop.f32.mrb[0].mxu0
  %v2242 = vadd.f32 0.0, %v2241
  %v2243 = vpop.f32.mrb[0].mxu0
  %2244 = vmatprep.mubr.f32.mxu0 0.0
  %2245 = vmatmul.mubr.f32.gmra.mrb[0].mxu0 %v1819
  %v2246 = vpop.f32.mrb[0].mxu0
  %v2247 = vadd.f32 0.0, %v2246
  %v2248 = vpop.f32.mrb[0].mxu0
  %2249 = vmatprep.mubr.f32.mxu0 0.0
  %2250 = vmatmul.mubr.f32.gmra.mrb[0].mxu0 %v1822
  %v2251 = vpop.f32.mrb[0].mxu0
  %v2252 = vadd.f32 0.0, %v2251
  %v2253 = vpop.f32.mrb[0].mxu0
  %2254 = vmatprep.mubr.f32.mxu0 0.0
  %2255 = vmatmul.mubr.f32.gmra.mrb[0].mxu0 %v1825
  %v2256 = vpop.f32.mrb[0].mxu0
  %v2257 = vadd.f32 0.0, %v2256
  %v2258 = vpop.f32.mrb[0].mxu0
  %2259 = vmatprep.mubr.f32.mxu0 0.0
  %2260 = vmatmul.mubr.f32.gmra.mrb[0].mxu0 %v1828
  %v2261 = vpop.f32.mrb[0].mxu0
  %v2262 = vadd.f32 0.0, %v2261
  %v2263 = vpop.f32.mrb[0].mxu0
  %2264 = vmatprep.mubr.f32.mxu0 0.0
  %2265 = vmatmul.mubr.f32.gmra.mrb[0].mxu0 %v1831
  %v2266 = vpop.f32.mrb[0].mxu0
  %v2267 = vadd.f32 0.0, %v2266
  %v2268 = vpop.f32.mrb[0].mxu0
  %2269 = vmatprep.mubr.f32.mxu0 0.0
  %2270 = vmatmul.mubr.f32.gmra.mrb[0].mxu0 %v1834
  %v2271 = vpop.f32.mrb[0].mxu0
  %v2272 = vadd.f32 0.0, %v2271
  %v2273 = vpop.f32.mrb[0].mxu0
  %2274 = vmatprep.mubr.f32.mxu0 0.0
  %2275 = vmatmul.mubr.f32.gmra.mrb[0].mxu0 %v1837
  %v2276 = vpop.f32.mrb[0].mxu0
  %v2277 = vadd.f32 0.0, %v2276
  %v2278 = vpop.f32.mrb[0].mxu0
  %2279 = vmatprep.mubr.f32.mxu0 0.0
  %2280 = vmatmul.mubr.f32.gmra.mrb[0].mxu0 %v1840
  %v2281 = vpop.f32.mrb[0].mxu0
  %v2282 = vadd.f32 0.0, %v2281
  %v2283 = vpop.f32.mrb[0].mxu0
  %2284 = vmatprep.mubr.f32.mxu0 0.0
  %2285 = vmatmul.mubr.f32.gmra.mrb[0].mxu0 %v1843
  %v2286 = vpop.f32.mrb[0].mxu0
  %v2287 = vadd.f32 0.0, %v2286
  %v2288 = vpop.f32.mrb[0].mxu0
  %2289 = vmatprep.mubr.f32.mxu0 0.0
  %2290 = vmatmul.mubr.f32.gmra.mrb[0].mxu0 %v1846
  %v2291 = vpop.f32.mrb[0].mxu0
  %v2292 = vadd.f32 0.0, %v2291
  %v2293 = vpop.f32.mrb[0].mxu0
  %2294 = vmatprep.mubr.f32.mxu0 0.0
  %2295 = vmatmul.mubr.f32.gmra.mrb[0].mxu0 %v1849
  %v2296 = vpop.f32.mrb[0].mxu0
  %v2297 = vadd.f32 0.0, %v2296
  %v2298 = vpop.f32.mrb[0].mxu0
  %2299 = vmatprep.mubr.f32.mxu0 0.0
  %2300 = vmatmul.mubr.f32.gmra.mrb[0].mxu0 %v1852
  %v2301 = vpop.f32.mrb[0].mxu0
  %v2302 = vadd.f32 0.0, %v2301
  %v2303 = vpop.f32.mrb[0].mxu0
  %2304 = vmatprep.mubr.f32.mxu0 0.0
  %2305 = vmatmul.mubr.f32.gmra.mrb[0].mxu0 %v1855
  %v2306 = vpop.f32.mrb[0].mxu0
  %v2307 = vadd.f32 0.0, %v2306
  %v2308 = vpop.f32.mrb[0].mxu0
  %2309 = vdwg.mxu0
  %v2310 = vadd.f32 %v1164, %v1927
  %v2311 = vadd.f32 %v1169, %v1932
  %v2312 = vadd.f32 %v1174, %v1937
  %v2313 = vadd.f32 %v1179, %v1942
  %v2314 = vadd.f32 %v1184, %v1947
  %v2315 = vadd.f32 %v1189, %v1952
  %v2316 = vadd.f32 %v1194, %v1957
  %v2317 = vadd.f32 %v1199, %v1962
  %v2318 = vadd.f32 %v1204, %v1967
  %v2319 = vadd.f32 %v1209, %v1972
  %v2320 = vadd.f32 %v1214, %v1977
  %v2321 = vadd.f32 %v1219, %v1982
  %v2322 = vadd.f32 %v1224, %v1987
  %v2323 = vadd.f32 %v1229, %v1992
  %v2324 = vadd.f32 %v1234, %v1997
  %v2325 = vadd.f32 %v1239, %v2002
  %v2326 = vadd.f32 %v1244, %v2007
  %v2327 = vadd.f32 %v1249, %v2012
  %v2328 = vadd.f32 %v1254, %v2017
  %v2329 = vadd.f32 %v1259, %v2022
  %v2330 = vadd.f32 %v1264, %v2027
  %v2331 = vadd.f32 %v1269, %v2032
  %v2332 = vadd.f32 %v1274, %v2037
  %v2333 = vadd.f32 %v1279, %v2042
  %v2334 = vadd.f32 %v1284, %v2047
  %v2335 = vadd.f32 %v1289, %v2052
  %v2336 = vadd.f32 %v1294, %v2057
  %v2337 = vadd.f32 %v1299, %v2062
  %v2338 = vadd.f32 %v1304, %v2067
  %v2339 = vadd.f32 %v1309, %v2072
  %v2340 = vadd.f32 %v1314, %v2077
  %v2341 = vadd.f32 %v1319, %v2082
  %v2342 = vadd.f32 %v1324, %v2087
  %v2343 = vadd.f32 %v1329, %v2092
  %v2344 = vadd.f32 %v1334, %v2097
  %v2345 = vadd.f32 %v1339, %v2102
  %v2346 = vadd.f32 %v1344, %v2107
  %v2347 = vadd.f32 %v1349, %v2112
  %v2348 = vadd.f32 %v1354, %v2117
  %v2349 = vadd.f32 %v1359, %v2122
  %v2350 = vadd.f32 %v1364, %v2127
  %v2351 = vadd.f32 %v1369, %v2132
  %v2352 = vadd.f32 %v1374, %v2137
  %v2353 = vadd.f32 %v1379, %v2142
  %v2354 = vadd.f32 %v1384, %v2147
  %v2355 = vadd.f32 %v1389, %v2152
  %v2356 = vadd.f32 %v1394, %v2157
  %v2357 = vadd.f32 %v1399, %v2162
  %v2358 = vadd.f32 %v1404, %v2167
  %v2359 = vadd.f32 %v1409, %v2172
  %v2360 = vadd.f32 %v1414, %v2177
  %v2361 = vadd.f32 %v1419, %v2182
  %v2362 = vadd.f32 %v1424, %v2187
  %v2363 = vadd.f32 %v1429, %v2192
  %v2364 = vadd.f32 %v1434, %v2197
  %v2365 = vadd.f32 %v1439, %v2202
  %v2366 = vadd.f32 %v1444, %v2207
  %v2367 = vadd.f32 %v1449, %v2212
  %v2368 = vadd.f32 %v1454, %v2217
  %v2369 = vadd.f32 %v1459, %v2222
  %v2370 = vadd.f32 %v1464, %v2227
  %v2371 = vadd.f32 %v1469, %v2232
  %v2372 = vadd.f32 %v1474, %v2237
  %v2373 = vadd.f32 %v1479, %v2242
  %v2374 = vadd.f32 %v1484, %v2247
  %v2375 = vadd.f32 %v1489, %v2252
  %v2376 = vadd.f32 %v1494, %v2257
  %v2377 = vadd.f32 %v1499, %v2262
  %v2378 = vadd.f32 %v1504, %v2267
  %v2379 = vadd.f32 %v1509, %v2272
  %v2380 = vadd.f32 %v1514, %v2277
  %v2381 = vadd.f32 %v1519, %v2282
  %v2382 = vadd.f32 %v1524, %v2287
  %v2383 = vadd.f32 %v1529, %v2292
  %v2384 = vadd.f32 %v1534, %v2297
  %v2385 = vadd.f32 %v1539, %v2302
  %v2386 = vadd.f32 %v1544, %v2307
  %v2387 = vld [vmem:[%s0 + $0x12] sm:$0xff]
  %v2388 = vld [vmem:[%s0 + $0x1a] sm:$0xff]
  %v2389 = vld [vmem:[%s0 + $0x22] sm:$0xff]
  %v2390 = vld [vmem:[%s0 + $0x2a] sm:$0xff]
  %v2391 = vld [vmem:[%s0 + $0x32] sm:$0xff]
  %v2392 = vld [vmem:[%s0 + $0x3a] sm:$0xff]
  %v2393 = vld [vmem:[%s0 + $0x42] sm:$0xff]
  %v2394 = vld [vmem:[%s0 + $0x4a] sm:$0xff]
  %v2395 = vld [vmem:[%s0 + $0x52] sm:$0xff]
  %v2396 = vld [vmem:[%s0 + $0x5a] sm:$0xff]
  %v2397 = vld [vmem:[%s0 + $0x62] sm:$0xff]
  %v2398 = vld [vmem:[%s0 + $0x6a] sm:$0xff]
  %v2399 = vld [vmem:[%s0 + $0x72] sm:$0xff]
  %v2400 = vld [vmem:[%s0 + $0x7a] sm:$0xff]
  %v2401 = vld [vmem:[%s0 + $0x82] sm:$0xff]
  %v2402 = vld [vmem:[%s0 + $0x8a] sm:$0xff]
  %v2403 = vld [vmem:[%s0 + $0x92] sm:$0xff]
  %v2404 = vld [vmem:[%s0 + $0x9a] sm:$0xff]
  %v2405 = vld [vmem:[%s0 + $0xa2] sm:$0xff]
  %v2406 = vld [vmem:[%s0 + $0xaa] sm:$0xff]
  %v2407 = vld [vmem:[%s0 + $0xb2] sm:$0xff]
  %v2408 = vld [vmem:[%s0 + $0xba] sm:$0xff]
  %v2409 = vld [vmem:[%s0 + $0xc2] sm:$0xff]
  %v2410 = vld [vmem:[%s0 + $0xca] sm:$0xff]
  %v2411 = vld [vmem:[%s0 + $0xd2] sm:$0xff]
  %v2412 = vld [vmem:[%s0 + $0xda] sm:$0xff]
  %v2413 = vld [vmem:[%s0 + $0xe2] sm:$0xff]
  %v2414 = vld [vmem:[%s0 + $0xea] sm:$0xff]
  %v2415 = vld [vmem:[%s0 + $0xf2] sm:$0xff]
  %v2416 = vld [vmem:[%s0 + $0xfa] sm:$0xff]
  %v2417 = vld [vmem:[%s0 + $0x102] sm:$0xff]
  %v2418 = vld [vmem:[%s0 + $0x10a] sm:$0xff]
  %v2419 = vld [vmem:[%s0 + $0x112] sm:$0xff]
  %v2420 = vld [vmem:[%s0 + $0x11a] sm:$0xff]
  %v2421 = vld [vmem:[%s0 + $0x122] sm:$0xff]
  %v2422 = vld [vmem:[%s0 + $0x12a] sm:$0xff]
  %v2423 = vld [vmem:[%s0 + $0x132] sm:$0xff]
  %v2424 = vld [vmem:[%s0 + $0x13a] sm:$0xff]
  %v2425 = vld [vmem:[%s0 + $0x142] sm:$0xff]
  %v2426 = vld [vmem:[%s0 + $0x14a] sm:$0xff]
  %v2427 = vld [vmem:[%s0 + $0x152] sm:$0xff]
  %v2428 = vld [vmem:[%s0 + $0x15a] sm:$0xff]
  %v2429 = vld [vmem:[%s0 + $0x162] sm:$0xff]
  %v2430 = vld [vmem:[%s0 + $0x16a] sm:$0xff]
  %v2431 = vld [vmem:[%s0 + $0x172] sm:$0xff]
  %v2432 = vld [vmem:[%s0 + $0x17a] sm:$0xff]
  %v2433 = vld [vmem:[%s0 + $0x182] sm:$0xff]
  %v2434 = vld [vmem:[%s0 + $0x18a] sm:$0xff]
  %v2435 = vld [vmem:[%s0 + $0x192] sm:$0xff]
  %v2436 = vld [vmem:[%s0 + $0x19a] sm:$0xff]
  %v2437 = vld [vmem:[%s0 + $0x1a2] sm:$0xff]
  %v2438 = vld [vmem:[%s0 + $0x1aa] sm:$0xff]
  %v2439 = vld [vmem:[%s0 + $0x1b2] sm:$0xff]
  %v2440 = vld [vmem:[%s0 + $0x1ba] sm:$0xff]
  %v2441 = vld [vmem:[%s0 + $0x1c2] sm:$0xff]
  %v2442 = vld [vmem:[%s0 + $0x1ca] sm:$0xff]
  %v2443 = vld [vmem:[%s0 + $0x1d2] sm:$0xff]
  %v2444 = vld [vmem:[%s0 + $0x1da] sm:$0xff]
  %v2445 = vld [vmem:[%s0 + $0x1e2] sm:$0xff]
  %v2446 = vld [vmem:[%s0 + $0x1ea] sm:$0xff]
  %v2447 = vld [vmem:[%s0 + $0x1f2] sm:$0xff]
  %v2448 = vld [vmem:[%s0 + $0x1fa] sm:$0xff]
  %v2449 = vld [vmem:[%s0 + $0x202] sm:$0xff]
  %v2450 = vld [vmem:[%s0 + $0x20a] sm:$0xff]
  %v2451 = vld [vmem:[%s0 + $0x212] sm:$0xff]
  %v2452 = vld [vmem:[%s0 + $0x21a] sm:$0xff]
  %v2453 = vld [vmem:[%s0 + $0x222] sm:$0xff]
  %v2454 = vld [vmem:[%s0 + $0x22a] sm:$0xff]
  %v2455 = vld [vmem:[%s0 + $0x232] sm:$0xff]
  %v2456 = vld [vmem:[%s0 + $0x23a] sm:$0xff]
  %v2457 = vld [vmem:[%s0 + $0x242] sm:$0xff]
  %v2458 = vld [vmem:[%s0 + $0x24a] sm:$0xff]
  %v2459 = vld [vmem:[%s0 + $0x252] sm:$0xff]
  %v2460 = vld [vmem:[%s0 + $0x25a] sm:$0xff]
  %v2461 = vld [vmem:[%s0 + $0x262] sm:$0xff]
  %v2462 = vld [vmem:[%s0 + $0x26a] sm:$0xff]
  %v2463 = vld [vmem:[%s0 + $0x272] sm:$0xff]
  %s2464 = scalar_lea.vmem %s1, 12
  %v2465 = vld [vmem:[%s2464] sm:$0xf]
  %v2467 = vsel %vm177, %v2387, 0
  %v2470 = vsel %vm177, %v2388, 0
  %v2473 = vsel %vm177, %v2389, 0
  %v2476 = vsel %vm177, %v2390, 0
  %v2479 = vsel %vm177, %v2391, 0
  %v2482 = vsel %vm177, %v2392, 0
  %v2485 = vsel %vm177, %v2393, 0
  %v2488 = vsel %vm177, %v2394, 0
  %v2491 = vsel %vm177, %v2395, 0
  %v2494 = vsel %vm177, %v2396, 0
  %v2497 = vsel %vm177, %v2397, 0
  %v2500 = vsel %vm177, %v2398, 0
  %v2503 = vsel %vm177, %v2399, 0
  %v2506 = vsel %vm177, %v2400, 0
  %v2509 = vsel %vm177, %v2401, 0
  %v2512 = vsel %vm177, %v2402, 0
  %v2515 = vsel %vm177, %v2403, 0
  %v2518 = vsel %vm177, %v2404, 0
  %v2521 = vsel %vm177, %v2405, 0
  %v2524 = vsel %vm177, %v2406, 0
  %v2527 = vsel %vm177, %v2407, 0
  %v2530 = vsel %vm177, %v2408, 0
  %v2533 = vsel %vm177, %v2409, 0
  %v2536 = vsel %vm177, %v2410, 0
  %v2539 = vsel %vm177, %v2411, 0
  %v2542 = vsel %vm177, %v2412, 0
  %v2545 = vsel %vm177, %v2413, 0
  %v2548 = vsel %vm177, %v2414, 0
  %v2551 = vsel %vm177, %v2415, 0
  %v2554 = vsel %vm177, %v2416, 0
  %v2557 = vsel %vm177, %v2417, 0
  %v2560 = vsel %vm177, %v2418, 0
  %v2563 = vsel %vm177, %v2419, 0
  %v2566 = vsel %vm177, %v2420, 0
  %v2569 = vsel %vm177, %v2421, 0
  %v2572 = vsel %vm177, %v2422, 0
  %v2575 = vsel %vm177, %v2423, 0
  %v2578 = vsel %vm177, %v2424, 0
  %v2581 = vsel %vm177, %v2425, 0
  %v2584 = vsel %vm177, %v2426, 0
  %v2587 = vsel %vm177, %v2427, 0
  %v2590 = vsel %vm177, %v2428, 0
  %v2593 = vsel %vm177, %v2429, 0
  %v2596 = vsel %vm177, %v2430, 0
  %v2599 = vsel %vm177, %v2431, 0
  %v2602 = vsel %vm177, %v2432, 0
  %v2605 = vsel %vm177, %v2433, 0
  %v2608 = vsel %vm177, %v2434, 0
  %v2611 = vsel %vm177, %v2435, 0
  %v2614 = vsel %vm177, %v2436, 0
  %v2617 = vsel %vm177, %v2437, 0
  %v2620 = vsel %vm177, %v2438, 0
  %v2623 = vsel %vm177, %v2439, 0
  %v2626 = vsel %vm177, %v2440, 0
  %v2629 = vsel %vm177, %v2441, 0
  %v2632 = vsel %vm177, %v2442, 0
  %v2635 = vsel %vm177, %v2443, 0
  %v2638 = vsel %vm177, %v2444, 0
  %v2641 = vsel %vm177, %v2445, 0
  %v2644 = vsel %vm177, %v2446, 0
  %v2647 = vsel %vm177, %v2447, 0
  %v2650 = vsel %vm177, %v2448, 0
  %v2653 = vsel %vm177, %v2449, 0
  %v2656 = vsel %vm177, %v2450, 0
  %v2659 = vsel %vm177, %v2451, 0
  %v2662 = vsel %vm177, %v2452, 0
  %v2665 = vsel %vm177, %v2453, 0
  %v2668 = vsel %vm177, %v2454, 0
  %v2671 = vsel %vm177, %v2455, 0
  %v2674 = vsel %vm177, %v2456, 0
  %v2677 = vsel %vm177, %v2457, 0
  %v2680 = vsel %vm177, %v2458, 0
  %v2683 = vsel %vm177, %v2459, 0
  %v2686 = vsel %vm177, %v2460, 0
  %v2689 = vsel %vm177, %v2461, 0
  %v2692 = vsel %vm177, %v2462, 0
  %v2695 = vsel %vm177, %v2463, 0
  %v2698 = vsel %vm409, %v2465, 0
  %2700 = vmatprep.subr.mxu0 0.0
  %2701 = vmatpush1.msra.mxu0 %v2698
  %2702 = vmatprep.subr.mxu0 0.0
  %2703 = vmatpush1.msra.mxu0 0.0
  %2704 = vmatprep.subr.mxu0 0.0
  %2705 = vmatpush1.msra.mxu0 0.0
  %2706 = vmatprep.subr.mxu0 0.0
  %2707 = vmatpush1.msra.mxu0 0.0
  %2708 = vmatprep.subr.mxu0 0.0
  %2709 = vmatpush1.msra.mxu0 0.0
  %2710 = vmatprep.subr.mxu0 0.0
  %2711 = vmatpush1.msra.mxu0 0.0
  %2712 = vmatprep.subr.mxu0 0.0
  %2713 = vmatpush1.msra.mxu0 0.0
  %2714 = vmatprep.subr.mxu0 0.0
  %2715 = vmatpush1.msra.mxu0 0.0
  %2716 = vmatprep.subr.mxu0 0.0
  %2717 = vmatpush1.msra.mxu0 0.0
  %2718 = vmatprep.subr.mxu0 0.0
  %2719 = vmatpush1.msra.mxu0 0.0
  %2720 = vmatprep.subr.mxu0 0.0
  %2721 = vmatpush1.msra.mxu0 0.0
  %2722 = vmatprep.subr.mxu0 0.0
  %2723 = vmatpush1.msra.mxu0 0.0
  %2724 = vmatprep.subr.mxu0 0.0
  %2725 = vmatpush1.msra.mxu0 0.0
  %2726 = vmatprep.subr.mxu0 0.0
  %2727 = vmatpush1.msra.mxu0 0.0
  %2728 = vmatprep.subr.mxu0 0.0
  %2729 = vmatpush1.msra.mxu0 0.0
  %2730 = vmatprep.subr.mxu0 0.0
  %2731 = vmatpush1.msra.mxu0 0.0
  %2732 = vmatprep.subr.mxu0 0.0
  %2733 = vmatpush1.msra.mxu0 0.0
  %2734 = vmatprep.subr.mxu0 0.0
  %2735 = vmatpush1.msra.mxu0 0.0
  %2736 = vmatprep.subr.mxu0 0.0
  %2737 = vmatpush1.msra.mxu0 0.0
  %2738 = vmatprep.subr.mxu0 0.0
  %2739 = vmatpush1.msra.mxu0 0.0
  %2740 = vmatprep.subr.mxu0 0.0
  %2741 = vmatpush1.msra.mxu0 0.0
  %2742 = vmatprep.subr.mxu0 0.0
  %2743 = vmatpush1.msra.mxu0 0.0
  %2744 = vmatprep.subr.mxu0 0.0
  %2745 = vmatpush1.msra.mxu0 0.0
  %2746 = vmatprep.subr.mxu0 0.0
  %2747 = vmatpush1.msra.mxu0 0.0
  %2748 = vmatprep.subr.mxu0 0.0
  %2749 = vmatpush1.msra.mxu0 0.0
  %2750 = vmatprep.subr.mxu0 0.0
  %2751 = vmatpush1.msra.mxu0 0.0
  %2752 = vmatprep.subr.mxu0 0.0
  %2753 = vmatpush1.msra.mxu0 0.0
  %2754 = vmatprep.subr.mxu0 0.0
  %2755 = vmatpush1.msra.mxu0 0.0
  %2756 = vmatprep.subr.mxu0 0.0
  %2757 = vmatpush1.msra.mxu0 0.0
  %2758 = vmatprep.subr.mxu0 0.0
  %2759 = vmatpush1.msra.mxu0 0.0
  %2760 = vmatprep.subr.mxu0 0.0
  %2761 = vmatpush1.msra.mxu0 0.0
  %2762 = vmatprep.subr.mxu0 0.0
  %2763 = vmatpush1.msra.mxu0 0.0
  %2764 = vmatprep.mubr.f32.mxu0 0.0
  %2765 = vmatmul.mubr.f32.gmra.mrb[0].mxu0 %v2467
  %v2766 = vpop.f32.mrb[0].mxu0
  %v2767 = vadd.f32 0.0, %v2766
  %v2768 = vpop.f32.mrb[0].mxu0
  %2769 = vmatprep.mubr.f32.mxu0 0.0
  %2770 = vmatmul.mubr.f32.gmra.mrb[0].mxu0 %v2470
  %v2771 = vpop.f32.mrb[0].mxu0
  %v2772 = vadd.f32 0.0, %v2771
  %v2773 = vpop.f32.mrb[0].mxu0
  %2774 = vmatprep.mubr.f32.mxu0 0.0
  %2775 = vmatmul.mubr.f32.gmra.mrb[0].mxu0 %v2473
  %v2776 = vpop.f32.mrb[0].mxu0
  %v2777 = vadd.f32 0.0, %v2776
  %v2778 = vpop.f32.mrb[0].mxu0
  %2779 = vmatprep.mubr.f32.mxu0 0.0
  %2780 = vmatmul.mubr.f32.gmra.mrb[0].mxu0 %v2476
  %v2781 = vpop.f32.mrb[0].mxu0
  %v2782 = vadd.f32 0.0, %v2781
  %v2783 = vpop.f32.mrb[0].mxu0
  %2784 = vmatprep.mubr.f32.mxu0 0.0
  %2785 = vmatmul.mubr.f32.gmra.mrb[0].mxu0 %v2479
  %v2786 = vpop.f32.mrb[0].mxu0
  %v2787 = vadd.f32 0.0, %v2786
  %v2788 = vpop.f32.mrb[0].mxu0
  %2789 = vmatprep.mubr.f32.mxu0 0.0
  %2790 = vmatmul.mubr.f32.gmra.mrb[0].mxu0 %v2482
  %v2791 = vpop.f32.mrb[0].mxu0
  %v2792 = vadd.f32 0.0, %v2791
  %v2793 = vpop.f32.mrb[0].mxu0
  %2794 = vmatprep.mubr.f32.mxu0 0.0
  %2795 = vmatmul.mubr.f32.gmra.mrb[0].mxu0 %v2485
  %v2796 = vpop.f32.mrb[0].mxu0
  %v2797 = vadd.f32 0.0, %v2796
  %v2798 = vpop.f32.mrb[0].mxu0
  %2799 = vmatprep.mubr.f32.mxu0 0.0
  %2800 = vmatmul.mubr.f32.gmra.mrb[0].mxu0 %v2488
  %v2801 = vpop.f32.mrb[0].mxu0
  %v2802 = vadd.f32 0.0, %v2801
  %v2803 = vpop.f32.mrb[0].mxu0
  %2804 = vmatprep.mubr.f32.mxu0 0.0
  %2805 = vmatmul.mubr.f32.gmra.mrb[0].mxu0 %v2491
  %v2806 = vpop.f32.mrb[0].mxu0
  %v2807 = vadd.f32 0.0, %v2806
  %v2808 = vpop.f32.mrb[0].mxu0
  %2809 = vmatprep.mubr.f32.mxu0 0.0
  %2810 = vmatmul.mubr.f32.gmra.mrb[0].mxu0 %v2494
  %v2811 = vpop.f32.mrb[0].mxu0
  %v2812 = vadd.f32 0.0, %v2811
  %v2813 = vpop.f32.mrb[0].mxu0
  %2814 = vmatprep.mubr.f32.mxu0 0.0
  %2815 = vmatmul.mubr.f32.gmra.mrb[0].mxu0 %v2497
  %v2816 = vpop.f32.mrb[0].mxu0
  %v2817 = vadd.f32 0.0, %v2816
  %v2818 = vpop.f32.mrb[0].mxu0
  %2819 = vmatprep.mubr.f32.mxu0 0.0
  %2820 = vmatmul.mubr.f32.gmra.mrb[0].mxu0 %v2500
  %v2821 = vpop.f32.mrb[0].mxu0
  %v2822 = vadd.f32 0.0, %v2821
  %v2823 = vpop.f32.mrb[0].mxu0
  %2824 = vmatprep.mubr.f32.mxu0 0.0
  %2825 = vmatmul.mubr.f32.gmra.mrb[0].mxu0 %v2503
  %v2826 = vpop.f32.mrb[0].mxu0
  %v2827 = vadd.f32 0.0, %v2826
  %v2828 = vpop.f32.mrb[0].mxu0
  %2829 = vmatprep.mubr.f32.mxu0 0.0
  %2830 = vmatmul.mubr.f32.gmra.mrb[0].mxu0 %v2506
  %v2831 = vpop.f32.mrb[0].mxu0
  %v2832 = vadd.f32 0.0, %v2831
  %v2833 = vpop.f32.mrb[0].mxu0
  %2834 = vmatprep.mubr.f32.mxu0 0.0
  %2835 = vmatmul.mubr.f32.gmra.mrb[0].mxu0 %v2509
  %v2836 = vpop.f32.mrb[0].mxu0
  %v2837 = vadd.f32 0.0, %v2836
  %v2838 = vpop.f32.mrb[0].mxu0
  %2839 = vmatprep.mubr.f32.mxu0 0.0
  %2840 = vmatmul.mubr.f32.gmra.mrb[0].mxu0 %v2512
  %v2841 = vpop.f32.mrb[0].mxu0
  %v2842 = vadd.f32 0.0, %v2841
  %v2843 = vpop.f32.mrb[0].mxu0
  %2844 = vmatprep.mubr.f32.mxu0 0.0
  %2845 = vmatmul.mubr.f32.gmra.mrb[0].mxu0 %v2515
  %v2846 = vpop.f32.mrb[0].mxu0
  %v2847 = vadd.f32 0.0, %v2846
  %v2848 = vpop.f32.mrb[0].mxu0
  %2849 = vmatprep.mubr.f32.mxu0 0.0
  %2850 = vmatmul.mubr.f32.gmra.mrb[0].mxu0 %v2518
  %v2851 = vpop.f32.mrb[0].mxu0
  %v2852 = vadd.f32 0.0, %v2851
  %v2853 = vpop.f32.mrb[0].mxu0
  %2854 = vmatprep.mubr.f32.mxu0 0.0
  %2855 = vmatmul.mubr.f32.gmra.mrb[0].mxu0 %v2521
  %v2856 = vpop.f32.mrb[0].mxu0
  %v2857 = vadd.f32 0.0, %v2856
  %v2858 = vpop.f32.mrb[0].mxu0
  %2859 = vmatprep.mubr.f32.mxu0 0.0
  %2860 = vmatmul.mubr.f32.gmra.mrb[0].mxu0 %v2524
  %v2861 = vpop.f32.mrb[0].mxu0
  %v2862 = vadd.f32 0.0, %v2861
  %v2863 = vpop.f32.mrb[0].mxu0
  %2864 = vmatprep.mubr.f32.mxu0 0.0
  %2865 = vmatmul.mubr.f32.gmra.mrb[0].mxu0 %v2527
  %v2866 = vpop.f32.mrb[0].mxu0
  %v2867 = vadd.f32 0.0, %v2866
  %v2868 = vpop.f32.mrb[0].mxu0
  %2869 = vmatprep.mubr.f32.mxu0 0.0
  %2870 = vmatmul.mubr.f32.gmra.mrb[0].mxu0 %v2530
  %v2871 = vpop.f32.mrb[0].mxu0
  %v2872 = vadd.f32 0.0, %v2871
  %v2873 = vpop.f32.mrb[0].mxu0
  %2874 = vmatprep.mubr.f32.mxu0 0.0
  %2875 = vmatmul.mubr.f32.gmra.mrb[0].mxu0 %v2533
  %v2876 = vpop.f32.mrb[0].mxu0
  %v2877 = vadd.f32 0.0, %v2876
  %v2878 = vpop.f32.mrb[0].mxu0
  %2879 = vmatprep.mubr.f32.mxu0 0.0
  %2880 = vmatmul.mubr.f32.gmra.mrb[0].mxu0 %v2536
  %v2881 = vpop.f32.mrb[0].mxu0
  %v2882 = vadd.f32 0.0, %v2881
  %v2883 = vpop.f32.mrb[0].mxu0
  %2884 = vmatprep.mubr.f32.mxu0 0.0
  %2885 = vmatmul.mubr.f32.gmra.mrb[0].mxu0 %v2539
  %v2886 = vpop.f32.mrb[0].mxu0
  %v2887 = vadd.f32 0.0, %v2886
  %v2888 = vpop.f32.mrb[0].mxu0
  %2889 = vmatprep.mubr.f32.mxu0 0.0
  %2890 = vmatmul.mubr.f32.gmra.mrb[0].mxu0 %v2542
  %v2891 = vpop.f32.mrb[0].mxu0
  %v2892 = vadd.f32 0.0, %v2891
  %v2893 = vpop.f32.mrb[0].mxu0
  %2894 = vmatprep.mubr.f32.mxu0 0.0
  %2895 = vmatmul.mubr.f32.gmra.mrb[0].mxu0 %v2545
  %v2896 = vpop.f32.mrb[0].mxu0
  %v2897 = vadd.f32 0.0, %v2896
  %v2898 = vpop.f32.mrb[0].mxu0
  %2899 = vmatprep.mubr.f32.mxu0 0.0
  %2900 = vmatmul.mubr.f32.gmra.mrb[0].mxu0 %v2548
  %v2901 = vpop.f32.mrb[0].mxu0
  %v2902 = vadd.f32 0.0, %v2901
  %v2903 = vpop.f32.mrb[0].mxu0
  %2904 = vmatprep.mubr.f32.mxu0 0.0
  %2905 = vmatmul.mubr.f32.gmra.mrb[0].mxu0 %v2551
  %v2906 = vpop.f32.mrb[0].mxu0
  %v2907 = vadd.f32 0.0, %v2906
  %v2908 = vpop.f32.mrb[0].mxu0
  %2909 = vmatprep.mubr.f32.mxu0 0.0
  %2910 = vmatmul.mubr.f32.gmra.mrb[0].mxu0 %v2554
  %v2911 = vpop.f32.mrb[0].mxu0
  %v2912 = vadd.f32 0.0, %v2911
  %v2913 = vpop.f32.mrb[0].mxu0
  %2914 = vmatprep.mubr.f32.mxu0 0.0
  %2915 = vmatmul.mubr.f32.gmra.mrb[0].mxu0 %v2557
  %v2916 = vpop.f32.mrb[0].mxu0
  %v2917 = vadd.f32 0.0, %v2916
  %v2918 = vpop.f32.mrb[0].mxu0
  %2919 = vmatprep.mubr.f32.mxu0 0.0
  %2920 = vmatmul.mubr.f32.gmra.mrb[0].mxu0 %v2560
  %v2921 = vpop.f32.mrb[0].mxu0
  %v2922 = vadd.f32 0.0, %v2921
  %v2923 = vpop.f32.mrb[0].mxu0
  %2924 = vmatprep.mubr.f32.mxu0 0.0
  %2925 = vmatmul.mubr.f32.gmra.mrb[0].mxu0 %v2563
  %v2926 = vpop.f32.mrb[0].mxu0
  %v2927 = vadd.f32 0.0, %v2926
  %v2928 = vpop.f32.mrb[0].mxu0
  %2929 = vmatprep.mubr.f32.mxu0 0.0
  %2930 = vmatmul.mubr.f32.gmra.mrb[0].mxu0 %v2566
  %v2931 = vpop.f32.mrb[0].mxu0
  %v2932 = vadd.f32 0.0, %v2931
  %v2933 = vpop.f32.mrb[0].mxu0
  %2934 = vmatprep.mubr.f32.mxu0 0.0
  %2935 = vmatmul.mubr.f32.gmra.mrb[0].mxu0 %v2569
  %v2936 = vpop.f32.mrb[0].mxu0
  %v2937 = vadd.f32 0.0, %v2936
  %v2938 = vpop.f32.mrb[0].mxu0
  %2939 = vmatprep.mubr.f32.mxu0 0.0
  %2940 = vmatmul.mubr.f32.gmra.mrb[0].mxu0 %v2572
  %v2941 = vpop.f32.mrb[0].mxu0
  %v2942 = vadd.f32 0.0, %v2941
  %v2943 = vpop.f32.mrb[0].mxu0
  %2944 = vmatprep.mubr.f32.mxu0 0.0
  %2945 = vmatmul.mubr.f32.gmra.mrb[0].mxu0 %v2575
  %v2946 = vpop.f32.mrb[0].mxu0
  %v2947 = vadd.f32 0.0, %v2946
  %v2948 = vpop.f32.mrb[0].mxu0
  %2949 = vmatprep.mubr.f32.mxu0 0.0
  %2950 = vmatmul.mubr.f32.gmra.mrb[0].mxu0 %v2578
  %v2951 = vpop.f32.mrb[0].mxu0
  %v2952 = vadd.f32 0.0, %v2951
  %v2953 = vpop.f32.mrb[0].mxu0
  %2954 = vmatprep.mubr.f32.mxu0 0.0
  %2955 = vmatmul.mubr.f32.gmra.mrb[0].mxu0 %v2581
  %v2956 = vpop.f32.mrb[0].mxu0
  %v2957 = vadd.f32 0.0, %v2956
  %v2958 = vpop.f32.mrb[0].mxu0
  %2959 = vmatprep.mubr.f32.mxu0 0.0
  %2960 = vmatmul.mubr.f32.gmra.mrb[0].mxu0 %v2584
  %v2961 = vpop.f32.mrb[0].mxu0
  %v2962 = vadd.f32 0.0, %v2961
  %v2963 = vpop.f32.mrb[0].mxu0
  %2964 = vmatprep.mubr.f32.mxu0 0.0
  %2965 = vmatmul.mubr.f32.gmra.mrb[0].mxu0 %v2587
  %v2966 = vpop.f32.mrb[0].mxu0
  %v2967 = vadd.f32 0.0, %v2966
  %v2968 = vpop.f32.mrb[0].mxu0
  %2969 = vmatprep.mubr.f32.mxu0 0.0
  %2970 = vmatmul.mubr.f32.gmra.mrb[0].mxu0 %v2590
  %v2971 = vpop.f32.mrb[0].mxu0
  %v2972 = vadd.f32 0.0, %v2971
  %v2973 = vpop.f32.mrb[0].mxu0
  %2974 = vmatprep.mubr.f32.mxu0 0.0
  %2975 = vmatmul.mubr.f32.gmra.mrb[0].mxu0 %v2593
  %v2976 = vpop.f32.mrb[0].mxu0
  %v2977 = vadd.f32 0.0, %v2976
  %v2978 = vpop.f32.mrb[0].mxu0
  %2979 = vmatprep.mubr.f32.mxu0 0.0
  %2980 = vmatmul.mubr.f32.gmra.mrb[0].mxu0 %v2596
  %v2981 = vpop.f32.mrb[0].mxu0
  %v2982 = vadd.f32 0.0, %v2981
  %v2983 = vpop.f32.mrb[0].mxu0
  %2984 = vmatprep.mubr.f32.mxu0 0.0
  %2985 = vmatmul.mubr.f32.gmra.mrb[0].mxu0 %v2599
  %v2986 = vpop.f32.mrb[0].mxu0
  %v2987 = vadd.f32 0.0, %v2986
  %v2988 = vpop.f32.mrb[0].mxu0
  %2989 = vmatprep.mubr.f32.mxu0 0.0
  %2990 = vmatmul.mubr.f32.gmra.mrb[0].mxu0 %v2602
  %v2991 = vpop.f32.mrb[0].mxu0
  %v2992 = vadd.f32 0.0, %v2991
  %v2993 = vpop.f32.mrb[0].mxu0
  %2994 = vmatprep.mubr.f32.mxu0 0.0
  %2995 = vmatmul.mubr.f32.gmra.mrb[0].mxu0 %v2605
  %v2996 = vpop.f32.mrb[0].mxu0
  %v2997 = vadd.f32 0.0, %v2996
  %v2998 = vpop.f32.mrb[0].mxu0
  %2999 = vmatprep.mubr.f32.mxu0 0.0
  %3000 = vmatmul.mubr.f32.gmra.mrb[0].mxu0 %v2608
  %v3001 = vpop.f32.mrb[0].mxu0
  %v3002 = vadd.f32 0.0, %v3001
  %v3003 = vpop.f32.mrb[0].mxu0
  %3004 = vmatprep.mubr.f32.mxu0 0.0
  %3005 = vmatmul.mubr.f32.gmra.mrb[0].mxu0 %v2611
  %v3006 = vpop.f32.mrb[0].mxu0
  %v3007 = vadd.f32 0.0, %v3006
  %v3008 = vpop.f32.mrb[0].mxu0
  %3009 = vmatprep.mubr.f32.mxu0 0.0
  %3010 = vmatmul.mubr.f32.gmra.mrb[0].mxu0 %v2614
  %v3011 = vpop.f32.mrb[0].mxu0
  %v3012 = vadd.f32 0.0, %v3011
  %v3013 = vpop.f32.mrb[0].mxu0
  %3014 = vmatprep.mubr.f32.mxu0 0.0
  %3015 = vmatmul.mubr.f32.gmra.mrb[0].mxu0 %v2617
  %v3016 = vpop.f32.mrb[0].mxu0
  %v3017 = vadd.f32 0.0, %v3016
  %v3018 = vpop.f32.mrb[0].mxu0
  %3019 = vmatprep.mubr.f32.mxu0 0.0
  %3020 = vmatmul.mubr.f32.gmra.mrb[0].mxu0 %v2620
  %v3021 = vpop.f32.mrb[0].mxu0
  %v3022 = vadd.f32 0.0, %v3021
  %v3023 = vpop.f32.mrb[0].mxu0
  %3024 = vmatprep.mubr.f32.mxu0 0.0
  %3025 = vmatmul.mubr.f32.gmra.mrb[0].mxu0 %v2623
  %v3026 = vpop.f32.mrb[0].mxu0
  %v3027 = vadd.f32 0.0, %v3026
  %v3028 = vpop.f32.mrb[0].mxu0
  %3029 = vmatprep.mubr.f32.mxu0 0.0
  %3030 = vmatmul.mubr.f32.gmra.mrb[0].mxu0 %v2626
  %v3031 = vpop.f32.mrb[0].mxu0
  %v3032 = vadd.f32 0.0, %v3031
  %v3033 = vpop.f32.mrb[0].mxu0
  %3034 = vmatprep.mubr.f32.mxu0 0.0
  %3035 = vmatmul.mubr.f32.gmra.mrb[0].mxu0 %v2629
  %v3036 = vpop.f32.mrb[0].mxu0
  %v3037 = vadd.f32 0.0, %v3036
  %v3038 = vpop.f32.mrb[0].mxu0
  %3039 = vmatprep.mubr.f32.mxu0 0.0
  %3040 = vmatmul.mubr.f32.gmra.mrb[0].mxu0 %v2632
  %v3041 = vpop.f32.mrb[0].mxu0
  %v3042 = vadd.f32 0.0, %v3041
  %v3043 = vpop.f32.mrb[0].mxu0
  %3044 = vmatprep.mubr.f32.mxu0 0.0
  %3045 = vmatmul.mubr.f32.gmra.mrb[0].mxu0 %v2635
  %v3046 = vpop.f32.mrb[0].mxu0
  %v3047 = vadd.f32 0.0, %v3046
  %v3048 = vpop.f32.mrb[0].mxu0
  %3049 = vmatprep.mubr.f32.mxu0 0.0
  %3050 = vmatmul.mubr.f32.gmra.mrb[0].mxu0 %v2638
  %v3051 = vpop.f32.mrb[0].mxu0
  %v3052 = vadd.f32 0.0, %v3051
  %v3053 = vpop.f32.mrb[0].mxu0
  %3054 = vmatprep.mubr.f32.mxu0 0.0
  %3055 = vmatmul.mubr.f32.gmra.mrb[0].mxu0 %v2641
  %v3056 = vpop.f32.mrb[0].mxu0
  %v3057 = vadd.f32 0.0, %v3056
  %v3058 = vpop.f32.mrb[0].mxu0
  %3059 = vmatprep.mubr.f32.mxu0 0.0
  %3060 = vmatmul.mubr.f32.gmra.mrb[0].mxu0 %v2644
  %v3061 = vpop.f32.mrb[0].mxu0
  %v3062 = vadd.f32 0.0, %v3061
  %v3063 = vpop.f32.mrb[0].mxu0
  %3064 = vmatprep.mubr.f32.mxu0 0.0
  %3065 = vmatmul.mubr.f32.gmra.mrb[0].mxu0 %v2647
  %v3066 = vpop.f32.mrb[0].mxu0
  %v3067 = vadd.f32 0.0, %v3066
  %v3068 = vpop.f32.mrb[0].mxu0
  %3069 = vmatprep.mubr.f32.mxu0 0.0
  %3070 = vmatmul.mubr.f32.gmra.mrb[0].mxu0 %v2650
  %v3071 = vpop.f32.mrb[0].mxu0
  %v3072 = vadd.f32 0.0, %v3071
  %v3073 = vpop.f32.mrb[0].mxu0
  %3074 = vmatprep.mubr.f32.mxu0 0.0
  %3075 = vmatmul.mubr.f32.gmra.mrb[0].mxu0 %v2653
  %v3076 = vpop.f32.mrb[0].mxu0
  %v3077 = vadd.f32 0.0, %v3076
  %v3078 = vpop.f32.mrb[0].mxu0
  %3079 = vmatprep.mubr.f32.mxu0 0.0
  %3080 = vmatmul.mubr.f32.gmra.mrb[0].mxu0 %v2656
  %v3081 = vpop.f32.mrb[0].mxu0
  %v3082 = vadd.f32 0.0, %v3081
  %v3083 = vpop.f32.mrb[0].mxu0
  %3084 = vmatprep.mubr.f32.mxu0 0.0
  %3085 = vmatmul.mubr.f32.gmra.mrb[0].mxu0 %v2659
  %v3086 = vpop.f32.mrb[0].mxu0
  %v3087 = vadd.f32 0.0, %v3086
  %v3088 = vpop.f32.mrb[0].mxu0
  %3089 = vmatprep.mubr.f32.mxu0 0.0
  %3090 = vmatmul.mubr.f32.gmra.mrb[0].mxu0 %v2662
  %v3091 = vpop.f32.mrb[0].mxu0
  %v3092 = vadd.f32 0.0, %v3091
  %v3093 = vpop.f32.mrb[0].mxu0
  %3094 = vmatprep.mubr.f32.mxu0 0.0
  %3095 = vmatmul.mubr.f32.gmra.mrb[0].mxu0 %v2665
  %v3096 = vpop.f32.mrb[0].mxu0
  %v3097 = vadd.f32 0.0, %v3096
  %v3098 = vpop.f32.mrb[0].mxu0
  %3099 = vmatprep.mubr.f32.mxu0 0.0
  %3100 = vmatmul.mubr.f32.gmra.mrb[0].mxu0 %v2668
  %v3101 = vpop.f32.mrb[0].mxu0
  %v3102 = vadd.f32 0.0, %v3101
  %v3103 = vpop.f32.mrb[0].mxu0
  %3104 = vmatprep.mubr.f32.mxu0 0.0
  %3105 = vmatmul.mubr.f32.gmra.mrb[0].mxu0 %v2671
  %v3106 = vpop.f32.mrb[0].mxu0
  %v3107 = vadd.f32 0.0, %v3106
  %v3108 = vpop.f32.mrb[0].mxu0
  %3109 = vmatprep.mubr.f32.mxu0 0.0
  %3110 = vmatmul.mubr.f32.gmra.mrb[0].mxu0 %v2674
  %v3111 = vpop.f32.mrb[0].mxu0
  %v3112 = vadd.f32 0.0, %v3111
  %v3113 = vpop.f32.mrb[0].mxu0
  %3114 = vmatprep.mubr.f32.mxu0 0.0
  %3115 = vmatmul.mubr.f32.gmra.mrb[0].mxu0 %v2677
  %v3116 = vpop.f32.mrb[0].mxu0
  %v3117 = vadd.f32 0.0, %v3116
  %v3118 = vpop.f32.mrb[0].mxu0
  %3119 = vmatprep.mubr.f32.mxu0 0.0
  %3120 = vmatmul.mubr.f32.gmra.mrb[0].mxu0 %v2680
  %v3121 = vpop.f32.mrb[0].mxu0
  %v3122 = vadd.f32 0.0, %v3121
  %v3123 = vpop.f32.mrb[0].mxu0
  %3124 = vmatprep.mubr.f32.mxu0 0.0
  %3125 = vmatmul.mubr.f32.gmra.mrb[0].mxu0 %v2683
  %v3126 = vpop.f32.mrb[0].mxu0
  %v3127 = vadd.f32 0.0, %v3126
  %v3128 = vpop.f32.mrb[0].mxu0
  %3129 = vmatprep.mubr.f32.mxu0 0.0
  %3130 = vmatmul.mubr.f32.gmra.mrb[0].mxu0 %v2686
  %v3131 = vpop.f32.mrb[0].mxu0
  %v3132 = vadd.f32 0.0, %v3131
  %v3133 = vpop.f32.mrb[0].mxu0
  %3134 = vmatprep.mubr.f32.mxu0 0.0
  %3135 = vmatmul.mubr.f32.gmra.mrb[0].mxu0 %v2689
  %v3136 = vpop.f32.mrb[0].mxu0
  %v3137 = vadd.f32 0.0, %v3136
  %v3138 = vpop.f32.mrb[0].mxu0
  %3139 = vmatprep.mubr.f32.mxu0 0.0
  %3140 = vmatmul.mubr.f32.gmra.mrb[0].mxu0 %v2692
  %v3141 = vpop.f32.mrb[0].mxu0
  %v3142 = vadd.f32 0.0, %v3141
  %v3143 = vpop.f32.mrb[0].mxu0
  %3144 = vmatprep.mubr.f32.mxu0 0.0
  %3145 = vmatmul.mubr.f32.gmra.mrb[0].mxu0 %v2695
  %v3146 = vpop.f32.mrb[0].mxu0
  %v3147 = vadd.f32 0.0, %v3146
  %v3148 = vpop.f32.mrb[0].mxu0
  %3149 = vdwg.mxu0
  %v3150 = vadd.f32 %v2310, %v2767
  %v3151 = vadd.f32 %v2311, %v2772
  %v3152 = vadd.f32 %v2312, %v2777
  %v3153 = vadd.f32 %v2313, %v2782
  %v3154 = vadd.f32 %v2314, %v2787
  %v3155 = vadd.f32 %v2315, %v2792
  %v3156 = vadd.f32 %v2316, %v2797
  %v3157 = vadd.f32 %v2317, %v2802
  %v3158 = vadd.f32 %v2318, %v2807
  %v3159 = vadd.f32 %v2319, %v2812
  %v3160 = vadd.f32 %v2320, %v2817
  %v3161 = vadd.f32 %v2321, %v2822
  %v3162 = vadd.f32 %v2322, %v2827
  %v3163 = vadd.f32 %v2323, %v2832
  %v3164 = vadd.f32 %v2324, %v2837
  %v3165 = vadd.f32 %v2325, %v2842
  %v3166 = vadd.f32 %v2326, %v2847
  %v3167 = vadd.f32 %v2327, %v2852
  %v3168 = vadd.f32 %v2328, %v2857
  %v3169 = vadd.f32 %v2329, %v2862
  %v3170 = vadd.f32 %v2330, %v2867
  %v3171 = vadd.f32 %v2331, %v2872
  %v3172 = vadd.f32 %v2332, %v2877
  %v3173 = vadd.f32 %v2333, %v2882
  %v3174 = vadd.f32 %v2334, %v2887
  %v3175 = vadd.f32 %v2335, %v2892
  %v3176 = vadd.f32 %v2336, %v2897
  %v3177 = vadd.f32 %v2337, %v2902
  %v3178 = vadd.f32 %v2338, %v2907
  %v3179 = vadd.f32 %v2339, %v2912
  %v3180 = vadd.f32 %v2340, %v2917
  %v3181 = vadd.f32 %v2341, %v2922
  %v3182 = vadd.f32 %v2342, %v2927
  %v3183 = vadd.f32 %v2343, %v2932
  %v3184 = vadd.f32 %v2344, %v2937
  %v3185 = vadd.f32 %v2345, %v2942
  %v3186 = vadd.f32 %v2346, %v2947
  %v3187 = vadd.f32 %v2347, %v2952
  %v3188 = vadd.f32 %v2348, %v2957
  %v3189 = vadd.f32 %v2349, %v2962
  %v3190 = vadd.f32 %v2350, %v2967
  %v3191 = vadd.f32 %v2351, %v2972
  %v3192 = vadd.f32 %v2352, %v2977
  %v3193 = vadd.f32 %v2353, %v2982
  %v3194 = vadd.f32 %v2354, %v2987
  %v3195 = vadd.f32 %v2355, %v2992
  %v3196 = vadd.f32 %v2356, %v2997
  %v3197 = vadd.f32 %v2357, %v3002
  %v3198 = vadd.f32 %v2358, %v3007
  %v3199 = vadd.f32 %v2359, %v3012
  %v3200 = vadd.f32 %v2360, %v3017
  %v3201 = vadd.f32 %v2361, %v3022
  %v3202 = vadd.f32 %v2362, %v3027
  %v3203 = vadd.f32 %v2363, %v3032
  %v3204 = vadd.f32 %v2364, %v3037
  %v3205 = vadd.f32 %v2365, %v3042
  %v3206 = vadd.f32 %v2366, %v3047
  %v3207 = vadd.f32 %v2367, %v3052
  %v3208 = vadd.f32 %v2368, %v3057
  %v3209 = vadd.f32 %v2369, %v3062
  %v3210 = vadd.f32 %v2370, %v3067
  %v3211 = vadd.f32 %v2371, %v3072
  %v3212 = vadd.f32 %v2372, %v3077
  %v3213 = vadd.f32 %v2373, %v3082
  %v3214 = vadd.f32 %v2374, %v3087
  %v3215 = vadd.f32 %v2375, %v3092
  %v3216 = vadd.f32 %v2376, %v3097
  %v3217 = vadd.f32 %v2377, %v3102
  %v3218 = vadd.f32 %v2378, %v3107
  %v3219 = vadd.f32 %v2379, %v3112
  %v3220 = vadd.f32 %v2380, %v3117
  %v3221 = vadd.f32 %v2381, %v3122
  %v3222 = vadd.f32 %v2382, %v3127
  %v3223 = vadd.f32 %v2383, %v3132
  %v3224 = vadd.f32 %v2384, %v3137
  %v3225 = vadd.f32 %v2385, %v3142
  %v3226 = vadd.f32 %v2386, %v3147
  %v3227 = vld [vmem:[%s0 + $0x13] sm:$0xff]
  %v3228 = vld [vmem:[%s0 + $0x1b] sm:$0xff]
  %v3229 = vld [vmem:[%s0 + $0x23] sm:$0xff]
  %v3230 = vld [vmem:[%s0 + $0x2b] sm:$0xff]
  %v3231 = vld [vmem:[%s0 + $0x33] sm:$0xff]
  %v3232 = vld [vmem:[%s0 + $0x3b] sm:$0xff]
  %v3233 = vld [vmem:[%s0 + $0x43] sm:$0xff]
  %v3234 = vld [vmem:[%s0 + $0x4b] sm:$0xff]
  %v3235 = vld [vmem:[%s0 + $0x53] sm:$0xff]
  %v3236 = vld [vmem:[%s0 + $0x5b] sm:$0xff]
  %v3237 = vld [vmem:[%s0 + $0x63] sm:$0xff]
  %v3238 = vld [vmem:[%s0 + $0x6b] sm:$0xff]
  %v3239 = vld [vmem:[%s0 + $0x73] sm:$0xff]
  %v3240 = vld [vmem:[%s0 + $0x7b] sm:$0xff]
  %v3241 = vld [vmem:[%s0 + $0x83] sm:$0xff]
  %v3242 = vld [vmem:[%s0 + $0x8b] sm:$0xff]
  %v3243 = vld [vmem:[%s0 + $0x93] sm:$0xff]
  %v3244 = vld [vmem:[%s0 + $0x9b] sm:$0xff]
  %v3245 = vld [vmem:[%s0 + $0xa3] sm:$0xff]
  %v3246 = vld [vmem:[%s0 + $0xab] sm:$0xff]
  %v3247 = vld [vmem:[%s0 + $0xb3] sm:$0xff]
  %v3248 = vld [vmem:[%s0 + $0xbb] sm:$0xff]
  %v3249 = vld [vmem:[%s0 + $0xc3] sm:$0xff]
  %v3250 = vld [vmem:[%s0 + $0xcb] sm:$0xff]
  %v3251 = vld [vmem:[%s0 + $0xd3] sm:$0xff]
  %v3252 = vld [vmem:[%s0 + $0xdb] sm:$0xff]
  %v3253 = vld [vmem:[%s0 + $0xe3] sm:$0xff]
  %v3254 = vld [vmem:[%s0 + $0xeb] sm:$0xff]
  %v3255 = vld [vmem:[%s0 + $0xf3] sm:$0xff]
  %v3256 = vld [vmem:[%s0 + $0xfb] sm:$0xff]
  %v3257 = vld [vmem:[%s0 + $0x103] sm:$0xff]
  %v3258 = vld [vmem:[%s0 + $0x10b] sm:$0xff]
  %v3259 = vld [vmem:[%s0 + $0x113] sm:$0xff]
  %v3260 = vld [vmem:[%s0 + $0x11b] sm:$0xff]
  %v3261 = vld [vmem:[%s0 + $0x123] sm:$0xff]
  %v3262 = vld [vmem:[%s0 + $0x12b] sm:$0xff]
  %v3263 = vld [vmem:[%s0 + $0x133] sm:$0xff]
  %v3264 = vld [vmem:[%s0 + $0x13b] sm:$0xff]
  %v3265 = vld [vmem:[%s0 + $0x143] sm:$0xff]
  %v3266 = vld [vmem:[%s0 + $0x14b] sm:$0xff]
  %v3267 = vld [vmem:[%s0 + $0x153] sm:$0xff]
  %v3268 = vld [vmem:[%s0 + $0x15b] sm:$0xff]
  %v3269 = vld [vmem:[%s0 + $0x163] sm:$0xff]
  %v3270 = vld [vmem:[%s0 + $0x16b] sm:$0xff]
  %v3271 = vld [vmem:[%s0 + $0x173] sm:$0xff]
  %v3272 = vld [vmem:[%s0 + $0x17b] sm:$0xff]
  %v3273 = vld [vmem:[%s0 + $0x183] sm:$0xff]
  %v3274 = vld [vmem:[%s0 + $0x18b] sm:$0xff]
  %v3275 = vld [vmem:[%s0 + $0x193] sm:$0xff]
  %v3276 = vld [vmem:[%s0 + $0x19b] sm:$0xff]
  %v3277 = vld [vmem:[%s0 + $0x1a3] sm:$0xff]
  %v3278 = vld [vmem:[%s0 + $0x1ab] sm:$0xff]
  %v3279 = vld [vmem:[%s0 + $0x1b3] sm:$0xff]
  %v3280 = vld [vmem:[%s0 + $0x1bb] sm:$0xff]
  %v3281 = vld [vmem:[%s0 + $0x1c3] sm:$0xff]
  %v3282 = vld [vmem:[%s0 + $0x1cb] sm:$0xff]
  %v3283 = vld [vmem:[%s0 + $0x1d3] sm:$0xff]
  %v3284 = vld [vmem:[%s0 + $0x1db] sm:$0xff]
  %v3285 = vld [vmem:[%s0 + $0x1e3] sm:$0xff]
  %v3286 = vld [vmem:[%s0 + $0x1eb] sm:$0xff]
  %v3287 = vld [vmem:[%s0 + $0x1f3] sm:$0xff]
  %v3288 = vld [vmem:[%s0 + $0x1fb] sm:$0xff]
  %v3289 = vld [vmem:[%s0 + $0x203] sm:$0xff]
  %v3290 = vld [vmem:[%s0 + $0x20b] sm:$0xff]
  %v3291 = vld [vmem:[%s0 + $0x213] sm:$0xff]
  %v3292 = vld [vmem:[%s0 + $0x21b] sm:$0xff]
  %v3293 = vld [vmem:[%s0 + $0x223] sm:$0xff]
  %v3294 = vld [vmem:[%s0 + $0x22b] sm:$0xff]
  %v3295 = vld [vmem:[%s0 + $0x233] sm:$0xff]
  %v3296 = vld [vmem:[%s0 + $0x23b] sm:$0xff]
  %v3297 = vld [vmem:[%s0 + $0x243] sm:$0xff]
  %v3298 = vld [vmem:[%s0 + $0x24b] sm:$0xff]
  %v3299 = vld [vmem:[%s0 + $0x253] sm:$0xff]
  %v3300 = vld [vmem:[%s0 + $0x25b] sm:$0xff]
  %v3301 = vld [vmem:[%s0 + $0x263] sm:$0xff]
  %v3302 = vld [vmem:[%s0 + $0x26b] sm:$0xff]
  %v3303 = vld [vmem:[%s0 + $0x273] sm:$0xff]
  %s3304 = scalar_lea.vmem %s1, 16
  %v3305 = vld [vmem:[%s3304] sm:$0xf]
  %v3307 = vsel %vm177, %v3227, 0
  %v3310 = vsel %vm177, %v3228, 0
  %v3313 = vsel %vm177, %v3229, 0
  %v3316 = vsel %vm177, %v3230, 0
  %v3319 = vsel %vm177, %v3231, 0
  %v3322 = vsel %vm177, %v3232, 0
  %v3325 = vsel %vm177, %v3233, 0
  %v3328 = vsel %vm177, %v3234, 0
  %v3331 = vsel %vm177, %v3235, 0
  %v3334 = vsel %vm177, %v3236, 0
  %v3337 = vsel %vm177, %v3237, 0
  %v3340 = vsel %vm177, %v3238, 0
  %v3343 = vsel %vm177, %v3239, 0
  %v3346 = vsel %vm177, %v3240, 0
  %v3349 = vsel %vm177, %v3241, 0
  %v3352 = vsel %vm177, %v3242, 0
  %v3355 = vsel %vm177, %v3243, 0
  %v3358 = vsel %vm177, %v3244, 0
  %v3361 = vsel %vm177, %v3245, 0
  %v3364 = vsel %vm177, %v3246, 0
  %v3367 = vsel %vm177, %v3247, 0
  %v3370 = vsel %vm177, %v3248, 0
  %v3373 = vsel %vm177, %v3249, 0
  %v3376 = vsel %vm177, %v3250, 0
  %v3379 = vsel %vm177, %v3251, 0
  %v3382 = vsel %vm177, %v3252, 0
  %v3385 = vsel %vm177, %v3253, 0
  %v3388 = vsel %vm177, %v3254, 0
  %v3391 = vsel %vm177, %v3255, 0
  %v3394 = vsel %vm177, %v3256, 0
  %v3397 = vsel %vm177, %v3257, 0
  %v3400 = vsel %vm177, %v3258, 0
  %v3403 = vsel %vm177, %v3259, 0
  %v3406 = vsel %vm177, %v3260, 0
  %v3409 = vsel %vm177, %v3261, 0
  %v3412 = vsel %vm177, %v3262, 0
  %v3415 = vsel %vm177, %v3263, 0
  %v3418 = vsel %vm177, %v3264, 0
  %v3421 = vsel %vm177, %v3265, 0
  %v3424 = vsel %vm177, %v3266, 0
  %v3427 = vsel %vm177, %v3267, 0
  %v3430 = vsel %vm177, %v3268, 0
  %v3433 = vsel %vm177, %v3269, 0
  %v3436 = vsel %vm177, %v3270, 0
  %v3439 = vsel %vm177, %v3271, 0
  %v3442 = vsel %vm177, %v3272, 0
  %v3445 = vsel %vm177, %v3273, 0
  %v3448 = vsel %vm177, %v3274, 0
  %v3451 = vsel %vm177, %v3275, 0
  %v3454 = vsel %vm177, %v3276, 0
  %v3457 = vsel %vm177, %v3277, 0
  %v3460 = vsel %vm177, %v3278, 0
  %v3463 = vsel %vm177, %v3279, 0
  %v3466 = vsel %vm177, %v3280, 0
  %v3469 = vsel %vm177, %v3281, 0
  %v3472 = vsel %vm177, %v3282, 0
  %v3475 = vsel %vm177, %v3283, 0
  %v3478 = vsel %vm177, %v3284, 0
  %v3481 = vsel %vm177, %v3285, 0
  %v3484 = vsel %vm177, %v3286, 0
  %v3487 = vsel %vm177, %v3287, 0
  %v3490 = vsel %vm177, %v3288, 0
  %v3493 = vsel %vm177, %v3289, 0
  %v3496 = vsel %vm177, %v3290, 0
  %v3499 = vsel %vm177, %v3291, 0
  %v3502 = vsel %vm177, %v3292, 0
  %v3505 = vsel %vm177, %v3293, 0
  %v3508 = vsel %vm177, %v3294, 0
  %v3511 = vsel %vm177, %v3295, 0
  %v3514 = vsel %vm177, %v3296, 0
  %v3517 = vsel %vm177, %v3297, 0
  %v3520 = vsel %vm177, %v3298, 0
  %v3523 = vsel %vm177, %v3299, 0
  %v3526 = vsel %vm177, %v3300, 0
  %v3529 = vsel %vm177, %v3301, 0
  %v3532 = vsel %vm177, %v3302, 0
  %v3535 = vsel %vm177, %v3303, 0
  %v3538 = vsel %vm409, %v3305, 0
  %3540 = vmatprep.subr.mxu0 0.0
  %3541 = vmatpush1.msra.mxu0 %v3538
  %3542 = vmatprep.subr.mxu0 0.0
  %3543 = vmatpush1.msra.mxu0 0.0
  %3544 = vmatprep.subr.mxu0 0.0
  %3545 = vmatpush1.msra.mxu0 0.0
  %3546 = vmatprep.subr.mxu0 0.0
  %3547 = vmatpush1.msra.mxu0 0.0
  %3548 = vmatprep.subr.mxu0 0.0
  %3549 = vmatpush1.msra.mxu0 0.0
  %3550 = vmatprep.subr.mxu0 0.0
  %3551 = vmatpush1.msra.mxu0 0.0
  %3552 = vmatprep.subr.mxu0 0.0
  %3553 = vmatpush1.msra.mxu0 0.0
  %3554 = vmatprep.subr.mxu0 0.0
  %3555 = vmatpush1.msra.mxu0 0.0
  %3556 = vmatprep.subr.mxu0 0.0
  %3557 = vmatpush1.msra.mxu0 0.0
  %3558 = vmatprep.subr.mxu0 0.0
  %3559 = vmatpush1.msra.mxu0 0.0
  %3560 = vmatprep.subr.mxu0 0.0
  %3561 = vmatpush1.msra.mxu0 0.0
  %3562 = vmatprep.subr.mxu0 0.0
  %3563 = vmatpush1.msra.mxu0 0.0
  %3564 = vmatprep.subr.mxu0 0.0
  %3565 = vmatpush1.msra.mxu0 0.0
  %3566 = vmatprep.subr.mxu0 0.0
  %3567 = vmatpush1.msra.mxu0 0.0
  %3568 = vmatprep.subr.mxu0 0.0
  %3569 = vmatpush1.msra.mxu0 0.0
  %3570 = vmatprep.subr.mxu0 0.0
  %3571 = vmatpush1.msra.mxu0 0.0
  %3572 = vmatprep.subr.mxu0 0.0
  %3573 = vmatpush1.msra.mxu0 0.0
  %3574 = vmatprep.subr.mxu0 0.0
  %3575 = vmatpush1.msra.mxu0 0.0
  %3576 = vmatprep.subr.mxu0 0.0
  %3577 = vmatpush1.msra.mxu0 0.0
  %3578 = vmatprep.subr.mxu0 0.0
  %3579 = vmatpush1.msra.mxu0 0.0
  %3580 = vmatprep.subr.mxu0 0.0
  %3581 = vmatpush1.msra.mxu0 0.0
  %3582 = vmatprep.subr.mxu0 0.0
  %3583 = vmatpush1.msra.mxu0 0.0
  %3584 = vmatprep.subr.mxu0 0.0
  %3585 = vmatpush1.msra.mxu0 0.0
  %3586 = vmatprep.subr.mxu0 0.0
  %3587 = vmatpush1.msra.mxu0 0.0
  %3588 = vmatprep.subr.mxu0 0.0
  %3589 = vmatpush1.msra.mxu0 0.0
  %3590 = vmatprep.subr.mxu0 0.0
  %3591 = vmatpush1.msra.mxu0 0.0
  %3592 = vmatprep.subr.mxu0 0.0
  %3593 = vmatpush1.msra.mxu0 0.0
  %3594 = vmatprep.subr.mxu0 0.0
  %3595 = vmatpush1.msra.mxu0 0.0
  %3596 = vmatprep.subr.mxu0 0.0
  %3597 = vmatpush1.msra.mxu0 0.0
  %3598 = vmatprep.subr.mxu0 0.0
  %3599 = vmatpush1.msra.mxu0 0.0
  %3600 = vmatprep.subr.mxu0 0.0
  %3601 = vmatpush1.msra.mxu0 0.0
  %3602 = vmatprep.subr.mxu0 0.0
  %3603 = vmatpush1.msra.mxu0 0.0
  %3604 = vmatprep.mubr.f32.mxu0 0.0
  %3605 = vmatmul.mubr.f32.gmra.mrb[0].mxu0 %v3307
  %v3606 = vpop.f32.mrb[0].mxu0
  %v3607 = vadd.f32 0.0, %v3606
  %v3608 = vpop.f32.mrb[0].mxu0
  %3609 = vmatprep.mubr.f32.mxu0 0.0
  %3610 = vmatmul.mubr.f32.gmra.mrb[0].mxu0 %v3310
  %v3611 = vpop.f32.mrb[0].mxu0
  %v3612 = vadd.f32 0.0, %v3611
  %v3613 = vpop.f32.mrb[0].mxu0
  %3614 = vmatprep.mubr.f32.mxu0 0.0
  %3615 = vmatmul.mubr.f32.gmra.mrb[0].mxu0 %v3313
  %v3616 = vpop.f32.mrb[0].mxu0
  %v3617 = vadd.f32 0.0, %v3616
  %v3618 = vpop.f32.mrb[0].mxu0
  %3619 = vmatprep.mubr.f32.mxu0 0.0
  %3620 = vmatmul.mubr.f32.gmra.mrb[0].mxu0 %v3316
  %v3621 = vpop.f32.mrb[0].mxu0
  %v3622 = vadd.f32 0.0, %v3621
  %v3623 = vpop.f32.mrb[0].mxu0
  %3624 = vmatprep.mubr.f32.mxu0 0.0
  %3625 = vmatmul.mubr.f32.gmra.mrb[0].mxu0 %v3319
  %v3626 = vpop.f32.mrb[0].mxu0
  %v3627 = vadd.f32 0.0, %v3626
  %v3628 = vpop.f32.mrb[0].mxu0
  %3629 = vmatprep.mubr.f32.mxu0 0.0
  %3630 = vmatmul.mubr.f32.gmra.mrb[0].mxu0 %v3322
  %v3631 = vpop.f32.mrb[0].mxu0
  %v3632 = vadd.f32 0.0, %v3631
  %v3633 = vpop.f32.mrb[0].mxu0
  %3634 = vmatprep.mubr.f32.mxu0 0.0
  %3635 = vmatmul.mubr.f32.gmra.mrb[0].mxu0 %v3325
  %v3636 = vpop.f32.mrb[0].mxu0
  %v3637 = vadd.f32 0.0, %v3636
  %v3638 = vpop.f32.mrb[0].mxu0
  %3639 = vmatprep.mubr.f32.mxu0 0.0
  %3640 = vmatmul.mubr.f32.gmra.mrb[0].mxu0 %v3328
  %v3641 = vpop.f32.mrb[0].mxu0
  %v3642 = vadd.f32 0.0, %v3641
  %v3643 = vpop.f32.mrb[0].mxu0
  %3644 = vmatprep.mubr.f32.mxu0 0.0
  %3645 = vmatmul.mubr.f32.gmra.mrb[0].mxu0 %v3331
  %v3646 = vpop.f32.mrb[0].mxu0
  %v3647 = vadd.f32 0.0, %v3646
  %v3648 = vpop.f32.mrb[0].mxu0
  %3649 = vmatprep.mubr.f32.mxu0 0.0
  %3650 = vmatmul.mubr.f32.gmra.mrb[0].mxu0 %v3334
  %v3651 = vpop.f32.mrb[0].mxu0
  %v3652 = vadd.f32 0.0, %v3651
  %v3653 = vpop.f32.mrb[0].mxu0
  %3654 = vmatprep.mubr.f32.mxu0 0.0
  %3655 = vmatmul.mubr.f32.gmra.mrb[0].mxu0 %v3337
  %v3656 = vpop.f32.mrb[0].mxu0
  %v3657 = vadd.f32 0.0, %v3656
  %v3658 = vpop.f32.mrb[0].mxu0
  %3659 = vmatprep.mubr.f32.mxu0 0.0
  %3660 = vmatmul.mubr.f32.gmra.mrb[0].mxu0 %v3340
  %v3661 = vpop.f32.mrb[0].mxu0
  %v3662 = vadd.f32 0.0, %v3661
  %v3663 = vpop.f32.mrb[0].mxu0
  %3664 = vmatprep.mubr.f32.mxu0 0.0
  %3665 = vmatmul.mubr.f32.gmra.mrb[0].mxu0 %v3343
  %v3666 = vpop.f32.mrb[0].mxu0
  %v3667 = vadd.f32 0.0, %v3666
  %v3668 = vpop.f32.mrb[0].mxu0
  %3669 = vmatprep.mubr.f32.mxu0 0.0
  %3670 = vmatmul.mubr.f32.gmra.mrb[0].mxu0 %v3346
  %v3671 = vpop.f32.mrb[0].mxu0
  %v3672 = vadd.f32 0.0, %v3671
  %v3673 = vpop.f32.mrb[0].mxu0
  %3674 = vmatprep.mubr.f32.mxu0 0.0
  %3675 = vmatmul.mubr.f32.gmra.mrb[0].mxu0 %v3349
  %v3676 = vpop.f32.mrb[0].mxu0
  %v3677 = vadd.f32 0.0, %v3676
  %v3678 = vpop.f32.mrb[0].mxu0
  %3679 = vmatprep.mubr.f32.mxu0 0.0
  %3680 = vmatmul.mubr.f32.gmra.mrb[0].mxu0 %v3352
  %v3681 = vpop.f32.mrb[0].mxu0
  %v3682 = vadd.f32 0.0, %v3681
  %v3683 = vpop.f32.mrb[0].mxu0
  %3684 = vmatprep.mubr.f32.mxu0 0.0
  %3685 = vmatmul.mubr.f32.gmra.mrb[0].mxu0 %v3355
  %v3686 = vpop.f32.mrb[0].mxu0
  %v3687 = vadd.f32 0.0, %v3686
  %v3688 = vpop.f32.mrb[0].mxu0
  %3689 = vmatprep.mubr.f32.mxu0 0.0
  %3690 = vmatmul.mubr.f32.gmra.mrb[0].mxu0 %v3358
  %v3691 = vpop.f32.mrb[0].mxu0
  %v3692 = vadd.f32 0.0, %v3691
  %v3693 = vpop.f32.mrb[0].mxu0
  %3694 = vmatprep.mubr.f32.mxu0 0.0
  %3695 = vmatmul.mubr.f32.gmra.mrb[0].mxu0 %v3361
  %v3696 = vpop.f32.mrb[0].mxu0
  %v3697 = vadd.f32 0.0, %v3696
  %v3698 = vpop.f32.mrb[0].mxu0
  %3699 = vmatprep.mubr.f32.mxu0 0.0
  %3700 = vmatmul.mubr.f32.gmra.mrb[0].mxu0 %v3364
  %v3701 = vpop.f32.mrb[0].mxu0
  %v3702 = vadd.f32 0.0, %v3701
  %v3703 = vpop.f32.mrb[0].mxu0
  %3704 = vmatprep.mubr.f32.mxu0 0.0
  %3705 = vmatmul.mubr.f32.gmra.mrb[0].mxu0 %v3367
  %v3706 = vpop.f32.mrb[0].mxu0
  %v3707 = vadd.f32 0.0, %v3706
  %v3708 = vpop.f32.mrb[0].mxu0
  %3709 = vmatprep.mubr.f32.mxu0 0.0
  %3710 = vmatmul.mubr.f32.gmra.mrb[0].mxu0 %v3370
  %v3711 = vpop.f32.mrb[0].mxu0
  %v3712 = vadd.f32 0.0, %v3711
  %v3713 = vpop.f32.mrb[0].mxu0
  %3714 = vmatprep.mubr.f32.mxu0 0.0
  %3715 = vmatmul.mubr.f32.gmra.mrb[0].mxu0 %v3373
  %v3716 = vpop.f32.mrb[0].mxu0
  %v3717 = vadd.f32 0.0, %v3716
  %v3718 = vpop.f32.mrb[0].mxu0
  %3719 = vmatprep.mubr.f32.mxu0 0.0
  %3720 = vmatmul.mubr.f32.gmra.mrb[0].mxu0 %v3376
  %v3721 = vpop.f32.mrb[0].mxu0
  %v3722 = vadd.f32 0.0, %v3721
  %v3723 = vpop.f32.mrb[0].mxu0
  %3724 = vmatprep.mubr.f32.mxu0 0.0
  %3725 = vmatmul.mubr.f32.gmra.mrb[0].mxu0 %v3379
  %v3726 = vpop.f32.mrb[0].mxu0
  %v3727 = vadd.f32 0.0, %v3726
  %v3728 = vpop.f32.mrb[0].mxu0
  %3729 = vmatprep.mubr.f32.mxu0 0.0
  %3730 = vmatmul.mubr.f32.gmra.mrb[0].mxu0 %v3382
  %v3731 = vpop.f32.mrb[0].mxu0
  %v3732 = vadd.f32 0.0, %v3731
  %v3733 = vpop.f32.mrb[0].mxu0
  %3734 = vmatprep.mubr.f32.mxu0 0.0
  %3735 = vmatmul.mubr.f32.gmra.mrb[0].mxu0 %v3385
  %v3736 = vpop.f32.mrb[0].mxu0
  %v3737 = vadd.f32 0.0, %v3736
  %v3738 = vpop.f32.mrb[0].mxu0
  %3739 = vmatprep.mubr.f32.mxu0 0.0
  %3740 = vmatmul.mubr.f32.gmra.mrb[0].mxu0 %v3388
  %v3741 = vpop.f32.mrb[0].mxu0
  %v3742 = vadd.f32 0.0, %v3741
  %v3743 = vpop.f32.mrb[0].mxu0
  %3744 = vmatprep.mubr.f32.mxu0 0.0
  %3745 = vmatmul.mubr.f32.gmra.mrb[0].mxu0 %v3391
  %v3746 = vpop.f32.mrb[0].mxu0
  %v3747 = vadd.f32 0.0, %v3746
  %v3748 = vpop.f32.mrb[0].mxu0
  %3749 = vmatprep.mubr.f32.mxu0 0.0
  %3750 = vmatmul.mubr.f32.gmra.mrb[0].mxu0 %v3394
  %v3751 = vpop.f32.mrb[0].mxu0
  %v3752 = vadd.f32 0.0, %v3751
  %v3753 = vpop.f32.mrb[0].mxu0
  %3754 = vmatprep.mubr.f32.mxu0 0.0
  %3755 = vmatmul.mubr.f32.gmra.mrb[0].mxu0 %v3397
  %v3756 = vpop.f32.mrb[0].mxu0
  %v3757 = vadd.f32 0.0, %v3756
  %v3758 = vpop.f32.mrb[0].mxu0
  %3759 = vmatprep.mubr.f32.mxu0 0.0
  %3760 = vmatmul.mubr.f32.gmra.mrb[0].mxu0 %v3400
  %v3761 = vpop.f32.mrb[0].mxu0
  %v3762 = vadd.f32 0.0, %v3761
  %v3763 = vpop.f32.mrb[0].mxu0
  %3764 = vmatprep.mubr.f32.mxu0 0.0
  %3765 = vmatmul.mubr.f32.gmra.mrb[0].mxu0 %v3403
  %v3766 = vpop.f32.mrb[0].mxu0
  %v3767 = vadd.f32 0.0, %v3766
  %v3768 = vpop.f32.mrb[0].mxu0
  %3769 = vmatprep.mubr.f32.mxu0 0.0
  %3770 = vmatmul.mubr.f32.gmra.mrb[0].mxu0 %v3406
  %v3771 = vpop.f32.mrb[0].mxu0
  %v3772 = vadd.f32 0.0, %v3771
  %v3773 = vpop.f32.mrb[0].mxu0
  %3774 = vmatprep.mubr.f32.mxu0 0.0
  %3775 = vmatmul.mubr.f32.gmra.mrb[0].mxu0 %v3409
  %v3776 = vpop.f32.mrb[0].mxu0
  %v3777 = vadd.f32 0.0, %v3776
  %v3778 = vpop.f32.mrb[0].mxu0
  %3779 = vmatprep.mubr.f32.mxu0 0.0
  %3780 = vmatmul.mubr.f32.gmra.mrb[0].mxu0 %v3412
  %v3781 = vpop.f32.mrb[0].mxu0
  %v3782 = vadd.f32 0.0, %v3781
  %v3783 = vpop.f32.mrb[0].mxu0
  %3784 = vmatprep.mubr.f32.mxu0 0.0
  %3785 = vmatmul.mubr.f32.gmra.mrb[0].mxu0 %v3415
  %v3786 = vpop.f32.mrb[0].mxu0
  %v3787 = vadd.f32 0.0, %v3786
  %v3788 = vpop.f32.mrb[0].mxu0
  %3789 = vmatprep.mubr.f32.mxu0 0.0
  %3790 = vmatmul.mubr.f32.gmra.mrb[0].mxu0 %v3418
  %v3791 = vpop.f32.mrb[0].mxu0
  %v3792 = vadd.f32 0.0, %v3791
  %v3793 = vpop.f32.mrb[0].mxu0
  %3794 = vmatprep.mubr.f32.mxu0 0.0
  %3795 = vmatmul.mubr.f32.gmra.mrb[0].mxu0 %v3421
  %v3796 = vpop.f32.mrb[0].mxu0
  %v3797 = vadd.f32 0.0, %v3796
  %v3798 = vpop.f32.mrb[0].mxu0
  %3799 = vmatprep.mubr.f32.mxu0 0.0
  %3800 = vmatmul.mubr.f32.gmra.mrb[0].mxu0 %v3424
  %v3801 = vpop.f32.mrb[0].mxu0
  %v3802 = vadd.f32 0.0, %v3801
  %v3803 = vpop.f32.mrb[0].mxu0
  %3804 = vmatprep.mubr.f32.mxu0 0.0
  %3805 = vmatmul.mubr.f32.gmra.mrb[0].mxu0 %v3427
  %v3806 = vpop.f32.mrb[0].mxu0
  %v3807 = vadd.f32 0.0, %v3806
  %v3808 = vpop.f32.mrb[0].mxu0
  %3809 = vmatprep.mubr.f32.mxu0 0.0
  %3810 = vmatmul.mubr.f32.gmra.mrb[0].mxu0 %v3430
  %v3811 = vpop.f32.mrb[0].mxu0
  %v3812 = vadd.f32 0.0, %v3811
  %v3813 = vpop.f32.mrb[0].mxu0
  %3814 = vmatprep.mubr.f32.mxu0 0.0
  %3815 = vmatmul.mubr.f32.gmra.mrb[0].mxu0 %v3433
  %v3816 = vpop.f32.mrb[0].mxu0
  %v3817 = vadd.f32 0.0, %v3816
  %v3818 = vpop.f32.mrb[0].mxu0
  %3819 = vmatprep.mubr.f32.mxu0 0.0
  %3820 = vmatmul.mubr.f32.gmra.mrb[0].mxu0 %v3436
  %v3821 = vpop.f32.mrb[0].mxu0
  %v3822 = vadd.f32 0.0, %v3821
  %v3823 = vpop.f32.mrb[0].mxu0
  %3824 = vmatprep.mubr.f32.mxu0 0.0
  %3825 = vmatmul.mubr.f32.gmra.mrb[0].mxu0 %v3439
  %v3826 = vpop.f32.mrb[0].mxu0
  %v3827 = vadd.f32 0.0, %v3826
  %v3828 = vpop.f32.mrb[0].mxu0
  %3829 = vmatprep.mubr.f32.mxu0 0.0
  %3830 = vmatmul.mubr.f32.gmra.mrb[0].mxu0 %v3442
  %v3831 = vpop.f32.mrb[0].mxu0
  %v3832 = vadd.f32 0.0, %v3831
  %v3833 = vpop.f32.mrb[0].mxu0
  %3834 = vmatprep.mubr.f32.mxu0 0.0
  %3835 = vmatmul.mubr.f32.gmra.mrb[0].mxu0 %v3445
  %v3836 = vpop.f32.mrb[0].mxu0
  %v3837 = vadd.f32 0.0, %v3836
  %v3838 = vpop.f32.mrb[0].mxu0
  %3839 = vmatprep.mubr.f32.mxu0 0.0
  %3840 = vmatmul.mubr.f32.gmra.mrb[0].mxu0 %v3448
  %v3841 = vpop.f32.mrb[0].mxu0
  %v3842 = vadd.f32 0.0, %v3841
  %v3843 = vpop.f32.mrb[0].mxu0
  %3844 = vmatprep.mubr.f32.mxu0 0.0
  %3845 = vmatmul.mubr.f32.gmra.mrb[0].mxu0 %v3451
  %v3846 = vpop.f32.mrb[0].mxu0
  %v3847 = vadd.f32 0.0, %v3846
  %v3848 = vpop.f32.mrb[0].mxu0
  %3849 = vmatprep.mubr.f32.mxu0 0.0
  %3850 = vmatmul.mubr.f32.gmra.mrb[0].mxu0 %v3454
  %v3851 = vpop.f32.mrb[0].mxu0
  %v3852 = vadd.f32 0.0, %v3851
  %v3853 = vpop.f32.mrb[0].mxu0
  %3854 = vmatprep.mubr.f32.mxu0 0.0
  %3855 = vmatmul.mubr.f32.gmra.mrb[0].mxu0 %v3457
  %v3856 = vpop.f32.mrb[0].mxu0
  %v3857 = vadd.f32 0.0, %v3856
  %v3858 = vpop.f32.mrb[0].mxu0
  %3859 = vmatprep.mubr.f32.mxu0 0.0
  %3860 = vmatmul.mubr.f32.gmra.mrb[0].mxu0 %v3460
  %v3861 = vpop.f32.mrb[0].mxu0
  %v3862 = vadd.f32 0.0, %v3861
  %v3863 = vpop.f32.mrb[0].mxu0
  %3864 = vmatprep.mubr.f32.mxu0 0.0
  %3865 = vmatmul.mubr.f32.gmra.mrb[0].mxu0 %v3463
  %v3866 = vpop.f32.mrb[0].mxu0
  %v3867 = vadd.f32 0.0, %v3866
  %v3868 = vpop.f32.mrb[0].mxu0
  %3869 = vmatprep.mubr.f32.mxu0 0.0
  %3870 = vmatmul.mubr.f32.gmra.mrb[0].mxu0 %v3466
  %v3871 = vpop.f32.mrb[0].mxu0
  %v3872 = vadd.f32 0.0, %v3871
  %v3873 = vpop.f32.mrb[0].mxu0
  %3874 = vmatprep.mubr.f32.mxu0 0.0
  %3875 = vmatmul.mubr.f32.gmra.mrb[0].mxu0 %v3469
  %v3876 = vpop.f32.mrb[0].mxu0
  %v3877 = vadd.f32 0.0, %v3876
  %v3878 = vpop.f32.mrb[0].mxu0
  %3879 = vmatprep.mubr.f32.mxu0 0.0
  %3880 = vmatmul.mubr.f32.gmra.mrb[0].mxu0 %v3472
  %v3881 = vpop.f32.mrb[0].mxu0
  %v3882 = vadd.f32 0.0, %v3881
  %v3883 = vpop.f32.mrb[0].mxu0
  %3884 = vmatprep.mubr.f32.mxu0 0.0
  %3885 = vmatmul.mubr.f32.gmra.mrb[0].mxu0 %v3475
  %v3886 = vpop.f32.mrb[0].mxu0
  %v3887 = vadd.f32 0.0, %v3886
  %v3888 = vpop.f32.mrb[0].mxu0
  %3889 = vmatprep.mubr.f32.mxu0 0.0
  %3890 = vmatmul.mubr.f32.gmra.mrb[0].mxu0 %v3478
  %v3891 = vpop.f32.mrb[0].mxu0
  %v3892 = vadd.f32 0.0, %v3891
  %v3893 = vpop.f32.mrb[0].mxu0
  %3894 = vmatprep.mubr.f32.mxu0 0.0
  %3895 = vmatmul.mubr.f32.gmra.mrb[0].mxu0 %v3481
  %v3896 = vpop.f32.mrb[0].mxu0
  %v3897 = vadd.f32 0.0, %v3896
  %v3898 = vpop.f32.mrb[0].mxu0
  %3899 = vmatprep.mubr.f32.mxu0 0.0
  %3900 = vmatmul.mubr.f32.gmra.mrb[0].mxu0 %v3484
  %v3901 = vpop.f32.mrb[0].mxu0
  %v3902 = vadd.f32 0.0, %v3901
  %v3903 = vpop.f32.mrb[0].mxu0
  %3904 = vmatprep.mubr.f32.mxu0 0.0
  %3905 = vmatmul.mubr.f32.gmra.mrb[0].mxu0 %v3487
  %v3906 = vpop.f32.mrb[0].mxu0
  %v3907 = vadd.f32 0.0, %v3906
  %v3908 = vpop.f32.mrb[0].mxu0
  %3909 = vmatprep.mubr.f32.mxu0 0.0
  %3910 = vmatmul.mubr.f32.gmra.mrb[0].mxu0 %v3490
  %v3911 = vpop.f32.mrb[0].mxu0
  %v3912 = vadd.f32 0.0, %v3911
  %v3913 = vpop.f32.mrb[0].mxu0
  %3914 = vmatprep.mubr.f32.mxu0 0.0
  %3915 = vmatmul.mubr.f32.gmra.mrb[0].mxu0 %v3493
  %v3916 = vpop.f32.mrb[0].mxu0
  %v3917 = vadd.f32 0.0, %v3916
  %v3918 = vpop.f32.mrb[0].mxu0
  %3919 = vmatprep.mubr.f32.mxu0 0.0
  %3920 = vmatmul.mubr.f32.gmra.mrb[0].mxu0 %v3496
  %v3921 = vpop.f32.mrb[0].mxu0
  %v3922 = vadd.f32 0.0, %v3921
  %v3923 = vpop.f32.mrb[0].mxu0
  %3924 = vmatprep.mubr.f32.mxu0 0.0
  %3925 = vmatmul.mubr.f32.gmra.mrb[0].mxu0 %v3499
  %v3926 = vpop.f32.mrb[0].mxu0
  %v3927 = vadd.f32 0.0, %v3926
  %v3928 = vpop.f32.mrb[0].mxu0
  %3929 = vmatprep.mubr.f32.mxu0 0.0
  %3930 = vmatmul.mubr.f32.gmra.mrb[0].mxu0 %v3502
  %v3931 = vpop.f32.mrb[0].mxu0
  %v3932 = vadd.f32 0.0, %v3931
  %v3933 = vpop.f32.mrb[0].mxu0
  %3934 = vmatprep.mubr.f32.mxu0 0.0
  %3935 = vmatmul.mubr.f32.gmra.mrb[0].mxu0 %v3505
  %v3936 = vpop.f32.mrb[0].mxu0
  %v3937 = vadd.f32 0.0, %v3936
  %v3938 = vpop.f32.mrb[0].mxu0
  %3939 = vmatprep.mubr.f32.mxu0 0.0
  %3940 = vmatmul.mubr.f32.gmra.mrb[0].mxu0 %v3508
  %v3941 = vpop.f32.mrb[0].mxu0
  %v3942 = vadd.f32 0.0, %v3941
  %v3943 = vpop.f32.mrb[0].mxu0
  %3944 = vmatprep.mubr.f32.mxu0 0.0
  %3945 = vmatmul.mubr.f32.gmra.mrb[0].mxu0 %v3511
  %v3946 = vpop.f32.mrb[0].mxu0
  %v3947 = vadd.f32 0.0, %v3946
  %v3948 = vpop.f32.mrb[0].mxu0
  %3949 = vmatprep.mubr.f32.mxu0 0.0
  %3950 = vmatmul.mubr.f32.gmra.mrb[0].mxu0 %v3514
  %v3951 = vpop.f32.mrb[0].mxu0
  %v3952 = vadd.f32 0.0, %v3951
  %v3953 = vpop.f32.mrb[0].mxu0
  %3954 = vmatprep.mubr.f32.mxu0 0.0
  %3955 = vmatmul.mubr.f32.gmra.mrb[0].mxu0 %v3517
  %v3956 = vpop.f32.mrb[0].mxu0
  %v3957 = vadd.f32 0.0, %v3956
  %v3958 = vpop.f32.mrb[0].mxu0
  %3959 = vmatprep.mubr.f32.mxu0 0.0
  %3960 = vmatmul.mubr.f32.gmra.mrb[0].mxu0 %v3520
  %v3961 = vpop.f32.mrb[0].mxu0
  %v3962 = vadd.f32 0.0, %v3961
  %v3963 = vpop.f32.mrb[0].mxu0
  %3964 = vmatprep.mubr.f32.mxu0 0.0
  %3965 = vmatmul.mubr.f32.gmra.mrb[0].mxu0 %v3523
  %v3966 = vpop.f32.mrb[0].mxu0
  %v3967 = vadd.f32 0.0, %v3966
  %v3968 = vpop.f32.mrb[0].mxu0
  %3969 = vmatprep.mubr.f32.mxu0 0.0
  %3970 = vmatmul.mubr.f32.gmra.mrb[0].mxu0 %v3526
  %v3971 = vpop.f32.mrb[0].mxu0
  %v3972 = vadd.f32 0.0, %v3971
  %v3973 = vpop.f32.mrb[0].mxu0
  %3974 = vmatprep.mubr.f32.mxu0 0.0
  %3975 = vmatmul.mubr.f32.gmra.mrb[0].mxu0 %v3529
  %v3976 = vpop.f32.mrb[0].mxu0
  %v3977 = vadd.f32 0.0, %v3976
  %v3978 = vpop.f32.mrb[0].mxu0
  %3979 = vmatprep.mubr.f32.mxu0 0.0
  %3980 = vmatmul.mubr.f32.gmra.mrb[0].mxu0 %v3532
  %v3981 = vpop.f32.mrb[0].mxu0
  %v3982 = vadd.f32 0.0, %v3981
  %v3983 = vpop.f32.mrb[0].mxu0
  %3984 = vmatprep.mubr.f32.mxu0 0.0
  %3985 = vmatmul.mubr.f32.gmra.mrb[0].mxu0 %v3535
  %v3986 = vpop.f32.mrb[0].mxu0
  %v3987 = vadd.f32 0.0, %v3986
  %v3988 = vpop.f32.mrb[0].mxu0
  %3989 = vdwg.mxu0
  %v3990 = vadd.f32 %v3150, %v3607
  %v3991 = vadd.f32 %v3151, %v3612
  %v3992 = vadd.f32 %v3152, %v3617
  %v3993 = vadd.f32 %v3153, %v3622
  %v3994 = vadd.f32 %v3154, %v3627
  %v3995 = vadd.f32 %v3155, %v3632
  %v3996 = vadd.f32 %v3156, %v3637
  %v3997 = vadd.f32 %v3157, %v3642
  %v3998 = vadd.f32 %v3158, %v3647
  %v3999 = vadd.f32 %v3159, %v3652
  %v4000 = vadd.f32 %v3160, %v3657
  %v4001 = vadd.f32 %v3161, %v3662
  %v4002 = vadd.f32 %v3162, %v3667
  %v4003 = vadd.f32 %v3163, %v3672
  %v4004 = vadd.f32 %v3164, %v3677
  %v4005 = vadd.f32 %v3165, %v3682
  %v4006 = vadd.f32 %v3166, %v3687
  %v4007 = vadd.f32 %v3167, %v3692
  %v4008 = vadd.f32 %v3168, %v3697
  %v4009 = vadd.f32 %v3169, %v3702
  %v4010 = vadd.f32 %v3170, %v3707
  %v4011 = vadd.f32 %v3171, %v3712
  %v4012 = vadd.f32 %v3172, %v3717
  %v4013 = vadd.f32 %v3173, %v3722
  %v4014 = vadd.f32 %v3174, %v3727
  %v4015 = vadd.f32 %v3175, %v3732
  %v4016 = vadd.f32 %v3176, %v3737
  %v4017 = vadd.f32 %v3177, %v3742
  %v4018 = vadd.f32 %v3178, %v3747
  %v4019 = vadd.f32 %v3179, %v3752
  %v4020 = vadd.f32 %v3180, %v3757
  %v4021 = vadd.f32 %v3181, %v3762
  %v4022 = vadd.f32 %v3182, %v3767
  %v4023 = vadd.f32 %v3183, %v3772
  %v4024 = vadd.f32 %v3184, %v3777
  %v4025 = vadd.f32 %v3185, %v3782
  %v4026 = vadd.f32 %v3186, %v3787
  %v4027 = vadd.f32 %v3187, %v3792
  %v4028 = vadd.f32 %v3188, %v3797
  %v4029 = vadd.f32 %v3189, %v3802
  %v4030 = vadd.f32 %v3190, %v3807
  %v4031 = vadd.f32 %v3191, %v3812
  %v4032 = vadd.f32 %v3192, %v3817
  %v4033 = vadd.f32 %v3193, %v3822
  %v4034 = vadd.f32 %v3194, %v3827
  %v4035 = vadd.f32 %v3195, %v3832
  %v4036 = vadd.f32 %v3196, %v3837
  %v4037 = vadd.f32 %v3197, %v3842
  %v4038 = vadd.f32 %v3198, %v3847
  %v4039 = vadd.f32 %v3199, %v3852
  %v4040 = vadd.f32 %v3200, %v3857
  %v4041 = vadd.f32 %v3201, %v3862
  %v4042 = vadd.f32 %v3202, %v3867
  %v4043 = vadd.f32 %v3203, %v3872
  %v4044 = vadd.f32 %v3204, %v3877
  %v4045 = vadd.f32 %v3205, %v3882
  %v4046 = vadd.f32 %v3206, %v3887
  %v4047 = vadd.f32 %v3207, %v3892
  %v4048 = vadd.f32 %v3208, %v3897
  %v4049 = vadd.f32 %v3209, %v3902
  %v4050 = vadd.f32 %v3210, %v3907
  %v4051 = vadd.f32 %v3211, %v3912
  %v4052 = vadd.f32 %v3212, %v3917
  %v4053 = vadd.f32 %v3213, %v3922
  %v4054 = vadd.f32 %v3214, %v3927
  %v4055 = vadd.f32 %v3215, %v3932
  %v4056 = vadd.f32 %v3216, %v3937
  %v4057 = vadd.f32 %v3217, %v3942
  %v4058 = vadd.f32 %v3218, %v3947
  %v4059 = vadd.f32 %v3219, %v3952
  %v4060 = vadd.f32 %v3220, %v3957
  %v4061 = vadd.f32 %v3221, %v3962
  %v4062 = vadd.f32 %v3222, %v3967
  %v4063 = vadd.f32 %v3223, %v3972
  %v4064 = vadd.f32 %v3224, %v3977
  %v4065 = vadd.f32 %v3225, %v3982
  %v4066 = vadd.f32 %v3226, %v3987
  %v4067 = vld [vmem:[%s0 + $0x14] sm:$0xff]
  %v4068 = vld [vmem:[%s0 + $0x1c] sm:$0xff]
  %v4069 = vld [vmem:[%s0 + $0x24] sm:$0xff]
  %v4070 = vld [vmem:[%s0 + $0x2c] sm:$0xff]
  %v4071 = vld [vmem:[%s0 + $0x34] sm:$0xff]
  %v4072 = vld [vmem:[%s0 + $0x3c] sm:$0xff]
  %v4073 = vld [vmem:[%s0 + $0x44] sm:$0xff]
  %v4074 = vld [vmem:[%s0 + $0x4c] sm:$0xff]
  %v4075 = vld [vmem:[%s0 + $0x54] sm:$0xff]
  %v4076 = vld [vmem:[%s0 + $0x5c] sm:$0xff]
  %v4077 = vld [vmem:[%s0 + $0x64] sm:$0xff]
  %v4078 = vld [vmem:[%s0 + $0x6c] sm:$0xff]
  %v4079 = vld [vmem:[%s0 + $0x74] sm:$0xff]
  %v4080 = vld [vmem:[%s0 + $0x7c] sm:$0xff]
  %v4081 = vld [vmem:[%s0 + $0x84] sm:$0xff]
  %v4082 = vld [vmem:[%s0 + $0x8c] sm:$0xff]
  %v4083 = vld [vmem:[%s0 + $0x94] sm:$0xff]
  %v4084 = vld [vmem:[%s0 + $0x9c] sm:$0xff]
  %v4085 = vld [vmem:[%s0 + $0xa4] sm:$0xff]
  %v4086 = vld [vmem:[%s0 + $0xac] sm:$0xff]
  %v4087 = vld [vmem:[%s0 + $0xb4] sm:$0xff]
  %v4088 = vld [vmem:[%s0 + $0xbc] sm:$0xff]
  %v4089 = vld [vmem:[%s0 + $0xc4] sm:$0xff]
  %v4090 = vld [vmem:[%s0 + $0xcc] sm:$0xff]
  %v4091 = vld [vmem:[%s0 + $0xd4] sm:$0xff]
  %v4092 = vld [vmem:[%s0 + $0xdc] sm:$0xff]
  %v4093 = vld [vmem:[%s0 + $0xe4] sm:$0xff]
  %v4094 = vld [vmem:[%s0 + $0xec] sm:$0xff]
  %v4095 = vld [vmem:[%s0 + $0xf4] sm:$0xff]
  %v4096 = vld [vmem:[%s0 + $0xfc] sm:$0xff]
  %v4097 = vld [vmem:[%s0 + $0x104] sm:$0xff]
  %v4098 = vld [vmem:[%s0 + $0x10c] sm:$0xff]
  %v4099 = vld [vmem:[%s0 + $0x114] sm:$0xff]
  %v4100 = vld [vmem:[%s0 + $0x11c] sm:$0xff]
  %v4101 = vld [vmem:[%s0 + $0x124] sm:$0xff]
  %v4102 = vld [vmem:[%s0 + $0x12c] sm:$0xff]
  %v4103 = vld [vmem:[%s0 + $0x134] sm:$0xff]
  %v4104 = vld [vmem:[%s0 + $0x13c] sm:$0xff]
  %v4105 = vld [vmem:[%s0 + $0x144] sm:$0xff]
  %v4106 = vld [vmem:[%s0 + $0x14c] sm:$0xff]
  %v4107 = vld [vmem:[%s0 + $0x154] sm:$0xff]
  %v4108 = vld [vmem:[%s0 + $0x15c] sm:$0xff]
  %v4109 = vld [vmem:[%s0 + $0x164] sm:$0xff]
  %v4110 = vld [vmem:[%s0 + $0x16c] sm:$0xff]
  %v4111 = vld [vmem:[%s0 + $0x174] sm:$0xff]
  %v4112 = vld [vmem:[%s0 + $0x17c] sm:$0xff]
  %v4113 = vld [vmem:[%s0 + $0x184] sm:$0xff]
  %v4114 = vld [vmem:[%s0 + $0x18c] sm:$0xff]
  %v4115 = vld [vmem:[%s0 + $0x194] sm:$0xff]
  %v4116 = vld [vmem:[%s0 + $0x19c] sm:$0xff]
  %v4117 = vld [vmem:[%s0 + $0x1a4] sm:$0xff]
  %v4118 = vld [vmem:[%s0 + $0x1ac] sm:$0xff]
  %v4119 = vld [vmem:[%s0 + $0x1b4] sm:$0xff]
  %v4120 = vld [vmem:[%s0 + $0x1bc] sm:$0xff]
  %v4121 = vld [vmem:[%s0 + $0x1c4] sm:$0xff]
  %v4122 = vld [vmem:[%s0 + $0x1cc] sm:$0xff]
  %v4123 = vld [vmem:[%s0 + $0x1d4] sm:$0xff]
  %v4124 = vld [vmem:[%s0 + $0x1dc] sm:$0xff]
  %v4125 = vld [vmem:[%s0 + $0x1e4] sm:$0xff]
  %v4126 = vld [vmem:[%s0 + $0x1ec] sm:$0xff]
  %v4127 = vld [vmem:[%s0 + $0x1f4] sm:$0xff]
  %v4128 = vld [vmem:[%s0 + $0x1fc] sm:$0xff]
  %v4129 = vld [vmem:[%s0 + $0x204] sm:$0xff]
  %v4130 = vld [vmem:[%s0 + $0x20c] sm:$0xff]
  %v4131 = vld [vmem:[%s0 + $0x214] sm:$0xff]
  %v4132 = vld [vmem:[%s0 + $0x21c] sm:$0xff]
  %v4133 = vld [vmem:[%s0 + $0x224] sm:$0xff]
  %v4134 = vld [vmem:[%s0 + $0x22c] sm:$0xff]
  %v4135 = vld [vmem:[%s0 + $0x234] sm:$0xff]
  %v4136 = vld [vmem:[%s0 + $0x23c] sm:$0xff]
  %v4137 = vld [vmem:[%s0 + $0x244] sm:$0xff]
  %v4138 = vld [vmem:[%s0 + $0x24c] sm:$0xff]
  %v4139 = vld [vmem:[%s0 + $0x254] sm:$0xff]
  %v4140 = vld [vmem:[%s0 + $0x25c] sm:$0xff]
  %v4141 = vld [vmem:[%s0 + $0x264] sm:$0xff]
  %v4142 = vld [vmem:[%s0 + $0x26c] sm:$0xff]
  %v4143 = vld [vmem:[%s0 + $0x274] sm:$0xff]
  %s4144 = scalar_lea.vmem %s1, 20
  %v4145 = vld [vmem:[%s4144] sm:$0xf]
  %v4147 = vsel %vm177, %v4067, 0
  %v4150 = vsel %vm177, %v4068, 0
  %v4153 = vsel %vm177, %v4069, 0
  %v4156 = vsel %vm177, %v4070, 0
  %v4159 = vsel %vm177, %v4071, 0
  %v4162 = vsel %vm177, %v4072, 0
  %v4165 = vsel %vm177, %v4073, 0
  %v4168 = vsel %vm177, %v4074, 0
  %v4171 = vsel %vm177, %v4075, 0
  %v4174 = vsel %vm177, %v4076, 0
  %v4177 = vsel %vm177, %v4077, 0
  %v4180 = vsel %vm177, %v4078, 0
  %v4183 = vsel %vm177, %v4079, 0
  %v4186 = vsel %vm177, %v4080, 0
  %v4189 = vsel %vm177, %v4081, 0
  %v4192 = vsel %vm177, %v4082, 0
  %v4195 = vsel %vm177, %v4083, 0
  %v4198 = vsel %vm177, %v4084, 0
  %v4201 = vsel %vm177, %v4085, 0
  %v4204 = vsel %vm177, %v4086, 0
  %v4207 = vsel %vm177, %v4087, 0
  %v4210 = vsel %vm177, %v4088, 0
  %v4213 = vsel %vm177, %v4089, 0
  %v4216 = vsel %vm177, %v4090, 0
  %v4219 = vsel %vm177, %v4091, 0
  %v4222 = vsel %vm177, %v4092, 0
  %v4225 = vsel %vm177, %v4093, 0
  %v4228 = vsel %vm177, %v4094, 0
  %v4231 = vsel %vm177, %v4095, 0
  %v4234 = vsel %vm177, %v4096, 0
  %v4237 = vsel %vm177, %v4097, 0
  %v4240 = vsel %vm177, %v4098, 0
  %v4243 = vsel %vm177, %v4099, 0
  %v4246 = vsel %vm177, %v4100, 0
  %v4249 = vsel %vm177, %v4101, 0
  %v4252 = vsel %vm177, %v4102, 0
  %v4255 = vsel %vm177, %v4103, 0
  %v4258 = vsel %vm177, %v4104, 0
  %v4261 = vsel %vm177, %v4105, 0
  %v4264 = vsel %vm177, %v4106, 0
  %v4267 = vsel %vm177, %v4107, 0
  %v4270 = vsel %vm177, %v4108, 0
  %v4273 = vsel %vm177, %v4109, 0
  %v4276 = vsel %vm177, %v4110, 0
  %v4279 = vsel %vm177, %v4111, 0
  %v4282 = vsel %vm177, %v4112, 0
  %v4285 = vsel %vm177, %v4113, 0
  %v4288 = vsel %vm177, %v4114, 0
  %v4291 = vsel %vm177, %v4115, 0
  %v4294 = vsel %vm177, %v4116, 0
  %v4297 = vsel %vm177, %v4117, 0
  %v4300 = vsel %vm177, %v4118, 0
  %v4303 = vsel %vm177, %v4119, 0
  %v4306 = vsel %vm177, %v4120, 0
  %v4309 = vsel %vm177, %v4121, 0
  %v4312 = vsel %vm177, %v4122, 0
  %v4315 = vsel %vm177, %v4123, 0
  %v4318 = vsel %vm177, %v4124, 0
  %v4321 = vsel %vm177, %v4125, 0
  %v4324 = vsel %vm177, %v4126, 0
  %v4327 = vsel %vm177, %v4127, 0
  %v4330 = vsel %vm177, %v4128, 0
  %v4333 = vsel %vm177, %v4129, 0
  %v4336 = vsel %vm177, %v4130, 0
  %v4339 = vsel %vm177, %v4131, 0
  %v4342 = vsel %vm177, %v4132, 0
  %v4345 = vsel %vm177, %v4133, 0
  %v4348 = vsel %vm177, %v4134, 0
  %v4351 = vsel %vm177, %v4135, 0
  %v4354 = vsel %vm177, %v4136, 0
  %v4357 = vsel %vm177, %v4137, 0
  %v4360 = vsel %vm177, %v4138, 0
  %v4363 = vsel %vm177, %v4139, 0
  %v4366 = vsel %vm177, %v4140, 0
  %v4369 = vsel %vm177, %v4141, 0
  %v4372 = vsel %vm177, %v4142, 0
  %v4375 = vsel %vm177, %v4143, 0
  %v4378 = vsel %vm409, %v4145, 0
  %4380 = vmatprep.subr.mxu0 0.0
  %4381 = vmatpush1.msra.mxu0 %v4378
  %4382 = vmatprep.subr.mxu0 0.0
  %4383 = vmatpush1.msra.mxu0 0.0
  %4384 = vmatprep.subr.mxu0 0.0
  %4385 = vmatpush1.msra.mxu0 0.0
  %4386 = vmatprep.subr.mxu0 0.0
  %4387 = vmatpush1.msra.mxu0 0.0
  %4388 = vmatprep.subr.mxu0 0.0
  %4389 = vmatpush1.msra.mxu0 0.0
  %4390 = vmatprep.subr.mxu0 0.0
  %4391 = vmatpush1.msra.mxu0 0.0
  %4392 = vmatprep.subr.mxu0 0.0
  %4393 = vmatpush1.msra.mxu0 0.0
  %4394 = vmatprep.subr.mxu0 0.0
  %4395 = vmatpush1.msra.mxu0 0.0
  %4396 = vmatprep.subr.mxu0 0.0
  %4397 = vmatpush1.msra.mxu0 0.0
  %4398 = vmatprep.subr.mxu0 0.0
  %4399 = vmatpush1.msra.mxu0 0.0
  %4400 = vmatprep.subr.mxu0 0.0
  %4401 = vmatpush1.msra.mxu0 0.0
  %4402 = vmatprep.subr.mxu0 0.0
  %4403 = vmatpush1.msra.mxu0 0.0
  %4404 = vmatprep.subr.mxu0 0.0
  %4405 = vmatpush1.msra.mxu0 0.0
  %4406 = vmatprep.subr.mxu0 0.0
  %4407 = vmatpush1.msra.mxu0 0.0
  %4408 = vmatprep.subr.mxu0 0.0
  %4409 = vmatpush1.msra.mxu0 0.0
  %4410 = vmatprep.subr.mxu0 0.0
  %4411 = vmatpush1.msra.mxu0 0.0
  %4412 = vmatprep.subr.mxu0 0.0
  %4413 = vmatpush1.msra.mxu0 0.0
  %4414 = vmatprep.subr.mxu0 0.0
  %4415 = vmatpush1.msra.mxu0 0.0
  %4416 = vmatprep.subr.mxu0 0.0
  %4417 = vmatpush1.msra.mxu0 0.0
  %4418 = vmatprep.subr.mxu0 0.0
  %4419 = vmatpush1.msra.mxu0 0.0
  %4420 = vmatprep.subr.mxu0 0.0
  %4421 = vmatpush1.msra.mxu0 0.0
  %4422 = vmatprep.subr.mxu0 0.0
  %4423 = vmatpush1.msra.mxu0 0.0
  %4424 = vmatprep.subr.mxu0 0.0
  %4425 = vmatpush1.msra.mxu0 0.0
  %4426 = vmatprep.subr.mxu0 0.0
  %4427 = vmatpush1.msra.mxu0 0.0
  %4428 = vmatprep.subr.mxu0 0.0
  %4429 = vmatpush1.msra.mxu0 0.0
  %4430 = vmatprep.subr.mxu0 0.0
  %4431 = vmatpush1.msra.mxu0 0.0
  %4432 = vmatprep.subr.mxu0 0.0
  %4433 = vmatpush1.msra.mxu0 0.0
  %4434 = vmatprep.subr.mxu0 0.0
  %4435 = vmatpush1.msra.mxu0 0.0
  %4436 = vmatprep.subr.mxu0 0.0
  %4437 = vmatpush1.msra.mxu0 0.0
  %4438 = vmatprep.subr.mxu0 0.0
  %4439 = vmatpush1.msra.mxu0 0.0
  %4440 = vmatprep.subr.mxu0 0.0
  %4441 = vmatpush1.msra.mxu0 0.0
  %4442 = vmatprep.subr.mxu0 0.0
  %4443 = vmatpush1.msra.mxu0 0.0
  %4444 = vmatprep.mubr.f32.mxu0 0.0
  %4445 = vmatmul.mubr.f32.gmra.mrb[0].mxu0 %v4147
  %v4446 = vpop.f32.mrb[0].mxu0
  %v4447 = vadd.f32 0.0, %v4446
  %v4448 = vpop.f32.mrb[0].mxu0
  %4449 = vmatprep.mubr.f32.mxu0 0.0
  %4450 = vmatmul.mubr.f32.gmra.mrb[0].mxu0 %v4150
  %v4451 = vpop.f32.mrb[0].mxu0
  %v4452 = vadd.f32 0.0, %v4451
  %v4453 = vpop.f32.mrb[0].mxu0
  %4454 = vmatprep.mubr.f32.mxu0 0.0
  %4455 = vmatmul.mubr.f32.gmra.mrb[0].mxu0 %v4153
  %v4456 = vpop.f32.mrb[0].mxu0
  %v4457 = vadd.f32 0.0, %v4456
  %v4458 = vpop.f32.mrb[0].mxu0
  %4459 = vmatprep.mubr.f32.mxu0 0.0
  %4460 = vmatmul.mubr.f32.gmra.mrb[0].mxu0 %v4156
  %v4461 = vpop.f32.mrb[0].mxu0
  %v4462 = vadd.f32 0.0, %v4461
  %v4463 = vpop.f32.mrb[0].mxu0
  %4464 = vmatprep.mubr.f32.mxu0 0.0
  %4465 = vmatmul.mubr.f32.gmra.mrb[0].mxu0 %v4159
  %v4466 = vpop.f32.mrb[0].mxu0
  %v4467 = vadd.f32 0.0, %v4466
  %v4468 = vpop.f32.mrb[0].mxu0
  %4469 = vmatprep.mubr.f32.mxu0 0.0
  %4470 = vmatmul.mubr.f32.gmra.mrb[0].mxu0 %v4162
  %v4471 = vpop.f32.mrb[0].mxu0
  %v4472 = vadd.f32 0.0, %v4471
  %v4473 = vpop.f32.mrb[0].mxu0
  %4474 = vmatprep.mubr.f32.mxu0 0.0
  %4475 = vmatmul.mubr.f32.gmra.mrb[0].mxu0 %v4165
  %v4476 = vpop.f32.mrb[0].mxu0
  %v4477 = vadd.f32 0.0, %v4476
  %v4478 = vpop.f32.mrb[0].mxu0
  %4479 = vmatprep.mubr.f32.mxu0 0.0
  %4480 = vmatmul.mubr.f32.gmra.mrb[0].mxu0 %v4168
  %v4481 = vpop.f32.mrb[0].mxu0
  %v4482 = vadd.f32 0.0, %v4481
  %v4483 = vpop.f32.mrb[0].mxu0
  %4484 = vmatprep.mubr.f32.mxu0 0.0
  %4485 = vmatmul.mubr.f32.gmra.mrb[0].mxu0 %v4171
  %v4486 = vpop.f32.mrb[0].mxu0
  %v4487 = vadd.f32 0.0, %v4486
  %v4488 = vpop.f32.mrb[0].mxu0
  %4489 = vmatprep.mubr.f32.mxu0 0.0
  %4490 = vmatmul.mubr.f32.gmra.mrb[0].mxu0 %v4174
  %v4491 = vpop.f32.mrb[0].mxu0
  %v4492 = vadd.f32 0.0, %v4491
  %v4493 = vpop.f32.mrb[0].mxu0
  %4494 = vmatprep.mubr.f32.mxu0 0.0
  %4495 = vmatmul.mubr.f32.gmra.mrb[0].mxu0 %v4177
  %v4496 = vpop.f32.mrb[0].mxu0
  %v4497 = vadd.f32 0.0, %v4496
  %v4498 = vpop.f32.mrb[0].mxu0
  %4499 = vmatprep.mubr.f32.mxu0 0.0
  %4500 = vmatmul.mubr.f32.gmra.mrb[0].mxu0 %v4180
  %v4501 = vpop.f32.mrb[0].mxu0
  %v4502 = vadd.f32 0.0, %v4501
  %v4503 = vpop.f32.mrb[0].mxu0
  %4504 = vmatprep.mubr.f32.mxu0 0.0
  %4505 = vmatmul.mubr.f32.gmra.mrb[0].mxu0 %v4183
  %v4506 = vpop.f32.mrb[0].mxu0
  %v4507 = vadd.f32 0.0, %v4506
  %v4508 = vpop.f32.mrb[0].mxu0
  %4509 = vmatprep.mubr.f32.mxu0 0.0
  %4510 = vmatmul.mubr.f32.gmra.mrb[0].mxu0 %v4186
  %v4511 = vpop.f32.mrb[0].mxu0
  %v4512 = vadd.f32 0.0, %v4511
  %v4513 = vpop.f32.mrb[0].mxu0
  %4514 = vmatprep.mubr.f32.mxu0 0.0
  %4515 = vmatmul.mubr.f32.gmra.mrb[0].mxu0 %v4189
  %v4516 = vpop.f32.mrb[0].mxu0
  %v4517 = vadd.f32 0.0, %v4516
  %v4518 = vpop.f32.mrb[0].mxu0
  %4519 = vmatprep.mubr.f32.mxu0 0.0
  %4520 = vmatmul.mubr.f32.gmra.mrb[0].mxu0 %v4192
  %v4521 = vpop.f32.mrb[0].mxu0
  %v4522 = vadd.f32 0.0, %v4521
  %v4523 = vpop.f32.mrb[0].mxu0
  %4524 = vmatprep.mubr.f32.mxu0 0.0
  %4525 = vmatmul.mubr.f32.gmra.mrb[0].mxu0 %v4195
  %v4526 = vpop.f32.mrb[0].mxu0
  %v4527 = vadd.f32 0.0, %v4526
  %v4528 = vpop.f32.mrb[0].mxu0
  %4529 = vmatprep.mubr.f32.mxu0 0.0
  %4530 = vmatmul.mubr.f32.gmra.mrb[0].mxu0 %v4198
  %v4531 = vpop.f32.mrb[0].mxu0
  %v4532 = vadd.f32 0.0, %v4531
  %v4533 = vpop.f32.mrb[0].mxu0
  %4534 = vmatprep.mubr.f32.mxu0 0.0
  %4535 = vmatmul.mubr.f32.gmra.mrb[0].mxu0 %v4201
  %v4536 = vpop.f32.mrb[0].mxu0
  %v4537 = vadd.f32 0.0, %v4536
  %v4538 = vpop.f32.mrb[0].mxu0
  %4539 = vmatprep.mubr.f32.mxu0 0.0
  %4540 = vmatmul.mubr.f32.gmra.mrb[0].mxu0 %v4204
  %v4541 = vpop.f32.mrb[0].mxu0
  %v4542 = vadd.f32 0.0, %v4541
  %v4543 = vpop.f32.mrb[0].mxu0
  %4544 = vmatprep.mubr.f32.mxu0 0.0
  %4545 = vmatmul.mubr.f32.gmra.mrb[0].mxu0 %v4207
  %v4546 = vpop.f32.mrb[0].mxu0
  %v4547 = vadd.f32 0.0, %v4546
  %v4548 = vpop.f32.mrb[0].mxu0
  %4549 = vmatprep.mubr.f32.mxu0 0.0
  %4550 = vmatmul.mubr.f32.gmra.mrb[0].mxu0 %v4210
  %v4551 = vpop.f32.mrb[0].mxu0
  %v4552 = vadd.f32 0.0, %v4551
  %v4553 = vpop.f32.mrb[0].mxu0
  %4554 = vmatprep.mubr.f32.mxu0 0.0
  %4555 = vmatmul.mubr.f32.gmra.mrb[0].mxu0 %v4213
  %v4556 = vpop.f32.mrb[0].mxu0
  %v4557 = vadd.f32 0.0, %v4556
  %v4558 = vpop.f32.mrb[0].mxu0
  %4559 = vmatprep.mubr.f32.mxu0 0.0
  %4560 = vmatmul.mubr.f32.gmra.mrb[0].mxu0 %v4216
  %v4561 = vpop.f32.mrb[0].mxu0
  %v4562 = vadd.f32 0.0, %v4561
  %v4563 = vpop.f32.mrb[0].mxu0
  %4564 = vmatprep.mubr.f32.mxu0 0.0
  %4565 = vmatmul.mubr.f32.gmra.mrb[0].mxu0 %v4219
  %v4566 = vpop.f32.mrb[0].mxu0
  %v4567 = vadd.f32 0.0, %v4566
  %v4568 = vpop.f32.mrb[0].mxu0
  %4569 = vmatprep.mubr.f32.mxu0 0.0
  %4570 = vmatmul.mubr.f32.gmra.mrb[0].mxu0 %v4222
  %v4571 = vpop.f32.mrb[0].mxu0
  %v4572 = vadd.f32 0.0, %v4571
  %v4573 = vpop.f32.mrb[0].mxu0
  %4574 = vmatprep.mubr.f32.mxu0 0.0
  %4575 = vmatmul.mubr.f32.gmra.mrb[0].mxu0 %v4225
  %v4576 = vpop.f32.mrb[0].mxu0
  %v4577 = vadd.f32 0.0, %v4576
  %v4578 = vpop.f32.mrb[0].mxu0
  %4579 = vmatprep.mubr.f32.mxu0 0.0
  %4580 = vmatmul.mubr.f32.gmra.mrb[0].mxu0 %v4228
  %v4581 = vpop.f32.mrb[0].mxu0
  %v4582 = vadd.f32 0.0, %v4581
  %v4583 = vpop.f32.mrb[0].mxu0
  %4584 = vmatprep.mubr.f32.mxu0 0.0
  %4585 = vmatmul.mubr.f32.gmra.mrb[0].mxu0 %v4231
  %v4586 = vpop.f32.mrb[0].mxu0
  %v4587 = vadd.f32 0.0, %v4586
  %v4588 = vpop.f32.mrb[0].mxu0
  %4589 = vmatprep.mubr.f32.mxu0 0.0
  %4590 = vmatmul.mubr.f32.gmra.mrb[0].mxu0 %v4234
  %v4591 = vpop.f32.mrb[0].mxu0
  %v4592 = vadd.f32 0.0, %v4591
  %v4593 = vpop.f32.mrb[0].mxu0
  %4594 = vmatprep.mubr.f32.mxu0 0.0
  %4595 = vmatmul.mubr.f32.gmra.mrb[0].mxu0 %v4237
  %v4596 = vpop.f32.mrb[0].mxu0
  %v4597 = vadd.f32 0.0, %v4596
  %v4598 = vpop.f32.mrb[0].mxu0
  %4599 = vmatprep.mubr.f32.mxu0 0.0
  %4600 = vmatmul.mubr.f32.gmra.mrb[0].mxu0 %v4240
  %v4601 = vpop.f32.mrb[0].mxu0
  %v4602 = vadd.f32 0.0, %v4601
  %v4603 = vpop.f32.mrb[0].mxu0
  %4604 = vmatprep.mubr.f32.mxu0 0.0
  %4605 = vmatmul.mubr.f32.gmra.mrb[0].mxu0 %v4243
  %v4606 = vpop.f32.mrb[0].mxu0
  %v4607 = vadd.f32 0.0, %v4606
  %v4608 = vpop.f32.mrb[0].mxu0
  %4609 = vmatprep.mubr.f32.mxu0 0.0
  %4610 = vmatmul.mubr.f32.gmra.mrb[0].mxu0 %v4246
  %v4611 = vpop.f32.mrb[0].mxu0
  %v4612 = vadd.f32 0.0, %v4611
  %v4613 = vpop.f32.mrb[0].mxu0
  %4614 = vmatprep.mubr.f32.mxu0 0.0
  %4615 = vmatmul.mubr.f32.gmra.mrb[0].mxu0 %v4249
  %v4616 = vpop.f32.mrb[0].mxu0
  %v4617 = vadd.f32 0.0, %v4616
  %v4618 = vpop.f32.mrb[0].mxu0
  %4619 = vmatprep.mubr.f32.mxu0 0.0
  %4620 = vmatmul.mubr.f32.gmra.mrb[0].mxu0 %v4252
  %v4621 = vpop.f32.mrb[0].mxu0
  %v4622 = vadd.f32 0.0, %v4621
  %v4623 = vpop.f32.mrb[0].mxu0
  %4624 = vmatprep.mubr.f32.mxu0 0.0
  %4625 = vmatmul.mubr.f32.gmra.mrb[0].mxu0 %v4255
  %v4626 = vpop.f32.mrb[0].mxu0
  %v4627 = vadd.f32 0.0, %v4626
  %v4628 = vpop.f32.mrb[0].mxu0
  %4629 = vmatprep.mubr.f32.mxu0 0.0
  %4630 = vmatmul.mubr.f32.gmra.mrb[0].mxu0 %v4258
  %v4631 = vpop.f32.mrb[0].mxu0
  %v4632 = vadd.f32 0.0, %v4631
  %v4633 = vpop.f32.mrb[0].mxu0
  %4634 = vmatprep.mubr.f32.mxu0 0.0
  %4635 = vmatmul.mubr.f32.gmra.mrb[0].mxu0 %v4261
  %v4636 = vpop.f32.mrb[0].mxu0
  %v4637 = vadd.f32 0.0, %v4636
  %v4638 = vpop.f32.mrb[0].mxu0
  %4639 = vmatprep.mubr.f32.mxu0 0.0
  %4640 = vmatmul.mubr.f32.gmra.mrb[0].mxu0 %v4264
  %v4641 = vpop.f32.mrb[0].mxu0
  %v4642 = vadd.f32 0.0, %v4641
  %v4643 = vpop.f32.mrb[0].mxu0
  %4644 = vmatprep.mubr.f32.mxu0 0.0
  %4645 = vmatmul.mubr.f32.gmra.mrb[0].mxu0 %v4267
  %v4646 = vpop.f32.mrb[0].mxu0
  %v4647 = vadd.f32 0.0, %v4646
  %v4648 = vpop.f32.mrb[0].mxu0
  %4649 = vmatprep.mubr.f32.mxu0 0.0
  %4650 = vmatmul.mubr.f32.gmra.mrb[0].mxu0 %v4270
  %v4651 = vpop.f32.mrb[0].mxu0
  %v4652 = vadd.f32 0.0, %v4651
  %v4653 = vpop.f32.mrb[0].mxu0
  %4654 = vmatprep.mubr.f32.mxu0 0.0
  %4655 = vmatmul.mubr.f32.gmra.mrb[0].mxu0 %v4273
  %v4656 = vpop.f32.mrb[0].mxu0
  %v4657 = vadd.f32 0.0, %v4656
  %v4658 = vpop.f32.mrb[0].mxu0
  %4659 = vmatprep.mubr.f32.mxu0 0.0
  %4660 = vmatmul.mubr.f32.gmra.mrb[0].mxu0 %v4276
  %v4661 = vpop.f32.mrb[0].mxu0
  %v4662 = vadd.f32 0.0, %v4661
  %v4663 = vpop.f32.mrb[0].mxu0
  %4664 = vmatprep.mubr.f32.mxu0 0.0
  %4665 = vmatmul.mubr.f32.gmra.mrb[0].mxu0 %v4279
  %v4666 = vpop.f32.mrb[0].mxu0
  %v4667 = vadd.f32 0.0, %v4666
  %v4668 = vpop.f32.mrb[0].mxu0
  %4669 = vmatprep.mubr.f32.mxu0 0.0
  %4670 = vmatmul.mubr.f32.gmra.mrb[0].mxu0 %v4282
  %v4671 = vpop.f32.mrb[0].mxu0
  %v4672 = vadd.f32 0.0, %v4671
  %v4673 = vpop.f32.mrb[0].mxu0
  %4674 = vmatprep.mubr.f32.mxu0 0.0
  %4675 = vmatmul.mubr.f32.gmra.mrb[0].mxu0 %v4285
  %v4676 = vpop.f32.mrb[0].mxu0
  %v4677 = vadd.f32 0.0, %v4676
  %v4678 = vpop.f32.mrb[0].mxu0
  %4679 = vmatprep.mubr.f32.mxu0 0.0
  %4680 = vmatmul.mubr.f32.gmra.mrb[0].mxu0 %v4288
  %v4681 = vpop.f32.mrb[0].mxu0
  %v4682 = vadd.f32 0.0, %v4681
  %v4683 = vpop.f32.mrb[0].mxu0
  %4684 = vmatprep.mubr.f32.mxu0 0.0
  %4685 = vmatmul.mubr.f32.gmra.mrb[0].mxu0 %v4291
  %v4686 = vpop.f32.mrb[0].mxu0
  %v4687 = vadd.f32 0.0, %v4686
  %v4688 = vpop.f32.mrb[0].mxu0
  %4689 = vmatprep.mubr.f32.mxu0 0.0
  %4690 = vmatmul.mubr.f32.gmra.mrb[0].mxu0 %v4294
  %v4691 = vpop.f32.mrb[0].mxu0
  %v4692 = vadd.f32 0.0, %v4691
  %v4693 = vpop.f32.mrb[0].mxu0
  %4694 = vmatprep.mubr.f32.mxu0 0.0
  %4695 = vmatmul.mubr.f32.gmra.mrb[0].mxu0 %v4297
  %v4696 = vpop.f32.mrb[0].mxu0
  %v4697 = vadd.f32 0.0, %v4696
  %v4698 = vpop.f32.mrb[0].mxu0
  %4699 = vmatprep.mubr.f32.mxu0 0.0
  %4700 = vmatmul.mubr.f32.gmra.mrb[0].mxu0 %v4300
  %v4701 = vpop.f32.mrb[0].mxu0
  %v4702 = vadd.f32 0.0, %v4701
  %v4703 = vpop.f32.mrb[0].mxu0
  %4704 = vmatprep.mubr.f32.mxu0 0.0
  %4705 = vmatmul.mubr.f32.gmra.mrb[0].mxu0 %v4303
  %v4706 = vpop.f32.mrb[0].mxu0
  %v4707 = vadd.f32 0.0, %v4706
  %v4708 = vpop.f32.mrb[0].mxu0
  %4709 = vmatprep.mubr.f32.mxu0 0.0
  %4710 = vmatmul.mubr.f32.gmra.mrb[0].mxu0 %v4306
  %v4711 = vpop.f32.mrb[0].mxu0
  %v4712 = vadd.f32 0.0, %v4711
  %v4713 = vpop.f32.mrb[0].mxu0
  %4714 = vmatprep.mubr.f32.mxu0 0.0
  %4715 = vmatmul.mubr.f32.gmra.mrb[0].mxu0 %v4309
  %v4716 = vpop.f32.mrb[0].mxu0
  %v4717 = vadd.f32 0.0, %v4716
  %v4718 = vpop.f32.mrb[0].mxu0
  %4719 = vmatprep.mubr.f32.mxu0 0.0
  %4720 = vmatmul.mubr.f32.gmra.mrb[0].mxu0 %v4312
  %v4721 = vpop.f32.mrb[0].mxu0
  %v4722 = vadd.f32 0.0, %v4721
  %v4723 = vpop.f32.mrb[0].mxu0
  %4724 = vmatprep.mubr.f32.mxu0 0.0
  %4725 = vmatmul.mubr.f32.gmra.mrb[0].mxu0 %v4315
  %v4726 = vpop.f32.mrb[0].mxu0
  %v4727 = vadd.f32 0.0, %v4726
  %v4728 = vpop.f32.mrb[0].mxu0
  %4729 = vmatprep.mubr.f32.mxu0 0.0
  %4730 = vmatmul.mubr.f32.gmra.mrb[0].mxu0 %v4318
  %v4731 = vpop.f32.mrb[0].mxu0
  %v4732 = vadd.f32 0.0, %v4731
  %v4733 = vpop.f32.mrb[0].mxu0
  %4734 = vmatprep.mubr.f32.mxu0 0.0
  %4735 = vmatmul.mubr.f32.gmra.mrb[0].mxu0 %v4321
  %v4736 = vpop.f32.mrb[0].mxu0
  %v4737 = vadd.f32 0.0, %v4736
  %v4738 = vpop.f32.mrb[0].mxu0
  %4739 = vmatprep.mubr.f32.mxu0 0.0
  %4740 = vmatmul.mubr.f32.gmra.mrb[0].mxu0 %v4324
  %v4741 = vpop.f32.mrb[0].mxu0
  %v4742 = vadd.f32 0.0, %v4741
  %v4743 = vpop.f32.mrb[0].mxu0
  %4744 = vmatprep.mubr.f32.mxu0 0.0
  %4745 = vmatmul.mubr.f32.gmra.mrb[0].mxu0 %v4327
  %v4746 = vpop.f32.mrb[0].mxu0
  %v4747 = vadd.f32 0.0, %v4746
  %v4748 = vpop.f32.mrb[0].mxu0
  %4749 = vmatprep.mubr.f32.mxu0 0.0
  %4750 = vmatmul.mubr.f32.gmra.mrb[0].mxu0 %v4330
  %v4751 = vpop.f32.mrb[0].mxu0
  %v4752 = vadd.f32 0.0, %v4751
  %v4753 = vpop.f32.mrb[0].mxu0
  %4754 = vmatprep.mubr.f32.mxu0 0.0
  %4755 = vmatmul.mubr.f32.gmra.mrb[0].mxu0 %v4333
  %v4756 = vpop.f32.mrb[0].mxu0
  %v4757 = vadd.f32 0.0, %v4756
  %v4758 = vpop.f32.mrb[0].mxu0
  %4759 = vmatprep.mubr.f32.mxu0 0.0
  %4760 = vmatmul.mubr.f32.gmra.mrb[0].mxu0 %v4336
  %v4761 = vpop.f32.mrb[0].mxu0
  %v4762 = vadd.f32 0.0, %v4761
  %v4763 = vpop.f32.mrb[0].mxu0
  %4764 = vmatprep.mubr.f32.mxu0 0.0
  %4765 = vmatmul.mubr.f32.gmra.mrb[0].mxu0 %v4339
  %v4766 = vpop.f32.mrb[0].mxu0
  %v4767 = vadd.f32 0.0, %v4766
  %v4768 = vpop.f32.mrb[0].mxu0
  %4769 = vmatprep.mubr.f32.mxu0 0.0
  %4770 = vmatmul.mubr.f32.gmra.mrb[0].mxu0 %v4342
  %v4771 = vpop.f32.mrb[0].mxu0
  %v4772 = vadd.f32 0.0, %v4771
  %v4773 = vpop.f32.mrb[0].mxu0
  %4774 = vmatprep.mubr.f32.mxu0 0.0
  %4775 = vmatmul.mubr.f32.gmra.mrb[0].mxu0 %v4345
  %v4776 = vpop.f32.mrb[0].mxu0
  %v4777 = vadd.f32 0.0, %v4776
  %v4778 = vpop.f32.mrb[0].mxu0
  %4779 = vmatprep.mubr.f32.mxu0 0.0
  %4780 = vmatmul.mubr.f32.gmra.mrb[0].mxu0 %v4348
  %v4781 = vpop.f32.mrb[0].mxu0
  %v4782 = vadd.f32 0.0, %v4781
  %v4783 = vpop.f32.mrb[0].mxu0
  %4784 = vmatprep.mubr.f32.mxu0 0.0
  %4785 = vmatmul.mubr.f32.gmra.mrb[0].mxu0 %v4351
  %v4786 = vpop.f32.mrb[0].mxu0
  %v4787 = vadd.f32 0.0, %v4786
  %v4788 = vpop.f32.mrb[0].mxu0
  %4789 = vmatprep.mubr.f32.mxu0 0.0
  %4790 = vmatmul.mubr.f32.gmra.mrb[0].mxu0 %v4354
  %v4791 = vpop.f32.mrb[0].mxu0
  %v4792 = vadd.f32 0.0, %v4791
  %v4793 = vpop.f32.mrb[0].mxu0
  %4794 = vmatprep.mubr.f32.mxu0 0.0
  %4795 = vmatmul.mubr.f32.gmra.mrb[0].mxu0 %v4357
  %v4796 = vpop.f32.mrb[0].mxu0
  %v4797 = vadd.f32 0.0, %v4796
  %v4798 = vpop.f32.mrb[0].mxu0
  %4799 = vmatprep.mubr.f32.mxu0 0.0
  %4800 = vmatmul.mubr.f32.gmra.mrb[0].mxu0 %v4360
  %v4801 = vpop.f32.mrb[0].mxu0
  %v4802 = vadd.f32 0.0, %v4801
  %v4803 = vpop.f32.mrb[0].mxu0
  %4804 = vmatprep.mubr.f32.mxu0 0.0
  %4805 = vmatmul.mubr.f32.gmra.mrb[0].mxu0 %v4363
  %v4806 = vpop.f32.mrb[0].mxu0
  %v4807 = vadd.f32 0.0, %v4806
  %v4808 = vpop.f32.mrb[0].mxu0
  %4809 = vmatprep.mubr.f32.mxu0 0.0
  %4810 = vmatmul.mubr.f32.gmra.mrb[0].mxu0 %v4366
  %v4811 = vpop.f32.mrb[0].mxu0
  %v4812 = vadd.f32 0.0, %v4811
  %v4813 = vpop.f32.mrb[0].mxu0
  %4814 = vmatprep.mubr.f32.mxu0 0.0
  %4815 = vmatmul.mubr.f32.gmra.mrb[0].mxu0 %v4369
  %v4816 = vpop.f32.mrb[0].mxu0
  %v4817 = vadd.f32 0.0, %v4816
  %v4818 = vpop.f32.mrb[0].mxu0
  %4819 = vmatprep.mubr.f32.mxu0 0.0
  %4820 = vmatmul.mubr.f32.gmra.mrb[0].mxu0 %v4372
  %v4821 = vpop.f32.mrb[0].mxu0
  %v4822 = vadd.f32 0.0, %v4821
  %v4823 = vpop.f32.mrb[0].mxu0
  %4824 = vmatprep.mubr.f32.mxu0 0.0
  %4825 = vmatmul.mubr.f32.gmra.mrb[0].mxu0 %v4375
  %v4826 = vpop.f32.mrb[0].mxu0
  %v4827 = vadd.f32 0.0, %v4826
  %v4828 = vpop.f32.mrb[0].mxu0
  %4829 = vdwg.mxu0
  %v4830 = vadd.f32 %v3990, %v4447
  %v4831 = vadd.f32 %v3991, %v4452
  %v4832 = vadd.f32 %v3992, %v4457
  %v4833 = vadd.f32 %v3993, %v4462
  %v4834 = vadd.f32 %v3994, %v4467
  %v4835 = vadd.f32 %v3995, %v4472
  %v4836 = vadd.f32 %v3996, %v4477
  %v4837 = vadd.f32 %v3997, %v4482
  %v4838 = vadd.f32 %v3998, %v4487
  %v4839 = vadd.f32 %v3999, %v4492
  %v4840 = vadd.f32 %v4000, %v4497
  %v4841 = vadd.f32 %v4001, %v4502
  %v4842 = vadd.f32 %v4002, %v4507
  %v4843 = vadd.f32 %v4003, %v4512
  %v4844 = vadd.f32 %v4004, %v4517
  %v4845 = vadd.f32 %v4005, %v4522
  %v4846 = vadd.f32 %v4006, %v4527
  %v4847 = vadd.f32 %v4007, %v4532
  %v4848 = vadd.f32 %v4008, %v4537
  %v4849 = vadd.f32 %v4009, %v4542
  %v4850 = vadd.f32 %v4010, %v4547
  %v4851 = vadd.f32 %v4011, %v4552
  %v4852 = vadd.f32 %v4012, %v4557
  %v4853 = vadd.f32 %v4013, %v4562
  %v4854 = vadd.f32 %v4014, %v4567
  %v4855 = vadd.f32 %v4015, %v4572
  %v4856 = vadd.f32 %v4016, %v4577
  %v4857 = vadd.f32 %v4017, %v4582
  %v4858 = vadd.f32 %v4018, %v4587
  %v4859 = vadd.f32 %v4019, %v4592
  %v4860 = vadd.f32 %v4020, %v4597
  %v4861 = vadd.f32 %v4021, %v4602
  %v4862 = vadd.f32 %v4022, %v4607
  %v4863 = vadd.f32 %v4023, %v4612
  %v4864 = vadd.f32 %v4024, %v4617
  %v4865 = vadd.f32 %v4025, %v4622
  %v4866 = vadd.f32 %v4026, %v4627
  %v4867 = vadd.f32 %v4027, %v4632
  %v4868 = vadd.f32 %v4028, %v4637
  %v4869 = vadd.f32 %v4029, %v4642
  %v4870 = vadd.f32 %v4030, %v4647
  %v4871 = vadd.f32 %v4031, %v4652
  %v4872 = vadd.f32 %v4032, %v4657
  %v4873 = vadd.f32 %v4033, %v4662
  %v4874 = vadd.f32 %v4034, %v4667
  %v4875 = vadd.f32 %v4035, %v4672
  %v4876 = vadd.f32 %v4036, %v4677
  %v4877 = vadd.f32 %v4037, %v4682
  %v4878 = vadd.f32 %v4038, %v4687
  %v4879 = vadd.f32 %v4039, %v4692
  %v4880 = vadd.f32 %v4040, %v4697
  %v4881 = vadd.f32 %v4041, %v4702
  %v4882 = vadd.f32 %v4042, %v4707
  %v4883 = vadd.f32 %v4043, %v4712
  %v4884 = vadd.f32 %v4044, %v4717
  %v4885 = vadd.f32 %v4045, %v4722
  %v4886 = vadd.f32 %v4046, %v4727
  %v4887 = vadd.f32 %v4047, %v4732
  %v4888 = vadd.f32 %v4048, %v4737
  %v4889 = vadd.f32 %v4049, %v4742
  %v4890 = vadd.f32 %v4050, %v4747
  %v4891 = vadd.f32 %v4051, %v4752
  %v4892 = vadd.f32 %v4052, %v4757
  %v4893 = vadd.f32 %v4053, %v4762
  %v4894 = vadd.f32 %v4054, %v4767
  %v4895 = vadd.f32 %v4055, %v4772
  %v4896 = vadd.f32 %v4056, %v4777
  %v4897 = vadd.f32 %v4057, %v4782
  %v4898 = vadd.f32 %v4058, %v4787
  %v4899 = vadd.f32 %v4059, %v4792
  %v4900 = vadd.f32 %v4060, %v4797
  %v4901 = vadd.f32 %v4061, %v4802
  %v4902 = vadd.f32 %v4062, %v4807
  %v4903 = vadd.f32 %v4063, %v4812
  %v4904 = vadd.f32 %v4064, %v4817
  %v4905 = vadd.f32 %v4065, %v4822
  %v4906 = vadd.f32 %v4066, %v4827
  %v4907 = vld [vmem:[%s0 + $0x24] sm:$0xff]
  %v4908 = vld [vmem:[%s0 + $0x2c] sm:$0xff]
  %v4909 = vld [vmem:[%s0 + $0x34] sm:$0xff]
  %v4910 = vld [vmem:[%s0 + $0x3c] sm:$0xff]
  %v4911 = vld [vmem:[%s0 + $0x44] sm:$0xff]
  %v4912 = vld [vmem:[%s0 + $0x4c] sm:$0xff]
  %v4913 = vld [vmem:[%s0 + $0x54] sm:$0xff]
  %v4914 = vld [vmem:[%s0 + $0x5c] sm:$0xff]
  %v4915 = vld [vmem:[%s0 + $0x64] sm:$0xff]
  %v4916 = vld [vmem:[%s0 + $0x6c] sm:$0xff]
  %v4917 = vld [vmem:[%s0 + $0x74] sm:$0xff]
  %v4918 = vld [vmem:[%s0 + $0x7c] sm:$0xff]
  %v4919 = vld [vmem:[%s0 + $0x84] sm:$0xff]
  %v4920 = vld [vmem:[%s0 + $0x8c] sm:$0xff]
  %v4921 = vld [vmem:[%s0 + $0x94] sm:$0xff]
  %v4922 = vld [vmem:[%s0 + $0x9c] sm:$0xff]
  %v4923 = vld [vmem:[%s0 + $0xa4] sm:$0xff]
  %v4924 = vld [vmem:[%s0 + $0xac] sm:$0xff]
  %v4925 = vld [vmem:[%s0 + $0xb4] sm:$0xff]
  %v4926 = vld [vmem:[%s0 + $0xbc] sm:$0xff]
  %v4927 = vld [vmem:[%s0 + $0xc4] sm:$0xff]
  %v4928 = vld [vmem:[%s0 + $0xcc] sm:$0xff]
  %v4929 = vld [vmem:[%s0 + $0xd4] sm:$0xff]
  %v4930 = vld [vmem:[%s0 + $0xdc] sm:$0xff]
  %v4931 = vld [vmem:[%s0 + $0xe4] sm:$0xff]
  %v4932 = vld [vmem:[%s0 + $0xec] sm:$0xff]
  %v4933 = vld [vmem:[%s0 + $0xf4] sm:$0xff]
  %v4934 = vld [vmem:[%s0 + $0xfc] sm:$0xff]
  %v4935 = vld [vmem:[%s0 + $0x104] sm:$0xff]
  %v4936 = vld [vmem:[%s0 + $0x10c] sm:$0xff]
  %v4937 = vld [vmem:[%s0 + $0x114] sm:$0xff]
  %v4938 = vld [vmem:[%s0 + $0x11c] sm:$0xff]
  %v4939 = vld [vmem:[%s0 + $0x124] sm:$0xff]
  %v4940 = vld [vmem:[%s0 + $0x12c] sm:$0xff]
  %v4941 = vld [vmem:[%s0 + $0x134] sm:$0xff]
  %v4942 = vld [vmem:[%s0 + $0x13c] sm:$0xff]
  %v4943 = vld [vmem:[%s0 + $0x144] sm:$0xff]
  %v4944 = vld [vmem:[%s0 + $0x14c] sm:$0xff]
  %v4945 = vld [vmem:[%s0 + $0x154] sm:$0xff]
  %v4946 = vld [vmem:[%s0 + $0x15c] sm:$0xff]
  %v4947 = vld [vmem:[%s0 + $0x164] sm:$0xff]
  %v4948 = vld [vmem:[%s0 + $0x16c] sm:$0xff]
  %v4949 = vld [vmem:[%s0 + $0x174] sm:$0xff]
  %v4950 = vld [vmem:[%s0 + $0x17c] sm:$0xff]
  %v4951 = vld [vmem:[%s0 + $0x184] sm:$0xff]
  %v4952 = vld [vmem:[%s0 + $0x18c] sm:$0xff]
  %v4953 = vld [vmem:[%s0 + $0x194] sm:$0xff]
  %v4954 = vld [vmem:[%s0 + $0x19c] sm:$0xff]
  %v4955 = vld [vmem:[%s0 + $0x1a4] sm:$0xff]
  %v4956 = vld [vmem:[%s0 + $0x1ac] sm:$0xff]
  %v4957 = vld [vmem:[%s0 + $0x1b4] sm:$0xff]
  %v4958 = vld [vmem:[%s0 + $0x1bc] sm:$0xff]
  %v4959 = vld [vmem:[%s0 + $0x1c4] sm:$0xff]
  %v4960 = vld [vmem:[%s0 + $0x1cc] sm:$0xff]
  %v4961 = vld [vmem:[%s0 + $0x1d4] sm:$0xff]
  %v4962 = vld [vmem:[%s0 + $0x1dc] sm:$0xff]
  %v4963 = vld [vmem:[%s0 + $0x1e4] sm:$0xff]
  %v4964 = vld [vmem:[%s0 + $0x1ec] sm:$0xff]
  %v4965 = vld [vmem:[%s0 + $0x1f4] sm:$0xff]
  %v4966 = vld [vmem:[%s0 + $0x1fc] sm:$0xff]
  %v4967 = vld [vmem:[%s0 + $0x204] sm:$0xff]
  %v4968 = vld [vmem:[%s0 + $0x20c] sm:$0xff]
  %v4969 = vld [vmem:[%s0 + $0x214] sm:$0xff]
  %v4970 = vld [vmem:[%s0 + $0x21c] sm:$0xff]
  %v4971 = vld [vmem:[%s0 + $0x224] sm:$0xff]
  %v4972 = vld [vmem:[%s0 + $0x22c] sm:$0xff]
  %v4973 = vld [vmem:[%s0 + $0x234] sm:$0xff]
  %v4974 = vld [vmem:[%s0 + $0x23c] sm:$0xff]
  %v4975 = vld [vmem:[%s0 + $0x244] sm:$0xff]
  %v4976 = vld [vmem:[%s0 + $0x24c] sm:$0xff]
  %v4977 = vld [vmem:[%s0 + $0x254] sm:$0xff]
  %v4978 = vld [vmem:[%s0 + $0x25c] sm:$0xff]
  %v4979 = vld [vmem:[%s0 + $0x264] sm:$0xff]
  %v4980 = vld [vmem:[%s0 + $0x26c] sm:$0xff]
  %v4981 = vld [vmem:[%s0 + $0x274] sm:$0xff]
  %v4982 = vld [vmem:[%s0 + $0x27c] sm:$0xff]
  %v4983 = vld [vmem:[%s0 + $0x284] sm:$0xff]
  %s4984 = scalar_lea.vmem %s1, 24
  %v4985 = vld [vmem:[%s4984] sm:$0xf]
  %v4987 = vsel %vm177, %v4907, 0
  %v4990 = vsel %vm177, %v4908, 0
  %v4993 = vsel %vm177, %v4909, 0
  %v4996 = vsel %vm177, %v4910, 0
  %v4999 = vsel %vm177, %v4911, 0
  %v5002 = vsel %vm177, %v4912, 0
  %v5005 = vsel %vm177, %v4913, 0
  %v5008 = vsel %vm177, %v4914, 0
  %v5011 = vsel %vm177, %v4915, 0
  %v5014 = vsel %vm177, %v4916, 0
  %v5017 = vsel %vm177, %v4917, 0
  %v5020 = vsel %vm177, %v4918, 0
  %v5023 = vsel %vm177, %v4919, 0
  %v5026 = vsel %vm177, %v4920, 0
  %v5029 = vsel %vm177, %v4921, 0
  %v5032 = vsel %vm177, %v4922, 0
  %v5035 = vsel %vm177, %v4923, 0
  %v5038 = vsel %vm177, %v4924, 0
  %v5041 = vsel %vm177, %v4925, 0
  %v5044 = vsel %vm177, %v4926, 0
  %v5047 = vsel %vm177, %v4927, 0
  %v5050 = vsel %vm177, %v4928, 0
  %v5053 = vsel %vm177, %v4929, 0
  %v5056 = vsel %vm177, %v4930, 0
  %v5059 = vsel %vm177, %v4931, 0
  %v5062 = vsel %vm177, %v4932, 0
  %v5065 = vsel %vm177, %v4933, 0
  %v5068 = vsel %vm177, %v4934, 0
  %v5071 = vsel %vm177, %v4935, 0
  %v5074 = vsel %vm177, %v4936, 0
  %v5077 = vsel %vm177, %v4937, 0
  %v5080 = vsel %vm177, %v4938, 0
  %v5083 = vsel %vm177, %v4939, 0
  %v5086 = vsel %vm177, %v4940, 0
  %v5089 = vsel %vm177, %v4941, 0
  %v5092 = vsel %vm177, %v4942, 0
  %v5095 = vsel %vm177, %v4943, 0
  %v5098 = vsel %vm177, %v4944, 0
  %v5101 = vsel %vm177, %v4945, 0
  %v5104 = vsel %vm177, %v4946, 0
  %v5107 = vsel %vm177, %v4947, 0
  %v5110 = vsel %vm177, %v4948, 0
  %v5113 = vsel %vm177, %v4949, 0
  %v5116 = vsel %vm177, %v4950, 0
  %v5119 = vsel %vm177, %v4951, 0
  %v5122 = vsel %vm177, %v4952, 0
  %v5125 = vsel %vm177, %v4953, 0
  %v5128 = vsel %vm177, %v4954, 0
  %v5131 = vsel %vm177, %v4955, 0
  %v5134 = vsel %vm177, %v4956, 0
  %v5137 = vsel %vm177, %v4957, 0
  %v5140 = vsel %vm177, %v4958, 0
  %v5143 = vsel %vm177, %v4959, 0
  %v5146 = vsel %vm177, %v4960, 0
  %v5149 = vsel %vm177, %v4961, 0
  %v5152 = vsel %vm177, %v4962, 0
  %v5155 = vsel %vm177, %v4963, 0
  %v5158 = vsel %vm177, %v4964, 0
  %v5161 = vsel %vm177, %v4965, 0
  %v5164 = vsel %vm177, %v4966, 0
  %v5167 = vsel %vm177, %v4967, 0
  %v5170 = vsel %vm177, %v4968, 0
  %v5173 = vsel %vm177, %v4969, 0
  %v5176 = vsel %vm177, %v4970, 0
  %v5179 = vsel %vm177, %v4971, 0
  %v5182 = vsel %vm177, %v4972, 0
  %v5185 = vsel %vm177, %v4973, 0
  %v5188 = vsel %vm177, %v4974, 0
  %v5191 = vsel %vm177, %v4975, 0
  %v5194 = vsel %vm177, %v4976, 0
  %v5197 = vsel %vm177, %v4977, 0
  %v5200 = vsel %vm177, %v4978, 0
  %v5203 = vsel %vm177, %v4979, 0
  %v5206 = vsel %vm177, %v4980, 0
  %v5209 = vsel %vm177, %v4981, 0
  %v5212 = vsel %vm177, %v4982, 0
  %v5215 = vsel %vm177, %v4983, 0
  %v5218 = vsel %vm409, %v4985, 0
  %5220 = vmatprep.subr.mxu0 0.0
  %5221 = vmatpush1.msra.mxu0 %v5218
  %5222 = vmatprep.subr.mxu0 0.0
  %5223 = vmatpush1.msra.mxu0 0.0
  %5224 = vmatprep.subr.mxu0 0.0
  %5225 = vmatpush1.msra.mxu0 0.0
  %5226 = vmatprep.subr.mxu0 0.0
  %5227 = vmatpush1.msra.mxu0 0.0
  %5228 = vmatprep.subr.mxu0 0.0
  %5229 = vmatpush1.msra.mxu0 0.0
  %5230 = vmatprep.subr.mxu0 0.0
  %5231 = vmatpush1.msra.mxu0 0.0
  %5232 = vmatprep.subr.mxu0 0.0
  %5233 = vmatpush1.msra.mxu0 0.0
  %5234 = vmatprep.subr.mxu0 0.0
  %5235 = vmatpush1.msra.mxu0 0.0
  %5236 = vmatprep.subr.mxu0 0.0
  %5237 = vmatpush1.msra.mxu0 0.0
  %5238 = vmatprep.subr.mxu0 0.0
  %5239 = vmatpush1.msra.mxu0 0.0
  %5240 = vmatprep.subr.mxu0 0.0
  %5241 = vmatpush1.msra.mxu0 0.0
  %5242 = vmatprep.subr.mxu0 0.0
  %5243 = vmatpush1.msra.mxu0 0.0
  %5244 = vmatprep.subr.mxu0 0.0
  %5245 = vmatpush1.msra.mxu0 0.0
  %5246 = vmatprep.subr.mxu0 0.0
  %5247 = vmatpush1.msra.mxu0 0.0
  %5248 = vmatprep.subr.mxu0 0.0
  %5249 = vmatpush1.msra.mxu0 0.0
  %5250 = vmatprep.subr.mxu0 0.0
  %5251 = vmatpush1.msra.mxu0 0.0
  %5252 = vmatprep.subr.mxu0 0.0
  %5253 = vmatpush1.msra.mxu0 0.0
  %5254 = vmatprep.subr.mxu0 0.0
  %5255 = vmatpush1.msra.mxu0 0.0
  %5256 = vmatprep.subr.mxu0 0.0
  %5257 = vmatpush1.msra.mxu0 0.0
  %5258 = vmatprep.subr.mxu0 0.0
  %5259 = vmatpush1.msra.mxu0 0.0
  %5260 = vmatprep.subr.mxu0 0.0
  %5261 = vmatpush1.msra.mxu0 0.0
  %5262 = vmatprep.subr.mxu0 0.0
  %5263 = vmatpush1.msra.mxu0 0.0
  %5264 = vmatprep.subr.mxu0 0.0
  %5265 = vmatpush1.msra.mxu0 0.0
  %5266 = vmatprep.subr.mxu0 0.0
  %5267 = vmatpush1.msra.mxu0 0.0
  %5268 = vmatprep.subr.mxu0 0.0
  %5269 = vmatpush1.msra.mxu0 0.0
  %5270 = vmatprep.subr.mxu0 0.0
  %5271 = vmatpush1.msra.mxu0 0.0
  %5272 = vmatprep.subr.mxu0 0.0
  %5273 = vmatpush1.msra.mxu0 0.0
  %5274 = vmatprep.subr.mxu0 0.0
  %5275 = vmatpush1.msra.mxu0 0.0
  %5276 = vmatprep.subr.mxu0 0.0
  %5277 = vmatpush1.msra.mxu0 0.0
  %5278 = vmatprep.subr.mxu0 0.0
  %5279 = vmatpush1.msra.mxu0 0.0
  %5280 = vmatprep.subr.mxu0 0.0
  %5281 = vmatpush1.msra.mxu0 0.0
  %5282 = vmatprep.subr.mxu0 0.0
  %5283 = vmatpush1.msra.mxu0 0.0
  %5284 = vmatprep.mubr.f32.mxu0 0.0
  %5285 = vmatmul.mubr.f32.gmra.mrb[0].mxu0 %v4987
  %v5286 = vpop.f32.mrb[0].mxu0
  %v5287 = vadd.f32 0.0, %v5286
  %v5288 = vpop.f32.mrb[0].mxu0
  %5289 = vmatprep.mubr.f32.mxu0 0.0
  %5290 = vmatmul.mubr.f32.gmra.mrb[0].mxu0 %v4990
  %v5291 = vpop.f32.mrb[0].mxu0
  %v5292 = vadd.f32 0.0, %v5291
  %v5293 = vpop.f32.mrb[0].mxu0
  %5294 = vmatprep.mubr.f32.mxu0 0.0
  %5295 = vmatmul.mubr.f32.gmra.mrb[0].mxu0 %v4993
  %v5296 = vpop.f32.mrb[0].mxu0
  %v5297 = vadd.f32 0.0, %v5296
  %v5298 = vpop.f32.mrb[0].mxu0
  %5299 = vmatprep.mubr.f32.mxu0 0.0
  %5300 = vmatmul.mubr.f32.gmra.mrb[0].mxu0 %v4996
  %v5301 = vpop.f32.mrb[0].mxu0
  %v5302 = vadd.f32 0.0, %v5301
  %v5303 = vpop.f32.mrb[0].mxu0
  %5304 = vmatprep.mubr.f32.mxu0 0.0
  %5305 = vmatmul.mubr.f32.gmra.mrb[0].mxu0 %v4999
  %v5306 = vpop.f32.mrb[0].mxu0
  %v5307 = vadd.f32 0.0, %v5306
  %v5308 = vpop.f32.mrb[0].mxu0
  %5309 = vmatprep.mubr.f32.mxu0 0.0
  %5310 = vmatmul.mubr.f32.gmra.mrb[0].mxu0 %v5002
  %v5311 = vpop.f32.mrb[0].mxu0
  %v5312 = vadd.f32 0.0, %v5311
  %v5313 = vpop.f32.mrb[0].mxu0
  %5314 = vmatprep.mubr.f32.mxu0 0.0
  %5315 = vmatmul.mubr.f32.gmra.mrb[0].mxu0 %v5005
  %v5316 = vpop.f32.mrb[0].mxu0
  %v5317 = vadd.f32 0.0, %v5316
  %v5318 = vpop.f32.mrb[0].mxu0
  %5319 = vmatprep.mubr.f32.mxu0 0.0
  %5320 = vmatmul.mubr.f32.gmra.mrb[0].mxu0 %v5008
  %v5321 = vpop.f32.mrb[0].mxu0
  %v5322 = vadd.f32 0.0, %v5321
  %v5323 = vpop.f32.mrb[0].mxu0
  %5324 = vmatprep.mubr.f32.mxu0 0.0
  %5325 = vmatmul.mubr.f32.gmra.mrb[0].mxu0 %v5011
  %v5326 = vpop.f32.mrb[0].mxu0
  %v5327 = vadd.f32 0.0, %v5326
  %v5328 = vpop.f32.mrb[0].mxu0
  %5329 = vmatprep.mubr.f32.mxu0 0.0
  %5330 = vmatmul.mubr.f32.gmra.mrb[0].mxu0 %v5014
  %v5331 = vpop.f32.mrb[0].mxu0
  %v5332 = vadd.f32 0.0, %v5331
  %v5333 = vpop.f32.mrb[0].mxu0
  %5334 = vmatprep.mubr.f32.mxu0 0.0
  %5335 = vmatmul.mubr.f32.gmra.mrb[0].mxu0 %v5017
  %v5336 = vpop.f32.mrb[0].mxu0
  %v5337 = vadd.f32 0.0, %v5336
  %v5338 = vpop.f32.mrb[0].mxu0
  %5339 = vmatprep.mubr.f32.mxu0 0.0
  %5340 = vmatmul.mubr.f32.gmra.mrb[0].mxu0 %v5020
  %v5341 = vpop.f32.mrb[0].mxu0
  %v5342 = vadd.f32 0.0, %v5341
  %v5343 = vpop.f32.mrb[0].mxu0
  %5344 = vmatprep.mubr.f32.mxu0 0.0
  %5345 = vmatmul.mubr.f32.gmra.mrb[0].mxu0 %v5023
  %v5346 = vpop.f32.mrb[0].mxu0
  %v5347 = vadd.f32 0.0, %v5346
  %v5348 = vpop.f32.mrb[0].mxu0
  %5349 = vmatprep.mubr.f32.mxu0 0.0
  %5350 = vmatmul.mubr.f32.gmra.mrb[0].mxu0 %v5026
  %v5351 = vpop.f32.mrb[0].mxu0
  %v5352 = vadd.f32 0.0, %v5351
  %v5353 = vpop.f32.mrb[0].mxu0
  %5354 = vmatprep.mubr.f32.mxu0 0.0
  %5355 = vmatmul.mubr.f32.gmra.mrb[0].mxu0 %v5029
  %v5356 = vpop.f32.mrb[0].mxu0
  %v5357 = vadd.f32 0.0, %v5356
  %v5358 = vpop.f32.mrb[0].mxu0
  %5359 = vmatprep.mubr.f32.mxu0 0.0
  %5360 = vmatmul.mubr.f32.gmra.mrb[0].mxu0 %v5032
  %v5361 = vpop.f32.mrb[0].mxu0
  %v5362 = vadd.f32 0.0, %v5361
  %v5363 = vpop.f32.mrb[0].mxu0
  %5364 = vmatprep.mubr.f32.mxu0 0.0
  %5365 = vmatmul.mubr.f32.gmra.mrb[0].mxu0 %v5035
  %v5366 = vpop.f32.mrb[0].mxu0
  %v5367 = vadd.f32 0.0, %v5366
  %v5368 = vpop.f32.mrb[0].mxu0
  %5369 = vmatprep.mubr.f32.mxu0 0.0
  %5370 = vmatmul.mubr.f32.gmra.mrb[0].mxu0 %v5038
  %v5371 = vpop.f32.mrb[0].mxu0
  %v5372 = vadd.f32 0.0, %v5371
  %v5373 = vpop.f32.mrb[0].mxu0
  %5374 = vmatprep.mubr.f32.mxu0 0.0
  %5375 = vmatmul.mubr.f32.gmra.mrb[0].mxu0 %v5041
  %v5376 = vpop.f32.mrb[0].mxu0
  %v5377 = vadd.f32 0.0, %v5376
  %v5378 = vpop.f32.mrb[0].mxu0
  %5379 = vmatprep.mubr.f32.mxu0 0.0
  %5380 = vmatmul.mubr.f32.gmra.mrb[0].mxu0 %v5044
  %v5381 = vpop.f32.mrb[0].mxu0
  %v5382 = vadd.f32 0.0, %v5381
  %v5383 = vpop.f32.mrb[0].mxu0
  %5384 = vmatprep.mubr.f32.mxu0 0.0
  %5385 = vmatmul.mubr.f32.gmra.mrb[0].mxu0 %v5047
  %v5386 = vpop.f32.mrb[0].mxu0
  %v5387 = vadd.f32 0.0, %v5386
  %v5388 = vpop.f32.mrb[0].mxu0
  %5389 = vmatprep.mubr.f32.mxu0 0.0
  %5390 = vmatmul.mubr.f32.gmra.mrb[0].mxu0 %v5050
  %v5391 = vpop.f32.mrb[0].mxu0
  %v5392 = vadd.f32 0.0, %v5391
  %v5393 = vpop.f32.mrb[0].mxu0
  %5394 = vmatprep.mubr.f32.mxu0 0.0
  %5395 = vmatmul.mubr.f32.gmra.mrb[0].mxu0 %v5053
  %v5396 = vpop.f32.mrb[0].mxu0
  %v5397 = vadd.f32 0.0, %v5396
  %v5398 = vpop.f32.mrb[0].mxu0
  %5399 = vmatprep.mubr.f32.mxu0 0.0
  %5400 = vmatmul.mubr.f32.gmra.mrb[0].mxu0 %v5056
  %v5401 = vpop.f32.mrb[0].mxu0
  %v5402 = vadd.f32 0.0, %v5401
  %v5403 = vpop.f32.mrb[0].mxu0
  %5404 = vmatprep.mubr.f32.mxu0 0.0
  %5405 = vmatmul.mubr.f32.gmra.mrb[0].mxu0 %v5059
  %v5406 = vpop.f32.mrb[0].mxu0
  %v5407 = vadd.f32 0.0, %v5406
  %v5408 = vpop.f32.mrb[0].mxu0
  %5409 = vmatprep.mubr.f32.mxu0 0.0
  %5410 = vmatmul.mubr.f32.gmra.mrb[0].mxu0 %v5062
  %v5411 = vpop.f32.mrb[0].mxu0
  %v5412 = vadd.f32 0.0, %v5411
  %v5413 = vpop.f32.mrb[0].mxu0
  %5414 = vmatprep.mubr.f32.mxu0 0.0
  %5415 = vmatmul.mubr.f32.gmra.mrb[0].mxu0 %v5065
  %v5416 = vpop.f32.mrb[0].mxu0
  %v5417 = vadd.f32 0.0, %v5416
  %v5418 = vpop.f32.mrb[0].mxu0
  %5419 = vmatprep.mubr.f32.mxu0 0.0
  %5420 = vmatmul.mubr.f32.gmra.mrb[0].mxu0 %v5068
  %v5421 = vpop.f32.mrb[0].mxu0
  %v5422 = vadd.f32 0.0, %v5421
  %v5423 = vpop.f32.mrb[0].mxu0
  %5424 = vmatprep.mubr.f32.mxu0 0.0
  %5425 = vmatmul.mubr.f32.gmra.mrb[0].mxu0 %v5071
  %v5426 = vpop.f32.mrb[0].mxu0
  %v5427 = vadd.f32 0.0, %v5426
  %v5428 = vpop.f32.mrb[0].mxu0
  %5429 = vmatprep.mubr.f32.mxu0 0.0
  %5430 = vmatmul.mubr.f32.gmra.mrb[0].mxu0 %v5074
  %v5431 = vpop.f32.mrb[0].mxu0
  %v5432 = vadd.f32 0.0, %v5431
  %v5433 = vpop.f32.mrb[0].mxu0
  %5434 = vmatprep.mubr.f32.mxu0 0.0
  %5435 = vmatmul.mubr.f32.gmra.mrb[0].mxu0 %v5077
  %v5436 = vpop.f32.mrb[0].mxu0
  %v5437 = vadd.f32 0.0, %v5436
  %v5438 = vpop.f32.mrb[0].mxu0
  %5439 = vmatprep.mubr.f32.mxu0 0.0
  %5440 = vmatmul.mubr.f32.gmra.mrb[0].mxu0 %v5080
  %v5441 = vpop.f32.mrb[0].mxu0
  %v5442 = vadd.f32 0.0, %v5441
  %v5443 = vpop.f32.mrb[0].mxu0
  %5444 = vmatprep.mubr.f32.mxu0 0.0
  %5445 = vmatmul.mubr.f32.gmra.mrb[0].mxu0 %v5083
  %v5446 = vpop.f32.mrb[0].mxu0
  %v5447 = vadd.f32 0.0, %v5446
  %v5448 = vpop.f32.mrb[0].mxu0
  %5449 = vmatprep.mubr.f32.mxu0 0.0
  %5450 = vmatmul.mubr.f32.gmra.mrb[0].mxu0 %v5086
  %v5451 = vpop.f32.mrb[0].mxu0
  %v5452 = vadd.f32 0.0, %v5451
  %v5453 = vpop.f32.mrb[0].mxu0
  %5454 = vmatprep.mubr.f32.mxu0 0.0
  %5455 = vmatmul.mubr.f32.gmra.mrb[0].mxu0 %v5089
  %v5456 = vpop.f32.mrb[0].mxu0
  %v5457 = vadd.f32 0.0, %v5456
  %v5458 = vpop.f32.mrb[0].mxu0
  %5459 = vmatprep.mubr.f32.mxu0 0.0
  %5460 = vmatmul.mubr.f32.gmra.mrb[0].mxu0 %v5092
  %v5461 = vpop.f32.mrb[0].mxu0
  %v5462 = vadd.f32 0.0, %v5461
  %v5463 = vpop.f32.mrb[0].mxu0
  %5464 = vmatprep.mubr.f32.mxu0 0.0
  %5465 = vmatmul.mubr.f32.gmra.mrb[0].mxu0 %v5095
  %v5466 = vpop.f32.mrb[0].mxu0
  %v5467 = vadd.f32 0.0, %v5466
  %v5468 = vpop.f32.mrb[0].mxu0
  %5469 = vmatprep.mubr.f32.mxu0 0.0
  %5470 = vmatmul.mubr.f32.gmra.mrb[0].mxu0 %v5098
  %v5471 = vpop.f32.mrb[0].mxu0
  %v5472 = vadd.f32 0.0, %v5471
  %v5473 = vpop.f32.mrb[0].mxu0
  %5474 = vmatprep.mubr.f32.mxu0 0.0
  %5475 = vmatmul.mubr.f32.gmra.mrb[0].mxu0 %v5101
  %v5476 = vpop.f32.mrb[0].mxu0
  %v5477 = vadd.f32 0.0, %v5476
  %v5478 = vpop.f32.mrb[0].mxu0
  %5479 = vmatprep.mubr.f32.mxu0 0.0
  %5480 = vmatmul.mubr.f32.gmra.mrb[0].mxu0 %v5104
  %v5481 = vpop.f32.mrb[0].mxu0
  %v5482 = vadd.f32 0.0, %v5481
  %v5483 = vpop.f32.mrb[0].mxu0
  %5484 = vmatprep.mubr.f32.mxu0 0.0
  %5485 = vmatmul.mubr.f32.gmra.mrb[0].mxu0 %v5107
  %v5486 = vpop.f32.mrb[0].mxu0
  %v5487 = vadd.f32 0.0, %v5486
  %v5488 = vpop.f32.mrb[0].mxu0
  %5489 = vmatprep.mubr.f32.mxu0 0.0
  %5490 = vmatmul.mubr.f32.gmra.mrb[0].mxu0 %v5110
  %v5491 = vpop.f32.mrb[0].mxu0
  %v5492 = vadd.f32 0.0, %v5491
  %v5493 = vpop.f32.mrb[0].mxu0
  %5494 = vmatprep.mubr.f32.mxu0 0.0
  %5495 = vmatmul.mubr.f32.gmra.mrb[0].mxu0 %v5113
  %v5496 = vpop.f32.mrb[0].mxu0
  %v5497 = vadd.f32 0.0, %v5496
  %v5498 = vpop.f32.mrb[0].mxu0
  %5499 = vmatprep.mubr.f32.mxu0 0.0
  %5500 = vmatmul.mubr.f32.gmra.mrb[0].mxu0 %v5116
  %v5501 = vpop.f32.mrb[0].mxu0
  %v5502 = vadd.f32 0.0, %v5501
  %v5503 = vpop.f32.mrb[0].mxu0
  %5504 = vmatprep.mubr.f32.mxu0 0.0
  %5505 = vmatmul.mubr.f32.gmra.mrb[0].mxu0 %v5119
  %v5506 = vpop.f32.mrb[0].mxu0
  %v5507 = vadd.f32 0.0, %v5506
  %v5508 = vpop.f32.mrb[0].mxu0
  %5509 = vmatprep.mubr.f32.mxu0 0.0
  %5510 = vmatmul.mubr.f32.gmra.mrb[0].mxu0 %v5122
  %v5511 = vpop.f32.mrb[0].mxu0
  %v5512 = vadd.f32 0.0, %v5511
  %v5513 = vpop.f32.mrb[0].mxu0
  %5514 = vmatprep.mubr.f32.mxu0 0.0
  %5515 = vmatmul.mubr.f32.gmra.mrb[0].mxu0 %v5125
  %v5516 = vpop.f32.mrb[0].mxu0
  %v5517 = vadd.f32 0.0, %v5516
  %v5518 = vpop.f32.mrb[0].mxu0
  %5519 = vmatprep.mubr.f32.mxu0 0.0
  %5520 = vmatmul.mubr.f32.gmra.mrb[0].mxu0 %v5128
  %v5521 = vpop.f32.mrb[0].mxu0
  %v5522 = vadd.f32 0.0, %v5521
  %v5523 = vpop.f32.mrb[0].mxu0
  %5524 = vmatprep.mubr.f32.mxu0 0.0
  %5525 = vmatmul.mubr.f32.gmra.mrb[0].mxu0 %v5131
  %v5526 = vpop.f32.mrb[0].mxu0
  %v5527 = vadd.f32 0.0, %v5526
  %v5528 = vpop.f32.mrb[0].mxu0
  %5529 = vmatprep.mubr.f32.mxu0 0.0
  %5530 = vmatmul.mubr.f32.gmra.mrb[0].mxu0 %v5134
  %v5531 = vpop.f32.mrb[0].mxu0
  %v5532 = vadd.f32 0.0, %v5531
  %v5533 = vpop.f32.mrb[0].mxu0
  %5534 = vmatprep.mubr.f32.mxu0 0.0
  %5535 = vmatmul.mubr.f32.gmra.mrb[0].mxu0 %v5137
  %v5536 = vpop.f32.mrb[0].mxu0
  %v5537 = vadd.f32 0.0, %v5536
  %v5538 = vpop.f32.mrb[0].mxu0
  %5539 = vmatprep.mubr.f32.mxu0 0.0
  %5540 = vmatmul.mubr.f32.gmra.mrb[0].mxu0 %v5140
  %v5541 = vpop.f32.mrb[0].mxu0
  %v5542 = vadd.f32 0.0, %v5541
  %v5543 = vpop.f32.mrb[0].mxu0
  %5544 = vmatprep.mubr.f32.mxu0 0.0
  %5545 = vmatmul.mubr.f32.gmra.mrb[0].mxu0 %v5143
  %v5546 = vpop.f32.mrb[0].mxu0
  %v5547 = vadd.f32 0.0, %v5546
  %v5548 = vpop.f32.mrb[0].mxu0
  %5549 = vmatprep.mubr.f32.mxu0 0.0
  %5550 = vmatmul.mubr.f32.gmra.mrb[0].mxu0 %v5146
  %v5551 = vpop.f32.mrb[0].mxu0
  %v5552 = vadd.f32 0.0, %v5551
  %v5553 = vpop.f32.mrb[0].mxu0
  %5554 = vmatprep.mubr.f32.mxu0 0.0
  %5555 = vmatmul.mubr.f32.gmra.mrb[0].mxu0 %v5149
  %v5556 = vpop.f32.mrb[0].mxu0
  %v5557 = vadd.f32 0.0, %v5556
  %v5558 = vpop.f32.mrb[0].mxu0
  %5559 = vmatprep.mubr.f32.mxu0 0.0
  %5560 = vmatmul.mubr.f32.gmra.mrb[0].mxu0 %v5152
  %v5561 = vpop.f32.mrb[0].mxu0
  %v5562 = vadd.f32 0.0, %v5561
  %v5563 = vpop.f32.mrb[0].mxu0
  %5564 = vmatprep.mubr.f32.mxu0 0.0
  %5565 = vmatmul.mubr.f32.gmra.mrb[0].mxu0 %v5155
  %v5566 = vpop.f32.mrb[0].mxu0
  %v5567 = vadd.f32 0.0, %v5566
  %v5568 = vpop.f32.mrb[0].mxu0
  %5569 = vmatprep.mubr.f32.mxu0 0.0
  %5570 = vmatmul.mubr.f32.gmra.mrb[0].mxu0 %v5158
  %v5571 = vpop.f32.mrb[0].mxu0
  %v5572 = vadd.f32 0.0, %v5571
  %v5573 = vpop.f32.mrb[0].mxu0
  %5574 = vmatprep.mubr.f32.mxu0 0.0
  %5575 = vmatmul.mubr.f32.gmra.mrb[0].mxu0 %v5161
  %v5576 = vpop.f32.mrb[0].mxu0
  %v5577 = vadd.f32 0.0, %v5576
  %v5578 = vpop.f32.mrb[0].mxu0
  %5579 = vmatprep.mubr.f32.mxu0 0.0
  %5580 = vmatmul.mubr.f32.gmra.mrb[0].mxu0 %v5164
  %v5581 = vpop.f32.mrb[0].mxu0
  %v5582 = vadd.f32 0.0, %v5581
  %v5583 = vpop.f32.mrb[0].mxu0
  %5584 = vmatprep.mubr.f32.mxu0 0.0
  %5585 = vmatmul.mubr.f32.gmra.mrb[0].mxu0 %v5167
  %v5586 = vpop.f32.mrb[0].mxu0
  %v5587 = vadd.f32 0.0, %v5586
  %v5588 = vpop.f32.mrb[0].mxu0
  %5589 = vmatprep.mubr.f32.mxu0 0.0
  %5590 = vmatmul.mubr.f32.gmra.mrb[0].mxu0 %v5170
  %v5591 = vpop.f32.mrb[0].mxu0
  %v5592 = vadd.f32 0.0, %v5591
  %v5593 = vpop.f32.mrb[0].mxu0
  %5594 = vmatprep.mubr.f32.mxu0 0.0
  %5595 = vmatmul.mubr.f32.gmra.mrb[0].mxu0 %v5173
  %v5596 = vpop.f32.mrb[0].mxu0
  %v5597 = vadd.f32 0.0, %v5596
  %v5598 = vpop.f32.mrb[0].mxu0
  %5599 = vmatprep.mubr.f32.mxu0 0.0
  %5600 = vmatmul.mubr.f32.gmra.mrb[0].mxu0 %v5176
  %v5601 = vpop.f32.mrb[0].mxu0
  %v5602 = vadd.f32 0.0, %v5601
  %v5603 = vpop.f32.mrb[0].mxu0
  %5604 = vmatprep.mubr.f32.mxu0 0.0
  %5605 = vmatmul.mubr.f32.gmra.mrb[0].mxu0 %v5179
  %v5606 = vpop.f32.mrb[0].mxu0
  %v5607 = vadd.f32 0.0, %v5606
  %v5608 = vpop.f32.mrb[0].mxu0
  %5609 = vmatprep.mubr.f32.mxu0 0.0
  %5610 = vmatmul.mubr.f32.gmra.mrb[0].mxu0 %v5182
  %v5611 = vpop.f32.mrb[0].mxu0
  %v5612 = vadd.f32 0.0, %v5611
  %v5613 = vpop.f32.mrb[0].mxu0
  %5614 = vmatprep.mubr.f32.mxu0 0.0
  %5615 = vmatmul.mubr.f32.gmra.mrb[0].mxu0 %v5185
  %v5616 = vpop.f32.mrb[0].mxu0
  %v5617 = vadd.f32 0.0, %v5616
  %v5618 = vpop.f32.mrb[0].mxu0
  %5619 = vmatprep.mubr.f32.mxu0 0.0
  %5620 = vmatmul.mubr.f32.gmra.mrb[0].mxu0 %v5188
  %v5621 = vpop.f32.mrb[0].mxu0
  %v5622 = vadd.f32 0.0, %v5621
  %v5623 = vpop.f32.mrb[0].mxu0
  %5624 = vmatprep.mubr.f32.mxu0 0.0
  %5625 = vmatmul.mubr.f32.gmra.mrb[0].mxu0 %v5191
  %v5626 = vpop.f32.mrb[0].mxu0
  %v5627 = vadd.f32 0.0, %v5626
  %v5628 = vpop.f32.mrb[0].mxu0
  %5629 = vmatprep.mubr.f32.mxu0 0.0
  %5630 = vmatmul.mubr.f32.gmra.mrb[0].mxu0 %v5194
  %v5631 = vpop.f32.mrb[0].mxu0
  %v5632 = vadd.f32 0.0, %v5631
  %v5633 = vpop.f32.mrb[0].mxu0
  %5634 = vmatprep.mubr.f32.mxu0 0.0
  %5635 = vmatmul.mubr.f32.gmra.mrb[0].mxu0 %v5197
  %v5636 = vpop.f32.mrb[0].mxu0
  %v5637 = vadd.f32 0.0, %v5636
  %v5638 = vpop.f32.mrb[0].mxu0
  %5639 = vmatprep.mubr.f32.mxu0 0.0
  %5640 = vmatmul.mubr.f32.gmra.mrb[0].mxu0 %v5200
  %v5641 = vpop.f32.mrb[0].mxu0
  %v5642 = vadd.f32 0.0, %v5641
  %v5643 = vpop.f32.mrb[0].mxu0
  %5644 = vmatprep.mubr.f32.mxu0 0.0
  %5645 = vmatmul.mubr.f32.gmra.mrb[0].mxu0 %v5203
  %v5646 = vpop.f32.mrb[0].mxu0
  %v5647 = vadd.f32 0.0, %v5646
  %v5648 = vpop.f32.mrb[0].mxu0
  %5649 = vmatprep.mubr.f32.mxu0 0.0
  %5650 = vmatmul.mubr.f32.gmra.mrb[0].mxu0 %v5206
  %v5651 = vpop.f32.mrb[0].mxu0
  %v5652 = vadd.f32 0.0, %v5651
  %v5653 = vpop.f32.mrb[0].mxu0
  %5654 = vmatprep.mubr.f32.mxu0 0.0
  %5655 = vmatmul.mubr.f32.gmra.mrb[0].mxu0 %v5209
  %v5656 = vpop.f32.mrb[0].mxu0
  %v5657 = vadd.f32 0.0, %v5656
  %v5658 = vpop.f32.mrb[0].mxu0
  %5659 = vmatprep.mubr.f32.mxu0 0.0
  %5660 = vmatmul.mubr.f32.gmra.mrb[0].mxu0 %v5212
  %v5661 = vpop.f32.mrb[0].mxu0
  %v5662 = vadd.f32 0.0, %v5661
  %v5663 = vpop.f32.mrb[0].mxu0
  %5664 = vmatprep.mubr.f32.mxu0 0.0
  %5665 = vmatmul.mubr.f32.gmra.mrb[0].mxu0 %v5215
  %v5666 = vpop.f32.mrb[0].mxu0
  %v5667 = vadd.f32 0.0, %v5666
  %v5668 = vpop.f32.mrb[0].mxu0
  %5669 = vdwg.mxu0
  %v5670 = vadd.f32 %v4830, %v5287
  %v5671 = vadd.f32 %v4831, %v5292
  %v5672 = vadd.f32 %v4832, %v5297
  %v5673 = vadd.f32 %v4833, %v5302
  %v5674 = vadd.f32 %v4834, %v5307
  %v5675 = vadd.f32 %v4835, %v5312
  %v5676 = vadd.f32 %v4836, %v5317
  %v5677 = vadd.f32 %v4837, %v5322
  %v5678 = vadd.f32 %v4838, %v5327
  %v5679 = vadd.f32 %v4839, %v5332
  %v5680 = vadd.f32 %v4840, %v5337
  %v5681 = vadd.f32 %v4841, %v5342
  %v5682 = vadd.f32 %v4842, %v5347
  %v5683 = vadd.f32 %v4843, %v5352
  %v5684 = vadd.f32 %v4844, %v5357
  %v5685 = vadd.f32 %v4845, %v5362
  %v5686 = vadd.f32 %v4846, %v5367
  %v5687 = vadd.f32 %v4847, %v5372
  %v5688 = vadd.f32 %v4848, %v5377
  %v5689 = vadd.f32 %v4849, %v5382
  %v5690 = vadd.f32 %v4850, %v5387
  %v5691 = vadd.f32 %v4851, %v5392
  %v5692 = vadd.f32 %v4852, %v5397
  %v5693 = vadd.f32 %v4853, %v5402
  %v5694 = vadd.f32 %v4854, %v5407
  %v5695 = vadd.f32 %v4855, %v5412
  %v5696 = vadd.f32 %v4856, %v5417
  %v5697 = vadd.f32 %v4857, %v5422
  %v5698 = vadd.f32 %v4858, %v5427
  %v5699 = vadd.f32 %v4859, %v5432
  %v5700 = vadd.f32 %v4860, %v5437
  %v5701 = vadd.f32 %v4861, %v5442
  %v5702 = vadd.f32 %v4862, %v5447
  %v5703 = vadd.f32 %v4863, %v5452
  %v5704 = vadd.f32 %v4864, %v5457
  %v5705 = vadd.f32 %v4865, %v5462
  %v5706 = vadd.f32 %v4866, %v5467
  %v5707 = vadd.f32 %v4867, %v5472
  %v5708 = vadd.f32 %v4868, %v5477
  %v5709 = vadd.f32 %v4869, %v5482
  %v5710 = vadd.f32 %v4870, %v5487
  %v5711 = vadd.f32 %v4871, %v5492
  %v5712 = vadd.f32 %v4872, %v5497
  %v5713 = vadd.f32 %v4873, %v5502
  %v5714 = vadd.f32 %v4874, %v5507
  %v5715 = vadd.f32 %v4875, %v5512
  %v5716 = vadd.f32 %v4876, %v5517
  %v5717 = vadd.f32 %v4877, %v5522
  %v5718 = vadd.f32 %v4878, %v5527
  %v5719 = vadd.f32 %v4879, %v5532
  %v5720 = vadd.f32 %v4880, %v5537
  %v5721 = vadd.f32 %v4881, %v5542
  %v5722 = vadd.f32 %v4882, %v5547
  %v5723 = vadd.f32 %v4883, %v5552
  %v5724 = vadd.f32 %v4884, %v5557
  %v5725 = vadd.f32 %v4885, %v5562
  %v5726 = vadd.f32 %v4886, %v5567
  %v5727 = vadd.f32 %v4887, %v5572
  %v5728 = vadd.f32 %v4888, %v5577
  %v5729 = vadd.f32 %v4889, %v5582
  %v5730 = vadd.f32 %v4890, %v5587
  %v5731 = vadd.f32 %v4891, %v5592
  %v5732 = vadd.f32 %v4892, %v5597
  %v5733 = vadd.f32 %v4893, %v5602
  %v5734 = vadd.f32 %v4894, %v5607
  %v5735 = vadd.f32 %v4895, %v5612
  %v5736 = vadd.f32 %v4896, %v5617
  %v5737 = vadd.f32 %v4897, %v5622
  %v5738 = vadd.f32 %v4898, %v5627
  %v5739 = vadd.f32 %v4899, %v5632
  %v5740 = vadd.f32 %v4900, %v5637
  %v5741 = vadd.f32 %v4901, %v5642
  %v5742 = vadd.f32 %v4902, %v5647
  %v5743 = vadd.f32 %v4903, %v5652
  %v5744 = vadd.f32 %v4904, %v5657
  %v5745 = vadd.f32 %v4905, %v5662
  %v5746 = vadd.f32 %v4906, %v5667
  %v5747 = vld [vmem:[%s0 + $0x25] sm:$0xff]
  %v5748 = vld [vmem:[%s0 + $0x2d] sm:$0xff]
  %v5749 = vld [vmem:[%s0 + $0x35] sm:$0xff]
  %v5750 = vld [vmem:[%s0 + $0x3d] sm:$0xff]
  %v5751 = vld [vmem:[%s0 + $0x45] sm:$0xff]
  %v5752 = vld [vmem:[%s0 + $0x4d] sm:$0xff]
  %v5753 = vld [vmem:[%s0 + $0x55] sm:$0xff]
  %v5754 = vld [vmem:[%s0 + $0x5d] sm:$0xff]
  %v5755 = vld [vmem:[%s0 + $0x65] sm:$0xff]
  %v5756 = vld [vmem:[%s0 + $0x6d] sm:$0xff]
  %v5757 = vld [vmem:[%s0 + $0x75] sm:$0xff]
  %v5758 = vld [vmem:[%s0 + $0x7d] sm:$0xff]
  %v5759 = vld [vmem:[%s0 + $0x85] sm:$0xff]
  %v5760 = vld [vmem:[%s0 + $0x8d] sm:$0xff]
  %v5761 = vld [vmem:[%s0 + $0x95] sm:$0xff]
  %v5762 = vld [vmem:[%s0 + $0x9d] sm:$0xff]
  %v5763 = vld [vmem:[%s0 + $0xa5] sm:$0xff]
  %v5764 = vld [vmem:[%s0 + $0xad] sm:$0xff]
  %v5765 = vld [vmem:[%s0 + $0xb5] sm:$0xff]
  %v5766 = vld [vmem:[%s0 + $0xbd] sm:$0xff]
  %v5767 = vld [vmem:[%s0 + $0xc5] sm:$0xff]
  %v5768 = vld [vmem:[%s0 + $0xcd] sm:$0xff]
  %v5769 = vld [vmem:[%s0 + $0xd5] sm:$0xff]
  %v5770 = vld [vmem:[%s0 + $0xdd] sm:$0xff]
  %v5771 = vld [vmem:[%s0 + $0xe5] sm:$0xff]
  %v5772 = vld [vmem:[%s0 + $0xed] sm:$0xff]
  %v5773 = vld [vmem:[%s0 + $0xf5] sm:$0xff]
  %v5774 = vld [vmem:[%s0 + $0xfd] sm:$0xff]
  %v5775 = vld [vmem:[%s0 + $0x105] sm:$0xff]
  %v5776 = vld [vmem:[%s0 + $0x10d] sm:$0xff]
  %v5777 = vld [vmem:[%s0 + $0x115] sm:$0xff]
  %v5778 = vld [vmem:[%s0 + $0x11d] sm:$0xff]
  %v5779 = vld [vmem:[%s0 + $0x125] sm:$0xff]
  %v5780 = vld [vmem:[%s0 + $0x12d] sm:$0xff]
  %v5781 = vld [vmem:[%s0 + $0x135] sm:$0xff]
  %v5782 = vld [vmem:[%s0 + $0x13d] sm:$0xff]
  %v5783 = vld [vmem:[%s0 + $0x145] sm:$0xff]
  %v5784 = vld [vmem:[%s0 + $0x14d] sm:$0xff]
  %v5785 = vld [vmem:[%s0 + $0x155] sm:$0xff]
  %v5786 = vld [vmem:[%s0 + $0x15d] sm:$0xff]
  %v5787 = vld [vmem:[%s0 + $0x165] sm:$0xff]
  %v5788 = vld [vmem:[%s0 + $0x16d] sm:$0xff]
  %v5789 = vld [vmem:[%s0 + $0x175] sm:$0xff]
  %v5790 = vld [vmem:[%s0 + $0x17d] sm:$0xff]
  %v5791 = vld [vmem:[%s0 + $0x185] sm:$0xff]
  %v5792 = vld [vmem:[%s0 + $0x18d] sm:$0xff]
  %v5793 = vld [vmem:[%s0 + $0x195] sm:$0xff]
  %v5794 = vld [vmem:[%s0 + $0x19d] sm:$0xff]
  %v5795 = vld [vmem:[%s0 + $0x1a5] sm:$0xff]
  %v5796 = vld [vmem:[%s0 + $0x1ad] sm:$0xff]
  %v5797 = vld [vmem:[%s0 + $0x1b5] sm:$0xff]
  %v5798 = vld [vmem:[%s0 + $0x1bd] sm:$0xff]
  %v5799 = vld [vmem:[%s0 + $0x1c5] sm:$0xff]
  %v5800 = vld [vmem:[%s0 + $0x1cd] sm:$0xff]
  %v5801 = vld [vmem:[%s0 + $0x1d5] sm:$0xff]
  %v5802 = vld [vmem:[%s0 + $0x1dd] sm:$0xff]
  %v5803 = vld [vmem:[%s0 + $0x1e5] sm:$0xff]
  %v5804 = vld [vmem:[%s0 + $0x1ed] sm:$0xff]
  %v5805 = vld [vmem:[%s0 + $0x1f5] sm:$0xff]
  %v5806 = vld [vmem:[%s0 + $0x1fd] sm:$0xff]
  %v5807 = vld [vmem:[%s0 + $0x205] sm:$0xff]
  %v5808 = vld [vmem:[%s0 + $0x20d] sm:$0xff]
  %v5809 = vld [vmem:[%s0 + $0x215] sm:$0xff]
  %v5810 = vld [vmem:[%s0 + $0x21d] sm:$0xff]
  %v5811 = vld [vmem:[%s0 + $0x225] sm:$0xff]
  %v5812 = vld [vmem:[%s0 + $0x22d] sm:$0xff]
  %v5813 = vld [vmem:[%s0 + $0x235] sm:$0xff]
  %v5814 = vld [vmem:[%s0 + $0x23d] sm:$0xff]
  %v5815 = vld [vmem:[%s0 + $0x245] sm:$0xff]
  %v5816 = vld [vmem:[%s0 + $0x24d] sm:$0xff]
  %v5817 = vld [vmem:[%s0 + $0x255] sm:$0xff]
  %v5818 = vld [vmem:[%s0 + $0x25d] sm:$0xff]
  %v5819 = vld [vmem:[%s0 + $0x265] sm:$0xff]
  %v5820 = vld [vmem:[%s0 + $0x26d] sm:$0xff]
  %v5821 = vld [vmem:[%s0 + $0x275] sm:$0xff]
  %v5822 = vld [vmem:[%s0 + $0x27d] sm:$0xff]
  %v5823 = vld [vmem:[%s0 + $0x285] sm:$0xff]
  %s5824 = scalar_lea.vmem %s1, 28
  %v5825 = vld [vmem:[%s5824] sm:$0xf]
  %v5827 = vsel %vm177, %v5747, 0
  %v5830 = vsel %vm177, %v5748, 0
  %v5833 = vsel %vm177, %v5749, 0
  %v5836 = vsel %vm177, %v5750, 0
  %v5839 = vsel %vm177, %v5751, 0
  %v5842 = vsel %vm177, %v5752, 0
  %v5845 = vsel %vm177, %v5753, 0
  %v5848 = vsel %vm177, %v5754, 0
  %v5851 = vsel %vm177, %v5755, 0
  %v5854 = vsel %vm177, %v5756, 0
  %v5857 = vsel %vm177, %v5757, 0
  %v5860 = vsel %vm177, %v5758, 0
  %v5863 = vsel %vm177, %v5759, 0
  %v5866 = vsel %vm177, %v5760, 0
  %v5869 = vsel %vm177, %v5761, 0
  %v5872 = vsel %vm177, %v5762, 0
  %v5875 = vsel %vm177, %v5763, 0
  %v5878 = vsel %vm177, %v5764, 0
  %v5881 = vsel %vm177, %v5765, 0
  %v5884 = vsel %vm177, %v5766, 0
  %v5887 = vsel %vm177, %v5767, 0
  %v5890 = vsel %vm177, %v5768, 0
  %v5893 = vsel %vm177, %v5769, 0
  %v5896 = vsel %vm177, %v5770, 0
  %v5899 = vsel %vm177, %v5771, 0
  %v5902 = vsel %vm177, %v5772, 0
  %v5905 = vsel %vm177, %v5773, 0
  %v5908 = vsel %vm177, %v5774, 0
  %v5911 = vsel %vm177, %v5775, 0
  %v5914 = vsel %vm177, %v5776, 0
  %v5917 = vsel %vm177, %v5777, 0
  %v5920 = vsel %vm177, %v5778, 0
  %v5923 = vsel %vm177, %v5779, 0
  %v5926 = vsel %vm177, %v5780, 0
  %v5929 = vsel %vm177, %v5781, 0
  %v5932 = vsel %vm177, %v5782, 0
  %v5935 = vsel %vm177, %v5783, 0
  %v5938 = vsel %vm177, %v5784, 0
  %v5941 = vsel %vm177, %v5785, 0
  %v5944 = vsel %vm177, %v5786, 0
  %v5947 = vsel %vm177, %v5787, 0
  %v5950 = vsel %vm177, %v5788, 0
  %v5953 = vsel %vm177, %v5789, 0
  %v5956 = vsel %vm177, %v5790, 0
  %v5959 = vsel %vm177, %v5791, 0
  %v5962 = vsel %vm177, %v5792, 0
  %v5965 = vsel %vm177, %v5793, 0
  %v5968 = vsel %vm177, %v5794, 0
  %v5971 = vsel %vm177, %v5795, 0
  %v5974 = vsel %vm177, %v5796, 0
  %v5977 = vsel %vm177, %v5797, 0
  %v5980 = vsel %vm177, %v5798, 0
  %v5983 = vsel %vm177, %v5799, 0
  %v5986 = vsel %vm177, %v5800, 0
  %v5989 = vsel %vm177, %v5801, 0
  %v5992 = vsel %vm177, %v5802, 0
  %v5995 = vsel %vm177, %v5803, 0
  %v5998 = vsel %vm177, %v5804, 0
  %v6001 = vsel %vm177, %v5805, 0
  %v6004 = vsel %vm177, %v5806, 0
  %v6007 = vsel %vm177, %v5807, 0
  %v6010 = vsel %vm177, %v5808, 0
  %v6013 = vsel %vm177, %v5809, 0
  %v6016 = vsel %vm177, %v5810, 0
  %v6019 = vsel %vm177, %v5811, 0
  %v6022 = vsel %vm177, %v5812, 0
  %v6025 = vsel %vm177, %v5813, 0
  %v6028 = vsel %vm177, %v5814, 0
  %v6031 = vsel %vm177, %v5815, 0
  %v6034 = vsel %vm177, %v5816, 0
  %v6037 = vsel %vm177, %v5817, 0
  %v6040 = vsel %vm177, %v5818, 0
  %v6043 = vsel %vm177, %v5819, 0
  %v6046 = vsel %vm177, %v5820, 0
  %v6049 = vsel %vm177, %v5821, 0
  %v6052 = vsel %vm177, %v5822, 0
  %v6055 = vsel %vm177, %v5823, 0
  %v6058 = vsel %vm409, %v5825, 0
  %6060 = vmatprep.subr.mxu0 0.0
  %6061 = vmatpush1.msra.mxu0 %v6058
  %6062 = vmatprep.subr.mxu0 0.0
  %6063 = vmatpush1.msra.mxu0 0.0
  %6064 = vmatprep.subr.mxu0 0.0
  %6065 = vmatpush1.msra.mxu0 0.0
  %6066 = vmatprep.subr.mxu0 0.0
  %6067 = vmatpush1.msra.mxu0 0.0
  %6068 = vmatprep.subr.mxu0 0.0
  %6069 = vmatpush1.msra.mxu0 0.0
  %6070 = vmatprep.subr.mxu0 0.0
  %6071 = vmatpush1.msra.mxu0 0.0
  %6072 = vmatprep.subr.mxu0 0.0
  %6073 = vmatpush1.msra.mxu0 0.0
  %6074 = vmatprep.subr.mxu0 0.0
  %6075 = vmatpush1.msra.mxu0 0.0
  %6076 = vmatprep.subr.mxu0 0.0
  %6077 = vmatpush1.msra.mxu0 0.0
  %6078 = vmatprep.subr.mxu0 0.0
  %6079 = vmatpush1.msra.mxu0 0.0
  %6080 = vmatprep.subr.mxu0 0.0
  %6081 = vmatpush1.msra.mxu0 0.0
  %6082 = vmatprep.subr.mxu0 0.0
  %6083 = vmatpush1.msra.mxu0 0.0
  %6084 = vmatprep.subr.mxu0 0.0
  %6085 = vmatpush1.msra.mxu0 0.0
  %6086 = vmatprep.subr.mxu0 0.0
  %6087 = vmatpush1.msra.mxu0 0.0
  %6088 = vmatprep.subr.mxu0 0.0
  %6089 = vmatpush1.msra.mxu0 0.0
  %6090 = vmatprep.subr.mxu0 0.0
  %6091 = vmatpush1.msra.mxu0 0.0
  %6092 = vmatprep.subr.mxu0 0.0
  %6093 = vmatpush1.msra.mxu0 0.0
  %6094 = vmatprep.subr.mxu0 0.0
  %6095 = vmatpush1.msra.mxu0 0.0
  %6096 = vmatprep.subr.mxu0 0.0
  %6097 = vmatpush1.msra.mxu0 0.0
  %6098 = vmatprep.subr.mxu0 0.0
  %6099 = vmatpush1.msra.mxu0 0.0
  %6100 = vmatprep.subr.mxu0 0.0
  %6101 = vmatpush1.msra.mxu0 0.0
  %6102 = vmatprep.subr.mxu0 0.0
  %6103 = vmatpush1.msra.mxu0 0.0
  %6104 = vmatprep.subr.mxu0 0.0
  %6105 = vmatpush1.msra.mxu0 0.0
  %6106 = vmatprep.subr.mxu0 0.0
  %6107 = vmatpush1.msra.mxu0 0.0
  %6108 = vmatprep.subr.mxu0 0.0
  %6109 = vmatpush1.msra.mxu0 0.0
  %6110 = vmatprep.subr.mxu0 0.0
  %6111 = vmatpush1.msra.mxu0 0.0
  %6112 = vmatprep.subr.mxu0 0.0
  %6113 = vmatpush1.msra.mxu0 0.0
  %6114 = vmatprep.subr.mxu0 0.0
  %6115 = vmatpush1.msra.mxu0 0.0
  %6116 = vmatprep.subr.mxu0 0.0
  %6117 = vmatpush1.msra.mxu0 0.0
  %6118 = vmatprep.subr.mxu0 0.0
  %6119 = vmatpush1.msra.mxu0 0.0
  %6120 = vmatprep.subr.mxu0 0.0
  %6121 = vmatpush1.msra.mxu0 0.0
  %6122 = vmatprep.subr.mxu0 0.0
  %6123 = vmatpush1.msra.mxu0 0.0
  %6124 = vmatprep.mubr.f32.mxu0 0.0
  %6125 = vmatmul.mubr.f32.gmra.mrb[0].mxu0 %v5827
  %v6126 = vpop.f32.mrb[0].mxu0
  %v6127 = vadd.f32 0.0, %v6126
  %v6128 = vpop.f32.mrb[0].mxu0
  %6129 = vmatprep.mubr.f32.mxu0 0.0
  %6130 = vmatmul.mubr.f32.gmra.mrb[0].mxu0 %v5830
  %v6131 = vpop.f32.mrb[0].mxu0
  %v6132 = vadd.f32 0.0, %v6131
  %v6133 = vpop.f32.mrb[0].mxu0
  %6134 = vmatprep.mubr.f32.mxu0 0.0
  %6135 = vmatmul.mubr.f32.gmra.mrb[0].mxu0 %v5833
  %v6136 = vpop.f32.mrb[0].mxu0
  %v6137 = vadd.f32 0.0, %v6136
  %v6138 = vpop.f32.mrb[0].mxu0
  %6139 = vmatprep.mubr.f32.mxu0 0.0
  %6140 = vmatmul.mubr.f32.gmra.mrb[0].mxu0 %v5836
  %v6141 = vpop.f32.mrb[0].mxu0
  %v6142 = vadd.f32 0.0, %v6141
  %v6143 = vpop.f32.mrb[0].mxu0
  %6144 = vmatprep.mubr.f32.mxu0 0.0
  %6145 = vmatmul.mubr.f32.gmra.mrb[0].mxu0 %v5839
  %v6146 = vpop.f32.mrb[0].mxu0
  %v6147 = vadd.f32 0.0, %v6146
  %v6148 = vpop.f32.mrb[0].mxu0
  %6149 = vmatprep.mubr.f32.mxu0 0.0
  %6150 = vmatmul.mubr.f32.gmra.mrb[0].mxu0 %v5842
  %v6151 = vpop.f32.mrb[0].mxu0
  %v6152 = vadd.f32 0.0, %v6151
  %v6153 = vpop.f32.mrb[0].mxu0
  %6154 = vmatprep.mubr.f32.mxu0 0.0
  %6155 = vmatmul.mubr.f32.gmra.mrb[0].mxu0 %v5845
  %v6156 = vpop.f32.mrb[0].mxu0
  %v6157 = vadd.f32 0.0, %v6156
  %v6158 = vpop.f32.mrb[0].mxu0
  %6159 = vmatprep.mubr.f32.mxu0 0.0
  %6160 = vmatmul.mubr.f32.gmra.mrb[0].mxu0 %v5848
  %v6161 = vpop.f32.mrb[0].mxu0
  %v6162 = vadd.f32 0.0, %v6161
  %v6163 = vpop.f32.mrb[0].mxu0
  %6164 = vmatprep.mubr.f32.mxu0 0.0
  %6165 = vmatmul.mubr.f32.gmra.mrb[0].mxu0 %v5851
  %v6166 = vpop.f32.mrb[0].mxu0
  %v6167 = vadd.f32 0.0, %v6166
  %v6168 = vpop.f32.mrb[0].mxu0
  %6169 = vmatprep.mubr.f32.mxu0 0.0
  %6170 = vmatmul.mubr.f32.gmra.mrb[0].mxu0 %v5854
  %v6171 = vpop.f32.mrb[0].mxu0
  %v6172 = vadd.f32 0.0, %v6171
  %v6173 = vpop.f32.mrb[0].mxu0
  %6174 = vmatprep.mubr.f32.mxu0 0.0
  %6175 = vmatmul.mubr.f32.gmra.mrb[0].mxu0 %v5857
  %v6176 = vpop.f32.mrb[0].mxu0
  %v6177 = vadd.f32 0.0, %v6176
  %v6178 = vpop.f32.mrb[0].mxu0
  %6179 = vmatprep.mubr.f32.mxu0 0.0
  %6180 = vmatmul.mubr.f32.gmra.mrb[0].mxu0 %v5860
  %v6181 = vpop.f32.mrb[0].mxu0
  %v6182 = vadd.f32 0.0, %v6181
  %v6183 = vpop.f32.mrb[0].mxu0
  %6184 = vmatprep.mubr.f32.mxu0 0.0
  %6185 = vmatmul.mubr.f32.gmra.mrb[0].mxu0 %v5863
  %v6186 = vpop.f32.mrb[0].mxu0
  %v6187 = vadd.f32 0.0, %v6186
  %v6188 = vpop.f32.mrb[0].mxu0
  %6189 = vmatprep.mubr.f32.mxu0 0.0
  %6190 = vmatmul.mubr.f32.gmra.mrb[0].mxu0 %v5866
  %v6191 = vpop.f32.mrb[0].mxu0
  %v6192 = vadd.f32 0.0, %v6191
  %v6193 = vpop.f32.mrb[0].mxu0
  %6194 = vmatprep.mubr.f32.mxu0 0.0
  %6195 = vmatmul.mubr.f32.gmra.mrb[0].mxu0 %v5869
  %v6196 = vpop.f32.mrb[0].mxu0
  %v6197 = vadd.f32 0.0, %v6196
  %v6198 = vpop.f32.mrb[0].mxu0
  %6199 = vmatprep.mubr.f32.mxu0 0.0
  %6200 = vmatmul.mubr.f32.gmra.mrb[0].mxu0 %v5872
  %v6201 = vpop.f32.mrb[0].mxu0
  %v6202 = vadd.f32 0.0, %v6201
  %v6203 = vpop.f32.mrb[0].mxu0
  %6204 = vmatprep.mubr.f32.mxu0 0.0
  %6205 = vmatmul.mubr.f32.gmra.mrb[0].mxu0 %v5875
  %v6206 = vpop.f32.mrb[0].mxu0
  %v6207 = vadd.f32 0.0, %v6206
  %v6208 = vpop.f32.mrb[0].mxu0
  %6209 = vmatprep.mubr.f32.mxu0 0.0
  %6210 = vmatmul.mubr.f32.gmra.mrb[0].mxu0 %v5878
  %v6211 = vpop.f32.mrb[0].mxu0
  %v6212 = vadd.f32 0.0, %v6211
  %v6213 = vpop.f32.mrb[0].mxu0
  %6214 = vmatprep.mubr.f32.mxu0 0.0
  %6215 = vmatmul.mubr.f32.gmra.mrb[0].mxu0 %v5881
  %v6216 = vpop.f32.mrb[0].mxu0
  %v6217 = vadd.f32 0.0, %v6216
  %v6218 = vpop.f32.mrb[0].mxu0
  %6219 = vmatprep.mubr.f32.mxu0 0.0
  %6220 = vmatmul.mubr.f32.gmra.mrb[0].mxu0 %v5884
  %v6221 = vpop.f32.mrb[0].mxu0
  %v6222 = vadd.f32 0.0, %v6221
  %v6223 = vpop.f32.mrb[0].mxu0
  %6224 = vmatprep.mubr.f32.mxu0 0.0
  %6225 = vmatmul.mubr.f32.gmra.mrb[0].mxu0 %v5887
  %v6226 = vpop.f32.mrb[0].mxu0
  %v6227 = vadd.f32 0.0, %v6226
  %v6228 = vpop.f32.mrb[0].mxu0
  %6229 = vmatprep.mubr.f32.mxu0 0.0
  %6230 = vmatmul.mubr.f32.gmra.mrb[0].mxu0 %v5890
  %v6231 = vpop.f32.mrb[0].mxu0
  %v6232 = vadd.f32 0.0, %v6231
  %v6233 = vpop.f32.mrb[0].mxu0
  %6234 = vmatprep.mubr.f32.mxu0 0.0
  %6235 = vmatmul.mubr.f32.gmra.mrb[0].mxu0 %v5893
  %v6236 = vpop.f32.mrb[0].mxu0
  %v6237 = vadd.f32 0.0, %v6236
  %v6238 = vpop.f32.mrb[0].mxu0
  %6239 = vmatprep.mubr.f32.mxu0 0.0
  %6240 = vmatmul.mubr.f32.gmra.mrb[0].mxu0 %v5896
  %v6241 = vpop.f32.mrb[0].mxu0
  %v6242 = vadd.f32 0.0, %v6241
  %v6243 = vpop.f32.mrb[0].mxu0
  %6244 = vmatprep.mubr.f32.mxu0 0.0
  %6245 = vmatmul.mubr.f32.gmra.mrb[0].mxu0 %v5899
  %v6246 = vpop.f32.mrb[0].mxu0
  %v6247 = vadd.f32 0.0, %v6246
  %v6248 = vpop.f32.mrb[0].mxu0
  %6249 = vmatprep.mubr.f32.mxu0 0.0
  %6250 = vmatmul.mubr.f32.gmra.mrb[0].mxu0 %v5902
  %v6251 = vpop.f32.mrb[0].mxu0
  %v6252 = vadd.f32 0.0, %v6251
  %v6253 = vpop.f32.mrb[0].mxu0
  %6254 = vmatprep.mubr.f32.mxu0 0.0
  %6255 = vmatmul.mubr.f32.gmra.mrb[0].mxu0 %v5905
  %v6256 = vpop.f32.mrb[0].mxu0
  %v6257 = vadd.f32 0.0, %v6256
  %v6258 = vpop.f32.mrb[0].mxu0
  %6259 = vmatprep.mubr.f32.mxu0 0.0
  %6260 = vmatmul.mubr.f32.gmra.mrb[0].mxu0 %v5908
  %v6261 = vpop.f32.mrb[0].mxu0
  %v6262 = vadd.f32 0.0, %v6261
  %v6263 = vpop.f32.mrb[0].mxu0
  %6264 = vmatprep.mubr.f32.mxu0 0.0
  %6265 = vmatmul.mubr.f32.gmra.mrb[0].mxu0 %v5911
  %v6266 = vpop.f32.mrb[0].mxu0
  %v6267 = vadd.f32 0.0, %v6266
  %v6268 = vpop.f32.mrb[0].mxu0
  %6269 = vmatprep.mubr.f32.mxu0 0.0
  %6270 = vmatmul.mubr.f32.gmra.mrb[0].mxu0 %v5914
  %v6271 = vpop.f32.mrb[0].mxu0
  %v6272 = vadd.f32 0.0, %v6271
  %v6273 = vpop.f32.mrb[0].mxu0
  %6274 = vmatprep.mubr.f32.mxu0 0.0
  %6275 = vmatmul.mubr.f32.gmra.mrb[0].mxu0 %v5917
  %v6276 = vpop.f32.mrb[0].mxu0
  %v6277 = vadd.f32 0.0, %v6276
  %v6278 = vpop.f32.mrb[0].mxu0
  %6279 = vmatprep.mubr.f32.mxu0 0.0
  %6280 = vmatmul.mubr.f32.gmra.mrb[0].mxu0 %v5920
  %v6281 = vpop.f32.mrb[0].mxu0
  %v6282 = vadd.f32 0.0, %v6281
  %v6283 = vpop.f32.mrb[0].mxu0
  %6284 = vmatprep.mubr.f32.mxu0 0.0
  %6285 = vmatmul.mubr.f32.gmra.mrb[0].mxu0 %v5923
  %v6286 = vpop.f32.mrb[0].mxu0
  %v6287 = vadd.f32 0.0, %v6286
  %v6288 = vpop.f32.mrb[0].mxu0
  %6289 = vmatprep.mubr.f32.mxu0 0.0
  %6290 = vmatmul.mubr.f32.gmra.mrb[0].mxu0 %v5926
  %v6291 = vpop.f32.mrb[0].mxu0
  %v6292 = vadd.f32 0.0, %v6291
  %v6293 = vpop.f32.mrb[0].mxu0
  %6294 = vmatprep.mubr.f32.mxu0 0.0
  %6295 = vmatmul.mubr.f32.gmra.mrb[0].mxu0 %v5929
  %v6296 = vpop.f32.mrb[0].mxu0
  %v6297 = vadd.f32 0.0, %v6296
  %v6298 = vpop.f32.mrb[0].mxu0
  %6299 = vmatprep.mubr.f32.mxu0 0.0
  %6300 = vmatmul.mubr.f32.gmra.mrb[0].mxu0 %v5932
  %v6301 = vpop.f32.mrb[0].mxu0
  %v6302 = vadd.f32 0.0, %v6301
  %v6303 = vpop.f32.mrb[0].mxu0
  %6304 = vmatprep.mubr.f32.mxu0 0.0
  %6305 = vmatmul.mubr.f32.gmra.mrb[0].mxu0 %v5935
  %v6306 = vpop.f32.mrb[0].mxu0
  %v6307 = vadd.f32 0.0, %v6306
  %v6308 = vpop.f32.mrb[0].mxu0
  %6309 = vmatprep.mubr.f32.mxu0 0.0
  %6310 = vmatmul.mubr.f32.gmra.mrb[0].mxu0 %v5938
  %v6311 = vpop.f32.mrb[0].mxu0
  %v6312 = vadd.f32 0.0, %v6311
  %v6313 = vpop.f32.mrb[0].mxu0
  %6314 = vmatprep.mubr.f32.mxu0 0.0
  %6315 = vmatmul.mubr.f32.gmra.mrb[0].mxu0 %v5941
  %v6316 = vpop.f32.mrb[0].mxu0
  %v6317 = vadd.f32 0.0, %v6316
  %v6318 = vpop.f32.mrb[0].mxu0
  %6319 = vmatprep.mubr.f32.mxu0 0.0
  %6320 = vmatmul.mubr.f32.gmra.mrb[0].mxu0 %v5944
  %v6321 = vpop.f32.mrb[0].mxu0
  %v6322 = vadd.f32 0.0, %v6321
  %v6323 = vpop.f32.mrb[0].mxu0
  %6324 = vmatprep.mubr.f32.mxu0 0.0
  %6325 = vmatmul.mubr.f32.gmra.mrb[0].mxu0 %v5947
  %v6326 = vpop.f32.mrb[0].mxu0
  %v6327 = vadd.f32 0.0, %v6326
  %v6328 = vpop.f32.mrb[0].mxu0
  %6329 = vmatprep.mubr.f32.mxu0 0.0
  %6330 = vmatmul.mubr.f32.gmra.mrb[0].mxu0 %v5950
  %v6331 = vpop.f32.mrb[0].mxu0
  %v6332 = vadd.f32 0.0, %v6331
  %v6333 = vpop.f32.mrb[0].mxu0
  %6334 = vmatprep.mubr.f32.mxu0 0.0
  %6335 = vmatmul.mubr.f32.gmra.mrb[0].mxu0 %v5953
  %v6336 = vpop.f32.mrb[0].mxu0
  %v6337 = vadd.f32 0.0, %v6336
  %v6338 = vpop.f32.mrb[0].mxu0
  %6339 = vmatprep.mubr.f32.mxu0 0.0
  %6340 = vmatmul.mubr.f32.gmra.mrb[0].mxu0 %v5956
  %v6341 = vpop.f32.mrb[0].mxu0
  %v6342 = vadd.f32 0.0, %v6341
  %v6343 = vpop.f32.mrb[0].mxu0
  %6344 = vmatprep.mubr.f32.mxu0 0.0
  %6345 = vmatmul.mubr.f32.gmra.mrb[0].mxu0 %v5959
  %v6346 = vpop.f32.mrb[0].mxu0
  %v6347 = vadd.f32 0.0, %v6346
  %v6348 = vpop.f32.mrb[0].mxu0
  %6349 = vmatprep.mubr.f32.mxu0 0.0
  %6350 = vmatmul.mubr.f32.gmra.mrb[0].mxu0 %v5962
  %v6351 = vpop.f32.mrb[0].mxu0
  %v6352 = vadd.f32 0.0, %v6351
  %v6353 = vpop.f32.mrb[0].mxu0
  %6354 = vmatprep.mubr.f32.mxu0 0.0
  %6355 = vmatmul.mubr.f32.gmra.mrb[0].mxu0 %v5965
  %v6356 = vpop.f32.mrb[0].mxu0
  %v6357 = vadd.f32 0.0, %v6356
  %v6358 = vpop.f32.mrb[0].mxu0
  %6359 = vmatprep.mubr.f32.mxu0 0.0
  %6360 = vmatmul.mubr.f32.gmra.mrb[0].mxu0 %v5968
  %v6361 = vpop.f32.mrb[0].mxu0
  %v6362 = vadd.f32 0.0, %v6361
  %v6363 = vpop.f32.mrb[0].mxu0
  %6364 = vmatprep.mubr.f32.mxu0 0.0
  %6365 = vmatmul.mubr.f32.gmra.mrb[0].mxu0 %v5971
  %v6366 = vpop.f32.mrb[0].mxu0
  %v6367 = vadd.f32 0.0, %v6366
  %v6368 = vpop.f32.mrb[0].mxu0
  %6369 = vmatprep.mubr.f32.mxu0 0.0
  %6370 = vmatmul.mubr.f32.gmra.mrb[0].mxu0 %v5974
  %v6371 = vpop.f32.mrb[0].mxu0
  %v6372 = vadd.f32 0.0, %v6371
  %v6373 = vpop.f32.mrb[0].mxu0
  %6374 = vmatprep.mubr.f32.mxu0 0.0
  %6375 = vmatmul.mubr.f32.gmra.mrb[0].mxu0 %v5977
  %v6376 = vpop.f32.mrb[0].mxu0
  %v6377 = vadd.f32 0.0, %v6376
  %v6378 = vpop.f32.mrb[0].mxu0
  %6379 = vmatprep.mubr.f32.mxu0 0.0
  %6380 = vmatmul.mubr.f32.gmra.mrb[0].mxu0 %v5980
  %v6381 = vpop.f32.mrb[0].mxu0
  %v6382 = vadd.f32 0.0, %v6381
  %v6383 = vpop.f32.mrb[0].mxu0
  %6384 = vmatprep.mubr.f32.mxu0 0.0
  %6385 = vmatmul.mubr.f32.gmra.mrb[0].mxu0 %v5983
  %v6386 = vpop.f32.mrb[0].mxu0
  %v6387 = vadd.f32 0.0, %v6386
  %v6388 = vpop.f32.mrb[0].mxu0
  %6389 = vmatprep.mubr.f32.mxu0 0.0
  %6390 = vmatmul.mubr.f32.gmra.mrb[0].mxu0 %v5986
  %v6391 = vpop.f32.mrb[0].mxu0
  %v6392 = vadd.f32 0.0, %v6391
  %v6393 = vpop.f32.mrb[0].mxu0
  %6394 = vmatprep.mubr.f32.mxu0 0.0
  %6395 = vmatmul.mubr.f32.gmra.mrb[0].mxu0 %v5989
  %v6396 = vpop.f32.mrb[0].mxu0
  %v6397 = vadd.f32 0.0, %v6396
  %v6398 = vpop.f32.mrb[0].mxu0
  %6399 = vmatprep.mubr.f32.mxu0 0.0
  %6400 = vmatmul.mubr.f32.gmra.mrb[0].mxu0 %v5992
  %v6401 = vpop.f32.mrb[0].mxu0
  %v6402 = vadd.f32 0.0, %v6401
  %v6403 = vpop.f32.mrb[0].mxu0
  %6404 = vmatprep.mubr.f32.mxu0 0.0
  %6405 = vmatmul.mubr.f32.gmra.mrb[0].mxu0 %v5995
  %v6406 = vpop.f32.mrb[0].mxu0
  %v6407 = vadd.f32 0.0, %v6406
  %v6408 = vpop.f32.mrb[0].mxu0
  %6409 = vmatprep.mubr.f32.mxu0 0.0
  %6410 = vmatmul.mubr.f32.gmra.mrb[0].mxu0 %v5998
  %v6411 = vpop.f32.mrb[0].mxu0
  %v6412 = vadd.f32 0.0, %v6411
  %v6413 = vpop.f32.mrb[0].mxu0
  %6414 = vmatprep.mubr.f32.mxu0 0.0
  %6415 = vmatmul.mubr.f32.gmra.mrb[0].mxu0 %v6001
  %v6416 = vpop.f32.mrb[0].mxu0
  %v6417 = vadd.f32 0.0, %v6416
  %v6418 = vpop.f32.mrb[0].mxu0
  %6419 = vmatprep.mubr.f32.mxu0 0.0
  %6420 = vmatmul.mubr.f32.gmra.mrb[0].mxu0 %v6004
  %v6421 = vpop.f32.mrb[0].mxu0
  %v6422 = vadd.f32 0.0, %v6421
  %v6423 = vpop.f32.mrb[0].mxu0
  %6424 = vmatprep.mubr.f32.mxu0 0.0
  %6425 = vmatmul.mubr.f32.gmra.mrb[0].mxu0 %v6007
  %v6426 = vpop.f32.mrb[0].mxu0
  %v6427 = vadd.f32 0.0, %v6426
  %v6428 = vpop.f32.mrb[0].mxu0
  %6429 = vmatprep.mubr.f32.mxu0 0.0
  %6430 = vmatmul.mubr.f32.gmra.mrb[0].mxu0 %v6010
  %v6431 = vpop.f32.mrb[0].mxu0
  %v6432 = vadd.f32 0.0, %v6431
  %v6433 = vpop.f32.mrb[0].mxu0
  %6434 = vmatprep.mubr.f32.mxu0 0.0
  %6435 = vmatmul.mubr.f32.gmra.mrb[0].mxu0 %v6013
  %v6436 = vpop.f32.mrb[0].mxu0
  %v6437 = vadd.f32 0.0, %v6436
  %v6438 = vpop.f32.mrb[0].mxu0
  %6439 = vmatprep.mubr.f32.mxu0 0.0
  %6440 = vmatmul.mubr.f32.gmra.mrb[0].mxu0 %v6016
  %v6441 = vpop.f32.mrb[0].mxu0
  %v6442 = vadd.f32 0.0, %v6441
  %v6443 = vpop.f32.mrb[0].mxu0
  %6444 = vmatprep.mubr.f32.mxu0 0.0
  %6445 = vmatmul.mubr.f32.gmra.mrb[0].mxu0 %v6019
  %v6446 = vpop.f32.mrb[0].mxu0
  %v6447 = vadd.f32 0.0, %v6446
  %v6448 = vpop.f32.mrb[0].mxu0
  %6449 = vmatprep.mubr.f32.mxu0 0.0
  %6450 = vmatmul.mubr.f32.gmra.mrb[0].mxu0 %v6022
  %v6451 = vpop.f32.mrb[0].mxu0
  %v6452 = vadd.f32 0.0, %v6451
  %v6453 = vpop.f32.mrb[0].mxu0
  %6454 = vmatprep.mubr.f32.mxu0 0.0
  %6455 = vmatmul.mubr.f32.gmra.mrb[0].mxu0 %v6025
  %v6456 = vpop.f32.mrb[0].mxu0
  %v6457 = vadd.f32 0.0, %v6456
  %v6458 = vpop.f32.mrb[0].mxu0
  %6459 = vmatprep.mubr.f32.mxu0 0.0
  %6460 = vmatmul.mubr.f32.gmra.mrb[0].mxu0 %v6028
  %v6461 = vpop.f32.mrb[0].mxu0
  %v6462 = vadd.f32 0.0, %v6461
  %v6463 = vpop.f32.mrb[0].mxu0
  %6464 = vmatprep.mubr.f32.mxu0 0.0
  %6465 = vmatmul.mubr.f32.gmra.mrb[0].mxu0 %v6031
  %v6466 = vpop.f32.mrb[0].mxu0
  %v6467 = vadd.f32 0.0, %v6466
  %v6468 = vpop.f32.mrb[0].mxu0
  %6469 = vmatprep.mubr.f32.mxu0 0.0
  %6470 = vmatmul.mubr.f32.gmra.mrb[0].mxu0 %v6034
  %v6471 = vpop.f32.mrb[0].mxu0
  %v6472 = vadd.f32 0.0, %v6471
  %v6473 = vpop.f32.mrb[0].mxu0
  %6474 = vmatprep.mubr.f32.mxu0 0.0
  %6475 = vmatmul.mubr.f32.gmra.mrb[0].mxu0 %v6037
  %v6476 = vpop.f32.mrb[0].mxu0
  %v6477 = vadd.f32 0.0, %v6476
  %v6478 = vpop.f32.mrb[0].mxu0
  %6479 = vmatprep.mubr.f32.mxu0 0.0
  %6480 = vmatmul.mubr.f32.gmra.mrb[0].mxu0 %v6040
  %v6481 = vpop.f32.mrb[0].mxu0
  %v6482 = vadd.f32 0.0, %v6481
  %v6483 = vpop.f32.mrb[0].mxu0
  %6484 = vmatprep.mubr.f32.mxu0 0.0
  %6485 = vmatmul.mubr.f32.gmra.mrb[0].mxu0 %v6043
  %v6486 = vpop.f32.mrb[0].mxu0
  %v6487 = vadd.f32 0.0, %v6486
  %v6488 = vpop.f32.mrb[0].mxu0
  %6489 = vmatprep.mubr.f32.mxu0 0.0
  %6490 = vmatmul.mubr.f32.gmra.mrb[0].mxu0 %v6046
  %v6491 = vpop.f32.mrb[0].mxu0
  %v6492 = vadd.f32 0.0, %v6491
  %v6493 = vpop.f32.mrb[0].mxu0
  %6494 = vmatprep.mubr.f32.mxu0 0.0
  %6495 = vmatmul.mubr.f32.gmra.mrb[0].mxu0 %v6049
  %v6496 = vpop.f32.mrb[0].mxu0
  %v6497 = vadd.f32 0.0, %v6496
  %v6498 = vpop.f32.mrb[0].mxu0
  %6499 = vmatprep.mubr.f32.mxu0 0.0
  %6500 = vmatmul.mubr.f32.gmra.mrb[0].mxu0 %v6052
  %v6501 = vpop.f32.mrb[0].mxu0
  %v6502 = vadd.f32 0.0, %v6501
  %v6503 = vpop.f32.mrb[0].mxu0
  %6504 = vmatprep.mubr.f32.mxu0 0.0
  %6505 = vmatmul.mubr.f32.gmra.mrb[0].mxu0 %v6055
  %v6506 = vpop.f32.mrb[0].mxu0
  %v6507 = vadd.f32 0.0, %v6506
  %v6508 = vpop.f32.mrb[0].mxu0
  %6509 = vdwg.mxu0
  %v6510 = vadd.f32 %v5670, %v6127
  %v6511 = vadd.f32 %v5671, %v6132
  %v6512 = vadd.f32 %v5672, %v6137
  %v6513 = vadd.f32 %v5673, %v6142
  %v6514 = vadd.f32 %v5674, %v6147
  %v6515 = vadd.f32 %v5675, %v6152
  %v6516 = vadd.f32 %v5676, %v6157
  %v6517 = vadd.f32 %v5677, %v6162
  %v6518 = vadd.f32 %v5678, %v6167
  %v6519 = vadd.f32 %v5679, %v6172
  %v6520 = vadd.f32 %v5680, %v6177
  %v6521 = vadd.f32 %v5681, %v6182
  %v6522 = vadd.f32 %v5682, %v6187
  %v6523 = vadd.f32 %v5683, %v6192
  %v6524 = vadd.f32 %v5684, %v6197
  %v6525 = vadd.f32 %v5685, %v6202
  %v6526 = vadd.f32 %v5686, %v6207
  %v6527 = vadd.f32 %v5687, %v6212
  %v6528 = vadd.f32 %v5688, %v6217
  %v6529 = vadd.f32 %v5689, %v6222
  %v6530 = vadd.f32 %v5690, %v6227
  %v6531 = vadd.f32 %v5691, %v6232
  %v6532 = vadd.f32 %v5692, %v6237
  %v6533 = vadd.f32 %v5693, %v6242
  %v6534 = vadd.f32 %v5694, %v6247
  %v6535 = vadd.f32 %v5695, %v6252
  %v6536 = vadd.f32 %v5696, %v6257
  %v6537 = vadd.f32 %v5697, %v6262
  %v6538 = vadd.f32 %v5698, %v6267
  %v6539 = vadd.f32 %v5699, %v6272
  %v6540 = vadd.f32 %v5700, %v6277
  %v6541 = vadd.f32 %v5701, %v6282
  %v6542 = vadd.f32 %v5702, %v6287
  %v6543 = vadd.f32 %v5703, %v6292
  %v6544 = vadd.f32 %v5704, %v6297
  %v6545 = vadd.f32 %v5705, %v6302
  %v6546 = vadd.f32 %v5706, %v6307
  %v6547 = vadd.f32 %v5707, %v6312
  %v6548 = vadd.f32 %v5708, %v6317
  %v6549 = vadd.f32 %v5709, %v6322
  %v6550 = vadd.f32 %v5710, %v6327
  %v6551 = vadd.f32 %v5711, %v6332
  %v6552 = vadd.f32 %v5712, %v6337
  %v6553 = vadd.f32 %v5713, %v6342
  %v6554 = vadd.f32 %v5714, %v6347
  %v6555 = vadd.f32 %v5715, %v6352
  %v6556 = vadd.f32 %v5716, %v6357
  %v6557 = vadd.f32 %v5717, %v6362
  %v6558 = vadd.f32 %v5718, %v6367
  %v6559 = vadd.f32 %v5719, %v6372
  %v6560 = vadd.f32 %v5720, %v6377
  %v6561 = vadd.f32 %v5721, %v6382
  %v6562 = vadd.f32 %v5722, %v6387
  %v6563 = vadd.f32 %v5723, %v6392
  %v6564 = vadd.f32 %v5724, %v6397
  %v6565 = vadd.f32 %v5725, %v6402
  %v6566 = vadd.f32 %v5726, %v6407
  %v6567 = vadd.f32 %v5727, %v6412
  %v6568 = vadd.f32 %v5728, %v6417
  %v6569 = vadd.f32 %v5729, %v6422
  %v6570 = vadd.f32 %v5730, %v6427
  %v6571 = vadd.f32 %v5731, %v6432
  %v6572 = vadd.f32 %v5732, %v6437
  %v6573 = vadd.f32 %v5733, %v6442
  %v6574 = vadd.f32 %v5734, %v6447
  %v6575 = vadd.f32 %v5735, %v6452
  %v6576 = vadd.f32 %v5736, %v6457
  %v6577 = vadd.f32 %v5737, %v6462
  %v6578 = vadd.f32 %v5738, %v6467
  %v6579 = vadd.f32 %v5739, %v6472
  %v6580 = vadd.f32 %v5740, %v6477
  %v6581 = vadd.f32 %v5741, %v6482
  %v6582 = vadd.f32 %v5742, %v6487
  %v6583 = vadd.f32 %v5743, %v6492
  %v6584 = vadd.f32 %v5744, %v6497
  %v6585 = vadd.f32 %v5745, %v6502
  %v6586 = vadd.f32 %v5746, %v6507
  %v6587 = vld [vmem:[%s0 + $0x26] sm:$0xff]
  %v6588 = vld [vmem:[%s0 + $0x2e] sm:$0xff]
  %v6589 = vld [vmem:[%s0 + $0x36] sm:$0xff]
  %v6590 = vld [vmem:[%s0 + $0x3e] sm:$0xff]
  %v6591 = vld [vmem:[%s0 + $0x46] sm:$0xff]
  %v6592 = vld [vmem:[%s0 + $0x4e] sm:$0xff]
  %v6593 = vld [vmem:[%s0 + $0x56] sm:$0xff]
  %v6594 = vld [vmem:[%s0 + $0x5e] sm:$0xff]
  %v6595 = vld [vmem:[%s0 + $0x66] sm:$0xff]
  %v6596 = vld [vmem:[%s0 + $0x6e] sm:$0xff]
  %v6597 = vld [vmem:[%s0 + $0x76] sm:$0xff]
  %v6598 = vld [vmem:[%s0 + $0x7e] sm:$0xff]
  %v6599 = vld [vmem:[%s0 + $0x86] sm:$0xff]
  %v6600 = vld [vmem:[%s0 + $0x8e] sm:$0xff]
  %v6601 = vld [vmem:[%s0 + $0x96] sm:$0xff]
  %v6602 = vld [vmem:[%s0 + $0x9e] sm:$0xff]
  %v6603 = vld [vmem:[%s0 + $0xa6] sm:$0xff]
  %v6604 = vld [vmem:[%s0 + $0xae] sm:$0xff]
  %v6605 = vld [vmem:[%s0 + $0xb6] sm:$0xff]
  %v6606 = vld [vmem:[%s0 + $0xbe] sm:$0xff]
  %v6607 = vld [vmem:[%s0 + $0xc6] sm:$0xff]
  %v6608 = vld [vmem:[%s0 + $0xce] sm:$0xff]
  %v6609 = vld [vmem:[%s0 + $0xd6] sm:$0xff]
  %v6610 = vld [vmem:[%s0 + $0xde] sm:$0xff]
  %v6611 = vld [vmem:[%s0 + $0xe6] sm:$0xff]
  %v6612 = vld [vmem:[%s0 + $0xee] sm:$0xff]
  %v6613 = vld [vmem:[%s0 + $0xf6] sm:$0xff]
  %v6614 = vld [vmem:[%s0 + $0xfe] sm:$0xff]
  %v6615 = vld [vmem:[%s0 + $0x106] sm:$0xff]
  %v6616 = vld [vmem:[%s0 + $0x10e] sm:$0xff]
  %v6617 = vld [vmem:[%s0 + $0x116] sm:$0xff]
  %v6618 = vld [vmem:[%s0 + $0x11e] sm:$0xff]
  %v6619 = vld [vmem:[%s0 + $0x126] sm:$0xff]
  %v6620 = vld [vmem:[%s0 + $0x12e] sm:$0xff]
  %v6621 = vld [vmem:[%s0 + $0x136] sm:$0xff]
  %v6622 = vld [vmem:[%s0 + $0x13e] sm:$0xff]
  %v6623 = vld [vmem:[%s0 + $0x146] sm:$0xff]
  %v6624 = vld [vmem:[%s0 + $0x14e] sm:$0xff]
  %v6625 = vld [vmem:[%s0 + $0x156] sm:$0xff]
  %v6626 = vld [vmem:[%s0 + $0x15e] sm:$0xff]
  %v6627 = vld [vmem:[%s0 + $0x166] sm:$0xff]
  %v6628 = vld [vmem:[%s0 + $0x16e] sm:$0xff]
  %v6629 = vld [vmem:[%s0 + $0x176] sm:$0xff]
  %v6630 = vld [vmem:[%s0 + $0x17e] sm:$0xff]
  %v6631 = vld [vmem:[%s0 + $0x186] sm:$0xff]
  %v6632 = vld [vmem:[%s0 + $0x18e] sm:$0xff]
  %v6633 = vld [vmem:[%s0 + $0x196] sm:$0xff]
  %v6634 = vld [vmem:[%s0 + $0x19e] sm:$0xff]
  %v6635 = vld [vmem:[%s0 + $0x1a6] sm:$0xff]
  %v6636 = vld [vmem:[%s0 + $0x1ae] sm:$0xff]
  %v6637 = vld [vmem:[%s0 + $0x1b6] sm:$0xff]
  %v6638 = vld [vmem:[%s0 + $0x1be] sm:$0xff]
  %v6639 = vld [vmem:[%s0 + $0x1c6] sm:$0xff]
  %v6640 = vld [vmem:[%s0 + $0x1ce] sm:$0xff]
  %v6641 = vld [vmem:[%s0 + $0x1d6] sm:$0xff]
  %v6642 = vld [vmem:[%s0 + $0x1de] sm:$0xff]
  %v6643 = vld [vmem:[%s0 + $0x1e6] sm:$0xff]
  %v6644 = vld [vmem:[%s0 + $0x1ee] sm:$0xff]
  %v6645 = vld [vmem:[%s0 + $0x1f6] sm:$0xff]
  %v6646 = vld [vmem:[%s0 + $0x1fe] sm:$0xff]
  %v6647 = vld [vmem:[%s0 + $0x206] sm:$0xff]
  %v6648 = vld [vmem:[%s0 + $0x20e] sm:$0xff]
  %v6649 = vld [vmem:[%s0 + $0x216] sm:$0xff]
  %v6650 = vld [vmem:[%s0 + $0x21e] sm:$0xff]
  %v6651 = vld [vmem:[%s0 + $0x226] sm:$0xff]
  %v6652 = vld [vmem:[%s0 + $0x22e] sm:$0xff]
  %v6653 = vld [vmem:[%s0 + $0x236] sm:$0xff]
  %v6654 = vld [vmem:[%s0 + $0x23e] sm:$0xff]
  %v6655 = vld [vmem:[%s0 + $0x246] sm:$0xff]
  %v6656 = vld [vmem:[%s0 + $0x24e] sm:$0xff]
  %v6657 = vld [vmem:[%s0 + $0x256] sm:$0xff]
  %v6658 = vld [vmem:[%s0 + $0x25e] sm:$0xff]
  %v6659 = vld [vmem:[%s0 + $0x266] sm:$0xff]
  %v6660 = vld [vmem:[%s0 + $0x26e] sm:$0xff]
  %v6661 = vld [vmem:[%s0 + $0x276] sm:$0xff]
  %v6662 = vld [vmem:[%s0 + $0x27e] sm:$0xff]
  %v6663 = vld [vmem:[%s0 + $0x286] sm:$0xff]
  %s6664 = scalar_lea.vmem %s1, 32
  %v6665 = vld [vmem:[%s6664] sm:$0xf]
  %v6667 = vsel %vm177, %v6587, 0
  %v6670 = vsel %vm177, %v6588, 0
  %v6673 = vsel %vm177, %v6589, 0
  %v6676 = vsel %vm177, %v6590, 0
  %v6679 = vsel %vm177, %v6591, 0
  %v6682 = vsel %vm177, %v6592, 0
  %v6685 = vsel %vm177, %v6593, 0
  %v6688 = vsel %vm177, %v6594, 0
  %v6691 = vsel %vm177, %v6595, 0
  %v6694 = vsel %vm177, %v6596, 0
  %v6697 = vsel %vm177, %v6597, 0
  %v6700 = vsel %vm177, %v6598, 0
  %v6703 = vsel %vm177, %v6599, 0
  %v6706 = vsel %vm177, %v6600, 0
  %v6709 = vsel %vm177, %v6601, 0
  %v6712 = vsel %vm177, %v6602, 0
  %v6715 = vsel %vm177, %v6603, 0
  %v6718 = vsel %vm177, %v6604, 0
  %v6721 = vsel %vm177, %v6605, 0
  %v6724 = vsel %vm177, %v6606, 0
  %v6727 = vsel %vm177, %v6607, 0
  %v6730 = vsel %vm177, %v6608, 0
  %v6733 = vsel %vm177, %v6609, 0
  %v6736 = vsel %vm177, %v6610, 0
  %v6739 = vsel %vm177, %v6611, 0
  %v6742 = vsel %vm177, %v6612, 0
  %v6745 = vsel %vm177, %v6613, 0
  %v6748 = vsel %vm177, %v6614, 0
  %v6751 = vsel %vm177, %v6615, 0
  %v6754 = vsel %vm177, %v6616, 0
  %v6757 = vsel %vm177, %v6617, 0
  %v6760 = vsel %vm177, %v6618, 0
  %v6763 = vsel %vm177, %v6619, 0
  %v6766 = vsel %vm177, %v6620, 0
  %v6769 = vsel %vm177, %v6621, 0
  %v6772 = vsel %vm177, %v6622, 0
  %v6775 = vsel %vm177, %v6623, 0
  %v6778 = vsel %vm177, %v6624, 0
  %v6781 = vsel %vm177, %v6625, 0
  %v6784 = vsel %vm177, %v6626, 0
  %v6787 = vsel %vm177, %v6627, 0
  %v6790 = vsel %vm177, %v6628, 0
  %v6793 = vsel %vm177, %v6629, 0
  %v6796 = vsel %vm177, %v6630, 0
  %v6799 = vsel %vm177, %v6631, 0
  %v6802 = vsel %vm177, %v6632, 0
  %v6805 = vsel %vm177, %v6633, 0
  %v6808 = vsel %vm177, %v6634, 0
  %v6811 = vsel %vm177, %v6635, 0
  %v6814 = vsel %vm177, %v6636, 0
  %v6817 = vsel %vm177, %v6637, 0
  %v6820 = vsel %vm177, %v6638, 0
  %v6823 = vsel %vm177, %v6639, 0
  %v6826 = vsel %vm177, %v6640, 0
  %v6829 = vsel %vm177, %v6641, 0
  %v6832 = vsel %vm177, %v6642, 0
  %v6835 = vsel %vm177, %v6643, 0
  %v6838 = vsel %vm177, %v6644, 0
  %v6841 = vsel %vm177, %v6645, 0
  %v6844 = vsel %vm177, %v6646, 0
  %v6847 = vsel %vm177, %v6647, 0
  %v6850 = vsel %vm177, %v6648, 0
  %v6853 = vsel %vm177, %v6649, 0
  %v6856 = vsel %vm177, %v6650, 0
  %v6859 = vsel %vm177, %v6651, 0
  %v6862 = vsel %vm177, %v6652, 0
  %v6865 = vsel %vm177, %v6653, 0
  %v6868 = vsel %vm177, %v6654, 0
  %v6871 = vsel %vm177, %v6655, 0
  %v6874 = vsel %vm177, %v6656, 0
  %v6877 = vsel %vm177, %v6657, 0
  %v6880 = vsel %vm177, %v6658, 0
  %v6883 = vsel %vm177, %v6659, 0
  %v6886 = vsel %vm177, %v6660, 0
  %v6889 = vsel %vm177, %v6661, 0
  %v6892 = vsel %vm177, %v6662, 0
  %v6895 = vsel %vm177, %v6663, 0
  %v6898 = vsel %vm409, %v6665, 0
  %6900 = vmatprep.subr.mxu0 0.0
  %6901 = vmatpush1.msra.mxu0 %v6898
  %6902 = vmatprep.subr.mxu0 0.0
  %6903 = vmatpush1.msra.mxu0 0.0
  %6904 = vmatprep.subr.mxu0 0.0
  %6905 = vmatpush1.msra.mxu0 0.0
  %6906 = vmatprep.subr.mxu0 0.0
  %6907 = vmatpush1.msra.mxu0 0.0
  %6908 = vmatprep.subr.mxu0 0.0
  %6909 = vmatpush1.msra.mxu0 0.0
  %6910 = vmatprep.subr.mxu0 0.0
  %6911 = vmatpush1.msra.mxu0 0.0
  %6912 = vmatprep.subr.mxu0 0.0
  %6913 = vmatpush1.msra.mxu0 0.0
  %6914 = vmatprep.subr.mxu0 0.0
  %6915 = vmatpush1.msra.mxu0 0.0
  %6916 = vmatprep.subr.mxu0 0.0
  %6917 = vmatpush1.msra.mxu0 0.0
  %6918 = vmatprep.subr.mxu0 0.0
  %6919 = vmatpush1.msra.mxu0 0.0
  %6920 = vmatprep.subr.mxu0 0.0
  %6921 = vmatpush1.msra.mxu0 0.0
  %6922 = vmatprep.subr.mxu0 0.0
  %6923 = vmatpush1.msra.mxu0 0.0
  %6924 = vmatprep.subr.mxu0 0.0
  %6925 = vmatpush1.msra.mxu0 0.0
  %6926 = vmatprep.subr.mxu0 0.0
  %6927 = vmatpush1.msra.mxu0 0.0
  %6928 = vmatprep.subr.mxu0 0.0
  %6929 = vmatpush1.msra.mxu0 0.0
  %6930 = vmatprep.subr.mxu0 0.0
  %6931 = vmatpush1.msra.mxu0 0.0
  %6932 = vmatprep.subr.mxu0 0.0
  %6933 = vmatpush1.msra.mxu0 0.0
  %6934 = vmatprep.subr.mxu0 0.0
  %6935 = vmatpush1.msra.mxu0 0.0
  %6936 = vmatprep.subr.mxu0 0.0
  %6937 = vmatpush1.msra.mxu0 0.0
  %6938 = vmatprep.subr.mxu0 0.0
  %6939 = vmatpush1.msra.mxu0 0.0
  %6940 = vmatprep.subr.mxu0 0.0
  %6941 = vmatpush1.msra.mxu0 0.0
  %6942 = vmatprep.subr.mxu0 0.0
  %6943 = vmatpush1.msra.mxu0 0.0
  %6944 = vmatprep.subr.mxu0 0.0
  %6945 = vmatpush1.msra.mxu0 0.0
  %6946 = vmatprep.subr.mxu0 0.0
  %6947 = vmatpush1.msra.mxu0 0.0
  %6948 = vmatprep.subr.mxu0 0.0
  %6949 = vmatpush1.msra.mxu0 0.0
  %6950 = vmatprep.subr.mxu0 0.0
  %6951 = vmatpush1.msra.mxu0 0.0
  %6952 = vmatprep.subr.mxu0 0.0
  %6953 = vmatpush1.msra.mxu0 0.0
  %6954 = vmatprep.subr.mxu0 0.0
  %6955 = vmatpush1.msra.mxu0 0.0
  %6956 = vmatprep.subr.mxu0 0.0
  %6957 = vmatpush1.msra.mxu0 0.0
  %6958 = vmatprep.subr.mxu0 0.0
  %6959 = vmatpush1.msra.mxu0 0.0
  %6960 = vmatprep.subr.mxu0 0.0
  %6961 = vmatpush1.msra.mxu0 0.0
  %6962 = vmatprep.subr.mxu0 0.0
  %6963 = vmatpush1.msra.mxu0 0.0
  %6964 = vmatprep.mubr.f32.mxu0 0.0
  %6965 = vmatmul.mubr.f32.gmra.mrb[0].mxu0 %v6667
  %v6966 = vpop.f32.mrb[0].mxu0
  %v6967 = vadd.f32 0.0, %v6966
  %v6968 = vpop.f32.mrb[0].mxu0
  %6969 = vmatprep.mubr.f32.mxu0 0.0
  %6970 = vmatmul.mubr.f32.gmra.mrb[0].mxu0 %v6670
  %v6971 = vpop.f32.mrb[0].mxu0
  %v6972 = vadd.f32 0.0, %v6971
  %v6973 = vpop.f32.mrb[0].mxu0
  %6974 = vmatprep.mubr.f32.mxu0 0.0
  %6975 = vmatmul.mubr.f32.gmra.mrb[0].mxu0 %v6673
  %v6976 = vpop.f32.mrb[0].mxu0
  %v6977 = vadd.f32 0.0, %v6976
  %v6978 = vpop.f32.mrb[0].mxu0
  %6979 = vmatprep.mubr.f32.mxu0 0.0
  %6980 = vmatmul.mubr.f32.gmra.mrb[0].mxu0 %v6676
  %v6981 = vpop.f32.mrb[0].mxu0
  %v6982 = vadd.f32 0.0, %v6981
  %v6983 = vpop.f32.mrb[0].mxu0
  %6984 = vmatprep.mubr.f32.mxu0 0.0
  %6985 = vmatmul.mubr.f32.gmra.mrb[0].mxu0 %v6679
  %v6986 = vpop.f32.mrb[0].mxu0
  %v6987 = vadd.f32 0.0, %v6986
  %v6988 = vpop.f32.mrb[0].mxu0
  %6989 = vmatprep.mubr.f32.mxu0 0.0
  %6990 = vmatmul.mubr.f32.gmra.mrb[0].mxu0 %v6682
  %v6991 = vpop.f32.mrb[0].mxu0
  %v6992 = vadd.f32 0.0, %v6991
  %v6993 = vpop.f32.mrb[0].mxu0
  %6994 = vmatprep.mubr.f32.mxu0 0.0
  %6995 = vmatmul.mubr.f32.gmra.mrb[0].mxu0 %v6685
  %v6996 = vpop.f32.mrb[0].mxu0
  %v6997 = vadd.f32 0.0, %v6996
  %v6998 = vpop.f32.mrb[0].mxu0
  %6999 = vmatprep.mubr.f32.mxu0 0.0
  %7000 = vmatmul.mubr.f32.gmra.mrb[0].mxu0 %v6688
  %v7001 = vpop.f32.mrb[0].mxu0
  %v7002 = vadd.f32 0.0, %v7001
  %v7003 = vpop.f32.mrb[0].mxu0
  %7004 = vmatprep.mubr.f32.mxu0 0.0
  %7005 = vmatmul.mubr.f32.gmra.mrb[0].mxu0 %v6691
  %v7006 = vpop.f32.mrb[0].mxu0
  %v7007 = vadd.f32 0.0, %v7006
  %v7008 = vpop.f32.mrb[0].mxu0
  %7009 = vmatprep.mubr.f32.mxu0 0.0
  %7010 = vmatmul.mubr.f32.gmra.mrb[0].mxu0 %v6694
  %v7011 = vpop.f32.mrb[0].mxu0
  %v7012 = vadd.f32 0.0, %v7011
  %v7013 = vpop.f32.mrb[0].mxu0
  %7014 = vmatprep.mubr.f32.mxu0 0.0
  %7015 = vmatmul.mubr.f32.gmra.mrb[0].mxu0 %v6697
  %v7016 = vpop.f32.mrb[0].mxu0
  %v7017 = vadd.f32 0.0, %v7016
  %v7018 = vpop.f32.mrb[0].mxu0
  %7019 = vmatprep.mubr.f32.mxu0 0.0
  %7020 = vmatmul.mubr.f32.gmra.mrb[0].mxu0 %v6700
  %v7021 = vpop.f32.mrb[0].mxu0
  %v7022 = vadd.f32 0.0, %v7021
  %v7023 = vpop.f32.mrb[0].mxu0
  %7024 = vmatprep.mubr.f32.mxu0 0.0
  %7025 = vmatmul.mubr.f32.gmra.mrb[0].mxu0 %v6703
  %v7026 = vpop.f32.mrb[0].mxu0
  %v7027 = vadd.f32 0.0, %v7026
  %v7028 = vpop.f32.mrb[0].mxu0
  %7029 = vmatprep.mubr.f32.mxu0 0.0
  %7030 = vmatmul.mubr.f32.gmra.mrb[0].mxu0 %v6706
  %v7031 = vpop.f32.mrb[0].mxu0
  %v7032 = vadd.f32 0.0, %v7031
  %v7033 = vpop.f32.mrb[0].mxu0
  %7034 = vmatprep.mubr.f32.mxu0 0.0
  %7035 = vmatmul.mubr.f32.gmra.mrb[0].mxu0 %v6709
  %v7036 = vpop.f32.mrb[0].mxu0
  %v7037 = vadd.f32 0.0, %v7036
  %v7038 = vpop.f32.mrb[0].mxu0
  %7039 = vmatprep.mubr.f32.mxu0 0.0
  %7040 = vmatmul.mubr.f32.gmra.mrb[0].mxu0 %v6712
  %v7041 = vpop.f32.mrb[0].mxu0
  %v7042 = vadd.f32 0.0, %v7041
  %v7043 = vpop.f32.mrb[0].mxu0
  %7044 = vmatprep.mubr.f32.mxu0 0.0
  %7045 = vmatmul.mubr.f32.gmra.mrb[0].mxu0 %v6715
  %v7046 = vpop.f32.mrb[0].mxu0
  %v7047 = vadd.f32 0.0, %v7046
  %v7048 = vpop.f32.mrb[0].mxu0
  %7049 = vmatprep.mubr.f32.mxu0 0.0
  %7050 = vmatmul.mubr.f32.gmra.mrb[0].mxu0 %v6718
  %v7051 = vpop.f32.mrb[0].mxu0
  %v7052 = vadd.f32 0.0, %v7051
  %v7053 = vpop.f32.mrb[0].mxu0
  %7054 = vmatprep.mubr.f32.mxu0 0.0
  %7055 = vmatmul.mubr.f32.gmra.mrb[0].mxu0 %v6721
  %v7056 = vpop.f32.mrb[0].mxu0
  %v7057 = vadd.f32 0.0, %v7056
  %v7058 = vpop.f32.mrb[0].mxu0
  %7059 = vmatprep.mubr.f32.mxu0 0.0
  %7060 = vmatmul.mubr.f32.gmra.mrb[0].mxu0 %v6724
  %v7061 = vpop.f32.mrb[0].mxu0
  %v7062 = vadd.f32 0.0, %v7061
  %v7063 = vpop.f32.mrb[0].mxu0
  %7064 = vmatprep.mubr.f32.mxu0 0.0
  %7065 = vmatmul.mubr.f32.gmra.mrb[0].mxu0 %v6727
  %v7066 = vpop.f32.mrb[0].mxu0
  %v7067 = vadd.f32 0.0, %v7066
  %v7068 = vpop.f32.mrb[0].mxu0
  %7069 = vmatprep.mubr.f32.mxu0 0.0
  %7070 = vmatmul.mubr.f32.gmra.mrb[0].mxu0 %v6730
  %v7071 = vpop.f32.mrb[0].mxu0
  %v7072 = vadd.f32 0.0, %v7071
  %v7073 = vpop.f32.mrb[0].mxu0
  %7074 = vmatprep.mubr.f32.mxu0 0.0
  %7075 = vmatmul.mubr.f32.gmra.mrb[0].mxu0 %v6733
  %v7076 = vpop.f32.mrb[0].mxu0
  %v7077 = vadd.f32 0.0, %v7076
  %v7078 = vpop.f32.mrb[0].mxu0
  %7079 = vmatprep.mubr.f32.mxu0 0.0
  %7080 = vmatmul.mubr.f32.gmra.mrb[0].mxu0 %v6736
  %v7081 = vpop.f32.mrb[0].mxu0
  %v7082 = vadd.f32 0.0, %v7081
  %v7083 = vpop.f32.mrb[0].mxu0
  %7084 = vmatprep.mubr.f32.mxu0 0.0
  %7085 = vmatmul.mubr.f32.gmra.mrb[0].mxu0 %v6739
  %v7086 = vpop.f32.mrb[0].mxu0
  %v7087 = vadd.f32 0.0, %v7086
  %v7088 = vpop.f32.mrb[0].mxu0
  %7089 = vmatprep.mubr.f32.mxu0 0.0
  %7090 = vmatmul.mubr.f32.gmra.mrb[0].mxu0 %v6742
  %v7091 = vpop.f32.mrb[0].mxu0
  %v7092 = vadd.f32 0.0, %v7091
  %v7093 = vpop.f32.mrb[0].mxu0
  %7094 = vmatprep.mubr.f32.mxu0 0.0
  %7095 = vmatmul.mubr.f32.gmra.mrb[0].mxu0 %v6745
  %v7096 = vpop.f32.mrb[0].mxu0
  %v7097 = vadd.f32 0.0, %v7096
  %v7098 = vpop.f32.mrb[0].mxu0
  %7099 = vmatprep.mubr.f32.mxu0 0.0
  %7100 = vmatmul.mubr.f32.gmra.mrb[0].mxu0 %v6748
  %v7101 = vpop.f32.mrb[0].mxu0
  %v7102 = vadd.f32 0.0, %v7101
  %v7103 = vpop.f32.mrb[0].mxu0
  %7104 = vmatprep.mubr.f32.mxu0 0.0
  %7105 = vmatmul.mubr.f32.gmra.mrb[0].mxu0 %v6751
  %v7106 = vpop.f32.mrb[0].mxu0
  %v7107 = vadd.f32 0.0, %v7106
  %v7108 = vpop.f32.mrb[0].mxu0
  %7109 = vmatprep.mubr.f32.mxu0 0.0
  %7110 = vmatmul.mubr.f32.gmra.mrb[0].mxu0 %v6754
  %v7111 = vpop.f32.mrb[0].mxu0
  %v7112 = vadd.f32 0.0, %v7111
  %v7113 = vpop.f32.mrb[0].mxu0
  %7114 = vmatprep.mubr.f32.mxu0 0.0
  %7115 = vmatmul.mubr.f32.gmra.mrb[0].mxu0 %v6757
  %v7116 = vpop.f32.mrb[0].mxu0
  %v7117 = vadd.f32 0.0, %v7116
  %v7118 = vpop.f32.mrb[0].mxu0
  %7119 = vmatprep.mubr.f32.mxu0 0.0
  %7120 = vmatmul.mubr.f32.gmra.mrb[0].mxu0 %v6760
  %v7121 = vpop.f32.mrb[0].mxu0
  %v7122 = vadd.f32 0.0, %v7121
  %v7123 = vpop.f32.mrb[0].mxu0
  %7124 = vmatprep.mubr.f32.mxu0 0.0
  %7125 = vmatmul.mubr.f32.gmra.mrb[0].mxu0 %v6763
  %v7126 = vpop.f32.mrb[0].mxu0
  %v7127 = vadd.f32 0.0, %v7126
  %v7128 = vpop.f32.mrb[0].mxu0
  %7129 = vmatprep.mubr.f32.mxu0 0.0
  %7130 = vmatmul.mubr.f32.gmra.mrb[0].mxu0 %v6766
  %v7131 = vpop.f32.mrb[0].mxu0
  %v7132 = vadd.f32 0.0, %v7131
  %v7133 = vpop.f32.mrb[0].mxu0
  %7134 = vmatprep.mubr.f32.mxu0 0.0
  %7135 = vmatmul.mubr.f32.gmra.mrb[0].mxu0 %v6769
  %v7136 = vpop.f32.mrb[0].mxu0
  %v7137 = vadd.f32 0.0, %v7136
  %v7138 = vpop.f32.mrb[0].mxu0
  %7139 = vmatprep.mubr.f32.mxu0 0.0
  %7140 = vmatmul.mubr.f32.gmra.mrb[0].mxu0 %v6772
  %v7141 = vpop.f32.mrb[0].mxu0
  %v7142 = vadd.f32 0.0, %v7141
  %v7143 = vpop.f32.mrb[0].mxu0
  %7144 = vmatprep.mubr.f32.mxu0 0.0
  %7145 = vmatmul.mubr.f32.gmra.mrb[0].mxu0 %v6775
  %v7146 = vpop.f32.mrb[0].mxu0
  %v7147 = vadd.f32 0.0, %v7146
  %v7148 = vpop.f32.mrb[0].mxu0
  %7149 = vmatprep.mubr.f32.mxu0 0.0
  %7150 = vmatmul.mubr.f32.gmra.mrb[0].mxu0 %v6778
  %v7151 = vpop.f32.mrb[0].mxu0
  %v7152 = vadd.f32 0.0, %v7151
  %v7153 = vpop.f32.mrb[0].mxu0
  %7154 = vmatprep.mubr.f32.mxu0 0.0
  %7155 = vmatmul.mubr.f32.gmra.mrb[0].mxu0 %v6781
  %v7156 = vpop.f32.mrb[0].mxu0
  %v7157 = vadd.f32 0.0, %v7156
  %v7158 = vpop.f32.mrb[0].mxu0
  %7159 = vmatprep.mubr.f32.mxu0 0.0
  %7160 = vmatmul.mubr.f32.gmra.mrb[0].mxu0 %v6784
  %v7161 = vpop.f32.mrb[0].mxu0
  %v7162 = vadd.f32 0.0, %v7161
  %v7163 = vpop.f32.mrb[0].mxu0
  %7164 = vmatprep.mubr.f32.mxu0 0.0
  %7165 = vmatmul.mubr.f32.gmra.mrb[0].mxu0 %v6787
  %v7166 = vpop.f32.mrb[0].mxu0
  %v7167 = vadd.f32 0.0, %v7166
  %v7168 = vpop.f32.mrb[0].mxu0
  %7169 = vmatprep.mubr.f32.mxu0 0.0
  %7170 = vmatmul.mubr.f32.gmra.mrb[0].mxu0 %v6790
  %v7171 = vpop.f32.mrb[0].mxu0
  %v7172 = vadd.f32 0.0, %v7171
  %v7173 = vpop.f32.mrb[0].mxu0
  %7174 = vmatprep.mubr.f32.mxu0 0.0
  %7175 = vmatmul.mubr.f32.gmra.mrb[0].mxu0 %v6793
  %v7176 = vpop.f32.mrb[0].mxu0
  %v7177 = vadd.f32 0.0, %v7176
  %v7178 = vpop.f32.mrb[0].mxu0
  %7179 = vmatprep.mubr.f32.mxu0 0.0
  %7180 = vmatmul.mubr.f32.gmra.mrb[0].mxu0 %v6796
  %v7181 = vpop.f32.mrb[0].mxu0
  %v7182 = vadd.f32 0.0, %v7181
  %v7183 = vpop.f32.mrb[0].mxu0
  %7184 = vmatprep.mubr.f32.mxu0 0.0
  %7185 = vmatmul.mubr.f32.gmra.mrb[0].mxu0 %v6799
  %v7186 = vpop.f32.mrb[0].mxu0
  %v7187 = vadd.f32 0.0, %v7186
  %v7188 = vpop.f32.mrb[0].mxu0
  %7189 = vmatprep.mubr.f32.mxu0 0.0
  %7190 = vmatmul.mubr.f32.gmra.mrb[0].mxu0 %v6802
  %v7191 = vpop.f32.mrb[0].mxu0
  %v7192 = vadd.f32 0.0, %v7191
  %v7193 = vpop.f32.mrb[0].mxu0
  %7194 = vmatprep.mubr.f32.mxu0 0.0
  %7195 = vmatmul.mubr.f32.gmra.mrb[0].mxu0 %v6805
  %v7196 = vpop.f32.mrb[0].mxu0
  %v7197 = vadd.f32 0.0, %v7196
  %v7198 = vpop.f32.mrb[0].mxu0
  %7199 = vmatprep.mubr.f32.mxu0 0.0
  %7200 = vmatmul.mubr.f32.gmra.mrb[0].mxu0 %v6808
  %v7201 = vpop.f32.mrb[0].mxu0
  %v7202 = vadd.f32 0.0, %v7201
  %v7203 = vpop.f32.mrb[0].mxu0
  %7204 = vmatprep.mubr.f32.mxu0 0.0
  %7205 = vmatmul.mubr.f32.gmra.mrb[0].mxu0 %v6811
  %v7206 = vpop.f32.mrb[0].mxu0
  %v7207 = vadd.f32 0.0, %v7206
  %v7208 = vpop.f32.mrb[0].mxu0
  %7209 = vmatprep.mubr.f32.mxu0 0.0
  %7210 = vmatmul.mubr.f32.gmra.mrb[0].mxu0 %v6814
  %v7211 = vpop.f32.mrb[0].mxu0
  %v7212 = vadd.f32 0.0, %v7211
  %v7213 = vpop.f32.mrb[0].mxu0
  %7214 = vmatprep.mubr.f32.mxu0 0.0
  %7215 = vmatmul.mubr.f32.gmra.mrb[0].mxu0 %v6817
  %v7216 = vpop.f32.mrb[0].mxu0
  %v7217 = vadd.f32 0.0, %v7216
  %v7218 = vpop.f32.mrb[0].mxu0
  %7219 = vmatprep.mubr.f32.mxu0 0.0
  %7220 = vmatmul.mubr.f32.gmra.mrb[0].mxu0 %v6820
  %v7221 = vpop.f32.mrb[0].mxu0
  %v7222 = vadd.f32 0.0, %v7221
  %v7223 = vpop.f32.mrb[0].mxu0
  %7224 = vmatprep.mubr.f32.mxu0 0.0
  %7225 = vmatmul.mubr.f32.gmra.mrb[0].mxu0 %v6823
  %v7226 = vpop.f32.mrb[0].mxu0
  %v7227 = vadd.f32 0.0, %v7226
  %v7228 = vpop.f32.mrb[0].mxu0
  %7229 = vmatprep.mubr.f32.mxu0 0.0
  %7230 = vmatmul.mubr.f32.gmra.mrb[0].mxu0 %v6826
  %v7231 = vpop.f32.mrb[0].mxu0
  %v7232 = vadd.f32 0.0, %v7231
  %v7233 = vpop.f32.mrb[0].mxu0
  %7234 = vmatprep.mubr.f32.mxu0 0.0
  %7235 = vmatmul.mubr.f32.gmra.mrb[0].mxu0 %v6829
  %v7236 = vpop.f32.mrb[0].mxu0
  %v7237 = vadd.f32 0.0, %v7236
  %v7238 = vpop.f32.mrb[0].mxu0
  %7239 = vmatprep.mubr.f32.mxu0 0.0
  %7240 = vmatmul.mubr.f32.gmra.mrb[0].mxu0 %v6832
  %v7241 = vpop.f32.mrb[0].mxu0
  %v7242 = vadd.f32 0.0, %v7241
  %v7243 = vpop.f32.mrb[0].mxu0
  %7244 = vmatprep.mubr.f32.mxu0 0.0
  %7245 = vmatmul.mubr.f32.gmra.mrb[0].mxu0 %v6835
  %v7246 = vpop.f32.mrb[0].mxu0
  %v7247 = vadd.f32 0.0, %v7246
  %v7248 = vpop.f32.mrb[0].mxu0
  %7249 = vmatprep.mubr.f32.mxu0 0.0
  %7250 = vmatmul.mubr.f32.gmra.mrb[0].mxu0 %v6838
  %v7251 = vpop.f32.mrb[0].mxu0
  %v7252 = vadd.f32 0.0, %v7251
  %v7253 = vpop.f32.mrb[0].mxu0
  %7254 = vmatprep.mubr.f32.mxu0 0.0
  %7255 = vmatmul.mubr.f32.gmra.mrb[0].mxu0 %v6841
  %v7256 = vpop.f32.mrb[0].mxu0
  %v7257 = vadd.f32 0.0, %v7256
  %v7258 = vpop.f32.mrb[0].mxu0
  %7259 = vmatprep.mubr.f32.mxu0 0.0
  %7260 = vmatmul.mubr.f32.gmra.mrb[0].mxu0 %v6844
  %v7261 = vpop.f32.mrb[0].mxu0
  %v7262 = vadd.f32 0.0, %v7261
  %v7263 = vpop.f32.mrb[0].mxu0
  %7264 = vmatprep.mubr.f32.mxu0 0.0
  %7265 = vmatmul.mubr.f32.gmra.mrb[0].mxu0 %v6847
  %v7266 = vpop.f32.mrb[0].mxu0
  %v7267 = vadd.f32 0.0, %v7266
  %v7268 = vpop.f32.mrb[0].mxu0
  %7269 = vmatprep.mubr.f32.mxu0 0.0
  %7270 = vmatmul.mubr.f32.gmra.mrb[0].mxu0 %v6850
  %v7271 = vpop.f32.mrb[0].mxu0
  %v7272 = vadd.f32 0.0, %v7271
  %v7273 = vpop.f32.mrb[0].mxu0
  %7274 = vmatprep.mubr.f32.mxu0 0.0
  %7275 = vmatmul.mubr.f32.gmra.mrb[0].mxu0 %v6853
  %v7276 = vpop.f32.mrb[0].mxu0
  %v7277 = vadd.f32 0.0, %v7276
  %v7278 = vpop.f32.mrb[0].mxu0
  %7279 = vmatprep.mubr.f32.mxu0 0.0
  %7280 = vmatmul.mubr.f32.gmra.mrb[0].mxu0 %v6856
  %v7281 = vpop.f32.mrb[0].mxu0
  %v7282 = vadd.f32 0.0, %v7281
  %v7283 = vpop.f32.mrb[0].mxu0
  %7284 = vmatprep.mubr.f32.mxu0 0.0
  %7285 = vmatmul.mubr.f32.gmra.mrb[0].mxu0 %v6859
  %v7286 = vpop.f32.mrb[0].mxu0
  %v7287 = vadd.f32 0.0, %v7286
  %v7288 = vpop.f32.mrb[0].mxu0
  %7289 = vmatprep.mubr.f32.mxu0 0.0
  %7290 = vmatmul.mubr.f32.gmra.mrb[0].mxu0 %v6862
  %v7291 = vpop.f32.mrb[0].mxu0
  %v7292 = vadd.f32 0.0, %v7291
  %v7293 = vpop.f32.mrb[0].mxu0
  %7294 = vmatprep.mubr.f32.mxu0 0.0
  %7295 = vmatmul.mubr.f32.gmra.mrb[0].mxu0 %v6865
  %v7296 = vpop.f32.mrb[0].mxu0
  %v7297 = vadd.f32 0.0, %v7296
  %v7298 = vpop.f32.mrb[0].mxu0
  %7299 = vmatprep.mubr.f32.mxu0 0.0
  %7300 = vmatmul.mubr.f32.gmra.mrb[0].mxu0 %v6868
  %v7301 = vpop.f32.mrb[0].mxu0
  %v7302 = vadd.f32 0.0, %v7301
  %v7303 = vpop.f32.mrb[0].mxu0
  %7304 = vmatprep.mubr.f32.mxu0 0.0
  %7305 = vmatmul.mubr.f32.gmra.mrb[0].mxu0 %v6871
  %v7306 = vpop.f32.mrb[0].mxu0
  %v7307 = vadd.f32 0.0, %v7306
  %v7308 = vpop.f32.mrb[0].mxu0
  %7309 = vmatprep.mubr.f32.mxu0 0.0
  %7310 = vmatmul.mubr.f32.gmra.mrb[0].mxu0 %v6874
  %v7311 = vpop.f32.mrb[0].mxu0
  %v7312 = vadd.f32 0.0, %v7311
  %v7313 = vpop.f32.mrb[0].mxu0
  %7314 = vmatprep.mubr.f32.mxu0 0.0
  %7315 = vmatmul.mubr.f32.gmra.mrb[0].mxu0 %v6877
  %v7316 = vpop.f32.mrb[0].mxu0
  %v7317 = vadd.f32 0.0, %v7316
  %v7318 = vpop.f32.mrb[0].mxu0
  %7319 = vmatprep.mubr.f32.mxu0 0.0
  %7320 = vmatmul.mubr.f32.gmra.mrb[0].mxu0 %v6880
  %v7321 = vpop.f32.mrb[0].mxu0
  %v7322 = vadd.f32 0.0, %v7321
  %v7323 = vpop.f32.mrb[0].mxu0
  %7324 = vmatprep.mubr.f32.mxu0 0.0
  %7325 = vmatmul.mubr.f32.gmra.mrb[0].mxu0 %v6883
  %v7326 = vpop.f32.mrb[0].mxu0
  %v7327 = vadd.f32 0.0, %v7326
  %v7328 = vpop.f32.mrb[0].mxu0
  %7329 = vmatprep.mubr.f32.mxu0 0.0
  %7330 = vmatmul.mubr.f32.gmra.mrb[0].mxu0 %v6886
  %v7331 = vpop.f32.mrb[0].mxu0
  %v7332 = vadd.f32 0.0, %v7331
  %v7333 = vpop.f32.mrb[0].mxu0
  %7334 = vmatprep.mubr.f32.mxu0 0.0
  %7335 = vmatmul.mubr.f32.gmra.mrb[0].mxu0 %v6889
  %v7336 = vpop.f32.mrb[0].mxu0
  %v7337 = vadd.f32 0.0, %v7336
  %v7338 = vpop.f32.mrb[0].mxu0
  %7339 = vmatprep.mubr.f32.mxu0 0.0
  %7340 = vmatmul.mubr.f32.gmra.mrb[0].mxu0 %v6892
  %v7341 = vpop.f32.mrb[0].mxu0
  %v7342 = vadd.f32 0.0, %v7341
  %v7343 = vpop.f32.mrb[0].mxu0
  %7344 = vmatprep.mubr.f32.mxu0 0.0
  %7345 = vmatmul.mubr.f32.gmra.mrb[0].mxu0 %v6895
  %v7346 = vpop.f32.mrb[0].mxu0
  %v7347 = vadd.f32 0.0, %v7346
  %v7348 = vpop.f32.mrb[0].mxu0
  %7349 = vdwg.mxu0
  %v7350 = vadd.f32 %v6510, %v6967
  %v7351 = vadd.f32 %v6511, %v6972
  %v7352 = vadd.f32 %v6512, %v6977
  %v7353 = vadd.f32 %v6513, %v6982
  %v7354 = vadd.f32 %v6514, %v6987
  %v7355 = vadd.f32 %v6515, %v6992
  %v7356 = vadd.f32 %v6516, %v6997
  %v7357 = vadd.f32 %v6517, %v7002
  %v7358 = vadd.f32 %v6518, %v7007
  %v7359 = vadd.f32 %v6519, %v7012
  %v7360 = vadd.f32 %v6520, %v7017
  %v7361 = vadd.f32 %v6521, %v7022
  %v7362 = vadd.f32 %v6522, %v7027
  %v7363 = vadd.f32 %v6523, %v7032
  %v7364 = vadd.f32 %v6524, %v7037
  %v7365 = vadd.f32 %v6525, %v7042
  %v7366 = vadd.f32 %v6526, %v7047
  %v7367 = vadd.f32 %v6527, %v7052
  %v7368 = vadd.f32 %v6528, %v7057
  %v7369 = vadd.f32 %v6529, %v7062
  %v7370 = vadd.f32 %v6530, %v7067
  %v7371 = vadd.f32 %v6531, %v7072
  %v7372 = vadd.f32 %v6532, %v7077
  %v7373 = vadd.f32 %v6533, %v7082
  %v7374 = vadd.f32 %v6534, %v7087
  %v7375 = vadd.f32 %v6535, %v7092
  %v7376 = vadd.f32 %v6536, %v7097
  %v7377 = vadd.f32 %v6537, %v7102
  %v7378 = vadd.f32 %v6538, %v7107
  %v7379 = vadd.f32 %v6539, %v7112
  %v7380 = vadd.f32 %v6540, %v7117
  %v7381 = vadd.f32 %v6541, %v7122
  %v7382 = vadd.f32 %v6542, %v7127
  %v7383 = vadd.f32 %v6543, %v7132
  %v7384 = vadd.f32 %v6544, %v7137
  %v7385 = vadd.f32 %v6545, %v7142
  %v7386 = vadd.f32 %v6546, %v7147
  %v7387 = vadd.f32 %v6547, %v7152
  %v7388 = vadd.f32 %v6548, %v7157
  %v7389 = vadd.f32 %v6549, %v7162
  %v7390 = vadd.f32 %v6550, %v7167
  %v7391 = vadd.f32 %v6551, %v7172
  %v7392 = vadd.f32 %v6552, %v7177
  %v7393 = vadd.f32 %v6553, %v7182
  %v7394 = vadd.f32 %v6554, %v7187
  %v7395 = vadd.f32 %v6555, %v7192
  %v7396 = vadd.f32 %v6556, %v7197
  %v7397 = vadd.f32 %v6557, %v7202
  %v7398 = vadd.f32 %v6558, %v7207
  %v7399 = vadd.f32 %v6559, %v7212
  %v7400 = vadd.f32 %v6560, %v7217
  %v7401 = vadd.f32 %v6561, %v7222
  %v7402 = vadd.f32 %v6562, %v7227
  %v7403 = vadd.f32 %v6563, %v7232
  %v7404 = vadd.f32 %v6564, %v7237
  %v7405 = vadd.f32 %v6565, %v7242
  %v7406 = vadd.f32 %v6566, %v7247
  %v7407 = vadd.f32 %v6567, %v7252
  %v7408 = vadd.f32 %v6568, %v7257
  %v7409 = vadd.f32 %v6569, %v7262
  %v7410 = vadd.f32 %v6570, %v7267
  %v7411 = vadd.f32 %v6571, %v7272
  %v7412 = vadd.f32 %v6572, %v7277
  %v7413 = vadd.f32 %v6573, %v7282
  %v7414 = vadd.f32 %v6574, %v7287
  %v7415 = vadd.f32 %v6575, %v7292
  %v7416 = vadd.f32 %v6576, %v7297
  %v7417 = vadd.f32 %v6577, %v7302
  %v7418 = vadd.f32 %v6578, %v7307
  %v7419 = vadd.f32 %v6579, %v7312
  %v7420 = vadd.f32 %v6580, %v7317
  %v7421 = vadd.f32 %v6581, %v7322
  %v7422 = vadd.f32 %v6582, %v7327
  %v7423 = vadd.f32 %v6583, %v7332
  %v7424 = vadd.f32 %v6584, %v7337
  %v7425 = vadd.f32 %v6585, %v7342
  %v7426 = vadd.f32 %v6586, %v7347
  %v7427 = vld [vmem:[%s2] sm:$0x1]
  %v7429 = vlaneseq
  %v7430 = vshrl.u32 %v7429, 7
  %v7431 = vsub.s32 0, %v7430
  %v7432 = vrot.slane %v7427, %v7431
  %v7434 = vadd.f32 %v7350, %v7432
  %v7435 = vadd.f32 %v7351, %v7432
  %v7436 = vadd.f32 %v7352, %v7432
  %v7437 = vadd.f32 %v7353, %v7432
  %v7438 = vadd.f32 %v7354, %v7432
  %v7439 = vadd.f32 %v7355, %v7432
  %v7440 = vadd.f32 %v7356, %v7432
  %v7441 = vadd.f32 %v7357, %v7432
  %v7442 = vadd.f32 %v7358, %v7432
  %v7443 = vadd.f32 %v7359, %v7432
  %v7444 = vadd.f32 %v7360, %v7432
  %v7445 = vadd.f32 %v7361, %v7432
  %v7446 = vadd.f32 %v7362, %v7432
  %v7447 = vadd.f32 %v7363, %v7432
  %v7448 = vadd.f32 %v7364, %v7432
  %v7449 = vadd.f32 %v7365, %v7432
  %v7450 = vadd.f32 %v7366, %v7432
  %v7451 = vadd.f32 %v7367, %v7432
  %v7452 = vadd.f32 %v7368, %v7432
  %v7453 = vadd.f32 %v7369, %v7432
  %v7454 = vadd.f32 %v7370, %v7432
  %v7455 = vadd.f32 %v7371, %v7432
  %v7456 = vadd.f32 %v7372, %v7432
  %v7457 = vadd.f32 %v7373, %v7432
  %v7458 = vadd.f32 %v7374, %v7432
  %v7459 = vadd.f32 %v7375, %v7432
  %v7460 = vadd.f32 %v7376, %v7432
  %v7461 = vadd.f32 %v7377, %v7432
  %v7462 = vadd.f32 %v7378, %v7432
  %v7463 = vadd.f32 %v7379, %v7432
  %v7464 = vadd.f32 %v7380, %v7432
  %v7465 = vadd.f32 %v7381, %v7432
  %v7466 = vadd.f32 %v7382, %v7432
  %v7467 = vadd.f32 %v7383, %v7432
  %v7468 = vadd.f32 %v7384, %v7432
  %v7469 = vadd.f32 %v7385, %v7432
  %v7470 = vadd.f32 %v7386, %v7432
  %v7471 = vadd.f32 %v7387, %v7432
  %v7472 = vadd.f32 %v7388, %v7432
  %v7473 = vadd.f32 %v7389, %v7432
  %v7474 = vadd.f32 %v7390, %v7432
  %v7475 = vadd.f32 %v7391, %v7432
  %v7476 = vadd.f32 %v7392, %v7432
  %v7477 = vadd.f32 %v7393, %v7432
  %v7478 = vadd.f32 %v7394, %v7432
  %v7479 = vadd.f32 %v7395, %v7432
  %v7480 = vadd.f32 %v7396, %v7432
  %v7481 = vadd.f32 %v7397, %v7432
  %v7482 = vadd.f32 %v7398, %v7432
  %v7483 = vadd.f32 %v7399, %v7432
  %v7484 = vadd.f32 %v7400, %v7432
  %v7485 = vadd.f32 %v7401, %v7432
  %v7486 = vadd.f32 %v7402, %v7432
  %v7487 = vadd.f32 %v7403, %v7432
  %v7488 = vadd.f32 %v7404, %v7432
  %v7489 = vadd.f32 %v7405, %v7432
  %v7490 = vadd.f32 %v7406, %v7432
  %v7491 = vadd.f32 %v7407, %v7432
  %v7492 = vadd.f32 %v7408, %v7432
  %v7493 = vadd.f32 %v7409, %v7432
  %v7494 = vadd.f32 %v7410, %v7432
  %v7495 = vadd.f32 %v7411, %v7432
  %v7496 = vadd.f32 %v7412, %v7432
  %v7497 = vadd.f32 %v7413, %v7432
  %v7498 = vadd.f32 %v7414, %v7432
  %v7499 = vadd.f32 %v7415, %v7432
  %v7500 = vadd.f32 %v7416, %v7432
  %v7501 = vadd.f32 %v7417, %v7432
  %v7502 = vadd.f32 %v7418, %v7432
  %v7503 = vadd.f32 %v7419, %v7432
  %v7504 = vadd.f32 %v7420, %v7432
  %v7505 = vadd.f32 %v7421, %v7432
  %v7506 = vadd.f32 %v7422, %v7432
  %v7507 = vadd.f32 %v7423, %v7432
  %v7508 = vadd.f32 %v7424, %v7432
  %v7509 = vadd.f32 %v7425, %v7432
  %v7510 = vadd.f32 %v7426, %v7432
  %v7511 = vmax.f32 %v7434, 0.0
  %v7512 = vmax.f32 %v7435, 0.0
  %v7513 = vmax.f32 %v7436, 0.0
  %v7514 = vmax.f32 %v7437, 0.0
  %v7515 = vmax.f32 %v7438, 0.0
  %v7516 = vmax.f32 %v7439, 0.0
  %v7517 = vmax.f32 %v7440, 0.0
  %v7518 = vmax.f32 %v7441, 0.0
  %v7519 = vmax.f32 %v7442, 0.0
  %v7520 = vmax.f32 %v7443, 0.0
  %v7521 = vmax.f32 %v7444, 0.0
  %v7522 = vmax.f32 %v7445, 0.0
  %v7523 = vmax.f32 %v7446, 0.0
  %v7524 = vmax.f32 %v7447, 0.0
  %v7525 = vmax.f32 %v7448, 0.0
  %v7526 = vmax.f32 %v7449, 0.0
  %v7527 = vmax.f32 %v7450, 0.0
  %v7528 = vmax.f32 %v7451, 0.0
  %v7529 = vmax.f32 %v7452, 0.0
  %v7530 = vmax.f32 %v7453, 0.0
  %v7531 = vmax.f32 %v7454, 0.0
  %v7532 = vmax.f32 %v7455, 0.0
  %v7533 = vmax.f32 %v7456, 0.0
  %v7534 = vmax.f32 %v7457, 0.0
  %v7535 = vmax.f32 %v7458, 0.0
  %v7536 = vmax.f32 %v7459, 0.0
  %v7537 = vmax.f32 %v7460, 0.0
  %v7538 = vmax.f32 %v7461, 0.0
  %v7539 = vmax.f32 %v7462, 0.0
  %v7540 = vmax.f32 %v7463, 0.0
  %v7541 = vmax.f32 %v7464, 0.0
  %v7542 = vmax.f32 %v7465, 0.0
  %v7543 = vmax.f32 %v7466, 0.0
  %v7544 = vmax.f32 %v7467, 0.0
  %v7545 = vmax.f32 %v7468, 0.0
  %v7546 = vmax.f32 %v7469, 0.0
  %v7547 = vmax.f32 %v7470, 0.0
  %v7548 = vmax.f32 %v7471, 0.0
  %v7549 = vmax.f32 %v7472, 0.0
  %v7550 = vmax.f32 %v7473, 0.0
  %v7551 = vmax.f32 %v7474, 0.0
  %v7552 = vmax.f32 %v7475, 0.0
  %v7553 = vmax.f32 %v7476, 0.0
  %v7554 = vmax.f32 %v7477, 0.0
  %v7555 = vmax.f32 %v7478, 0.0
  %v7556 = vmax.f32 %v7479, 0.0
  %v7557 = vmax.f32 %v7480, 0.0
  %v7558 = vmax.f32 %v7481, 0.0
  %v7559 = vmax.f32 %v7482, 0.0
  %v7560 = vmax.f32 %v7483, 0.0
  %v7561 = vmax.f32 %v7484, 0.0
  %v7562 = vmax.f32 %v7485, 0.0
  %v7563 = vmax.f32 %v7486, 0.0
  %v7564 = vmax.f32 %v7487, 0.0
  %v7565 = vmax.f32 %v7488, 0.0
  %v7566 = vmax.f32 %v7489, 0.0
  %v7567 = vmax.f32 %v7490, 0.0
  %v7568 = vmax.f32 %v7491, 0.0
  %v7569 = vmax.f32 %v7492, 0.0
  %v7570 = vmax.f32 %v7493, 0.0
  %v7571 = vmax.f32 %v7494, 0.0
  %v7572 = vmax.f32 %v7495, 0.0
  %v7573 = vmax.f32 %v7496, 0.0
  %v7574 = vmax.f32 %v7497, 0.0
  %v7575 = vmax.f32 %v7498, 0.0
  %v7576 = vmax.f32 %v7499, 0.0
  %v7577 = vmax.f32 %v7500, 0.0
  %v7578 = vmax.f32 %v7501, 0.0
  %v7579 = vmax.f32 %v7502, 0.0
  %v7580 = vmax.f32 %v7503, 0.0
  %v7581 = vmax.f32 %v7504, 0.0
  %v7582 = vmax.f32 %v7505, 0.0
  %v7583 = vmax.f32 %v7506, 0.0
  %v7584 = vmax.f32 %v7507, 0.0
  %v7585 = vmax.f32 %v7508, 0.0
  %v7586 = vmax.f32 %v7509, 0.0
  %v7587 = vmax.f32 %v7510, 0.0
  %vm7588 = vcmask 64512
  %7589 = vst.msk [vmem:[#allocation2] sm:$0xff] %vm7588, %v7511
  %7590 = vst.msk [vmem:[#allocation2 + $0x8] sm:$0xff] %vm7588, %v7512
  %7591 = vst.msk [vmem:[#allocation2 + $0x10] sm:$0xff] %vm7588, %v7513
  %7592 = vst.msk [vmem:[#allocation2 + $0x18] sm:$0xff] %vm7588, %v7514
  %7593 = vst.msk [vmem:[#allocation2 + $0x20] sm:$0xff] %vm7588, %v7515
  %7594 = vst.msk [vmem:[#allocation2 + $0x28] sm:$0xff] %vm7588, %v7516
  %7595 = vst.msk [vmem:[#allocation2 + $0x30] sm:$0xff] %vm7588, %v7517
  %7596 = vst.msk [vmem:[#allocation2 + $0x38] sm:$0xff] %vm7588, %v7518
  %7597 = vst.msk [vmem:[#allocation2 + $0x40] sm:$0xff] %vm7588, %v7519
  %7598 = vst.msk [vmem:[#allocation2 + $0x48] sm:$0xff] %vm7588, %v7520
  %7599 = vst.msk [vmem:[#allocation2 + $0x50] sm:$0xff] %vm7588, %v7521
  %7600 = vst.msk [vmem:[#allocation2 + $0x58] sm:$0xff] %vm7588, %v7522
  %7601 = vst.msk [vmem:[#allocation2 + $0x60] sm:$0xff] %vm7588, %v7523
  %7602 = vst.msk [vmem:[#allocation2 + $0x68] sm:$0xff] %vm7588, %v7524
  %7603 = vst.msk [vmem:[#allocation2 + $0x70] sm:$0xff] %vm7588, %v7525
  %7604 = vst.msk [vmem:[#allocation2 + $0x78] sm:$0xff] %vm7588, %v7526
  %7605 = vst.msk [vmem:[#allocation2 + $0x80] sm:$0xff] %vm7588, %v7527
  %7606 = vst.msk [vmem:[#allocation2 + $0x88] sm:$0xff] %vm7588, %v7528
  %7607 = vst.msk [vmem:[#allocation2 + $0x90] sm:$0xff] %vm7588, %v7529
  %7608 = vst.msk [vmem:[#allocation2 + $0x98] sm:$0xff] %vm7588, %v7530
  %7609 = vst.msk [vmem:[#allocation2 + $0xa0] sm:$0xff] %vm7588, %v7531
  %7610 = vst.msk [vmem:[#allocation2 + $0xa8] sm:$0xff] %vm7588, %v7532
  %7611 = vst.msk [vmem:[#allocation2 + $0xb0] sm:$0xff] %vm7588, %v7533
  %7612 = vst.msk [vmem:[#allocation2 + $0xb8] sm:$0xff] %vm7588, %v7534
  %7613 = vst.msk [vmem:[#allocation2 + $0xc0] sm:$0xff] %vm7588, %v7535
  %7614 = vst.msk [vmem:[#allocation2 + $0xc8] sm:$0xff] %vm7588, %v7536
  %7615 = vst.msk [vmem:[#allocation2 + $0xd0] sm:$0xff] %vm7588, %v7537
  %7616 = vst.msk [vmem:[#allocation2 + $0xd8] sm:$0xff] %vm7588, %v7538
  %7617 = vst.msk [vmem:[#allocation2 + $0xe0] sm:$0xff] %vm7588, %v7539
  %7618 = vst.msk [vmem:[#allocation2 + $0xe8] sm:$0xff] %vm7588, %v7540
  %7619 = vst.msk [vmem:[#allocation2 + $0xf0] sm:$0xff] %vm7588, %v7541
  %7620 = vst.msk [vmem:[#allocation2 + $0xf8] sm:$0xff] %vm7588, %v7542
  %7621 = vst.msk [vmem:[#allocation2 + $0x100] sm:$0xff] %vm7588, %v7543
  %7622 = vst.msk [vmem:[#allocation2 + $0x108] sm:$0xff] %vm7588, %v7544
  %7623 = vst.msk [vmem:[#allocation2 + $0x110] sm:$0xff] %vm7588, %v7545
  %7624 = vst.msk [vmem:[#allocation2 + $0x118] sm:$0xff] %vm7588, %v7546
  %7625 = vst.msk [vmem:[#allocation2 + $0x120] sm:$0xff] %vm7588, %v7547
  %7626 = vst.msk [vmem:[#allocation2 + $0x128] sm:$0xff] %vm7588, %v7548
  %7627 = vst.msk [vmem:[#allocation2 + $0x130] sm:$0xff] %vm7588, %v7549
  %7628 = vst.msk [vmem:[#allocation2 + $0x138] sm:$0xff] %vm7588, %v7550
  %7629 = vst.msk [vmem:[#allocation2 + $0x140] sm:$0xff] %vm7588, %v7551
  %7630 = vst.msk [vmem:[#allocation2 + $0x148] sm:$0xff] %vm7588, %v7552
  %7631 = vst.msk [vmem:[#allocation2 + $0x150] sm:$0xff] %vm7588, %v7553
  %7632 = vst.msk [vmem:[#allocation2 + $0x158] sm:$0xff] %vm7588, %v7554
  %7633 = vst.msk [vmem:[#allocation2 + $0x160] sm:$0xff] %vm7588, %v7555
  %7634 = vst.msk [vmem:[#allocation2 + $0x168] sm:$0xff] %vm7588, %v7556
  %7635 = vst.msk [vmem:[#allocation2 + $0x170] sm:$0xff] %vm7588, %v7557
  %7636 = vst.msk [vmem:[#allocation2 + $0x178] sm:$0xff] %vm7588, %v7558
  %7637 = vst.msk [vmem:[#allocation2 + $0x180] sm:$0xff] %vm7588, %v7559
  %7638 = vst.msk [vmem:[#allocation2 + $0x188] sm:$0xff] %vm7588, %v7560
  %7639 = vst.msk [vmem:[#allocation2 + $0x190] sm:$0xff] %vm7588, %v7561
  %7640 = vst.msk [vmem:[#allocation2 + $0x198] sm:$0xff] %vm7588, %v7562
  %7641 = vst.msk [vmem:[#allocation2 + $0x1a0] sm:$0xff] %vm7588, %v7563
  %7642 = vst.msk [vmem:[#allocation2 + $0x1a8] sm:$0xff] %vm7588, %v7564
  %7643 = vst.msk [vmem:[#allocation2 + $0x1b0] sm:$0xff] %vm7588, %v7565
  %7644 = vst.msk [vmem:[#allocation2 + $0x1b8] sm:$0xff] %vm7588, %v7566
  %7645 = vst.msk [vmem:[#allocation2 + $0x1c0] sm:$0xff] %vm7588, %v7567
  %7646 = vst.msk [vmem:[#allocation2 + $0x1c8] sm:$0xff] %vm7588, %v7568
  %7647 = vst.msk [vmem:[#allocation2 + $0x1d0] sm:$0xff] %vm7588, %v7569
  %7648 = vst.msk [vmem:[#allocation2 + $0x1d8] sm:$0xff] %vm7588, %v7570
  %7649 = vst.msk [vmem:[#allocation2 + $0x1e0] sm:$0xff] %vm7588, %v7571
  %7650 = vst.msk [vmem:[#allocation2 + $0x1e8] sm:$0xff] %vm7588, %v7572
  %7651 = vst.msk [vmem:[#allocation2 + $0x1f0] sm:$0xff] %vm7588, %v7573
  %7652 = vst.msk [vmem:[#allocation2 + $0x1f8] sm:$0xff] %vm7588, %v7574
  %7653 = vst.msk [vmem:[#allocation2 + $0x200] sm:$0xff] %vm7588, %v7575
  %7654 = vst.msk [vmem:[#allocation2 + $0x208] sm:$0xff] %vm7588, %v7576
  %7655 = vst.msk [vmem:[#allocation2 + $0x210] sm:$0xff] %vm7588, %v7577
  %7656 = vst.msk [vmem:[#allocation2 + $0x218] sm:$0xff] %vm7588, %v7578
  %7657 = vst.msk [vmem:[#allocation2 + $0x220] sm:$0xff] %vm7588, %v7579
  %7658 = vst.msk [vmem:[#allocation2 + $0x228] sm:$0xff] %vm7588, %v7580
  %7659 = vst.msk [vmem:[#allocation2 + $0x230] sm:$0xff] %vm7588, %v7581
  %7660 = vst.msk [vmem:[#allocation2 + $0x238] sm:$0xff] %vm7588, %v7582
  %7661 = vst.msk [vmem:[#allocation2 + $0x240] sm:$0xff] %vm7588, %v7583
  %7662 = vst.msk [vmem:[#allocation2 + $0x248] sm:$0xff] %vm7588, %v7584
  %7663 = vst.msk [vmem:[#allocation2 + $0x250] sm:$0xff] %vm7588, %v7585
  %7664 = vst.msk [vmem:[#allocation2 + $0x258] sm:$0xff] %vm7588, %v7586
  %7665 = vst.msk [vmem:[#allocation2 + $0x260] sm:$0xff] %vm7588, %v7587
  %7666 = vst.msk [vmem:[#allocation4] sm:$0xff] %vm7588, 0.0
  %7667 = vst.msk [vmem:[#allocation4 + $0x8] sm:$0xff] %vm7588, 0.0
  %7668 = vst.msk [vmem:[#allocation4 + $0x10] sm:$0xff] %vm7588, 0.0
  %7669 = vst.msk [vmem:[#allocation4 + $0x18] sm:$0xff] %vm7588, 0.0
  %7670 = vst.msk [vmem:[#allocation4 + $0x20] sm:$0xff] %vm7588, 0.0
  %7671 = vst.msk [vmem:[#allocation4 + $0x28] sm:$0xff] %vm7588, 0.0
  %7672 = vst.msk [vmem:[#allocation4 + $0x30] sm:$0xff] %vm7588, 0.0
  %7673 = vst.msk [vmem:[#allocation4 + $0x38] sm:$0xff] %vm7588, 0.0
  %7674 = vst.msk [vmem:[#allocation4 + $0x40] sm:$0xff] %vm7588, 0.0
  %7675 = vst.msk [vmem:[#allocation4 + $0x48] sm:$0xff] %vm7588, 0.0
  %7676 = vst.msk [vmem:[#allocation4 + $0x50] sm:$0xff] %vm7588, 0.0
  %7677 = vst.msk [vmem:[#allocation4 + $0x58] sm:$0xff] %vm7588, 0.0
  %7678 = vst.msk [vmem:[#allocation4 + $0x60] sm:$0xff] %vm7588, 0.0
  %7679 = vst.msk [vmem:[#allocation4 + $0x68] sm:$0xff] %vm7588, 0.0
  %7680 = vst.msk [vmem:[#allocation4 + $0x70] sm:$0xff] %vm7588, 0.0
  %7681 = vst.msk [vmem:[#allocation4 + $0x78] sm:$0xff] %vm7588, 0.0
  %7682 = vst.msk [vmem:[#allocation4 + $0x80] sm:$0xff] %vm7588, 0.0
  %7683 = vst.msk [vmem:[#allocation4 + $0x88] sm:$0xff] %vm7588, 0.0
  %7684 = vst.msk [vmem:[#allocation4 + $0x90] sm:$0xff] %vm7588, 0.0
  %7685 = vst.msk [vmem:[#allocation4 + $0x98] sm:$0xff] %vm7588, 0.0
  %7686 = vst.msk [vmem:[#allocation4 + $0xa0] sm:$0xff] %vm7588, 0.0
  %7687 = vst.msk [vmem:[#allocation4 + $0xa8] sm:$0xff] %vm7588, 0.0
  %7688 = vst.msk [vmem:[#allocation4 + $0xb0] sm:$0xff] %vm7588, 0.0
  %7689 = vst.msk [vmem:[#allocation4 + $0xb8] sm:$0xff] %vm7588, 0.0
  %7690 = vst.msk [vmem:[#allocation4 + $0xc0] sm:$0xff] %vm7588, 0.0
  %7691 = vst.msk [vmem:[#allocation4 + $0xc8] sm:$0xff] %vm7588, 0.0
  %v7692 = vld [vmem:[#allocation2] ss:$2 sm:$0xff]
  %s7693 = scalar_lea.vmem [#allocation2], 1
  %v7694 = vld [vmem:[%s7693] ss:$2 sm:$0xff]
  %s7695 = scalar_lea.vmem [#allocation2], 18
  %v7696 = vld [vmem:[%s7695] ss:$2 sm:$0xff]
  %s7697 = scalar_lea.vmem [#allocation2], 19
  %v7698 = vld [vmem:[%s7697] ss:$2 sm:$0xff]
  %v7699 = vmax.f32 %v7692, %v7694
  %v7700 = vmax.f32 %v7696, %v7698
  %v7701 = vmax.f32 %v7699, %v7700
  %7702 = vst.msk [vmem:[#allocation4 + $0xb] sm:$0xff] %vm7588, %v7701
  %s7703 = scalar_lea.vmem [#allocation2], 36
  %v7704 = vld [vmem:[%s7703] ss:$2 sm:$0xff]
  %s7705 = scalar_lea.vmem [#allocation2], 37
  %v7706 = vld [vmem:[%s7705] ss:$2 sm:$0xff]
  %s7707 = scalar_lea.vmem [#allocation2], 54
  %v7708 = vld [vmem:[%s7707] ss:$2 sm:$0xff]
  %s7709 = scalar_lea.vmem [#allocation2], 55
  %v7710 = vld [vmem:[%s7709] ss:$2 sm:$0xff]
  %v7711 = vmax.f32 %v7704, %v7706
  %v7712 = vmax.f32 %v7708, %v7710
  %v7713 = vmax.f32 %v7711, %v7712
  %7714 = vst.msk [vmem:[#allocation4 + $0x15] sm:$0xff] %vm7588, %v7713
  %s7715 = scalar_lea.vmem [#allocation2], 72
  %v7716 = vld [vmem:[%s7715] ss:$2 sm:$0xff]
  %s7717 = scalar_lea.vmem [#allocation2], 73
  %v7718 = vld [vmem:[%s7717] ss:$2 sm:$0xff]
  %s7719 = scalar_lea.vmem [#allocation2], 90
  %v7720 = vld [vmem:[%s7719] ss:$2 sm:$0xff]
  %s7721 = scalar_lea.vmem [#allocation2], 91
  %v7722 = vld [vmem:[%s7721] ss:$2 sm:$0xff]
  %v7723 = vmax.f32 %v7716, %v7718
  %v7724 = vmax.f32 %v7720, %v7722
  %v7725 = vmax.f32 %v7723, %v7724
  %7726 = vst.msk [vmem:[#allocation4 + $0x1f] sm:$0xff] %vm7588, %v7725
  %s7727 = scalar_lea.vmem [#allocation2], 108
  %v7728 = vld [vmem:[%s7727] ss:$2 sm:$0xff]
  %s7729 = scalar_lea.vmem [#allocation2], 109
  %v7730 = vld [vmem:[%s7729] ss:$2 sm:$0xff]
  %s7731 = scalar_lea.vmem [#allocation2], 126
  %v7732 = vld [vmem:[%s7731] ss:$2 sm:$0xff]
  %s7733 = scalar_lea.vmem [#allocation2], 127
  %v7734 = vld [vmem:[%s7733] ss:$2 sm:$0xff]
  %v7735 = vmax.f32 %v7728, %v7730
  %v7736 = vmax.f32 %v7732, %v7734
  %v7737 = vmax.f32 %v7735, %v7736
  %7738 = vst.msk [vmem:[#allocation4 + $0x29] sm:$0xff] %vm7588, %v7737
  %s7739 = scalar_lea.vmem [#allocation2], 144
  %v7740 = vld [vmem:[%s7739] ss:$2 sm:$0xff]
  %s7741 = scalar_lea.vmem [#allocation2], 145
  %v7742 = vld [vmem:[%s7741] ss:$2 sm:$0xff]
  %s7743 = scalar_lea.vmem [#allocation2], 162
  %v7744 = vld [vmem:[%s7743] ss:$2 sm:$0xff]
  %s7745 = scalar_lea.vmem [#allocation2], 163
  %v7746 = vld [vmem:[%s7745] ss:$2 sm:$0xff]
  %v7747 = vmax.f32 %v7740, %v7742
  %v7748 = vmax.f32 %v7744, %v7746
  %v7749 = vmax.f32 %v7747, %v7748
  %7750 = vst.msk [vmem:[#allocation4 + $0x33] sm:$0xff] %vm7588, %v7749
  %s7751 = scalar_lea.vmem [#allocation2], 180
  %v7752 = vld [vmem:[%s7751] ss:$2 sm:$0xff]
  %s7753 = scalar_lea.vmem [#allocation2], 181
  %v7754 = vld [vmem:[%s7753] ss:$2 sm:$0xff]
  %s7755 = scalar_lea.vmem [#allocation2], 198
  %v7756 = vld [vmem:[%s7755] ss:$2 sm:$0xff]
  %s7757 = scalar_lea.vmem [#allocation2], 199
  %v7758 = vld [vmem:[%s7757] ss:$2 sm:$0xff]
  %v7759 = vmax.f32 %v7752, %v7754
  %v7760 = vmax.f32 %v7756, %v7758
  %v7761 = vmax.f32 %v7759, %v7760
  %7762 = vst.msk [vmem:[#allocation4 + $0x3d] sm:$0xff] %vm7588, %v7761
  %s7763 = scalar_lea.vmem [#allocation2], 216
  %v7764 = vld [vmem:[%s7763] ss:$2 sm:$0xff]
  %s7765 = scalar_lea.vmem [#allocation2], 217
  %v7766 = vld [vmem:[%s7765] ss:$2 sm:$0xff]
  %s7767 = scalar_lea.vmem [#allocation2], 234
  %v7768 = vld [vmem:[%s7767] ss:$2 sm:$0xff]
  %s7769 = scalar_lea.vmem [#allocation2], 235
  %v7770 = vld [vmem:[%s7769] ss:$2 sm:$0xff]
  %v7771 = vmax.f32 %v7764, %v7766
  %v7772 = vmax.f32 %v7768, %v7770
  %v7773 = vmax.f32 %v7771, %v7772
  %7774 = vst.msk [vmem:[#allocation4 + $0x47] sm:$0xff] %vm7588, %v7773
  %s7775 = scalar_lea.vmem [#allocation2], 252
  %v7776 = vld [vmem:[%s7775] ss:$2 sm:$0xff]
  %s7777 = scalar_lea.vmem [#allocation2], 253
  %v7778 = vld [vmem:[%s7777] ss:$2 sm:$0xff]
  %s7779 = scalar_lea.vmem [#allocation2], 270
  %v7780 = vld [vmem:[%s7779] ss:$2 sm:$0xff]
  %s7781 = scalar_lea.vmem [#allocation2], 271
  %v7782 = vld [vmem:[%s7781] ss:$2 sm:$0xff]
  %v7783 = vmax.f32 %v7776, %v7778
  %v7784 = vmax.f32 %v7780, %v7782
  %v7785 = vmax.f32 %v7783, %v7784
  %7786 = vst.msk [vmem:[#allocation4 + $0x51] sm:$0xff] %vm7588, %v7785
  %s7787 = scalar_lea.vmem [#allocation2], 328
  %v7788 = vld [vmem:[%s7787] ss:$2 sm:$0xff]
  %s7789 = scalar_lea.vmem [#allocation2], 329
  %v7790 = vld [vmem:[%s7789] ss:$2 sm:$0xff]
  %s7791 = scalar_lea.vmem [#allocation2], 346
  %v7792 = vld [vmem:[%s7791] ss:$2 sm:$0xff]
  %s7793 = scalar_lea.vmem [#allocation2], 347
  %v7794 = vld [vmem:[%s7793] ss:$2 sm:$0xff]
  %v7795 = vmax.f32 %v7788, %v7790
  %v7796 = vmax.f32 %v7792, %v7794
  %v7797 = vmax.f32 %v7795, %v7796
  %7798 = vst.msk [vmem:[#allocation4 + $0x73] sm:$0xff] %vm7588, %v7797
  %s7799 = scalar_lea.vmem [#allocation2], 364
  %v7800 = vld [vmem:[%s7799] ss:$2 sm:$0xff]
  %s7801 = scalar_lea.vmem [#allocation2], 365
  %v7802 = vld [vmem:[%s7801] ss:$2 sm:$0xff]
  %s7803 = scalar_lea.vmem [#allocation2], 382
  %v7804 = vld [vmem:[%s7803] ss:$2 sm:$0xff]
  %s7805 = scalar_lea.vmem [#allocation2], 383
  %v7806 = vld [vmem:[%s7805] ss:$2 sm:$0xff]
  %v7807 = vmax.f32 %v7800, %v7802
  %v7808 = vmax.f32 %v7804, %v7806
  %v7809 = vmax.f32 %v7807, %v7808
  %7810 = vst.msk [vmem:[#allocation4 + $0x7d] sm:$0xff] %vm7588, %v7809
  %s7811 = scalar_lea.vmem [#allocation2], 400
  %v7812 = vld [vmem:[%s7811] ss:$2 sm:$0xff]
  %s7813 = scalar_lea.vmem [#allocation2], 401
  %v7814 = vld [vmem:[%s7813] ss:$2 sm:$0xff]
  %s7815 = scalar_lea.vmem [#allocation2], 418
  %v7816 = vld [vmem:[%s7815] ss:$2 sm:$0xff]
  %s7817 = scalar_lea.vmem [#allocation2], 419
  %v7818 = vld [vmem:[%s7817] ss:$2 sm:$0xff]
  %v7819 = vmax.f32 %v7812, %v7814
  %v7820 = vmax.f32 %v7816, %v7818
  %v7821 = vmax.f32 %v7819, %v7820
  %7822 = vst.msk [vmem:[#allocation4 + $0x87] sm:$0xff] %vm7588, %v7821
  %s7823 = scalar_lea.vmem [#allocation2], 436
  %v7824 = vld [vmem:[%s7823] ss:$2 sm:$0xff]
  %s7825 = scalar_lea.vmem [#allocation2], 437
  %v7826 = vld [vmem:[%s7825] ss:$2 sm:$0xff]
  %s7827 = scalar_lea.vmem [#allocation2], 454
  %v7828 = vld [vmem:[%s7827] ss:$2 sm:$0xff]
  %s7829 = scalar_lea.vmem [#allocation2], 455
  %v7830 = vld [vmem:[%s7829] ss:$2 sm:$0xff]
  %v7831 = vmax.f32 %v7824, %v7826
  %v7832 = vmax.f32 %v7828, %v7830
  %v7833 = vmax.f32 %v7831, %v7832
  %7834 = vst.msk [vmem:[#allocation4 + $0x91] sm:$0xff] %vm7588, %v7833
  %s7835 = scalar_lea.vmem [#allocation2], 472
  %v7836 = vld [vmem:[%s7835] ss:$2 sm:$0xff]
  %s7837 = scalar_lea.vmem [#allocation2], 473
  %v7838 = vld [vmem:[%s7837] ss:$2 sm:$0xff]
  %s7839 = scalar_lea.vmem [#allocation2], 490
  %v7840 = vld [vmem:[%s7839] ss:$2 sm:$0xff]
  %s7841 = scalar_lea.vmem [#allocation2], 491
  %v7842 = vld [vmem:[%s7841] ss:$2 sm:$0xff]
  %v7843 = vmax.f32 %v7836, %v7838
  %v7844 = vmax.f32 %v7840, %v7842
  %v7845 = vmax.f32 %v7843, %v7844
  %7846 = vst.msk [vmem:[#allocation4 + $0x9b] sm:$0xff] %vm7588, %v7845
  %s7847 = scalar_lea.vmem [#allocation2], 508
  %v7848 = vld [vmem:[%s7847] ss:$2 sm:$0xff]
  %s7849 = scalar_lea.vmem [#allocation2], 509
  %v7850 = vld [vmem:[%s7849] ss:$2 sm:$0xff]
  %s7851 = scalar_lea.vmem [#allocation2], 526
  %v7852 = vld [vmem:[%s7851] ss:$2 sm:$0xff]
  %s7853 = scalar_lea.vmem [#allocation2], 527
  %v7854 = vld [vmem:[%s7853] ss:$2 sm:$0xff]
  %v7855 = vmax.f32 %v7848, %v7850
  %v7856 = vmax.f32 %v7852, %v7854
  %v7857 = vmax.f32 %v7855, %v7856
  %7858 = vst.msk [vmem:[#allocation4 + $0xa5] sm:$0xff] %vm7588, %v7857
  %s7859 = scalar_lea.vmem [#allocation2], 544
  %v7860 = vld [vmem:[%s7859] ss:$2 sm:$0xff]
  %s7861 = scalar_lea.vmem [#allocation2], 545
  %v7862 = vld [vmem:[%s7861] ss:$2 sm:$0xff]
  %s7863 = scalar_lea.vmem [#allocation2], 562
  %v7864 = vld [vmem:[%s7863] ss:$2 sm:$0xff]
  %s7865 = scalar_lea.vmem [#allocation2], 563
  %v7866 = vld [vmem:[%s7865] ss:$2 sm:$0xff]
  %v7867 = vmax.f32 %v7860, %v7862
  %v7868 = vmax.f32 %v7864, %v7866
  %v7869 = vmax.f32 %v7867, %v7868
  %7870 = vst.msk [vmem:[#allocation4 + $0xaf] sm:$0xff] %vm7588, %v7869
  %s7871 = scalar_lea.vmem [#allocation2], 580
  %v7872 = vld [vmem:[%s7871] ss:$2 sm:$0xff]
  %s7873 = scalar_lea.vmem [#allocation2], 581
  %v7874 = vld [vmem:[%s7873] ss:$2 sm:$0xff]
  %s7875 = scalar_lea.vmem [#allocation2], 598
  %v7876 = vld [vmem:[%s7875] ss:$2 sm:$0xff]
  %s7877 = scalar_lea.vmem [#allocation2], 599
  %v7878 = vld [vmem:[%s7877] ss:$2 sm:$0xff]
  %v7879 = vmax.f32 %v7872, %v7874
  %v7880 = vmax.f32 %v7876, %v7878
  %v7881 = vmax.f32 %v7879, %v7880
  %7882 = vst.msk [vmem:[#allocation4 + $0xb9] sm:$0xff] %vm7588, %v7881
  %v7883 = vld [vmem:[#allocation4] sm:$0xff]
  %v7884 = vld [vmem:[#allocation4 + $0x8] sm:$0xff]
  %v7885 = vld [vmem:[#allocation4 + $0x10] sm:$0xff]
  %v7886 = vld [vmem:[#allocation4 + $0x18] sm:$0xff]
  %v7887 = vld [vmem:[#allocation4 + $0x20] sm:$0xff]
  %v7888 = vld [vmem:[#allocation4 + $0x28] sm:$0xff]
  %v7889 = vld [vmem:[#allocation4 + $0x30] sm:$0xff]
  %v7890 = vld [vmem:[#allocation4 + $0x38] sm:$0xff]
  %v7891 = vld [vmem:[#allocation4 + $0x40] sm:$0xff]
  %v7892 = vld [vmem:[#allocation4 + $0x48] sm:$0xff]
  %v7893 = vld [vmem:[#allocation4 + $0x50] sm:$0xff]
  %v7894 = vld [vmem:[#allocation4 + $0x58] sm:$0xff]
  %v7895 = vld [vmem:[#allocation4 + $0x60] sm:$0xff]
  %v7896 = vld [vmem:[#allocation4 + $0x68] sm:$0xff]
  %v7897 = vld [vmem:[#allocation4 + $0x70] sm:$0xff]
  %v7898 = vld [vmem:[#allocation4 + $0x78] sm:$0xff]
  %v7899 = vld [vmem:[#allocation4 + $0x80] sm:$0xff]
  %v7900 = vld [vmem:[#allocation4 + $0x88] sm:$0xff]
  %v7901 = vld [vmem:[#allocation4 + $0x90] sm:$0xff]
  %v7902 = vld [vmem:[#allocation4 + $0x98] sm:$0xff]
  %v7903 = vld [vmem:[#allocation4 + $0xa0] sm:$0xff]
  %v7904 = vld [vmem:[#allocation4 + $0xa8] sm:$0xff]
  %v7905 = vld [vmem:[#allocation4 + $0xb0] sm:$0xff]
  %v7906 = vld [vmem:[%s3] sm:$0xff]
  %v7907 = vld [vmem:[#allocation4 + $0x1] sm:$0xff]
  %v7908 = vld [vmem:[#allocation4 + $0x9] sm:$0xff]
  %v7909 = vld [vmem:[#allocation4 + $0x11] sm:$0xff]
  %v7910 = vld [vmem:[#allocation4 + $0x19] sm:$0xff]
  %v7911 = vld [vmem:[#allocation4 + $0x21] sm:$0xff]
  %v7912 = vld [vmem:[#allocation4 + $0x29] sm:$0xff]
  %v7913 = vld [vmem:[#allocation4 + $0x31] sm:$0xff]
  %v7914 = vld [vmem:[#allocation4 + $0x39] sm:$0xff]
  %v7915 = vld [vmem:[#allocation4 + $0x41] sm:$0xff]
  %v7916 = vld [vmem:[#allocation4 + $0x49] sm:$0xff]
  %v7917 = vld [vmem:[#allocation4 + $0x51] sm:$0xff]
  %v7918 = vld [vmem:[#allocation4 + $0x59] sm:$0xff]
  %v7919 = vld [vmem:[#allocation4 + $0x61] sm:$0xff]
  %v7920 = vld [vmem:[#allocation4 + $0x69] sm:$0xff]
  %v7921 = vld [vmem:[#allocation4 + $0x71] sm:$0xff]
  %v7922 = vld [vmem:[#allocation4 + $0x79] sm:$0xff]
  %v7923 = vld [vmem:[#allocation4 + $0x81] sm:$0xff]
  %v7924 = vld [vmem:[#allocation4 + $0x89] sm:$0xff]
  %v7925 = vld [vmem:[#allocation4 + $0x91] sm:$0xff]
  %v7926 = vld [vmem:[#allocation4 + $0x99] sm:$0xff]
  %v7927 = vld [vmem:[#allocation4 + $0xa1] sm:$0xff]
  %v7928 = vld [vmem:[#allocation4 + $0xa9] sm:$0xff]
  %v7929 = vld [vmem:[#allocation4 + $0xb1] sm:$0xff]
  %s7930 = scalar_lea.vmem %s3, 8
  %v7931 = vld [vmem:[%s7930] sm:$0xff]
  %v7933 = vsel %vm7588, %v7907, 0
  %v7936 = vsel %vm7588, %v7908, 0
  %v7939 = vsel %vm7588, %v7909, 0
  %v7942 = vsel %vm7588, %v7910, 0
  %v7945 = vsel %vm7588, %v7911, 0
  %v7948 = vsel %vm7588, %v7912, 0
  %v7951 = vsel %vm7588, %v7913, 0
  %v7954 = vsel %vm7588, %v7914, 0
  %v7957 = vsel %vm7588, %v7915, 0
  %v7960 = vsel %vm7588, %v7916, 0
  %v7963 = vsel %vm7588, %v7917, 0
  %v7966 = vsel %vm7588, %v7918, 0
  %v7969 = vsel %vm7588, %v7919, 0
  %v7972 = vsel %vm7588, %v7920, 0
  %v7975 = vsel %vm7588, %v7921, 0
  %v7978 = vsel %vm7588, %v7922, 0
  %v7981 = vsel %vm7588, %v7923, 0
  %v7984 = vsel %vm7588, %v7924, 0
  %v7987 = vsel %vm7588, %v7925, 0
  %v7990 = vsel %vm7588, %v7926, 0
  %v7993 = vsel %vm7588, %v7927, 0
  %v7996 = vsel %vm7588, %v7928, 0
  %v7999 = vsel %vm7588, %v7929, 0
  %8001 = vmatprep.subr.mxu0 0.0
  %8002 = vmatpush1.msra.mxu0 %v7931
  %8003 = vmatprep.subr.mxu0 0.0
  %8004 = vmatpush1.msra.mxu0 0.0
  %8005 = vmatprep.subr.mxu0 0.0
  %8006 = vmatpush1.msra.mxu0 0.0
  %8007 = vmatprep.subr.mxu0 0.0
  %8008 = vmatpush1.msra.mxu0 0.0
  %8009 = vmatprep.subr.mxu0 0.0
  %8010 = vmatpush1.msra.mxu0 0.0
  %8011 = vmatprep.subr.mxu0 0.0
  %8012 = vmatpush1.msra.mxu0 0.0
  %8013 = vmatprep.subr.mxu0 0.0
  %8014 = vmatpush1.msra.mxu0 0.0
  %8015 = vmatprep.subr.mxu0 0.0
  %8016 = vmatpush1.msra.mxu0 0.0
  %8017 = vmatprep.subr.mxu0 0.0
  %8018 = vmatpush1.msra.mxu0 0.0
  %8019 = vmatprep.subr.mxu0 0.0
  %8020 = vmatpush1.msra.mxu0 0.0
  %8021 = vmatprep.subr.mxu0 0.0
  %8022 = vmatpush1.msra.mxu0 0.0
  %8023 = vmatprep.subr.mxu0 0.0
  %8024 = vmatpush1.msra.mxu0 0.0
  %8025 = vmatprep.subr.mxu0 0.0
  %8026 = vmatpush1.msra.mxu0 0.0
  %8027 = vmatprep.subr.mxu0 0.0
  %8028 = vmatpush1.msra.mxu0 0.0
  %8029 = vmatprep.subr.mxu0 0.0
  %8030 = vmatpush1.msra.mxu0 0.0
  %8031 = vmatprep.subr.mxu0 0.0
  %8032 = vmatpush1.msra.mxu0 0.0
  %8033 = vmatprep.subr.mxu0 0.0
  %8034 = vmatpush1.msra.mxu0 0.0
  %8035 = vmatprep.subr.mxu0 0.0
  %8036 = vmatpush1.msra.mxu0 0.0
  %8037 = vmatprep.subr.mxu0 0.0
  %8038 = vmatpush1.msra.mxu0 0.0
  %8039 = vmatprep.subr.mxu0 0.0
  %8040 = vmatpush1.msra.mxu0 0.0
  %8041 = vmatprep.subr.mxu0 0.0
  %8042 = vmatpush1.msra.mxu0 0.0
  %8043 = vmatprep.subr.mxu0 0.0
  %8044 = vmatpush1.msra.mxu0 0.0
  %8045 = vmatprep.subr.mxu0 0.0
  %8046 = vmatpush1.msra.mxu0 0.0
  %8047 = vmatprep.subr.mxu0 0.0
  %8048 = vmatpush1.msra.mxu0 0.0
  %8049 = vmatprep.subr.mxu0 0.0
  %8050 = vmatpush1.msra.mxu0 0.0
  %8051 = vmatprep.subr.mxu0 0.0
  %8052 = vmatpush1.msra.mxu0 0.0
  %8053 = vmatprep.subr.mxu0 0.0
  %8054 = vmatpush1.msra.mxu0 0.0
  %8055 = vmatprep.subr.mxu0 0.0
  %8056 = vmatpush1.msra.mxu0 0.0
  %8057 = vmatprep.subr.mxu0 0.0
  %8058 = vmatpush1.msra.mxu0 0.0
  %8059 = vmatprep.subr.mxu0 0.0
  %8060 = vmatpush1.msra.mxu0 0.0
  %8061 = vmatprep.subr.mxu0 0.0
  %8062 = vmatpush1.msra.mxu0 0.0
  %8063 = vmatprep.subr.mxu0 0.0
  %8064 = vmatpush1.msra.mxu0 0.0
  %8065 = vmatprep.mubr.f32.mxu0 0.0
  %8066 = vmatmul.mubr.f32.gmra.mrb[0].mxu0 %v7933
  %v8067 = vpop.f32.mrb[0].mxu0
  %v8068 = vadd.f32 0.0, %v8067
  %v8069 = vpop.f32.mrb[0].mxu0
  %8070 = vmatprep.mubr.f32.mxu0 0.0
  %8071 = vmatmul.mubr.f32.gmra.mrb[0].mxu0 %v7936
  %v8072 = vpop.f32.mrb[0].mxu0
  %v8073 = vadd.f32 0.0, %v8072
  %v8074 = vpop.f32.mrb[0].mxu0
  %8075 = vmatprep.mubr.f32.mxu0 0.0
  %8076 = vmatmul.mubr.f32.gmra.mrb[0].mxu0 %v7939
  %v8077 = vpop.f32.mrb[0].mxu0
  %v8078 = vadd.f32 0.0, %v8077
  %v8079 = vpop.f32.mrb[0].mxu0
  %8080 = vmatprep.mubr.f32.mxu0 0.0
  %8081 = vmatmul.mubr.f32.gmra.mrb[0].mxu0 %v7942
  %v8082 = vpop.f32.mrb[0].mxu0
  %v8083 = vadd.f32 0.0, %v8082
  %v8084 = vpop.f32.mrb[0].mxu0
  %8085 = vmatprep.mubr.f32.mxu0 0.0
  %8086 = vmatmul.mubr.f32.gmra.mrb[0].mxu0 %v7945
  %v8087 = vpop.f32.mrb[0].mxu0
  %v8088 = vadd.f32 0.0, %v8087
  %v8089 = vpop.f32.mrb[0].mxu0
  %8090 = vmatprep.mubr.f32.mxu0 0.0
  %8091 = vmatmul.mubr.f32.gmra.mrb[0].mxu0 %v7948
  %v8092 = vpop.f32.mrb[0].mxu0
  %v8093 = vadd.f32 0.0, %v8092
  %v8094 = vpop.f32.mrb[0].mxu0
  %8095 = vmatprep.mubr.f32.mxu0 0.0
  %8096 = vmatmul.mubr.f32.gmra.mrb[0].mxu0 %v7951
  %v8097 = vpop.f32.mrb[0].mxu0
  %v8098 = vadd.f32 0.0, %v8097
  %v8099 = vpop.f32.mrb[0].mxu0
  %8100 = vmatprep.mubr.f32.mxu0 0.0
  %8101 = vmatmul.mubr.f32.gmra.mrb[0].mxu0 %v7954
  %v8102 = vpop.f32.mrb[0].mxu0
  %v8103 = vadd.f32 0.0, %v8102
  %v8104 = vpop.f32.mrb[0].mxu0
  %8105 = vmatprep.mubr.f32.mxu0 0.0
  %8106 = vmatmul.mubr.f32.gmra.mrb[0].mxu0 %v7957
  %v8107 = vpop.f32.mrb[0].mxu0
  %v8108 = vadd.f32 0.0, %v8107
  %v8109 = vpop.f32.mrb[0].mxu0
  %8110 = vmatprep.mubr.f32.mxu0 0.0
  %8111 = vmatmul.mubr.f32.gmra.mrb[0].mxu0 %v7960
  %v8112 = vpop.f32.mrb[0].mxu0
  %v8113 = vadd.f32 0.0, %v8112
  %v8114 = vpop.f32.mrb[0].mxu0
  %8115 = vmatprep.mubr.f32.mxu0 0.0
  %8116 = vmatmul.mubr.f32.gmra.mrb[0].mxu0 %v7963
  %v8117 = vpop.f32.mrb[0].mxu0
  %v8118 = vadd.f32 0.0, %v8117
  %v8119 = vpop.f32.mrb[0].mxu0
  %8120 = vmatprep.mubr.f32.mxu0 0.0
  %8121 = vmatmul.mubr.f32.gmra.mrb[0].mxu0 %v7966
  %v8122 = vpop.f32.mrb[0].mxu0
  %v8123 = vadd.f32 0.0, %v8122
  %v8124 = vpop.f32.mrb[0].mxu0
  %8125 = vmatprep.mubr.f32.mxu0 0.0
  %8126 = vmatmul.mubr.f32.gmra.mrb[0].mxu0 %v7969
  %v8127 = vpop.f32.mrb[0].mxu0
  %v8128 = vadd.f32 0.0, %v8127
  %v8129 = vpop.f32.mrb[0].mxu0
  %8130 = vmatprep.mubr.f32.mxu0 0.0
  %8131 = vmatmul.mubr.f32.gmra.mrb[0].mxu0 %v7972
  %v8132 = vpop.f32.mrb[0].mxu0
  %v8133 = vadd.f32 0.0, %v8132
  %v8134 = vpop.f32.mrb[0].mxu0
  %8135 = vmatprep.mubr.f32.mxu0 0.0
  %8136 = vmatmul.mubr.f32.gmra.mrb[0].mxu0 %v7975
  %v8137 = vpop.f32.mrb[0].mxu0
  %v8138 = vadd.f32 0.0, %v8137
  %v8139 = vpop.f32.mrb[0].mxu0
  %8140 = vmatprep.mubr.f32.mxu0 0.0
  %8141 = vmatmul.mubr.f32.gmra.mrb[0].mxu0 %v7978
  %v8142 = vpop.f32.mrb[0].mxu0
  %v8143 = vadd.f32 0.0, %v8142
  %v8144 = vpop.f32.mrb[0].mxu0
  %8145 = vmatprep.mubr.f32.mxu0 0.0
  %8146 = vmatmul.mubr.f32.gmra.mrb[0].mxu0 %v7981
  %v8147 = vpop.f32.mrb[0].mxu0
  %v8148 = vadd.f32 0.0, %v8147
  %v8149 = vpop.f32.mrb[0].mxu0
  %8150 = vmatprep.mubr.f32.mxu0 0.0
  %8151 = vmatmul.mubr.f32.gmra.mrb[0].mxu0 %v7984
  %v8152 = vpop.f32.mrb[0].mxu0
  %v8153 = vadd.f32 0.0, %v8152
  %v8154 = vpop.f32.mrb[0].mxu0
  %8155 = vmatprep.mubr.f32.mxu0 0.0
  %8156 = vmatmul.mubr.f32.gmra.mrb[0].mxu0 %v7987
  %v8157 = vpop.f32.mrb[0].mxu0
  %v8158 = vadd.f32 0.0, %v8157
  %v8159 = vpop.f32.mrb[0].mxu0
  %8160 = vmatprep.mubr.f32.mxu0 0.0
  %8161 = vmatmul.mubr.f32.gmra.mrb[0].mxu0 %v7990
  %v8162 = vpop.f32.mrb[0].mxu0
  %v8163 = vadd.f32 0.0, %v8162
  %v8164 = vpop.f32.mrb[0].mxu0
  %8165 = vmatprep.mubr.f32.mxu0 0.0
  %8166 = vmatmul.mubr.f32.gmra.mrb[0].mxu0 %v7993
  %v8167 = vpop.f32.mrb[0].mxu0
  %v8168 = vadd.f32 0.0, %v8167
  %v8169 = vpop.f32.mrb[0].mxu0
  %8170 = vmatprep.mubr.f32.mxu0 0.0
  %8171 = vmatmul.mubr.f32.gmra.mrb[0].mxu0 %v7996
  %v8172 = vpop.f32.mrb[0].mxu0
  %v8173 = vadd.f32 0.0, %v8172
  %v8174 = vpop.f32.mrb[0].mxu0
  %8175 = vmatprep.mubr.f32.mxu0 0.0
  %8176 = vmatmul.mubr.f32.gmra.mrb[0].mxu0 %v7999
  %v8177 = vpop.f32.mrb[0].mxu0
  %v8178 = vadd.f32 0.0, %v8177
  %v8179 = vpop.f32.mrb[0].mxu0
  %8180 = vdwg.mxu0
  %v8182 = vsel %vm7588, %v7883, 0
  %v8185 = vsel %vm7588, %v7884, 0
  %v8188 = vsel %vm7588, %v7885, 0
  %v8191 = vsel %vm7588, %v7886, 0
  %v8194 = vsel %vm7588, %v7887, 0
  %v8197 = vsel %vm7588, %v7888, 0
  %v8200 = vsel %vm7588, %v7889, 0
  %v8203 = vsel %vm7588, %v7890, 0
  %v8206 = vsel %vm7588, %v7891, 0
  %v8209 = vsel %vm7588, %v7892, 0
  %v8212 = vsel %vm7588, %v7893, 0
  %v8215 = vsel %vm7588, %v7894, 0
  %v8218 = vsel %vm7588, %v7895, 0
  %v8221 = vsel %vm7588, %v7896, 0
  %v8224 = vsel %vm7588, %v7897, 0
  %v8227 = vsel %vm7588, %v7898, 0
  %v8230 = vsel %vm7588, %v7899, 0
  %v8233 = vsel %vm7588, %v7900, 0
  %v8236 = vsel %vm7588, %v7901, 0
  %v8239 = vsel %vm7588, %v7902, 0
  %v8242 = vsel %vm7588, %v7903, 0
  %v8245 = vsel %vm7588, %v7904, 0
  %v8248 = vsel %vm7588, %v7905, 0
  %8250 = vmatprep.subr.mxu0 0.0
  %8251 = vmatpush1.msra.mxu0 %v7906
  %8252 = vmatprep.subr.mxu0 0.0
  %8253 = vmatpush1.msra.mxu0 0.0
  %8254 = vmatprep.subr.mxu0 0.0
  %8255 = vmatpush1.msra.mxu0 0.0
  %8256 = vmatprep.subr.mxu0 0.0
  %8257 = vmatpush1.msra.mxu0 0.0
  %8258 = vmatprep.subr.mxu0 0.0
  %8259 = vmatpush1.msra.mxu0 0.0
  %8260 = vmatprep.subr.mxu0 0.0
  %8261 = vmatpush1.msra.mxu0 0.0
  %8262 = vmatprep.subr.mxu0 0.0
  %8263 = vmatpush1.msra.mxu0 0.0
  %8264 = vmatprep.subr.mxu0 0.0
  %8265 = vmatpush1.msra.mxu0 0.0
  %8266 = vmatprep.subr.mxu0 0.0
  %8267 = vmatpush1.msra.mxu0 0.0
  %8268 = vmatprep.subr.mxu0 0.0
  %8269 = vmatpush1.msra.mxu0 0.0
  %8270 = vmatprep.subr.mxu0 0.0
  %8271 = vmatpush1.msra.mxu0 0.0
  %8272 = vmatprep.subr.mxu0 0.0
  %8273 = vmatpush1.msra.mxu0 0.0
  %8274 = vmatprep.subr.mxu0 0.0
  %8275 = vmatpush1.msra.mxu0 0.0
  %8276 = vmatprep.subr.mxu0 0.0
  %8277 = vmatpush1.msra.mxu0 0.0
  %8278 = vmatprep.subr.mxu0 0.0
  %8279 = vmatpush1.msra.mxu0 0.0
  %8280 = vmatprep.subr.mxu0 0.0
  %8281 = vmatpush1.msra.mxu0 0.0
  %8282 = vmatprep.subr.mxu0 0.0
  %8283 = vmatpush1.msra.mxu0 0.0
  %8284 = vmatprep.subr.mxu0 0.0
  %8285 = vmatpush1.msra.mxu0 0.0
  %8286 = vmatprep.subr.mxu0 0.0
  %8287 = vmatpush1.msra.mxu0 0.0
  %8288 = vmatprep.subr.mxu0 0.0
  %8289 = vmatpush1.msra.mxu0 0.0
  %8290 = vmatprep.subr.mxu0 0.0
  %8291 = vmatpush1.msra.mxu0 0.0
  %8292 = vmatprep.subr.mxu0 0.0
  %8293 = vmatpush1.msra.mxu0 0.0
  %8294 = vmatprep.subr.mxu0 0.0
  %8295 = vmatpush1.msra.mxu0 0.0
  %8296 = vmatprep.subr.mxu0 0.0
  %8297 = vmatpush1.msra.mxu0 0.0
  %8298 = vmatprep.subr.mxu0 0.0
  %8299 = vmatpush1.msra.mxu0 0.0
  %8300 = vmatprep.subr.mxu0 0.0
  %8301 = vmatpush1.msra.mxu0 0.0
  %8302 = vmatprep.subr.mxu0 0.0
  %8303 = vmatpush1.msra.mxu0 0.0
  %8304 = vmatprep.subr.mxu0 0.0
  %8305 = vmatpush1.msra.mxu0 0.0
  %8306 = vmatprep.subr.mxu0 0.0
  %8307 = vmatpush1.msra.mxu0 0.0
  %8308 = vmatprep.subr.mxu0 0.0
  %8309 = vmatpush1.msra.mxu0 0.0
  %8310 = vmatprep.subr.mxu0 0.0
  %8311 = vmatpush1.msra.mxu0 0.0
  %8312 = vmatprep.subr.mxu0 0.0
  %8313 = vmatpush1.msra.mxu0 0.0
  %8314 = vmatprep.mubr.f32.mxu0 0.0
  %8315 = vmatmul.mubr.f32.gmra.mrb[0].mxu0 %v8182
  %v8316 = vpop.f32.mrb[0].mxu0
  %v8317 = vadd.f32 %v8068, %v8316
  %v8318 = vpop.f32.mrb[0].mxu0
  %8319 = vmatprep.mubr.f32.mxu0 0.0
  %8320 = vmatmul.mubr.f32.gmra.mrb[0].mxu0 %v8185
  %v8321 = vpop.f32.mrb[0].mxu0
  %v8322 = vadd.f32 %v8073, %v8321
  %v8323 = vpop.f32.mrb[0].mxu0
  %8324 = vmatprep.mubr.f32.mxu0 0.0
  %8325 = vmatmul.mubr.f32.gmra.mrb[0].mxu0 %v8188
  %v8326 = vpop.f32.mrb[0].mxu0
  %v8327 = vadd.f32 %v8078, %v8326
  %v8328 = vpop.f32.mrb[0].mxu0
  %8329 = vmatprep.mubr.f32.mxu0 0.0
  %8330 = vmatmul.mubr.f32.gmra.mrb[0].mxu0 %v8191
  %v8331 = vpop.f32.mrb[0].mxu0
  %v8332 = vadd.f32 %v8083, %v8331
  %v8333 = vpop.f32.mrb[0].mxu0
  %8334 = vmatprep.mubr.f32.mxu0 0.0
  %8335 = vmatmul.mubr.f32.gmra.mrb[0].mxu0 %v8194
  %v8336 = vpop.f32.mrb[0].mxu0
  %v8337 = vadd.f32 %v8088, %v8336
  %v8338 = vpop.f32.mrb[0].mxu0
  %8339 = vmatprep.mubr.f32.mxu0 0.0
  %8340 = vmatmul.mubr.f32.gmra.mrb[0].mxu0 %v8197
  %v8341 = vpop.f32.mrb[0].mxu0
  %v8342 = vadd.f32 %v8093, %v8341
  %v8343 = vpop.f32.mrb[0].mxu0
  %8344 = vmatprep.mubr.f32.mxu0 0.0
  %8345 = vmatmul.mubr.f32.gmra.mrb[0].mxu0 %v8200
  %v8346 = vpop.f32.mrb[0].mxu0
  %v8347 = vadd.f32 %v8098, %v8346
  %v8348 = vpop.f32.mrb[0].mxu0
  %8349 = vmatprep.mubr.f32.mxu0 0.0
  %8350 = vmatmul.mubr.f32.gmra.mrb[0].mxu0 %v8203
  %v8351 = vpop.f32.mrb[0].mxu0
  %v8352 = vadd.f32 %v8103, %v8351
  %v8353 = vpop.f32.mrb[0].mxu0
  %8354 = vmatprep.mubr.f32.mxu0 0.0
  %8355 = vmatmul.mubr.f32.gmra.mrb[0].mxu0 %v8206
  %v8356 = vpop.f32.mrb[0].mxu0
  %v8357 = vadd.f32 %v8108, %v8356
  %v8358 = vpop.f32.mrb[0].mxu0
  %8359 = vmatprep.mubr.f32.mxu0 0.0
  %8360 = vmatmul.mubr.f32.gmra.mrb[0].mxu0 %v8209
  %v8361 = vpop.f32.mrb[0].mxu0
  %v8362 = vadd.f32 %v8113, %v8361
  %v8363 = vpop.f32.mrb[0].mxu0
  %8364 = vmatprep.mubr.f32.mxu0 0.0
  %8365 = vmatmul.mubr.f32.gmra.mrb[0].mxu0 %v8212
  %v8366 = vpop.f32.mrb[0].mxu0
  %v8367 = vadd.f32 %v8118, %v8366
  %v8368 = vpop.f32.mrb[0].mxu0
  %8369 = vmatprep.mubr.f32.mxu0 0.0
  %8370 = vmatmul.mubr.f32.gmra.mrb[0].mxu0 %v8215
  %v8371 = vpop.f32.mrb[0].mxu0
  %v8372 = vadd.f32 %v8123, %v8371
  %v8373 = vpop.f32.mrb[0].mxu0
  %8374 = vmatprep.mubr.f32.mxu0 0.0
  %8375 = vmatmul.mubr.f32.gmra.mrb[0].mxu0 %v8218
  %v8376 = vpop.f32.mrb[0].mxu0
  %v8377 = vadd.f32 %v8128, %v8376
  %v8378 = vpop.f32.mrb[0].mxu0
  %8379 = vmatprep.mubr.f32.mxu0 0.0
  %8380 = vmatmul.mubr.f32.gmra.mrb[0].mxu0 %v8221
  %v8381 = vpop.f32.mrb[0].mxu0
  %v8382 = vadd.f32 %v8133, %v8381
  %v8383 = vpop.f32.mrb[0].mxu0
  %8384 = vmatprep.mubr.f32.mxu0 0.0
  %8385 = vmatmul.mubr.f32.gmra.mrb[0].mxu0 %v8224
  %v8386 = vpop.f32.mrb[0].mxu0
  %v8387 = vadd.f32 %v8138, %v8386
  %v8388 = vpop.f32.mrb[0].mxu0
  %8389 = vmatprep.mubr.f32.mxu0 0.0
  %8390 = vmatmul.mubr.f32.gmra.mrb[0].mxu0 %v8227
  %v8391 = vpop.f32.mrb[0].mxu0
  %v8392 = vadd.f32 %v8143, %v8391
  %v8393 = vpop.f32.mrb[0].mxu0
  %8394 = vmatprep.mubr.f32.mxu0 0.0
  %8395 = vmatmul.mubr.f32.gmra.mrb[0].mxu0 %v8230
  %v8396 = vpop.f32.mrb[0].mxu0
  %v8397 = vadd.f32 %v8148, %v8396
  %v8398 = vpop.f32.mrb[0].mxu0
  %8399 = vmatprep.mubr.f32.mxu0 0.0
  %8400 = vmatmul.mubr.f32.gmra.mrb[0].mxu0 %v8233
  %v8401 = vpop.f32.mrb[0].mxu0
  %v8402 = vadd.f32 %v8153, %v8401
  %v8403 = vpop.f32.mrb[0].mxu0
  %8404 = vmatprep.mubr.f32.mxu0 0.0
  %8405 = vmatmul.mubr.f32.gmra.mrb[0].mxu0 %v8236
  %v8406 = vpop.f32.mrb[0].mxu0
  %v8407 = vadd.f32 %v8158, %v8406
  %v8408 = vpop.f32.mrb[0].mxu0
  %8409 = vmatprep.mubr.f32.mxu0 0.0
  %8410 = vmatmul.mubr.f32.gmra.mrb[0].mxu0 %v8239
  %v8411 = vpop.f32.mrb[0].mxu0
  %v8412 = vadd.f32 %v8163, %v8411
  %v8413 = vpop.f32.mrb[0].mxu0
  %8414 = vmatprep.mubr.f32.mxu0 0.0
  %8415 = vmatmul.mubr.f32.gmra.mrb[0].mxu0 %v8242
  %v8416 = vpop.f32.mrb[0].mxu0
  %v8417 = vadd.f32 %v8168, %v8416
  %v8418 = vpop.f32.mrb[0].mxu0
  %8419 = vmatprep.mubr.f32.mxu0 0.0
  %8420 = vmatmul.mubr.f32.gmra.mrb[0].mxu0 %v8245
  %v8421 = vpop.f32.mrb[0].mxu0
  %v8422 = vadd.f32 %v8173, %v8421
  %v8423 = vpop.f32.mrb[0].mxu0
  %8424 = vmatprep.mubr.f32.mxu0 0.0
  %8425 = vmatmul.mubr.f32.gmra.mrb[0].mxu0 %v8248
  %v8426 = vpop.f32.mrb[0].mxu0
  %v8427 = vadd.f32 %v8178, %v8426
  %v8428 = vpop.f32.mrb[0].mxu0
  %8429 = vdwg.mxu0
  %v8430 = vld [vmem:[#allocation4 + $0x2] sm:$0xff]
  %v8431 = vld [vmem:[#allocation4 + $0xa] sm:$0xff]
  %v8432 = vld [vmem:[#allocation4 + $0x12] sm:$0xff]
  %v8433 = vld [vmem:[#allocation4 + $0x1a] sm:$0xff]
  %v8434 = vld [vmem:[#allocation4 + $0x22] sm:$0xff]
  %v8435 = vld [vmem:[#allocation4 + $0x2a] sm:$0xff]
  %v8436 = vld [vmem:[#allocation4 + $0x32] sm:$0xff]
  %v8437 = vld [vmem:[#allocation4 + $0x3a] sm:$0xff]
  %v8438 = vld [vmem:[#allocation4 + $0x42] sm:$0xff]
  %v8439 = vld [vmem:[#allocation4 + $0x4a] sm:$0xff]
  %v8440 = vld [vmem:[#allocation4 + $0x52] sm:$0xff]
  %v8441 = vld [vmem:[#allocation4 + $0x5a] sm:$0xff]
  %v8442 = vld [vmem:[#allocation4 + $0x62] sm:$0xff]
  %v8443 = vld [vmem:[#allocation4 + $0x6a] sm:$0xff]
  %v8444 = vld [vmem:[#allocation4 + $0x72] sm:$0xff]
  %v8445 = vld [vmem:[#allocation4 + $0x7a] sm:$0xff]
  %v8446 = vld [vmem:[#allocation4 + $0x82] sm:$0xff]
  %v8447 = vld [vmem:[#allocation4 + $0x8a] sm:$0xff]
  %v8448 = vld [vmem:[#allocation4 + $0x92] sm:$0xff]
  %v8449 = vld [vmem:[#allocation4 + $0x9a] sm:$0xff]
  %v8450 = vld [vmem:[#allocation4 + $0xa2] sm:$0xff]
  %v8451 = vld [vmem:[#allocation4 + $0xaa] sm:$0xff]
  %v8452 = vld [vmem:[#allocation4 + $0xb2] sm:$0xff]
  %s8453 = scalar_lea.vmem %s3, 16
  %v8454 = vld [vmem:[%s8453] sm:$0xff]
  %v8456 = vsel %vm7588, %v8430, 0
  %v8459 = vsel %vm7588, %v8431, 0
  %v8462 = vsel %vm7588, %v8432, 0
  %v8465 = vsel %vm7588, %v8433, 0
  %v8468 = vsel %vm7588, %v8434, 0
  %v8471 = vsel %vm7588, %v8435, 0
  %v8474 = vsel %vm7588, %v8436, 0
  %v8477 = vsel %vm7588, %v8437, 0
  %v8480 = vsel %vm7588, %v8438, 0
  %v8483 = vsel %vm7588, %v8439, 0
  %v8486 = vsel %vm7588, %v8440, 0
  %v8489 = vsel %vm7588, %v8441, 0
  %v8492 = vsel %vm7588, %v8442, 0
  %v8495 = vsel %vm7588, %v8443, 0
  %v8498 = vsel %vm7588, %v8444, 0
  %v8501 = vsel %vm7588, %v8445, 0
  %v8504 = vsel %vm7588, %v8446, 0
  %v8507 = vsel %vm7588, %v8447, 0
  %v8510 = vsel %vm7588, %v8448, 0
  %v8513 = vsel %vm7588, %v8449, 0
  %v8516 = vsel %vm7588, %v8450, 0
  %v8519 = vsel %vm7588, %v8451, 0
  %v8522 = vsel %vm7588, %v8452, 0
  %8524 = vmatprep.subr.mxu0 0.0
  %8525 = vmatpush1.msra.mxu0 %v8454
  %8526 = vmatprep.subr.mxu0 0.0
  %8527 = vmatpush1.msra.mxu0 0.0
  %8528 = vmatprep.subr.mxu0 0.0
  %8529 = vmatpush1.msra.mxu0 0.0
  %8530 = vmatprep.subr.mxu0 0.0
  %8531 = vmatpush1.msra.mxu0 0.0
  %8532 = vmatprep.subr.mxu0 0.0
  %8533 = vmatpush1.msra.mxu0 0.0
  %8534 = vmatprep.subr.mxu0 0.0
  %8535 = vmatpush1.msra.mxu0 0.0
  %8536 = vmatprep.subr.mxu0 0.0
  %8537 = vmatpush1.msra.mxu0 0.0
  %8538 = vmatprep.subr.mxu0 0.0
  %8539 = vmatpush1.msra.mxu0 0.0
  %8540 = vmatprep.subr.mxu0 0.0
  %8541 = vmatpush1.msra.mxu0 0.0
  %8542 = vmatprep.subr.mxu0 0.0
  %8543 = vmatpush1.msra.mxu0 0.0
  %8544 = vmatprep.subr.mxu0 0.0
  %8545 = vmatpush1.msra.mxu0 0.0
  %8546 = vmatprep.subr.mxu0 0.0
  %8547 = vmatpush1.msra.mxu0 0.0
  %8548 = vmatprep.subr.mxu0 0.0
  %8549 = vmatpush1.msra.mxu0 0.0
  %8550 = vmatprep.subr.mxu0 0.0
  %8551 = vmatpush1.msra.mxu0 0.0
  %8552 = vmatprep.subr.mxu0 0.0
  %8553 = vmatpush1.msra.mxu0 0.0
  %8554 = vmatprep.subr.mxu0 0.0
  %8555 = vmatpush1.msra.mxu0 0.0
  %8556 = vmatprep.subr.mxu0 0.0
  %8557 = vmatpush1.msra.mxu0 0.0
  %8558 = vmatprep.subr.mxu0 0.0
  %8559 = vmatpush1.msra.mxu0 0.0
  %8560 = vmatprep.subr.mxu0 0.0
  %8561 = vmatpush1.msra.mxu0 0.0
  %8562 = vmatprep.subr.mxu0 0.0
  %8563 = vmatpush1.msra.mxu0 0.0
  %8564 = vmatprep.subr.mxu0 0.0
  %8565 = vmatpush1.msra.mxu0 0.0
  %8566 = vmatprep.subr.mxu0 0.0
  %8567 = vmatpush1.msra.mxu0 0.0
  %8568 = vmatprep.subr.mxu0 0.0
  %8569 = vmatpush1.msra.mxu0 0.0
  %8570 = vmatprep.subr.mxu0 0.0
  %8571 = vmatpush1.msra.mxu0 0.0
  %8572 = vmatprep.subr.mxu0 0.0
  %8573 = vmatpush1.msra.mxu0 0.0
  %8574 = vmatprep.subr.mxu0 0.0
  %8575 = vmatpush1.msra.mxu0 0.0
  %8576 = vmatprep.subr.mxu0 0.0
  %8577 = vmatpush1.msra.mxu0 0.0
  %8578 = vmatprep.subr.mxu0 0.0
  %8579 = vmatpush1.msra.mxu0 0.0
  %8580 = vmatprep.subr.mxu0 0.0
  %8581 = vmatpush1.msra.mxu0 0.0
  %8582 = vmatprep.subr.mxu0 0.0
  %8583 = vmatpush1.msra.mxu0 0.0
  %8584 = vmatprep.subr.mxu0 0.0
  %8585 = vmatpush1.msra.mxu0 0.0
  %8586 = vmatprep.subr.mxu0 0.0
  %8587 = vmatpush1.msra.mxu0 0.0
  %8588 = vmatprep.mubr.f32.mxu0 0.0
  %8589 = vmatmul.mubr.f32.gmra.mrb[0].mxu0 %v8456
  %v8590 = vpop.f32.mrb[0].mxu0
  %v8591 = vadd.f32 0.0, %v8590
  %v8592 = vpop.f32.mrb[0].mxu0
  %8593 = vmatprep.mubr.f32.mxu0 0.0
  %8594 = vmatmul.mubr.f32.gmra.mrb[0].mxu0 %v8459
  %v8595 = vpop.f32.mrb[0].mxu0
  %v8596 = vadd.f32 0.0, %v8595
  %v8597 = vpop.f32.mrb[0].mxu0
  %8598 = vmatprep.mubr.f32.mxu0 0.0
  %8599 = vmatmul.mubr.f32.gmra.mrb[0].mxu0 %v8462
  %v8600 = vpop.f32.mrb[0].mxu0
  %v8601 = vadd.f32 0.0, %v8600
  %v8602 = vpop.f32.mrb[0].mxu0
  %8603 = vmatprep.mubr.f32.mxu0 0.0
  %8604 = vmatmul.mubr.f32.gmra.mrb[0].mxu0 %v8465
  %v8605 = vpop.f32.mrb[0].mxu0
  %v8606 = vadd.f32 0.0, %v8605
  %v8607 = vpop.f32.mrb[0].mxu0
  %8608 = vmatprep.mubr.f32.mxu0 0.0
  %8609 = vmatmul.mubr.f32.gmra.mrb[0].mxu0 %v8468
  %v8610 = vpop.f32.mrb[0].mxu0
  %v8611 = vadd.f32 0.0, %v8610
  %v8612 = vpop.f32.mrb[0].mxu0
  %8613 = vmatprep.mubr.f32.mxu0 0.0
  %8614 = vmatmul.mubr.f32.gmra.mrb[0].mxu0 %v8471
  %v8615 = vpop.f32.mrb[0].mxu0
  %v8616 = vadd.f32 0.0, %v8615
  %v8617 = vpop.f32.mrb[0].mxu0
  %8618 = vmatprep.mubr.f32.mxu0 0.0
  %8619 = vmatmul.mubr.f32.gmra.mrb[0].mxu0 %v8474
  %v8620 = vpop.f32.mrb[0].mxu0
  %v8621 = vadd.f32 0.0, %v8620
  %v8622 = vpop.f32.mrb[0].mxu0
  %8623 = vmatprep.mubr.f32.mxu0 0.0
  %8624 = vmatmul.mubr.f32.gmra.mrb[0].mxu0 %v8477
  %v8625 = vpop.f32.mrb[0].mxu0
  %v8626 = vadd.f32 0.0, %v8625
  %v8627 = vpop.f32.mrb[0].mxu0
  %8628 = vmatprep.mubr.f32.mxu0 0.0
  %8629 = vmatmul.mubr.f32.gmra.mrb[0].mxu0 %v8480
  %v8630 = vpop.f32.mrb[0].mxu0
  %v8631 = vadd.f32 0.0, %v8630
  %v8632 = vpop.f32.mrb[0].mxu0
  %8633 = vmatprep.mubr.f32.mxu0 0.0
  %8634 = vmatmul.mubr.f32.gmra.mrb[0].mxu0 %v8483
  %v8635 = vpop.f32.mrb[0].mxu0
  %v8636 = vadd.f32 0.0, %v8635
  %v8637 = vpop.f32.mrb[0].mxu0
  %8638 = vmatprep.mubr.f32.mxu0 0.0
  %8639 = vmatmul.mubr.f32.gmra.mrb[0].mxu0 %v8486
  %v8640 = vpop.f32.mrb[0].mxu0
  %v8641 = vadd.f32 0.0, %v8640
  %v8642 = vpop.f32.mrb[0].mxu0
  %8643 = vmatprep.mubr.f32.mxu0 0.0
  %8644 = vmatmul.mubr.f32.gmra.mrb[0].mxu0 %v8489
  %v8645 = vpop.f32.mrb[0].mxu0
  %v8646 = vadd.f32 0.0, %v8645
  %v8647 = vpop.f32.mrb[0].mxu0
  %8648 = vmatprep.mubr.f32.mxu0 0.0
  %8649 = vmatmul.mubr.f32.gmra.mrb[0].mxu0 %v8492
  %v8650 = vpop.f32.mrb[0].mxu0
  %v8651 = vadd.f32 0.0, %v8650
  %v8652 = vpop.f32.mrb[0].mxu0
  %8653 = vmatprep.mubr.f32.mxu0 0.0
  %8654 = vmatmul.mubr.f32.gmra.mrb[0].mxu0 %v8495
  %v8655 = vpop.f32.mrb[0].mxu0
  %v8656 = vadd.f32 0.0, %v8655
  %v8657 = vpop.f32.mrb[0].mxu0
  %8658 = vmatprep.mubr.f32.mxu0 0.0
  %8659 = vmatmul.mubr.f32.gmra.mrb[0].mxu0 %v8498
  %v8660 = vpop.f32.mrb[0].mxu0
  %v8661 = vadd.f32 0.0, %v8660
  %v8662 = vpop.f32.mrb[0].mxu0
  %8663 = vmatprep.mubr.f32.mxu0 0.0
  %8664 = vmatmul.mubr.f32.gmra.mrb[0].mxu0 %v8501
  %v8665 = vpop.f32.mrb[0].mxu0
  %v8666 = vadd.f32 0.0, %v8665
  %v8667 = vpop.f32.mrb[0].mxu0
  %8668 = vmatprep.mubr.f32.mxu0 0.0
  %8669 = vmatmul.mubr.f32.gmra.mrb[0].mxu0 %v8504
  %v8670 = vpop.f32.mrb[0].mxu0
  %v8671 = vadd.f32 0.0, %v8670
  %v8672 = vpop.f32.mrb[0].mxu0
  %8673 = vmatprep.mubr.f32.mxu0 0.0
  %8674 = vmatmul.mubr.f32.gmra.mrb[0].mxu0 %v8507
  %v8675 = vpop.f32.mrb[0].mxu0
  %v8676 = vadd.f32 0.0, %v8675
  %v8677 = vpop.f32.mrb[0].mxu0
  %8678 = vmatprep.mubr.f32.mxu0 0.0
  %8679 = vmatmul.mubr.f32.gmra.mrb[0].mxu0 %v8510
  %v8680 = vpop.f32.mrb[0].mxu0
  %v8681 = vadd.f32 0.0, %v8680
  %v8682 = vpop.f32.mrb[0].mxu0
  %8683 = vmatprep.mubr.f32.mxu0 0.0
  %8684 = vmatmul.mubr.f32.gmra.mrb[0].mxu0 %v8513
  %v8685 = vpop.f32.mrb[0].mxu0
  %v8686 = vadd.f32 0.0, %v8685
  %v8687 = vpop.f32.mrb[0].mxu0
  %8688 = vmatprep.mubr.f32.mxu0 0.0
  %8689 = vmatmul.mubr.f32.gmra.mrb[0].mxu0 %v8516
  %v8690 = vpop.f32.mrb[0].mxu0
  %v8691 = vadd.f32 0.0, %v8690
  %v8692 = vpop.f32.mrb[0].mxu0
  %8693 = vmatprep.mubr.f32.mxu0 0.0
  %8694 = vmatmul.mubr.f32.gmra.mrb[0].mxu0 %v8519
  %v8695 = vpop.f32.mrb[0].mxu0
  %v8696 = vadd.f32 0.0, %v8695
  %v8697 = vpop.f32.mrb[0].mxu0
  %8698 = vmatprep.mubr.f32.mxu0 0.0
  %8699 = vmatmul.mubr.f32.gmra.mrb[0].mxu0 %v8522
  %v8700 = vpop.f32.mrb[0].mxu0
  %v8701 = vadd.f32 0.0, %v8700
  %v8702 = vpop.f32.mrb[0].mxu0
  %8703 = vdwg.mxu0
  %v8704 = vadd.f32 %v8317, %v8591
  %v8705 = vadd.f32 %v8322, %v8596
  %v8706 = vadd.f32 %v8327, %v8601
  %v8707 = vadd.f32 %v8332, %v8606
  %v8708 = vadd.f32 %v8337, %v8611
  %v8709 = vadd.f32 %v8342, %v8616
  %v8710 = vadd.f32 %v8347, %v8621
  %v8711 = vadd.f32 %v8352, %v8626
  %v8712 = vadd.f32 %v8357, %v8631
  %v8713 = vadd.f32 %v8362, %v8636
  %v8714 = vadd.f32 %v8367, %v8641
  %v8715 = vadd.f32 %v8372, %v8646
  %v8716 = vadd.f32 %v8377, %v8651
  %v8717 = vadd.f32 %v8382, %v8656
  %v8718 = vadd.f32 %v8387, %v8661
  %v8719 = vadd.f32 %v8392, %v8666
  %v8720 = vadd.f32 %v8397, %v8671
  %v8721 = vadd.f32 %v8402, %v8676
  %v8722 = vadd.f32 %v8407, %v8681
  %v8723 = vadd.f32 %v8412, %v8686
  %v8724 = vadd.f32 %v8417, %v8691
  %v8725 = vadd.f32 %v8422, %v8696
  %v8726 = vadd.f32 %v8427, %v8701
  %v8727 = vld [vmem:[#allocation4 + $0xa] sm:$0xff]
  %v8728 = vld [vmem:[#allocation4 + $0x12] sm:$0xff]
  %v8729 = vld [vmem:[#allocation4 + $0x1a] sm:$0xff]
  %v8730 = vld [vmem:[#allocation4 + $0x22] sm:$0xff]
  %v8731 = vld [vmem:[#allocation4 + $0x2a] sm:$0xff]
  %v8732 = vld [vmem:[#allocation4 + $0x32] sm:$0xff]
  %v8733 = vld [vmem:[#allocation4 + $0x3a] sm:$0xff]
  %v8734 = vld [vmem:[#allocation4 + $0x42] sm:$0xff]
  %v8735 = vld [vmem:[#allocation4 + $0x4a] sm:$0xff]
  %v8736 = vld [vmem:[#allocation4 + $0x52] sm:$0xff]
  %v8737 = vld [vmem:[#allocation4 + $0x5a] sm:$0xff]
  %v8738 = vld [vmem:[#allocation4 + $0x62] sm:$0xff]
  %v8739 = vld [vmem:[#allocation4 + $0x6a] sm:$0xff]
  %v8740 = vld [vmem:[#allocation4 + $0x72] sm:$0xff]
  %v8741 = vld [vmem:[#allocation4 + $0x7a] sm:$0xff]
  %v8742 = vld [vmem:[#allocation4 + $0x82] sm:$0xff]
  %v8743 = vld [vmem:[#allocation4 + $0x8a] sm:$0xff]
  %v8744 = vld [vmem:[#allocation4 + $0x92] sm:$0xff]
  %v8745 = vld [vmem:[#allocation4 + $0x9a] sm:$0xff]
  %v8746 = vld [vmem:[#allocation4 + $0xa2] sm:$0xff]
  %v8747 = vld [vmem:[#allocation4 + $0xaa] sm:$0xff]
  %v8748 = vld [vmem:[#allocation4 + $0xb2] sm:$0xff]
  %v8749 = vld [vmem:[#allocation4 + $0xba] sm:$0xff]
  %s8750 = scalar_lea.vmem %s3, 24
  %v8751 = vld [vmem:[%s8750] sm:$0xff]
  %v8753 = vsel %vm7588, %v8727, 0
  %v8756 = vsel %vm7588, %v8728, 0
  %v8759 = vsel %vm7588, %v8729, 0
  %v8762 = vsel %vm7588, %v8730, 0
  %v8765 = vsel %vm7588, %v8731, 0
  %v8768 = vsel %vm7588, %v8732, 0
  %v8771 = vsel %vm7588, %v8733, 0
  %v8774 = vsel %vm7588, %v8734, 0
  %v8777 = vsel %vm7588, %v8735, 0
  %v8780 = vsel %vm7588, %v8736, 0
  %v8783 = vsel %vm7588, %v8737, 0
  %v8786 = vsel %vm7588, %v8738, 0
  %v8789 = vsel %vm7588, %v8739, 0
  %v8792 = vsel %vm7588, %v8740, 0
  %v8795 = vsel %vm7588, %v8741, 0
  %v8798 = vsel %vm7588, %v8742, 0
  %v8801 = vsel %vm7588, %v8743, 0
  %v8804 = vsel %vm7588, %v8744, 0
  %v8807 = vsel %vm7588, %v8745, 0
  %v8810 = vsel %vm7588, %v8746, 0
  %v8813 = vsel %vm7588, %v8747, 0
  %v8816 = vsel %vm7588, %v8748, 0
  %v8819 = vsel %vm7588, %v8749, 0
  %8821 = vmatprep.subr.mxu0 0.0
  %8822 = vmatpush1.msra.mxu0 %v8751
  %8823 = vmatprep.subr.mxu0 0.0
  %8824 = vmatpush1.msra.mxu0 0.0
  %8825 = vmatprep.subr.mxu0 0.0
  %8826 = vmatpush1.msra.mxu0 0.0
  %8827 = vmatprep.subr.mxu0 0.0
  %8828 = vmatpush1.msra.mxu0 0.0
  %8829 = vmatprep.subr.mxu0 0.0
  %8830 = vmatpush1.msra.mxu0 0.0
  %8831 = vmatprep.subr.mxu0 0.0
  %8832 = vmatpush1.msra.mxu0 0.0
  %8833 = vmatprep.subr.mxu0 0.0
  %8834 = vmatpush1.msra.mxu0 0.0
  %8835 = vmatprep.subr.mxu0 0.0
  %8836 = vmatpush1.msra.mxu0 0.0
  %8837 = vmatprep.subr.mxu0 0.0
  %8838 = vmatpush1.msra.mxu0 0.0
  %8839 = vmatprep.subr.mxu0 0.0
  %8840 = vmatpush1.msra.mxu0 0.0
  %8841 = vmatprep.subr.mxu0 0.0
  %8842 = vmatpush1.msra.mxu0 0.0
  %8843 = vmatprep.subr.mxu0 0.0
  %8844 = vmatpush1.msra.mxu0 0.0
  %8845 = vmatprep.subr.mxu0 0.0
  %8846 = vmatpush1.msra.mxu0 0.0
  %8847 = vmatprep.subr.mxu0 0.0
  %8848 = vmatpush1.msra.mxu0 0.0
  %8849 = vmatprep.subr.mxu0 0.0
  %8850 = vmatpush1.msra.mxu0 0.0
  %8851 = vmatprep.subr.mxu0 0.0
  %8852 = vmatpush1.msra.mxu0 0.0
  %8853 = vmatprep.subr.mxu0 0.0
  %8854 = vmatpush1.msra.mxu0 0.0
  %8855 = vmatprep.subr.mxu0 0.0
  %8856 = vmatpush1.msra.mxu0 0.0
  %8857 = vmatprep.subr.mxu0 0.0
  %8858 = vmatpush1.msra.mxu0 0.0
  %8859 = vmatprep.subr.mxu0 0.0
  %8860 = vmatpush1.msra.mxu0 0.0
  %8861 = vmatprep.subr.mxu0 0.0
  %8862 = vmatpush1.msra.mxu0 0.0
  %8863 = vmatprep.subr.mxu0 0.0
  %8864 = vmatpush1.msra.mxu0 0.0
  %8865 = vmatprep.subr.mxu0 0.0
  %8866 = vmatpush1.msra.mxu0 0.0
  %8867 = vmatprep.subr.mxu0 0.0
  %8868 = vmatpush1.msra.mxu0 0.0
  %8869 = vmatprep.subr.mxu0 0.0
  %8870 = vmatpush1.msra.mxu0 0.0
  %8871 = vmatprep.subr.mxu0 0.0
  %8872 = vmatpush1.msra.mxu0 0.0
  %8873 = vmatprep.subr.mxu0 0.0
  %8874 = vmatpush1.msra.mxu0 0.0
  %8875 = vmatprep.subr.mxu0 0.0
  %8876 = vmatpush1.msra.mxu0 0.0
  %8877 = vmatprep.subr.mxu0 0.0
  %8878 = vmatpush1.msra.mxu0 0.0
  %8879 = vmatprep.subr.mxu0 0.0
  %8880 = vmatpush1.msra.mxu0 0.0
  %8881 = vmatprep.subr.mxu0 0.0
  %8882 = vmatpush1.msra.mxu0 0.0
  %8883 = vmatprep.subr.mxu0 0.0
  %8884 = vmatpush1.msra.mxu0 0.0
  %8885 = vmatprep.mubr.f32.mxu0 0.0
  %8886 = vmatmul.mubr.f32.gmra.mrb[0].mxu0 %v8753
  %v8887 = vpop.f32.mrb[0].mxu0
  %v8888 = vadd.f32 0.0, %v8887
  %v8889 = vpop.f32.mrb[0].mxu0
  %8890 = vmatprep.mubr.f32.mxu0 0.0
  %8891 = vmatmul.mubr.f32.gmra.mrb[0].mxu0 %v8756
  %v8892 = vpop.f32.mrb[0].mxu0
  %v8893 = vadd.f32 0.0, %v8892
  %v8894 = vpop.f32.mrb[0].mxu0
  %8895 = vmatprep.mubr.f32.mxu0 0.0
  %8896 = vmatmul.mubr.f32.gmra.mrb[0].mxu0 %v8759
  %v8897 = vpop.f32.mrb[0].mxu0
  %v8898 = vadd.f32 0.0, %v8897
  %v8899 = vpop.f32.mrb[0].mxu0
  %8900 = vmatprep.mubr.f32.mxu0 0.0
  %8901 = vmatmul.mubr.f32.gmra.mrb[0].mxu0 %v8762
  %v8902 = vpop.f32.mrb[0].mxu0
  %v8903 = vadd.f32 0.0, %v8902
  %v8904 = vpop.f32.mrb[0].mxu0
  %8905 = vmatprep.mubr.f32.mxu0 0.0
  %8906 = vmatmul.mubr.f32.gmra.mrb[0].mxu0 %v8765
  %v8907 = vpop.f32.mrb[0].mxu0
  %v8908 = vadd.f32 0.0, %v8907
  %v8909 = vpop.f32.mrb[0].mxu0
  %8910 = vmatprep.mubr.f32.mxu0 0.0
  %8911 = vmatmul.mubr.f32.gmra.mrb[0].mxu0 %v8768
  %v8912 = vpop.f32.mrb[0].mxu0
  %v8913 = vadd.f32 0.0, %v8912
  %v8914 = vpop.f32.mrb[0].mxu0
  %8915 = vmatprep.mubr.f32.mxu0 0.0
  %8916 = vmatmul.mubr.f32.gmra.mrb[0].mxu0 %v8771
  %v8917 = vpop.f32.mrb[0].mxu0
  %v8918 = vadd.f32 0.0, %v8917
  %v8919 = vpop.f32.mrb[0].mxu0
  %8920 = vmatprep.mubr.f32.mxu0 0.0
  %8921 = vmatmul.mubr.f32.gmra.mrb[0].mxu0 %v8774
  %v8922 = vpop.f32.mrb[0].mxu0
  %v8923 = vadd.f32 0.0, %v8922
  %v8924 = vpop.f32.mrb[0].mxu0
  %8925 = vmatprep.mubr.f32.mxu0 0.0
  %8926 = vmatmul.mubr.f32.gmra.mrb[0].mxu0 %v8777
  %v8927 = vpop.f32.mrb[0].mxu0
  %v8928 = vadd.f32 0.0, %v8927
  %v8929 = vpop.f32.mrb[0].mxu0
  %8930 = vmatprep.mubr.f32.mxu0 0.0
  %8931 = vmatmul.mubr.f32.gmra.mrb[0].mxu0 %v8780
  %v8932 = vpop.f32.mrb[0].mxu0
  %v8933 = vadd.f32 0.0, %v8932
  %v8934 = vpop.f32.mrb[0].mxu0
  %8935 = vmatprep.mubr.f32.mxu0 0.0
  %8936 = vmatmul.mubr.f32.gmra.mrb[0].mxu0 %v8783
  %v8937 = vpop.f32.mrb[0].mxu0
  %v8938 = vadd.f32 0.0, %v8937
  %v8939 = vpop.f32.mrb[0].mxu0
  %8940 = vmatprep.mubr.f32.mxu0 0.0
  %8941 = vmatmul.mubr.f32.gmra.mrb[0].mxu0 %v8786
  %v8942 = vpop.f32.mrb[0].mxu0
  %v8943 = vadd.f32 0.0, %v8942
  %v8944 = vpop.f32.mrb[0].mxu0
  %8945 = vmatprep.mubr.f32.mxu0 0.0
  %8946 = vmatmul.mubr.f32.gmra.mrb[0].mxu0 %v8789
  %v8947 = vpop.f32.mrb[0].mxu0
  %v8948 = vadd.f32 0.0, %v8947
  %v8949 = vpop.f32.mrb[0].mxu0
  %8950 = vmatprep.mubr.f32.mxu0 0.0
  %8951 = vmatmul.mubr.f32.gmra.mrb[0].mxu0 %v8792
  %v8952 = vpop.f32.mrb[0].mxu0
  %v8953 = vadd.f32 0.0, %v8952
  %v8954 = vpop.f32.mrb[0].mxu0
  %8955 = vmatprep.mubr.f32.mxu0 0.0
  %8956 = vmatmul.mubr.f32.gmra.mrb[0].mxu0 %v8795
  %v8957 = vpop.f32.mrb[0].mxu0
  %v8958 = vadd.f32 0.0, %v8957
  %v8959 = vpop.f32.mrb[0].mxu0
  %8960 = vmatprep.mubr.f32.mxu0 0.0
  %8961 = vmatmul.mubr.f32.gmra.mrb[0].mxu0 %v8798
  %v8962 = vpop.f32.mrb[0].mxu0
  %v8963 = vadd.f32 0.0, %v8962
  %v8964 = vpop.f32.mrb[0].mxu0
  %8965 = vmatprep.mubr.f32.mxu0 0.0
  %8966 = vmatmul.mubr.f32.gmra.mrb[0].mxu0 %v8801
  %v8967 = vpop.f32.mrb[0].mxu0
  %v8968 = vadd.f32 0.0, %v8967
  %v8969 = vpop.f32.mrb[0].mxu0
  %8970 = vmatprep.mubr.f32.mxu0 0.0
  %8971 = vmatmul.mubr.f32.gmra.mrb[0].mxu0 %v8804
  %v8972 = vpop.f32.mrb[0].mxu0
  %v8973 = vadd.f32 0.0, %v8972
  %v8974 = vpop.f32.mrb[0].mxu0
  %8975 = vmatprep.mubr.f32.mxu0 0.0
  %8976 = vmatmul.mubr.f32.gmra.mrb[0].mxu0 %v8807
  %v8977 = vpop.f32.mrb[0].mxu0
  %v8978 = vadd.f32 0.0, %v8977
  %v8979 = vpop.f32.mrb[0].mxu0
  %8980 = vmatprep.mubr.f32.mxu0 0.0
  %8981 = vmatmul.mubr.f32.gmra.mrb[0].mxu0 %v8810
  %v8982 = vpop.f32.mrb[0].mxu0
  %v8983 = vadd.f32 0.0, %v8982
  %v8984 = vpop.f32.mrb[0].mxu0
  %8985 = vmatprep.mubr.f32.mxu0 0.0
  %8986 = vmatmul.mubr.f32.gmra.mrb[0].mxu0 %v8813
  %v8987 = vpop.f32.mrb[0].mxu0
  %v8988 = vadd.f32 0.0, %v8987
  %v8989 = vpop.f32.mrb[0].mxu0
  %8990 = vmatprep.mubr.f32.mxu0 0.0
  %8991 = vmatmul.mubr.f32.gmra.mrb[0].mxu0 %v8816
  %v8992 = vpop.f32.mrb[0].mxu0
  %v8993 = vadd.f32 0.0, %v8992
  %v8994 = vpop.f32.mrb[0].mxu0
  %8995 = vmatprep.mubr.f32.mxu0 0.0
  %8996 = vmatmul.mubr.f32.gmra.mrb[0].mxu0 %v8819
  %v8997 = vpop.f32.mrb[0].mxu0
  %v8998 = vadd.f32 0.0, %v8997
  %v8999 = vpop.f32.mrb[0].mxu0
  %9000 = vdwg.mxu0
  %v9001 = vadd.f32 %v8704, %v8888
  %v9002 = vadd.f32 %v8705, %v8893
  %v9003 = vadd.f32 %v8706, %v8898
  %v9004 = vadd.f32 %v8707, %v8903
  %v9005 = vadd.f32 %v8708, %v8908
  %v9006 = vadd.f32 %v8709, %v8913
  %v9007 = vadd.f32 %v8710, %v8918
  %v9008 = vadd.f32 %v8711, %v8923
  %v9009 = vadd.f32 %v8712, %v8928
  %v9010 = vadd.f32 %v8713, %v8933
  %v9011 = vadd.f32 %v8714, %v8938
  %v9012 = vadd.f32 %v8715, %v8943
  %v9013 = vadd.f32 %v8716, %v8948
  %v9014 = vadd.f32 %v8717, %v8953
  %v9015 = vadd.f32 %v8718, %v8958
  %v9016 = vadd.f32 %v8719, %v8963
  %v9017 = vadd.f32 %v8720, %v8968
  %v9018 = vadd.f32 %v8721, %v8973
  %v9019 = vadd.f32 %v8722, %v8978
  %v9020 = vadd.f32 %v8723, %v8983
  %v9021 = vadd.f32 %v8724, %v8988
  %v9022 = vadd.f32 %v8725, %v8993
  %v9023 = vadd.f32 %v8726, %v8998
  %v9024 = vld [vmem:[#allocation4 + $0xb] sm:$0xff]
  %v9025 = vld [vmem:[#allocation4 + $0x13] sm:$0xff]
  %v9026 = vld [vmem:[#allocation4 + $0x1b] sm:$0xff]
  %v9027 = vld [vmem:[#allocation4 + $0x23] sm:$0xff]
  %v9028 = vld [vmem:[#allocation4 + $0x2b] sm:$0xff]
  %v9029 = vld [vmem:[#allocation4 + $0x33] sm:$0xff]
  %v9030 = vld [vmem:[#allocation4 + $0x3b] sm:$0xff]
  %v9031 = vld [vmem:[#allocation4 + $0x43] sm:$0xff]
  %v9032 = vld [vmem:[#allocation4 + $0x4b] sm:$0xff]
  %v9033 = vld [vmem:[#allocation4 + $0x53] sm:$0xff]
  %v9034 = vld [vmem:[#allocation4 + $0x5b] sm:$0xff]
  %v9035 = vld [vmem:[#allocation4 + $0x63] sm:$0xff]
  %v9036 = vld [vmem:[#allocation4 + $0x6b] sm:$0xff]
  %v9037 = vld [vmem:[#allocation4 + $0x73] sm:$0xff]
  %v9038 = vld [vmem:[#allocation4 + $0x7b] sm:$0xff]
  %v9039 = vld [vmem:[#allocation4 + $0x83] sm:$0xff]
  %v9040 = vld [vmem:[#allocation4 + $0x8b] sm:$0xff]
  %v9041 = vld [vmem:[#allocation4 + $0x93] sm:$0xff]
  %v9042 = vld [vmem:[#allocation4 + $0x9b] sm:$0xff]
  %v9043 = vld [vmem:[#allocation4 + $0xa3] sm:$0xff]
  %v9044 = vld [vmem:[#allocation4 + $0xab] sm:$0xff]
  %v9045 = vld [vmem:[#allocation4 + $0xb3] sm:$0xff]
  %v9046 = vld [vmem:[#allocation4 + $0xbb] sm:$0xff]
  %s9047 = scalar_lea.vmem %s3, 32
  %v9048 = vld [vmem:[%s9047] sm:$0xff]
  %v9050 = vsel %vm7588, %v9024, 0
  %v9053 = vsel %vm7588, %v9025, 0
  %v9056 = vsel %vm7588, %v9026, 0
  %v9059 = vsel %vm7588, %v9027, 0
  %v9062 = vsel %vm7588, %v9028, 0
  %v9065 = vsel %vm7588, %v9029, 0
  %v9068 = vsel %vm7588, %v9030, 0
  %v9071 = vsel %vm7588, %v9031, 0
  %v9074 = vsel %vm7588, %v9032, 0
  %v9077 = vsel %vm7588, %v9033, 0
  %v9080 = vsel %vm7588, %v9034, 0
  %v9083 = vsel %vm7588, %v9035, 0
  %v9086 = vsel %vm7588, %v9036, 0
  %v9089 = vsel %vm7588, %v9037, 0
  %v9092 = vsel %vm7588, %v9038, 0
  %v9095 = vsel %vm7588, %v9039, 0
  %v9098 = vsel %vm7588, %v9040, 0
  %v9101 = vsel %vm7588, %v9041, 0
  %v9104 = vsel %vm7588, %v9042, 0
  %v9107 = vsel %vm7588, %v9043, 0
  %v9110 = vsel %vm7588, %v9044, 0
  %v9113 = vsel %vm7588, %v9045, 0
  %v9116 = vsel %vm7588, %v9046, 0
  %9118 = vmatprep.subr.mxu0 0.0
  %9119 = vmatpush1.msra.mxu0 %v9048
  %9120 = vmatprep.subr.mxu0 0.0
  %9121 = vmatpush1.msra.mxu0 0.0
  %9122 = vmatprep.subr.mxu0 0.0
  %9123 = vmatpush1.msra.mxu0 0.0
  %9124 = vmatprep.subr.mxu0 0.0
  %9125 = vmatpush1.msra.mxu0 0.0
  %9126 = vmatprep.subr.mxu0 0.0
  %9127 = vmatpush1.msra.mxu0 0.0
  %9128 = vmatprep.subr.mxu0 0.0
  %9129 = vmatpush1.msra.mxu0 0.0
  %9130 = vmatprep.subr.mxu0 0.0
  %9131 = vmatpush1.msra.mxu0 0.0
  %9132 = vmatprep.subr.mxu0 0.0
  %9133 = vmatpush1.msra.mxu0 0.0
  %9134 = vmatprep.subr.mxu0 0.0
  %9135 = vmatpush1.msra.mxu0 0.0
  %9136 = vmatprep.subr.mxu0 0.0
  %9137 = vmatpush1.msra.mxu0 0.0
  %9138 = vmatprep.subr.mxu0 0.0
  %9139 = vmatpush1.msra.mxu0 0.0
  %9140 = vmatprep.subr.mxu0 0.0
  %9141 = vmatpush1.msra.mxu0 0.0
  %9142 = vmatprep.subr.mxu0 0.0
  %9143 = vmatpush1.msra.mxu0 0.0
  %9144 = vmatprep.subr.mxu0 0.0
  %9145 = vmatpush1.msra.mxu0 0.0
  %9146 = vmatprep.subr.mxu0 0.0
  %9147 = vmatpush1.msra.mxu0 0.0
  %9148 = vmatprep.subr.mxu0 0.0
  %9149 = vmatpush1.msra.mxu0 0.0
  %9150 = vmatprep.subr.mxu0 0.0
  %9151 = vmatpush1.msra.mxu0 0.0
  %9152 = vmatprep.subr.mxu0 0.0
  %9153 = vmatpush1.msra.mxu0 0.0
  %9154 = vmatprep.subr.mxu0 0.0
  %9155 = vmatpush1.msra.mxu0 0.0
  %9156 = vmatprep.subr.mxu0 0.0
  %9157 = vmatpush1.msra.mxu0 0.0
  %9158 = vmatprep.subr.mxu0 0.0
  %9159 = vmatpush1.msra.mxu0 0.0
  %9160 = vmatprep.subr.mxu0 0.0
  %9161 = vmatpush1.msra.mxu0 0.0
  %9162 = vmatprep.subr.mxu0 0.0
  %9163 = vmatpush1.msra.mxu0 0.0
  %9164 = vmatprep.subr.mxu0 0.0
  %9165 = vmatpush1.msra.mxu0 0.0
  %9166 = vmatprep.subr.mxu0 0.0
  %9167 = vmatpush1.msra.mxu0 0.0
  %9168 = vmatprep.subr.mxu0 0.0
  %9169 = vmatpush1.msra.mxu0 0.0
  %9170 = vmatprep.subr.mxu0 0.0
  %9171 = vmatpush1.msra.mxu0 0.0
  %9172 = vmatprep.subr.mxu0 0.0
  %9173 = vmatpush1.msra.mxu0 0.0
  %9174 = vmatprep.subr.mxu0 0.0
  %9175 = vmatpush1.msra.mxu0 0.0
  %9176 = vmatprep.subr.mxu0 0.0
  %9177 = vmatpush1.msra.mxu0 0.0
  %9178 = vmatprep.subr.mxu0 0.0
  %9179 = vmatpush1.msra.mxu0 0.0
  %9180 = vmatprep.subr.mxu0 0.0
  %9181 = vmatpush1.msra.mxu0 0.0
  %9182 = vmatprep.mubr.f32.mxu0 0.0
  %9183 = vmatmul.mubr.f32.gmra.mrb[0].mxu0 %v9050
  %v9184 = vpop.f32.mrb[0].mxu0
  %v9185 = vadd.f32 0.0, %v9184
  %v9186 = vpop.f32.mrb[0].mxu0
  %9187 = vmatprep.mubr.f32.mxu0 0.0
  %9188 = vmatmul.mubr.f32.gmra.mrb[0].mxu0 %v9053
  %v9189 = vpop.f32.mrb[0].mxu0
  %v9190 = vadd.f32 0.0, %v9189
  %v9191 = vpop.f32.mrb[0].mxu0
  %9192 = vmatprep.mubr.f32.mxu0 0.0
  %9193 = vmatmul.mubr.f32.gmra.mrb[0].mxu0 %v9056
  %v9194 = vpop.f32.mrb[0].mxu0
  %v9195 = vadd.f32 0.0, %v9194
  %v9196 = vpop.f32.mrb[0].mxu0
  %9197 = vmatprep.mubr.f32.mxu0 0.0
  %9198 = vmatmul.mubr.f32.gmra.mrb[0].mxu0 %v9059
  %v9199 = vpop.f32.mrb[0].mxu0
  %v9200 = vadd.f32 0.0, %v9199
  %v9201 = vpop.f32.mrb[0].mxu0
  %9202 = vmatprep.mubr.f32.mxu0 0.0
  %9203 = vmatmul.mubr.f32.gmra.mrb[0].mxu0 %v9062
  %v9204 = vpop.f32.mrb[0].mxu0
  %v9205 = vadd.f32 0.0, %v9204
  %v9206 = vpop.f32.mrb[0].mxu0
  %9207 = vmatprep.mubr.f32.mxu0 0.0
  %9208 = vmatmul.mubr.f32.gmra.mrb[0].mxu0 %v9065
  %v9209 = vpop.f32.mrb[0].mxu0
  %v9210 = vadd.f32 0.0, %v9209
  %v9211 = vpop.f32.mrb[0].mxu0
  %9212 = vmatprep.mubr.f32.mxu0 0.0
  %9213 = vmatmul.mubr.f32.gmra.mrb[0].mxu0 %v9068
  %v9214 = vpop.f32.mrb[0].mxu0
  %v9215 = vadd.f32 0.0, %v9214
  %v9216 = vpop.f32.mrb[0].mxu0
  %9217 = vmatprep.mubr.f32.mxu0 0.0
  %9218 = vmatmul.mubr.f32.gmra.mrb[0].mxu0 %v9071
  %v9219 = vpop.f32.mrb[0].mxu0
  %v9220 = vadd.f32 0.0, %v9219
  %v9221 = vpop.f32.mrb[0].mxu0
  %9222 = vmatprep.mubr.f32.mxu0 0.0
  %9223 = vmatmul.mubr.f32.gmra.mrb[0].mxu0 %v9074
  %v9224 = vpop.f32.mrb[0].mxu0
  %v9225 = vadd.f32 0.0, %v9224
  %v9226 = vpop.f32.mrb[0].mxu0
  %9227 = vmatprep.mubr.f32.mxu0 0.0
  %9228 = vmatmul.mubr.f32.gmra.mrb[0].mxu0 %v9077
  %v9229 = vpop.f32.mrb[0].mxu0
  %v9230 = vadd.f32 0.0, %v9229
  %v9231 = vpop.f32.mrb[0].mxu0
  %9232 = vmatprep.mubr.f32.mxu0 0.0
  %9233 = vmatmul.mubr.f32.gmra.mrb[0].mxu0 %v9080
  %v9234 = vpop.f32.mrb[0].mxu0
  %v9235 = vadd.f32 0.0, %v9234
  %v9236 = vpop.f32.mrb[0].mxu0
  %9237 = vmatprep.mubr.f32.mxu0 0.0
  %9238 = vmatmul.mubr.f32.gmra.mrb[0].mxu0 %v9083
  %v9239 = vpop.f32.mrb[0].mxu0
  %v9240 = vadd.f32 0.0, %v9239
  %v9241 = vpop.f32.mrb[0].mxu0
  %9242 = vmatprep.mubr.f32.mxu0 0.0
  %9243 = vmatmul.mubr.f32.gmra.mrb[0].mxu0 %v9086
  %v9244 = vpop.f32.mrb[0].mxu0
  %v9245 = vadd.f32 0.0, %v9244
  %v9246 = vpop.f32.mrb[0].mxu0
  %9247 = vmatprep.mubr.f32.mxu0 0.0
  %9248 = vmatmul.mubr.f32.gmra.mrb[0].mxu0 %v9089
  %v9249 = vpop.f32.mrb[0].mxu0
  %v9250 = vadd.f32 0.0, %v9249
  %v9251 = vpop.f32.mrb[0].mxu0
  %9252 = vmatprep.mubr.f32.mxu0 0.0
  %9253 = vmatmul.mubr.f32.gmra.mrb[0].mxu0 %v9092
  %v9254 = vpop.f32.mrb[0].mxu0
  %v9255 = vadd.f32 0.0, %v9254
  %v9256 = vpop.f32.mrb[0].mxu0
  %9257 = vmatprep.mubr.f32.mxu0 0.0
  %9258 = vmatmul.mubr.f32.gmra.mrb[0].mxu0 %v9095
  %v9259 = vpop.f32.mrb[0].mxu0
  %v9260 = vadd.f32 0.0, %v9259
  %v9261 = vpop.f32.mrb[0].mxu0
  %9262 = vmatprep.mubr.f32.mxu0 0.0
  %9263 = vmatmul.mubr.f32.gmra.mrb[0].mxu0 %v9098
  %v9264 = vpop.f32.mrb[0].mxu0
  %v9265 = vadd.f32 0.0, %v9264
  %v9266 = vpop.f32.mrb[0].mxu0
  %9267 = vmatprep.mubr.f32.mxu0 0.0
  %9268 = vmatmul.mubr.f32.gmra.mrb[0].mxu0 %v9101
  %v9269 = vpop.f32.mrb[0].mxu0
  %v9270 = vadd.f32 0.0, %v9269
  %v9271 = vpop.f32.mrb[0].mxu0
  %9272 = vmatprep.mubr.f32.mxu0 0.0
  %9273 = vmatmul.mubr.f32.gmra.mrb[0].mxu0 %v9104
  %v9274 = vpop.f32.mrb[0].mxu0
  %v9275 = vadd.f32 0.0, %v9274
  %v9276 = vpop.f32.mrb[0].mxu0
  %9277 = vmatprep.mubr.f32.mxu0 0.0
  %9278 = vmatmul.mubr.f32.gmra.mrb[0].mxu0 %v9107
  %v9279 = vpop.f32.mrb[0].mxu0
  %v9280 = vadd.f32 0.0, %v9279
  %v9281 = vpop.f32.mrb[0].mxu0
  %9282 = vmatprep.mubr.f32.mxu0 0.0
  %9283 = vmatmul.mubr.f32.gmra.mrb[0].mxu0 %v9110
  %v9284 = vpop.f32.mrb[0].mxu0
  %v9285 = vadd.f32 0.0, %v9284
  %v9286 = vpop.f32.mrb[0].mxu0
  %9287 = vmatprep.mubr.f32.mxu0 0.0
  %9288 = vmatmul.mubr.f32.gmra.mrb[0].mxu0 %v9113
  %v9289 = vpop.f32.mrb[0].mxu0
  %v9290 = vadd.f32 0.0, %v9289
  %v9291 = vpop.f32.mrb[0].mxu0
  %9292 = vmatprep.mubr.f32.mxu0 0.0
  %9293 = vmatmul.mubr.f32.gmra.mrb[0].mxu0 %v9116
  %v9294 = vpop.f32.mrb[0].mxu0
  %v9295 = vadd.f32 0.0, %v9294
  %v9296 = vpop.f32.mrb[0].mxu0
  %9297 = vdwg.mxu0
  %v9298 = vadd.f32 %v9001, %v9185
  %v9299 = vadd.f32 %v9002, %v9190
  %v9300 = vadd.f32 %v9003, %v9195
  %v9301 = vadd.f32 %v9004, %v9200
  %v9302 = vadd.f32 %v9005, %v9205
  %v9303 = vadd.f32 %v9006, %v9210
  %v9304 = vadd.f32 %v9007, %v9215
  %v9305 = vadd.f32 %v9008, %v9220
  %v9306 = vadd.f32 %v9009, %v9225
  %v9307 = vadd.f32 %v9010, %v9230
  %v9308 = vadd.f32 %v9011, %v9235
  %v9309 = vadd.f32 %v9012, %v9240
  %v9310 = vadd.f32 %v9013, %v9245
  %v9311 = vadd.f32 %v9014, %v9250
  %v9312 = vadd.f32 %v9015, %v9255
  %v9313 = vadd.f32 %v9016, %v9260
  %v9314 = vadd.f32 %v9017, %v9265
  %v9315 = vadd.f32 %v9018, %v9270
  %v9316 = vadd.f32 %v9019, %v9275
  %v9317 = vadd.f32 %v9020, %v9280
  %v9318 = vadd.f32 %v9021, %v9285
  %v9319 = vadd.f32 %v9022, %v9290
  %v9320 = vadd.f32 %v9023, %v9295
  %v9321 = vld [vmem:[#allocation4 + $0xc] sm:$0xff]
  %v9322 = vld [vmem:[#allocation4 + $0x14] sm:$0xff]
  %v9323 = vld [vmem:[#allocation4 + $0x1c] sm:$0xff]
  %v9324 = vld [vmem:[#allocation4 + $0x24] sm:$0xff]
  %v9325 = vld [vmem:[#allocation4 + $0x2c] sm:$0xff]
  %v9326 = vld [vmem:[#allocation4 + $0x34] sm:$0xff]
  %v9327 = vld [vmem:[#allocation4 + $0x3c] sm:$0xff]
  %v9328 = vld [vmem:[#allocation4 + $0x44] sm:$0xff]
  %v9329 = vld [vmem:[#allocation4 + $0x4c] sm:$0xff]
  %v9330 = vld [vmem:[#allocation4 + $0x54] sm:$0xff]
  %v9331 = vld [vmem:[#allocation4 + $0x5c] sm:$0xff]
  %v9332 = vld [vmem:[#allocation4 + $0x64] sm:$0xff]
  %v9333 = vld [vmem:[#allocation4 + $0x6c] sm:$0xff]
  %v9334 = vld [vmem:[#allocation4 + $0x74] sm:$0xff]
  %v9335 = vld [vmem:[#allocation4 + $0x7c] sm:$0xff]
  %v9336 = vld [vmem:[#allocation4 + $0x84] sm:$0xff]
  %v9337 = vld [vmem:[#allocation4 + $0x8c] sm:$0xff]
  %v9338 = vld [vmem:[#allocation4 + $0x94] sm:$0xff]
  %v9339 = vld [vmem:[#allocation4 + $0x9c] sm:$0xff]
  %v9340 = vld [vmem:[#allocation4 + $0xa4] sm:$0xff]
  %v9341 = vld [vmem:[#allocation4 + $0xac] sm:$0xff]
  %v9342 = vld [vmem:[#allocation4 + $0xb4] sm:$0xff]
  %v9343 = vld [vmem:[#allocation4 + $0xbc] sm:$0xff]
  %s9344 = scalar_lea.vmem %s3, 40
  %v9345 = vld [vmem:[%s9344] sm:$0xff]
  %v9347 = vsel %vm7588, %v9321, 0
  %v9350 = vsel %vm7588, %v9322, 0
  %v9353 = vsel %vm7588, %v9323, 0
  %v9356 = vsel %vm7588, %v9324, 0
  %v9359 = vsel %vm7588, %v9325, 0
  %v9362 = vsel %vm7588, %v9326, 0
  %v9365 = vsel %vm7588, %v9327, 0
  %v9368 = vsel %vm7588, %v9328, 0
  %v9371 = vsel %vm7588, %v9329, 0
  %v9374 = vsel %vm7588, %v9330, 0
  %v9377 = vsel %vm7588, %v9331, 0
  %v9380 = vsel %vm7588, %v9332, 0
  %v9383 = vsel %vm7588, %v9333, 0
  %v9386 = vsel %vm7588, %v9334, 0
  %v9389 = vsel %vm7588, %v9335, 0
  %v9392 = vsel %vm7588, %v9336, 0
  %v9395 = vsel %vm7588, %v9337, 0
  %v9398 = vsel %vm7588, %v9338, 0
  %v9401 = vsel %vm7588, %v9339, 0
  %v9404 = vsel %vm7588, %v9340, 0
  %v9407 = vsel %vm7588, %v9341, 0
  %v9410 = vsel %vm7588, %v9342, 0
  %v9413 = vsel %vm7588, %v9343, 0
  %9415 = vmatprep.subr.mxu0 0.0
  %9416 = vmatpush1.msra.mxu0 %v9345
  %9417 = vmatprep.subr.mxu0 0.0
  %9418 = vmatpush1.msra.mxu0 0.0
  %9419 = vmatprep.subr.mxu0 0.0
  %9420 = vmatpush1.msra.mxu0 0.0
  %9421 = vmatprep.subr.mxu0 0.0
  %9422 = vmatpush1.msra.mxu0 0.0
  %9423 = vmatprep.subr.mxu0 0.0
  %9424 = vmatpush1.msra.mxu0 0.0
  %9425 = vmatprep.subr.mxu0 0.0
  %9426 = vmatpush1.msra.mxu0 0.0
  %9427 = vmatprep.subr.mxu0 0.0
  %9428 = vmatpush1.msra.mxu0 0.0
  %9429 = vmatprep.subr.mxu0 0.0
  %9430 = vmatpush1.msra.mxu0 0.0
  %9431 = vmatprep.subr.mxu0 0.0
  %9432 = vmatpush1.msra.mxu0 0.0
  %9433 = vmatprep.subr.mxu0 0.0
  %9434 = vmatpush1.msra.mxu0 0.0
  %9435 = vmatprep.subr.mxu0 0.0
  %9436 = vmatpush1.msra.mxu0 0.0
  %9437 = vmatprep.subr.mxu0 0.0
  %9438 = vmatpush1.msra.mxu0 0.0
  %9439 = vmatprep.subr.mxu0 0.0
  %9440 = vmatpush1.msra.mxu0 0.0
  %9441 = vmatprep.subr.mxu0 0.0
  %9442 = vmatpush1.msra.mxu0 0.0
  %9443 = vmatprep.subr.mxu0 0.0
  %9444 = vmatpush1.msra.mxu0 0.0
  %9445 = vmatprep.subr.mxu0 0.0
  %9446 = vmatpush1.msra.mxu0 0.0
  %9447 = vmatprep.subr.mxu0 0.0
  %9448 = vmatpush1.msra.mxu0 0.0
  %9449 = vmatprep.subr.mxu0 0.0
  %9450 = vmatpush1.msra.mxu0 0.0
  %9451 = vmatprep.subr.mxu0 0.0
  %9452 = vmatpush1.msra.mxu0 0.0
  %9453 = vmatprep.subr.mxu0 0.0
  %9454 = vmatpush1.msra.mxu0 0.0
  %9455 = vmatprep.subr.mxu0 0.0
  %9456 = vmatpush1.msra.mxu0 0.0
  %9457 = vmatprep.subr.mxu0 0.0
  %9458 = vmatpush1.msra.mxu0 0.0
  %9459 = vmatprep.subr.mxu0 0.0
  %9460 = vmatpush1.msra.mxu0 0.0
  %9461 = vmatprep.subr.mxu0 0.0
  %9462 = vmatpush1.msra.mxu0 0.0
  %9463 = vmatprep.subr.mxu0 0.0
  %9464 = vmatpush1.msra.mxu0 0.0
  %9465 = vmatprep.subr.mxu0 0.0
  %9466 = vmatpush1.msra.mxu0 0.0
  %9467 = vmatprep.subr.mxu0 0.0
  %9468 = vmatpush1.msra.mxu0 0.0
  %9469 = vmatprep.subr.mxu0 0.0
  %9470 = vmatpush1.msra.mxu0 0.0
  %9471 = vmatprep.subr.mxu0 0.0
  %9472 = vmatpush1.msra.mxu0 0.0
  %9473 = vmatprep.subr.mxu0 0.0
  %9474 = vmatpush1.msra.mxu0 0.0
  %9475 = vmatprep.subr.mxu0 0.0
  %9476 = vmatpush1.msra.mxu0 0.0
  %9477 = vmatprep.subr.mxu0 0.0
  %9478 = vmatpush1.msra.mxu0 0.0
  %9479 = vmatprep.mubr.f32.mxu0 0.0
  %9480 = vmatmul.mubr.f32.gmra.mrb[0].mxu0 %v9347
  %v9481 = vpop.f32.mrb[0].mxu0
  %v9482 = vadd.f32 0.0, %v9481
  %v9483 = vpop.f32.mrb[0].mxu0
  %9484 = vmatprep.mubr.f32.mxu0 0.0
  %9485 = vmatmul.mubr.f32.gmra.mrb[0].mxu0 %v9350
  %v9486 = vpop.f32.mrb[0].mxu0
  %v9487 = vadd.f32 0.0, %v9486
  %v9488 = vpop.f32.mrb[0].mxu0
  %9489 = vmatprep.mubr.f32.mxu0 0.0
  %9490 = vmatmul.mubr.f32.gmra.mrb[0].mxu0 %v9353
  %v9491 = vpop.f32.mrb[0].mxu0
  %v9492 = vadd.f32 0.0, %v9491
  %v9493 = vpop.f32.mrb[0].mxu0
  %9494 = vmatprep.mubr.f32.mxu0 0.0
  %9495 = vmatmul.mubr.f32.gmra.mrb[0].mxu0 %v9356
  %v9496 = vpop.f32.mrb[0].mxu0
  %v9497 = vadd.f32 0.0, %v9496
  %v9498 = vpop.f32.mrb[0].mxu0
  %9499 = vmatprep.mubr.f32.mxu0 0.0
  %9500 = vmatmul.mubr.f32.gmra.mrb[0].mxu0 %v9359
  %v9501 = vpop.f32.mrb[0].mxu0
  %v9502 = vadd.f32 0.0, %v9501
  %v9503 = vpop.f32.mrb[0].mxu0
  %9504 = vmatprep.mubr.f32.mxu0 0.0
  %9505 = vmatmul.mubr.f32.gmra.mrb[0].mxu0 %v9362
  %v9506 = vpop.f32.mrb[0].mxu0
  %v9507 = vadd.f32 0.0, %v9506
  %v9508 = vpop.f32.mrb[0].mxu0
  %9509 = vmatprep.mubr.f32.mxu0 0.0
  %9510 = vmatmul.mubr.f32.gmra.mrb[0].mxu0 %v9365
  %v9511 = vpop.f32.mrb[0].mxu0
  %v9512 = vadd.f32 0.0, %v9511
  %v9513 = vpop.f32.mrb[0].mxu0
  %9514 = vmatprep.mubr.f32.mxu0 0.0
  %9515 = vmatmul.mubr.f32.gmra.mrb[0].mxu0 %v9368
  %v9516 = vpop.f32.mrb[0].mxu0
  %v9517 = vadd.f32 0.0, %v9516
  %v9518 = vpop.f32.mrb[0].mxu0
  %9519 = vmatprep.mubr.f32.mxu0 0.0
  %9520 = vmatmul.mubr.f32.gmra.mrb[0].mxu0 %v9371
  %v9521 = vpop.f32.mrb[0].mxu0
  %v9522 = vadd.f32 0.0, %v9521
  %v9523 = vpop.f32.mrb[0].mxu0
  %9524 = vmatprep.mubr.f32.mxu0 0.0
  %9525 = vmatmul.mubr.f32.gmra.mrb[0].mxu0 %v9374
  %v9526 = vpop.f32.mrb[0].mxu0
  %v9527 = vadd.f32 0.0, %v9526
  %v9528 = vpop.f32.mrb[0].mxu0
  %9529 = vmatprep.mubr.f32.mxu0 0.0
  %9530 = vmatmul.mubr.f32.gmra.mrb[0].mxu0 %v9377
  %v9531 = vpop.f32.mrb[0].mxu0
  %v9532 = vadd.f32 0.0, %v9531
  %v9533 = vpop.f32.mrb[0].mxu0
  %9534 = vmatprep.mubr.f32.mxu0 0.0
  %9535 = vmatmul.mubr.f32.gmra.mrb[0].mxu0 %v9380
  %v9536 = vpop.f32.mrb[0].mxu0
  %v9537 = vadd.f32 0.0, %v9536
  %v9538 = vpop.f32.mrb[0].mxu0
  %9539 = vmatprep.mubr.f32.mxu0 0.0
  %9540 = vmatmul.mubr.f32.gmra.mrb[0].mxu0 %v9383
  %v9541 = vpop.f32.mrb[0].mxu0
  %v9542 = vadd.f32 0.0, %v9541
  %v9543 = vpop.f32.mrb[0].mxu0
  %9544 = vmatprep.mubr.f32.mxu0 0.0
  %9545 = vmatmul.mubr.f32.gmra.mrb[0].mxu0 %v9386
  %v9546 = vpop.f32.mrb[0].mxu0
  %v9547 = vadd.f32 0.0, %v9546
  %v9548 = vpop.f32.mrb[0].mxu0
  %9549 = vmatprep.mubr.f32.mxu0 0.0
  %9550 = vmatmul.mubr.f32.gmra.mrb[0].mxu0 %v9389
  %v9551 = vpop.f32.mrb[0].mxu0
  %v9552 = vadd.f32 0.0, %v9551
  %v9553 = vpop.f32.mrb[0].mxu0
  %9554 = vmatprep.mubr.f32.mxu0 0.0
  %9555 = vmatmul.mubr.f32.gmra.mrb[0].mxu0 %v9392
  %v9556 = vpop.f32.mrb[0].mxu0
  %v9557 = vadd.f32 0.0, %v9556
  %v9558 = vpop.f32.mrb[0].mxu0
  %9559 = vmatprep.mubr.f32.mxu0 0.0
  %9560 = vmatmul.mubr.f32.gmra.mrb[0].mxu0 %v9395
  %v9561 = vpop.f32.mrb[0].mxu0
  %v9562 = vadd.f32 0.0, %v9561
  %v9563 = vpop.f32.mrb[0].mxu0
  %9564 = vmatprep.mubr.f32.mxu0 0.0
  %9565 = vmatmul.mubr.f32.gmra.mrb[0].mxu0 %v9398
  %v9566 = vpop.f32.mrb[0].mxu0
  %v9567 = vadd.f32 0.0, %v9566
  %v9568 = vpop.f32.mrb[0].mxu0
  %9569 = vmatprep.mubr.f32.mxu0 0.0
  %9570 = vmatmul.mubr.f32.gmra.mrb[0].mxu0 %v9401
  %v9571 = vpop.f32.mrb[0].mxu0
  %v9572 = vadd.f32 0.0, %v9571
  %v9573 = vpop.f32.mrb[0].mxu0
  %9574 = vmatprep.mubr.f32.mxu0 0.0
  %9575 = vmatmul.mubr.f32.gmra.mrb[0].mxu0 %v9404
  %v9576 = vpop.f32.mrb[0].mxu0
  %v9577 = vadd.f32 0.0, %v9576
  %v9578 = vpop.f32.mrb[0].mxu0
  %9579 = vmatprep.mubr.f32.mxu0 0.0
  %9580 = vmatmul.mubr.f32.gmra.mrb[0].mxu0 %v9407
  %v9581 = vpop.f32.mrb[0].mxu0
  %v9582 = vadd.f32 0.0, %v9581
  %v9583 = vpop.f32.mrb[0].mxu0
  %9584 = vmatprep.mubr.f32.mxu0 0.0
  %9585 = vmatmul.mubr.f32.gmra.mrb[0].mxu0 %v9410
  %v9586 = vpop.f32.mrb[0].mxu0
  %v9587 = vadd.f32 0.0, %v9586
  %v9588 = vpop.f32.mrb[0].mxu0
  %9589 = vmatprep.mubr.f32.mxu0 0.0
  %9590 = vmatmul.mubr.f32.gmra.mrb[0].mxu0 %v9413
  %v9591 = vpop.f32.mrb[0].mxu0
  %v9592 = vadd.f32 0.0, %v9591
  %v9593 = vpop.f32.mrb[0].mxu0
  %9594 = vdwg.mxu0
  %v9595 = vadd.f32 %v9298, %v9482
  %v9596 = vadd.f32 %v9299, %v9487
  %v9597 = vadd.f32 %v9300, %v9492
  %v9598 = vadd.f32 %v9301, %v9497
  %v9599 = vadd.f32 %v9302, %v9502
  %v9600 = vadd.f32 %v9303, %v9507
  %v9601 = vadd.f32 %v9304, %v9512
  %v9602 = vadd.f32 %v9305, %v9517
  %v9603 = vadd.f32 %v9306, %v9522
  %v9604 = vadd.f32 %v9307, %v9527
  %v9605 = vadd.f32 %v9308, %v9532
  %v9606 = vadd.f32 %v9309, %v9537
  %v9607 = vadd.f32 %v9310, %v9542
  %v9608 = vadd.f32 %v9311, %v9547
  %v9609 = vadd.f32 %v9312, %v9552
  %v9610 = vadd.f32 %v9313, %v9557
  %v9611 = vadd.f32 %v9314, %v9562
  %v9612 = vadd.f32 %v9315, %v9567
  %v9613 = vadd.f32 %v9316, %v9572
  %v9614 = vadd.f32 %v9317, %v9577
  %v9615 = vadd.f32 %v9318, %v9582
  %v9616 = vadd.f32 %v9319, %v9587
  %v9617 = vadd.f32 %v9320, %v9592
  %v9618 = vld [vmem:[#allocation4 + $0x14] sm:$0xff]
  %v9619 = vld [vmem:[#allocation4 + $0x1c] sm:$0xff]
  %v9620 = vld [vmem:[#allocation4 + $0x24] sm:$0xff]
  %v9621 = vld [vmem:[#allocation4 + $0x2c] sm:$0xff]
  %v9622 = vld [vmem:[#allocation4 + $0x34] sm:$0xff]
  %v9623 = vld [vmem:[#allocation4 + $0x3c] sm:$0xff]
  %v9624 = vld [vmem:[#allocation4 + $0x44] sm:$0xff]
  %v9625 = vld [vmem:[#allocation4 + $0x4c] sm:$0xff]
  %v9626 = vld [vmem:[#allocation4 + $0x54] sm:$0xff]
  %v9627 = vld [vmem:[#allocation4 + $0x5c] sm:$0xff]
  %v9628 = vld [vmem:[#allocation4 + $0x64] sm:$0xff]
  %v9629 = vld [vmem:[#allocation4 + $0x6c] sm:$0xff]
  %v9630 = vld [vmem:[#allocation4 + $0x74] sm:$0xff]
  %v9631 = vld [vmem:[#allocation4 + $0x7c] sm:$0xff]
  %v9632 = vld [vmem:[#allocation4 + $0x84] sm:$0xff]
  %v9633 = vld [vmem:[#allocation4 + $0x8c] sm:$0xff]
  %v9634 = vld [vmem:[#allocation4 + $0x94] sm:$0xff]
  %v9635 = vld [vmem:[#allocation4 + $0x9c] sm:$0xff]
  %v9636 = vld [vmem:[#allocation4 + $0xa4] sm:$0xff]
  %v9637 = vld [vmem:[#allocation4 + $0xac] sm:$0xff]
  %v9638 = vld [vmem:[#allocation4 + $0xb4] sm:$0xff]
  %v9639 = vld [vmem:[#allocation4 + $0xbc] sm:$0xff]
  %v9640 = vld [vmem:[#allocation4 + $0xc4] sm:$0xff]
  %s9641 = scalar_lea.vmem %s3, 48
  %v9642 = vld [vmem:[%s9641] sm:$0xff]
  %v9644 = vsel %vm7588, %v9618, 0
  %v9647 = vsel %vm7588, %v9619, 0
  %v9650 = vsel %vm7588, %v9620, 0
  %v9653 = vsel %vm7588, %v9621, 0
  %v9656 = vsel %vm7588, %v9622, 0
  %v9659 = vsel %vm7588, %v9623, 0
  %v9662 = vsel %vm7588, %v9624, 0
  %v9665 = vsel %vm7588, %v9625, 0
  %v9668 = vsel %vm7588, %v9626, 0
  %v9671 = vsel %vm7588, %v9627, 0
  %v9674 = vsel %vm7588, %v9628, 0
  %v9677 = vsel %vm7588, %v9629, 0
  %v9680 = vsel %vm7588, %v9630, 0
  %v9683 = vsel %vm7588, %v9631, 0
  %v9686 = vsel %vm7588, %v9632, 0
  %v9689 = vsel %vm7588, %v9633, 0
  %v9692 = vsel %vm7588, %v9634, 0
  %v9695 = vsel %vm7588, %v9635, 0
  %v9698 = vsel %vm7588, %v9636, 0
  %v9701 = vsel %vm7588, %v9637, 0
  %v9704 = vsel %vm7588, %v9638, 0
  %v9707 = vsel %vm7588, %v9639, 0
  %v9710 = vsel %vm7588, %v9640, 0
  %9712 = vmatprep.subr.mxu0 0.0
  %9713 = vmatpush1.msra.mxu0 %v9642
  %9714 = vmatprep.subr.mxu0 0.0
  %9715 = vmatpush1.msra.mxu0 0.0
  %9716 = vmatprep.subr.mxu0 0.0
  %9717 = vmatpush1.msra.mxu0 0.0
  %9718 = vmatprep.subr.mxu0 0.0
  %9719 = vmatpush1.msra.mxu0 0.0
  %9720 = vmatprep.subr.mxu0 0.0
  %9721 = vmatpush1.msra.mxu0 0.0
  %9722 = vmatprep.subr.mxu0 0.0
  %9723 = vmatpush1.msra.mxu0 0.0
  %9724 = vmatprep.subr.mxu0 0.0
  %9725 = vmatpush1.msra.mxu0 0.0
  %9726 = vmatprep.subr.mxu0 0.0
  %9727 = vmatpush1.msra.mxu0 0.0
  %9728 = vmatprep.subr.mxu0 0.0
  %9729 = vmatpush1.msra.mxu0 0.0
  %9730 = vmatprep.subr.mxu0 0.0
  %9731 = vmatpush1.msra.mxu0 0.0
  %9732 = vmatprep.subr.mxu0 0.0
  %9733 = vmatpush1.msra.mxu0 0.0
  %9734 = vmatprep.subr.mxu0 0.0
  %9735 = vmatpush1.msra.mxu0 0.0
  %9736 = vmatprep.subr.mxu0 0.0
  %9737 = vmatpush1.msra.mxu0 0.0
  %9738 = vmatprep.subr.mxu0 0.0
  %9739 = vmatpush1.msra.mxu0 0.0
  %9740 = vmatprep.subr.mxu0 0.0
  %9741 = vmatpush1.msra.mxu0 0.0
  %9742 = vmatprep.subr.mxu0 0.0
  %9743 = vmatpush1.msra.mxu0 0.0
  %9744 = vmatprep.subr.mxu0 0.0
  %9745 = vmatpush1.msra.mxu0 0.0
  %9746 = vmatprep.subr.mxu0 0.0
  %9747 = vmatpush1.msra.mxu0 0.0
  %9748 = vmatprep.subr.mxu0 0.0
  %9749 = vmatpush1.msra.mxu0 0.0
  %9750 = vmatprep.subr.mxu0 0.0
  %9751 = vmatpush1.msra.mxu0 0.0
  %9752 = vmatprep.subr.mxu0 0.0
  %9753 = vmatpush1.msra.mxu0 0.0
  %9754 = vmatprep.subr.mxu0 0.0
  %9755 = vmatpush1.msra.mxu0 0.0
  %9756 = vmatprep.subr.mxu0 0.0
  %9757 = vmatpush1.msra.mxu0 0.0
  %9758 = vmatprep.subr.mxu0 0.0
  %9759 = vmatpush1.msra.mxu0 0.0
  %9760 = vmatprep.subr.mxu0 0.0
  %9761 = vmatpush1.msra.mxu0 0.0
  %9762 = vmatprep.subr.mxu0 0.0
  %9763 = vmatpush1.msra.mxu0 0.0
  %9764 = vmatprep.subr.mxu0 0.0
  %9765 = vmatpush1.msra.mxu0 0.0
  %9766 = vmatprep.subr.mxu0 0.0
  %9767 = vmatpush1.msra.mxu0 0.0
  %9768 = vmatprep.subr.mxu0 0.0
  %9769 = vmatpush1.msra.mxu0 0.0
  %9770 = vmatprep.subr.mxu0 0.0
  %9771 = vmatpush1.msra.mxu0 0.0
  %9772 = vmatprep.subr.mxu0 0.0
  %9773 = vmatpush1.msra.mxu0 0.0
  %9774 = vmatprep.subr.mxu0 0.0
  %9775 = vmatpush1.msra.mxu0 0.0
  %9776 = vmatprep.mubr.f32.mxu0 0.0
  %9777 = vmatmul.mubr.f32.gmra.mrb[0].mxu0 %v9644
  %v9778 = vpop.f32.mrb[0].mxu0
  %v9779 = vadd.f32 0.0, %v9778
  %v9780 = vpop.f32.mrb[0].mxu0
  %9781 = vmatprep.mubr.f32.mxu0 0.0
  %9782 = vmatmul.mubr.f32.gmra.mrb[0].mxu0 %v9647
  %v9783 = vpop.f32.mrb[0].mxu0
  %v9784 = vadd.f32 0.0, %v9783
  %v9785 = vpop.f32.mrb[0].mxu0
  %9786 = vmatprep.mubr.f32.mxu0 0.0
  %9787 = vmatmul.mubr.f32.gmra.mrb[0].mxu0 %v9650
  %v9788 = vpop.f32.mrb[0].mxu0
  %v9789 = vadd.f32 0.0, %v9788
  %v9790 = vpop.f32.mrb[0].mxu0
  %9791 = vmatprep.mubr.f32.mxu0 0.0
  %9792 = vmatmul.mubr.f32.gmra.mrb[0].mxu0 %v9653
  %v9793 = vpop.f32.mrb[0].mxu0
  %v9794 = vadd.f32 0.0, %v9793
  %v9795 = vpop.f32.mrb[0].mxu0
  %9796 = vmatprep.mubr.f32.mxu0 0.0
  %9797 = vmatmul.mubr.f32.gmra.mrb[0].mxu0 %v9656
  %v9798 = vpop.f32.mrb[0].mxu0
  %v9799 = vadd.f32 0.0, %v9798
  %v9800 = vpop.f32.mrb[0].mxu0
  %9801 = vmatprep.mubr.f32.mxu0 0.0
  %9802 = vmatmul.mubr.f32.gmra.mrb[0].mxu0 %v9659
  %v9803 = vpop.f32.mrb[0].mxu0
  %v9804 = vadd.f32 0.0, %v9803
  %v9805 = vpop.f32.mrb[0].mxu0
  %9806 = vmatprep.mubr.f32.mxu0 0.0
  %9807 = vmatmul.mubr.f32.gmra.mrb[0].mxu0 %v9662
  %v9808 = vpop.f32.mrb[0].mxu0
  %v9809 = vadd.f32 0.0, %v9808
  %v9810 = vpop.f32.mrb[0].mxu0
  %9811 = vmatprep.mubr.f32.mxu0 0.0
  %9812 = vmatmul.mubr.f32.gmra.mrb[0].mxu0 %v9665
  %v9813 = vpop.f32.mrb[0].mxu0
  %v9814 = vadd.f32 0.0, %v9813
  %v9815 = vpop.f32.mrb[0].mxu0
  %9816 = vmatprep.mubr.f32.mxu0 0.0
  %9817 = vmatmul.mubr.f32.gmra.mrb[0].mxu0 %v9668
  %v9818 = vpop.f32.mrb[0].mxu0
  %v9819 = vadd.f32 0.0, %v9818
  %v9820 = vpop.f32.mrb[0].mxu0
  %9821 = vmatprep.mubr.f32.mxu0 0.0
  %9822 = vmatmul.mubr.f32.gmra.mrb[0].mxu0 %v9671
  %v9823 = vpop.f32.mrb[0].mxu0
  %v9824 = vadd.f32 0.0, %v9823
  %v9825 = vpop.f32.mrb[0].mxu0
  %9826 = vmatprep.mubr.f32.mxu0 0.0
  %9827 = vmatmul.mubr.f32.gmra.mrb[0].mxu0 %v9674
  %v9828 = vpop.f32.mrb[0].mxu0
  %v9829 = vadd.f32 0.0, %v9828
  %v9830 = vpop.f32.mrb[0].mxu0
  %9831 = vmatprep.mubr.f32.mxu0 0.0
  %9832 = vmatmul.mubr.f32.gmra.mrb[0].mxu0 %v9677
  %v9833 = vpop.f32.mrb[0].mxu0
  %v9834 = vadd.f32 0.0, %v9833
  %v9835 = vpop.f32.mrb[0].mxu0
  %9836 = vmatprep.mubr.f32.mxu0 0.0
  %9837 = vmatmul.mubr.f32.gmra.mrb[0].mxu0 %v9680
  %v9838 = vpop.f32.mrb[0].mxu0
  %v9839 = vadd.f32 0.0, %v9838
  %v9840 = vpop.f32.mrb[0].mxu0
  %9841 = vmatprep.mubr.f32.mxu0 0.0
  %9842 = vmatmul.mubr.f32.gmra.mrb[0].mxu0 %v9683
  %v9843 = vpop.f32.mrb[0].mxu0
  %v9844 = vadd.f32 0.0, %v9843
  %v9845 = vpop.f32.mrb[0].mxu0
  %9846 = vmatprep.mubr.f32.mxu0 0.0
  %9847 = vmatmul.mubr.f32.gmra.mrb[0].mxu0 %v9686
  %v9848 = vpop.f32.mrb[0].mxu0
  %v9849 = vadd.f32 0.0, %v9848
  %v9850 = vpop.f32.mrb[0].mxu0
  %9851 = vmatprep.mubr.f32.mxu0 0.0
  %9852 = vmatmul.mubr.f32.gmra.mrb[0].mxu0 %v9689
  %v9853 = vpop.f32.mrb[0].mxu0
  %v9854 = vadd.f32 0.0, %v9853
  %v9855 = vpop.f32.mrb[0].mxu0
  %9856 = vmatprep.mubr.f32.mxu0 0.0
  %9857 = vmatmul.mubr.f32.gmra.mrb[0].mxu0 %v9692
  %v9858 = vpop.f32.mrb[0].mxu0
  %v9859 = vadd.f32 0.0, %v9858
  %v9860 = vpop.f32.mrb[0].mxu0
  %9861 = vmatprep.mubr.f32.mxu0 0.0
  %9862 = vmatmul.mubr.f32.gmra.mrb[0].mxu0 %v9695
  %v9863 = vpop.f32.mrb[0].mxu0
  %v9864 = vadd.f32 0.0, %v9863
  %v9865 = vpop.f32.mrb[0].mxu0
  %9866 = vmatprep.mubr.f32.mxu0 0.0
  %9867 = vmatmul.mubr.f32.gmra.mrb[0].mxu0 %v9698
  %v9868 = vpop.f32.mrb[0].mxu0
  %v9869 = vadd.f32 0.0, %v9868
  %v9870 = vpop.f32.mrb[0].mxu0
  %9871 = vmatprep.mubr.f32.mxu0 0.0
  %9872 = vmatmul.mubr.f32.gmra.mrb[0].mxu0 %v9701
  %v9873 = vpop.f32.mrb[0].mxu0
  %v9874 = vadd.f32 0.0, %v9873
  %v9875 = vpop.f32.mrb[0].mxu0
  %9876 = vmatprep.mubr.f32.mxu0 0.0
  %9877 = vmatmul.mubr.f32.gmra.mrb[0].mxu0 %v9704
  %v9878 = vpop.f32.mrb[0].mxu0
  %v9879 = vadd.f32 0.0, %v9878
  %v9880 = vpop.f32.mrb[0].mxu0
  %9881 = vmatprep.mubr.f32.mxu0 0.0
  %9882 = vmatmul.mubr.f32.gmra.mrb[0].mxu0 %v9707
  %v9883 = vpop.f32.mrb[0].mxu0
  %v9884 = vadd.f32 0.0, %v9883
  %v9885 = vpop.f32.mrb[0].mxu0
  %9886 = vmatprep.mubr.f32.mxu0 0.0
  %9887 = vmatmul.mubr.f32.gmra.mrb[0].mxu0 %v9710
  %v9888 = vpop.f32.mrb[0].mxu0
  %v9889 = vadd.f32 0.0, %v9888
  %v9890 = vpop.f32.mrb[0].mxu0
  %9891 = vdwg.mxu0
  %v9892 = vadd.f32 %v9595, %v9779
  %v9893 = vadd.f32 %v9596, %v9784
  %v9894 = vadd.f32 %v9597, %v9789
  %v9895 = vadd.f32 %v9598, %v9794
  %v9896 = vadd.f32 %v9599, %v9799
  %v9897 = vadd.f32 %v9600, %v9804
  %v9898 = vadd.f32 %v9601, %v9809
  %v9899 = vadd.f32 %v9602, %v9814
  %v9900 = vadd.f32 %v9603, %v9819
  %v9901 = vadd.f32 %v9604, %v9824
  %v9902 = vadd.f32 %v9605, %v9829
  %v9903 = vadd.f32 %v9606, %v9834
  %v9904 = vadd.f32 %v9607, %v9839
  %v9905 = vadd.f32 %v9608, %v9844
  %v9906 = vadd.f32 %v9609, %v9849
  %v9907 = vadd.f32 %v9610, %v9854
  %v9908 = vadd.f32 %v9611, %v9859
  %v9909 = vadd.f32 %v9612, %v9864
  %v9910 = vadd.f32 %v9613, %v9869
  %v9911 = vadd.f32 %v9614, %v9874
  %v9912 = vadd.f32 %v9615, %v9879
  %v9913 = vadd.f32 %v9616, %v9884
  %v9914 = vadd.f32 %v9617, %v9889
  %v9915 = vld [vmem:[#allocation4 + $0x15] sm:$0xff]
  %v9916 = vld [vmem:[#allocation4 + $0x1d] sm:$0xff]
  %v9917 = vld [vmem:[#allocation4 + $0x25] sm:$0xff]
  %v9918 = vld [vmem:[#allocation4 + $0x2d] sm:$0xff]
  %v9919 = vld [vmem:[#allocation4 + $0x35] sm:$0xff]
  %v9920 = vld [vmem:[#allocation4 + $0x3d] sm:$0xff]
  %v9921 = vld [vmem:[#allocation4 + $0x45] sm:$0xff]
  %v9922 = vld [vmem:[#allocation4 + $0x4d] sm:$0xff]
  %v9923 = vld [vmem:[#allocation4 + $0x55] sm:$0xff]
  %v9924 = vld [vmem:[#allocation4 + $0x5d] sm:$0xff]
  %v9925 = vld [vmem:[#allocation4 + $0x65] sm:$0xff]
  %v9926 = vld [vmem:[#allocation4 + $0x6d] sm:$0xff]
  %v9927 = vld [vmem:[#allocation4 + $0x75] sm:$0xff]
  %v9928 = vld [vmem:[#allocation4 + $0x7d] sm:$0xff]
  %v9929 = vld [vmem:[#allocation4 + $0x85] sm:$0xff]
  %v9930 = vld [vmem:[#allocation4 + $0x8d] sm:$0xff]
  %v9931 = vld [vmem:[#allocation4 + $0x95] sm:$0xff]
  %v9932 = vld [vmem:[#allocation4 + $0x9d] sm:$0xff]
  %v9933 = vld [vmem:[#allocation4 + $0xa5] sm:$0xff]
  %v9934 = vld [vmem:[#allocation4 + $0xad] sm:$0xff]
  %v9935 = vld [vmem:[#allocation4 + $0xb5] sm:$0xff]
  %v9936 = vld [vmem:[#allocation4 + $0xbd] sm:$0xff]
  %v9937 = vld [vmem:[#allocation4 + $0xc5] sm:$0xff]
  %s9938 = scalar_lea.vmem %s3, 56
  %v9939 = vld [vmem:[%s9938] sm:$0xff]
  %v9941 = vsel %vm7588, %v9915, 0
  %v9944 = vsel %vm7588, %v9916, 0
  %v9947 = vsel %vm7588, %v9917, 0
  %v9950 = vsel %vm7588, %v9918, 0
  %v9953 = vsel %vm7588, %v9919, 0
  %v9956 = vsel %vm7588, %v9920, 0
  %v9959 = vsel %vm7588, %v9921, 0
  %v9962 = vsel %vm7588, %v9922, 0
  %v9965 = vsel %vm7588, %v9923, 0
  %v9968 = vsel %vm7588, %v9924, 0
  %v9971 = vsel %vm7588, %v9925, 0
  %v9974 = vsel %vm7588, %v9926, 0
  %v9977 = vsel %vm7588, %v9927, 0
  %v9980 = vsel %vm7588, %v9928, 0
  %v9983 = vsel %vm7588, %v9929, 0
  %v9986 = vsel %vm7588, %v9930, 0
  %v9989 = vsel %vm7588, %v9931, 0
  %v9992 = vsel %vm7588, %v9932, 0
  %v9995 = vsel %vm7588, %v9933, 0
  %v9998 = vsel %vm7588, %v9934, 0
  %v10001 = vsel %vm7588, %v9935, 0
  %v10004 = vsel %vm7588, %v9936, 0
  %v10007 = vsel %vm7588, %v9937, 0
  %10009 = vmatprep.subr.mxu0 0.0
  %10010 = vmatpush1.msra.mxu0 %v9939
  %10011 = vmatprep.subr.mxu0 0.0
  %10012 = vmatpush1.msra.mxu0 0.0
  %10013 = vmatprep.subr.mxu0 0.0
  %10014 = vmatpush1.msra.mxu0 0.0
  %10015 = vmatprep.subr.mxu0 0.0
  %10016 = vmatpush1.msra.mxu0 0.0
  %10017 = vmatprep.subr.mxu0 0.0
  %10018 = vmatpush1.msra.mxu0 0.0
  %10019 = vmatprep.subr.mxu0 0.0
  %10020 = vmatpush1.msra.mxu0 0.0
  %10021 = vmatprep.subr.mxu0 0.0
  %10022 = vmatpush1.msra.mxu0 0.0
  %10023 = vmatprep.subr.mxu0 0.0
  %10024 = vmatpush1.msra.mxu0 0.0
  %10025 = vmatprep.subr.mxu0 0.0
  %10026 = vmatpush1.msra.mxu0 0.0
  %10027 = vmatprep.subr.mxu0 0.0
  %10028 = vmatpush1.msra.mxu0 0.0
  %10029 = vmatprep.subr.mxu0 0.0
  %10030 = vmatpush1.msra.mxu0 0.0
  %10031 = vmatprep.subr.mxu0 0.0
  %10032 = vmatpush1.msra.mxu0 0.0
  %10033 = vmatprep.subr.mxu0 0.0
  %10034 = vmatpush1.msra.mxu0 0.0
  %10035 = vmatprep.subr.mxu0 0.0
  %10036 = vmatpush1.msra.mxu0 0.0
  %10037 = vmatprep.subr.mxu0 0.0
  %10038 = vmatpush1.msra.mxu0 0.0
  %10039 = vmatprep.subr.mxu0 0.0
  %10040 = vmatpush1.msra.mxu0 0.0
  %10041 = vmatprep.subr.mxu0 0.0
  %10042 = vmatpush1.msra.mxu0 0.0
  %10043 = vmatprep.subr.mxu0 0.0
  %10044 = vmatpush1.msra.mxu0 0.0
  %10045 = vmatprep.subr.mxu0 0.0
  %10046 = vmatpush1.msra.mxu0 0.0
  %10047 = vmatprep.subr.mxu0 0.0
  %10048 = vmatpush1.msra.mxu0 0.0
  %10049 = vmatprep.subr.mxu0 0.0
  %10050 = vmatpush1.msra.mxu0 0.0
  %10051 = vmatprep.subr.mxu0 0.0
  %10052 = vmatpush1.msra.mxu0 0.0
  %10053 = vmatprep.subr.mxu0 0.0
  %10054 = vmatpush1.msra.mxu0 0.0
  %10055 = vmatprep.subr.mxu0 0.0
  %10056 = vmatpush1.msra.mxu0 0.0
  %10057 = vmatprep.subr.mxu0 0.0
  %10058 = vmatpush1.msra.mxu0 0.0
  %10059 = vmatprep.subr.mxu0 0.0
  %10060 = vmatpush1.msra.mxu0 0.0
  %10061 = vmatprep.subr.mxu0 0.0
  %10062 = vmatpush1.msra.mxu0 0.0
  %10063 = vmatprep.subr.mxu0 0.0
  %10064 = vmatpush1.msra.mxu0 0.0
  %10065 = vmatprep.subr.mxu0 0.0
  %10066 = vmatpush1.msra.mxu0 0.0
  %10067 = vmatprep.subr.mxu0 0.0
  %10068 = vmatpush1.msra.mxu0 0.0
  %10069 = vmatprep.subr.mxu0 0.0
  %10070 = vmatpush1.msra.mxu0 0.0
  %10071 = vmatprep.subr.mxu0 0.0
  %10072 = vmatpush1.msra.mxu0 0.0
  %10073 = vmatprep.mubr.f32.mxu0 0.0
  %10074 = vmatmul.mubr.f32.gmra.mrb[0].mxu0 %v9941
  %v10075 = vpop.f32.mrb[0].mxu0
  %v10076 = vadd.f32 0.0, %v10075
  %v10077 = vpop.f32.mrb[0].mxu0
  %10078 = vmatprep.mubr.f32.mxu0 0.0
  %10079 = vmatmul.mubr.f32.gmra.mrb[0].mxu0 %v9944
  %v10080 = vpop.f32.mrb[0].mxu0
  %v10081 = vadd.f32 0.0, %v10080
  %v10082 = vpop.f32.mrb[0].mxu0
  %10083 = vmatprep.mubr.f32.mxu0 0.0
  %10084 = vmatmul.mubr.f32.gmra.mrb[0].mxu0 %v9947
  %v10085 = vpop.f32.mrb[0].mxu0
  %v10086 = vadd.f32 0.0, %v10085
  %v10087 = vpop.f32.mrb[0].mxu0
  %10088 = vmatprep.mubr.f32.mxu0 0.0
  %10089 = vmatmul.mubr.f32.gmra.mrb[0].mxu0 %v9950
  %v10090 = vpop.f32.mrb[0].mxu0
  %v10091 = vadd.f32 0.0, %v10090
  %v10092 = vpop.f32.mrb[0].mxu0
  %10093 = vmatprep.mubr.f32.mxu0 0.0
  %10094 = vmatmul.mubr.f32.gmra.mrb[0].mxu0 %v9953
  %v10095 = vpop.f32.mrb[0].mxu0
  %v10096 = vadd.f32 0.0, %v10095
  %v10097 = vpop.f32.mrb[0].mxu0
  %10098 = vmatprep.mubr.f32.mxu0 0.0
  %10099 = vmatmul.mubr.f32.gmra.mrb[0].mxu0 %v9956
  %v10100 = vpop.f32.mrb[0].mxu0
  %v10101 = vadd.f32 0.0, %v10100
  %v10102 = vpop.f32.mrb[0].mxu0
  %10103 = vmatprep.mubr.f32.mxu0 0.0
  %10104 = vmatmul.mubr.f32.gmra.mrb[0].mxu0 %v9959
  %v10105 = vpop.f32.mrb[0].mxu0
  %v10106 = vadd.f32 0.0, %v10105
  %v10107 = vpop.f32.mrb[0].mxu0
  %10108 = vmatprep.mubr.f32.mxu0 0.0
  %10109 = vmatmul.mubr.f32.gmra.mrb[0].mxu0 %v9962
  %v10110 = vpop.f32.mrb[0].mxu0
  %v10111 = vadd.f32 0.0, %v10110
  %v10112 = vpop.f32.mrb[0].mxu0
  %10113 = vmatprep.mubr.f32.mxu0 0.0
  %10114 = vmatmul.mubr.f32.gmra.mrb[0].mxu0 %v9965
  %v10115 = vpop.f32.mrb[0].mxu0
  %v10116 = vadd.f32 0.0, %v10115
  %v10117 = vpop.f32.mrb[0].mxu0
  %10118 = vmatprep.mubr.f32.mxu0 0.0
  %10119 = vmatmul.mubr.f32.gmra.mrb[0].mxu0 %v9968
  %v10120 = vpop.f32.mrb[0].mxu0
  %v10121 = vadd.f32 0.0, %v10120
  %v10122 = vpop.f32.mrb[0].mxu0
  %10123 = vmatprep.mubr.f32.mxu0 0.0
  %10124 = vmatmul.mubr.f32.gmra.mrb[0].mxu0 %v9971
  %v10125 = vpop.f32.mrb[0].mxu0
  %v10126 = vadd.f32 0.0, %v10125
  %v10127 = vpop.f32.mrb[0].mxu0
  %10128 = vmatprep.mubr.f32.mxu0 0.0
  %10129 = vmatmul.mubr.f32.gmra.mrb[0].mxu0 %v9974
  %v10130 = vpop.f32.mrb[0].mxu0
  %v10131 = vadd.f32 0.0, %v10130
  %v10132 = vpop.f32.mrb[0].mxu0
  %10133 = vmatprep.mubr.f32.mxu0 0.0
  %10134 = vmatmul.mubr.f32.gmra.mrb[0].mxu0 %v9977
  %v10135 = vpop.f32.mrb[0].mxu0
  %v10136 = vadd.f32 0.0, %v10135
  %v10137 = vpop.f32.mrb[0].mxu0
  %10138 = vmatprep.mubr.f32.mxu0 0.0
  %10139 = vmatmul.mubr.f32.gmra.mrb[0].mxu0 %v9980
  %v10140 = vpop.f32.mrb[0].mxu0
  %v10141 = vadd.f32 0.0, %v10140
  %v10142 = vpop.f32.mrb[0].mxu0
  %10143 = vmatprep.mubr.f32.mxu0 0.0
  %10144 = vmatmul.mubr.f32.gmra.mrb[0].mxu0 %v9983
  %v10145 = vpop.f32.mrb[0].mxu0
  %v10146 = vadd.f32 0.0, %v10145
  %v10147 = vpop.f32.mrb[0].mxu0
  %10148 = vmatprep.mubr.f32.mxu0 0.0
  %10149 = vmatmul.mubr.f32.gmra.mrb[0].mxu0 %v9986
  %v10150 = vpop.f32.mrb[0].mxu0
  %v10151 = vadd.f32 0.0, %v10150
  %v10152 = vpop.f32.mrb[0].mxu0
  %10153 = vmatprep.mubr.f32.mxu0 0.0
  %10154 = vmatmul.mubr.f32.gmra.mrb[0].mxu0 %v9989
  %v10155 = vpop.f32.mrb[0].mxu0
  %v10156 = vadd.f32 0.0, %v10155
  %v10157 = vpop.f32.mrb[0].mxu0
  %10158 = vmatprep.mubr.f32.mxu0 0.0
  %10159 = vmatmul.mubr.f32.gmra.mrb[0].mxu0 %v9992
  %v10160 = vpop.f32.mrb[0].mxu0
  %v10161 = vadd.f32 0.0, %v10160
  %v10162 = vpop.f32.mrb[0].mxu0
  %10163 = vmatprep.mubr.f32.mxu0 0.0
  %10164 = vmatmul.mubr.f32.gmra.mrb[0].mxu0 %v9995
  %v10165 = vpop.f32.mrb[0].mxu0
  %v10166 = vadd.f32 0.0, %v10165
  %v10167 = vpop.f32.mrb[0].mxu0
  %10168 = vmatprep.mubr.f32.mxu0 0.0
  %10169 = vmatmul.mubr.f32.gmra.mrb[0].mxu0 %v9998
  %v10170 = vpop.f32.mrb[0].mxu0
  %v10171 = vadd.f32 0.0, %v10170
  %v10172 = vpop.f32.mrb[0].mxu0
  %10173 = vmatprep.mubr.f32.mxu0 0.0
  %10174 = vmatmul.mubr.f32.gmra.mrb[0].mxu0 %v10001
  %v10175 = vpop.f32.mrb[0].mxu0
  %v10176 = vadd.f32 0.0, %v10175
  %v10177 = vpop.f32.mrb[0].mxu0
  %10178 = vmatprep.mubr.f32.mxu0 0.0
  %10179 = vmatmul.mubr.f32.gmra.mrb[0].mxu0 %v10004
  %v10180 = vpop.f32.mrb[0].mxu0
  %v10181 = vadd.f32 0.0, %v10180
  %v10182 = vpop.f32.mrb[0].mxu0
  %10183 = vmatprep.mubr.f32.mxu0 0.0
  %10184 = vmatmul.mubr.f32.gmra.mrb[0].mxu0 %v10007
  %v10185 = vpop.f32.mrb[0].mxu0
  %v10186 = vadd.f32 0.0, %v10185
  %v10187 = vpop.f32.mrb[0].mxu0
  %10188 = vdwg.mxu0
  %v10189 = vadd.f32 %v9892, %v10076
  %v10190 = vadd.f32 %v9893, %v10081
  %v10191 = vadd.f32 %v9894, %v10086
  %v10192 = vadd.f32 %v9895, %v10091
  %v10193 = vadd.f32 %v9896, %v10096
  %v10194 = vadd.f32 %v9897, %v10101
  %v10195 = vadd.f32 %v9898, %v10106
  %v10196 = vadd.f32 %v9899, %v10111
  %v10197 = vadd.f32 %v9900, %v10116
  %v10198 = vadd.f32 %v9901, %v10121
  %v10199 = vadd.f32 %v9902, %v10126
  %v10200 = vadd.f32 %v9903, %v10131
  %v10201 = vadd.f32 %v9904, %v10136
  %v10202 = vadd.f32 %v9905, %v10141
  %v10203 = vadd.f32 %v9906, %v10146
  %v10204 = vadd.f32 %v9907, %v10151
  %v10205 = vadd.f32 %v9908, %v10156
  %v10206 = vadd.f32 %v9909, %v10161
  %v10207 = vadd.f32 %v9910, %v10166
  %v10208 = vadd.f32 %v9911, %v10171
  %v10209 = vadd.f32 %v9912, %v10176
  %v10210 = vadd.f32 %v9913, %v10181
  %v10211 = vadd.f32 %v9914, %v10186
  %v10212 = vld [vmem:[#allocation4 + $0x16] sm:$0xff]
  %v10213 = vld [vmem:[#allocation4 + $0x1e] sm:$0xff]
  %v10214 = vld [vmem:[#allocation4 + $0x26] sm:$0xff]
  %v10215 = vld [vmem:[#allocation4 + $0x2e] sm:$0xff]
  %v10216 = vld [vmem:[#allocation4 + $0x36] sm:$0xff]
  %v10217 = vld [vmem:[#allocation4 + $0x3e] sm:$0xff]
  %v10218 = vld [vmem:[#allocation4 + $0x46] sm:$0xff]
  %v10219 = vld [vmem:[#allocation4 + $0x4e] sm:$0xff]
  %v10220 = vld [vmem:[#allocation4 + $0x56] sm:$0xff]
  %v10221 = vld [vmem:[#allocation4 + $0x5e] sm:$0xff]
  %v10222 = vld [vmem:[#allocation4 + $0x66] sm:$0xff]
  %v10223 = vld [vmem:[#allocation4 + $0x6e] sm:$0xff]
  %v10224 = vld [vmem:[#allocation4 + $0x76] sm:$0xff]
  %v10225 = vld [vmem:[#allocation4 + $0x7e] sm:$0xff]
  %v10226 = vld [vmem:[#allocation4 + $0x86] sm:$0xff]
  %v10227 = vld [vmem:[#allocation4 + $0x8e] sm:$0xff]
  %v10228 = vld [vmem:[#allocation4 + $0x96] sm:$0xff]
  %v10229 = vld [vmem:[#allocation4 + $0x9e] sm:$0xff]
  %v10230 = vld [vmem:[#allocation4 + $0xa6] sm:$0xff]
  %v10231 = vld [vmem:[#allocation4 + $0xae] sm:$0xff]
  %v10232 = vld [vmem:[#allocation4 + $0xb6] sm:$0xff]
  %v10233 = vld [vmem:[#allocation4 + $0xbe] sm:$0xff]
  %v10234 = vld [vmem:[#allocation4 + $0xc6] sm:$0xff]
  %s10235 = scalar_lea.vmem %s3, 64
  %v10236 = vld [vmem:[%s10235] sm:$0xff]
  %v10238 = vsel %vm7588, %v10212, 0
  %v10241 = vsel %vm7588, %v10213, 0
  %v10244 = vsel %vm7588, %v10214, 0
  %v10247 = vsel %vm7588, %v10215, 0
  %v10250 = vsel %vm7588, %v10216, 0
  %v10253 = vsel %vm7588, %v10217, 0
  %v10256 = vsel %vm7588, %v10218, 0
  %v10259 = vsel %vm7588, %v10219, 0
  %v10262 = vsel %vm7588, %v10220, 0
  %v10265 = vsel %vm7588, %v10221, 0
  %v10268 = vsel %vm7588, %v10222, 0
  %v10271 = vsel %vm7588, %v10223, 0
  %v10274 = vsel %vm7588, %v10224, 0
  %v10277 = vsel %vm7588, %v10225, 0
  %v10280 = vsel %vm7588, %v10226, 0
  %v10283 = vsel %vm7588, %v10227, 0
  %v10286 = vsel %vm7588, %v10228, 0
  %v10289 = vsel %vm7588, %v10229, 0
  %v10292 = vsel %vm7588, %v10230, 0
  %v10295 = vsel %vm7588, %v10231, 0
  %v10298 = vsel %vm7588, %v10232, 0
  %v10301 = vsel %vm7588, %v10233, 0
  %v10304 = vsel %vm7588, %v10234, 0
  %10306 = vmatprep.subr.mxu0 0.0
  %10307 = vmatpush1.msra.mxu0 %v10236
  %10308 = vmatprep.subr.mxu0 0.0
  %10309 = vmatpush1.msra.mxu0 0.0
  %10310 = vmatprep.subr.mxu0 0.0
  %10311 = vmatpush1.msra.mxu0 0.0
  %10312 = vmatprep.subr.mxu0 0.0
  %10313 = vmatpush1.msra.mxu0 0.0
  %10314 = vmatprep.subr.mxu0 0.0
  %10315 = vmatpush1.msra.mxu0 0.0
  %10316 = vmatprep.subr.mxu0 0.0
  %10317 = vmatpush1.msra.mxu0 0.0
  %10318 = vmatprep.subr.mxu0 0.0
  %10319 = vmatpush1.msra.mxu0 0.0
  %10320 = vmatprep.subr.mxu0 0.0
  %10321 = vmatpush1.msra.mxu0 0.0
  %10322 = vmatprep.subr.mxu0 0.0
  %10323 = vmatpush1.msra.mxu0 0.0
  %10324 = vmatprep.subr.mxu0 0.0
  %10325 = vmatpush1.msra.mxu0 0.0
  %10326 = vmatprep.subr.mxu0 0.0
  %10327 = vmatpush1.msra.mxu0 0.0
  %10328 = vmatprep.subr.mxu0 0.0
  %10329 = vmatpush1.msra.mxu0 0.0
  %10330 = vmatprep.subr.mxu0 0.0
  %10331 = vmatpush1.msra.mxu0 0.0
  %10332 = vmatprep.subr.mxu0 0.0
  %10333 = vmatpush1.msra.mxu0 0.0
  %10334 = vmatprep.subr.mxu0 0.0
  %10335 = vmatpush1.msra.mxu0 0.0
  %10336 = vmatprep.subr.mxu0 0.0
  %10337 = vmatpush1.msra.mxu0 0.0
  %10338 = vmatprep.subr.mxu0 0.0
  %10339 = vmatpush1.msra.mxu0 0.0
  %10340 = vmatprep.subr.mxu0 0.0
  %10341 = vmatpush1.msra.mxu0 0.0
  %10342 = vmatprep.subr.mxu0 0.0
  %10343 = vmatpush1.msra.mxu0 0.0
  %10344 = vmatprep.subr.mxu0 0.0
  %10345 = vmatpush1.msra.mxu0 0.0
  %10346 = vmatprep.subr.mxu0 0.0
  %10347 = vmatpush1.msra.mxu0 0.0
  %10348 = vmatprep.subr.mxu0 0.0
  %10349 = vmatpush1.msra.mxu0 0.0
  %10350 = vmatprep.subr.mxu0 0.0
  %10351 = vmatpush1.msra.mxu0 0.0
  %10352 = vmatprep.subr.mxu0 0.0
  %10353 = vmatpush1.msra.mxu0 0.0
  %10354 = vmatprep.subr.mxu0 0.0
  %10355 = vmatpush1.msra.mxu0 0.0
  %10356 = vmatprep.subr.mxu0 0.0
  %10357 = vmatpush1.msra.mxu0 0.0
  %10358 = vmatprep.subr.mxu0 0.0
  %10359 = vmatpush1.msra.mxu0 0.0
  %10360 = vmatprep.subr.mxu0 0.0
  %10361 = vmatpush1.msra.mxu0 0.0
  %10362 = vmatprep.subr.mxu0 0.0
  %10363 = vmatpush1.msra.mxu0 0.0
  %10364 = vmatprep.subr.mxu0 0.0
  %10365 = vmatpush1.msra.mxu0 0.0
  %10366 = vmatprep.subr.mxu0 0.0
  %10367 = vmatpush1.msra.mxu0 0.0
  %10368 = vmatprep.subr.mxu0 0.0
  %10369 = vmatpush1.msra.mxu0 0.0
  %10370 = vmatprep.mubr.f32.mxu0 0.0
  %10371 = vmatmul.mubr.f32.gmra.mrb[0].mxu0 %v10238
  %v10372 = vpop.f32.mrb[0].mxu0
  %v10373 = vadd.f32 0.0, %v10372
  %v10374 = vpop.f32.mrb[0].mxu0
  %10375 = vmatprep.mubr.f32.mxu0 0.0
  %10376 = vmatmul.mubr.f32.gmra.mrb[0].mxu0 %v10241
  %v10377 = vpop.f32.mrb[0].mxu0
  %v10378 = vadd.f32 0.0, %v10377
  %v10379 = vpop.f32.mrb[0].mxu0
  %10380 = vmatprep.mubr.f32.mxu0 0.0
  %10381 = vmatmul.mubr.f32.gmra.mrb[0].mxu0 %v10244
  %v10382 = vpop.f32.mrb[0].mxu0
  %v10383 = vadd.f32 0.0, %v10382
  %v10384 = vpop.f32.mrb[0].mxu0
  %10385 = vmatprep.mubr.f32.mxu0 0.0
  %10386 = vmatmul.mubr.f32.gmra.mrb[0].mxu0 %v10247
  %v10387 = vpop.f32.mrb[0].mxu0
  %v10388 = vadd.f32 0.0, %v10387
  %v10389 = vpop.f32.mrb[0].mxu0
  %10390 = vmatprep.mubr.f32.mxu0 0.0
  %10391 = vmatmul.mubr.f32.gmra.mrb[0].mxu0 %v10250
  %v10392 = vpop.f32.mrb[0].mxu0
  %v10393 = vadd.f32 0.0, %v10392
  %v10394 = vpop.f32.mrb[0].mxu0
  %10395 = vmatprep.mubr.f32.mxu0 0.0
  %10396 = vmatmul.mubr.f32.gmra.mrb[0].mxu0 %v10253
  %v10397 = vpop.f32.mrb[0].mxu0
  %v10398 = vadd.f32 0.0, %v10397
  %v10399 = vpop.f32.mrb[0].mxu0
  %10400 = vmatprep.mubr.f32.mxu0 0.0
  %10401 = vmatmul.mubr.f32.gmra.mrb[0].mxu0 %v10256
  %v10402 = vpop.f32.mrb[0].mxu0
  %v10403 = vadd.f32 0.0, %v10402
  %v10404 = vpop.f32.mrb[0].mxu0
  %10405 = vmatprep.mubr.f32.mxu0 0.0
  %10406 = vmatmul.mubr.f32.gmra.mrb[0].mxu0 %v10259
  %v10407 = vpop.f32.mrb[0].mxu0
  %v10408 = vadd.f32 0.0, %v10407
  %v10409 = vpop.f32.mrb[0].mxu0
  %10410 = vmatprep.mubr.f32.mxu0 0.0
  %10411 = vmatmul.mubr.f32.gmra.mrb[0].mxu0 %v10262
  %v10412 = vpop.f32.mrb[0].mxu0
  %v10413 = vadd.f32 0.0, %v10412
  %v10414 = vpop.f32.mrb[0].mxu0
  %10415 = vmatprep.mubr.f32.mxu0 0.0
  %10416 = vmatmul.mubr.f32.gmra.mrb[0].mxu0 %v10265
  %v10417 = vpop.f32.mrb[0].mxu0
  %v10418 = vadd.f32 0.0, %v10417
  %v10419 = vpop.f32.mrb[0].mxu0
  %10420 = vmatprep.mubr.f32.mxu0 0.0
  %10421 = vmatmul.mubr.f32.gmra.mrb[0].mxu0 %v10268
  %v10422 = vpop.f32.mrb[0].mxu0
  %v10423 = vadd.f32 0.0, %v10422
  %v10424 = vpop.f32.mrb[0].mxu0
  %10425 = vmatprep.mubr.f32.mxu0 0.0
  %10426 = vmatmul.mubr.f32.gmra.mrb[0].mxu0 %v10271
  %v10427 = vpop.f32.mrb[0].mxu0
  %v10428 = vadd.f32 0.0, %v10427
  %v10429 = vpop.f32.mrb[0].mxu0
  %10430 = vmatprep.mubr.f32.mxu0 0.0
  %10431 = vmatmul.mubr.f32.gmra.mrb[0].mxu0 %v10274
  %v10432 = vpop.f32.mrb[0].mxu0
  %v10433 = vadd.f32 0.0, %v10432
  %v10434 = vpop.f32.mrb[0].mxu0
  %10435 = vmatprep.mubr.f32.mxu0 0.0
  %10436 = vmatmul.mubr.f32.gmra.mrb[0].mxu0 %v10277
  %v10437 = vpop.f32.mrb[0].mxu0
  %v10438 = vadd.f32 0.0, %v10437
  %v10439 = vpop.f32.mrb[0].mxu0
  %10440 = vmatprep.mubr.f32.mxu0 0.0
  %10441 = vmatmul.mubr.f32.gmra.mrb[0].mxu0 %v10280
  %v10442 = vpop.f32.mrb[0].mxu0
  %v10443 = vadd.f32 0.0, %v10442
  %v10444 = vpop.f32.mrb[0].mxu0
  %10445 = vmatprep.mubr.f32.mxu0 0.0
  %10446 = vmatmul.mubr.f32.gmra.mrb[0].mxu0 %v10283
  %v10447 = vpop.f32.mrb[0].mxu0
  %v10448 = vadd.f32 0.0, %v10447
  %v10449 = vpop.f32.mrb[0].mxu0
  %10450 = vmatprep.mubr.f32.mxu0 0.0
  %10451 = vmatmul.mubr.f32.gmra.mrb[0].mxu0 %v10286
  %v10452 = vpop.f32.mrb[0].mxu0
  %v10453 = vadd.f32 0.0, %v10452
  %v10454 = vpop.f32.mrb[0].mxu0
  %10455 = vmatprep.mubr.f32.mxu0 0.0
  %10456 = vmatmul.mubr.f32.gmra.mrb[0].mxu0 %v10289
  %v10457 = vpop.f32.mrb[0].mxu0
  %v10458 = vadd.f32 0.0, %v10457
  %v10459 = vpop.f32.mrb[0].mxu0
  %10460 = vmatprep.mubr.f32.mxu0 0.0
  %10461 = vmatmul.mubr.f32.gmra.mrb[0].mxu0 %v10292
  %v10462 = vpop.f32.mrb[0].mxu0
  %v10463 = vadd.f32 0.0, %v10462
  %v10464 = vpop.f32.mrb[0].mxu0
  %10465 = vmatprep.mubr.f32.mxu0 0.0
  %10466 = vmatmul.mubr.f32.gmra.mrb[0].mxu0 %v10295
  %v10467 = vpop.f32.mrb[0].mxu0
  %v10468 = vadd.f32 0.0, %v10467
  %v10469 = vpop.f32.mrb[0].mxu0
  %10470 = vmatprep.mubr.f32.mxu0 0.0
  %10471 = vmatmul.mubr.f32.gmra.mrb[0].mxu0 %v10298
  %v10472 = vpop.f32.mrb[0].mxu0
  %v10473 = vadd.f32 0.0, %v10472
  %v10474 = vpop.f32.mrb[0].mxu0
  %10475 = vmatprep.mubr.f32.mxu0 0.0
  %10476 = vmatmul.mubr.f32.gmra.mrb[0].mxu0 %v10301
  %v10477 = vpop.f32.mrb[0].mxu0
  %v10478 = vadd.f32 0.0, %v10477
  %v10479 = vpop.f32.mrb[0].mxu0
  %10480 = vmatprep.mubr.f32.mxu0 0.0
  %10481 = vmatmul.mubr.f32.gmra.mrb[0].mxu0 %v10304
  %v10482 = vpop.f32.mrb[0].mxu0
  %v10483 = vadd.f32 0.0, %v10482
  %v10484 = vpop.f32.mrb[0].mxu0
  %10485 = vdwg.mxu0
  %v10486 = vadd.f32 %v10189, %v10373
  %v10487 = vadd.f32 %v10190, %v10378
  %v10488 = vadd.f32 %v10191, %v10383
  %v10489 = vadd.f32 %v10192, %v10388
  %v10490 = vadd.f32 %v10193, %v10393
  %v10491 = vadd.f32 %v10194, %v10398
  %v10492 = vadd.f32 %v10195, %v10403
  %v10493 = vadd.f32 %v10196, %v10408
  %v10494 = vadd.f32 %v10197, %v10413
  %v10495 = vadd.f32 %v10198, %v10418
  %v10496 = vadd.f32 %v10199, %v10423
  %v10497 = vadd.f32 %v10200, %v10428
  %v10498 = vadd.f32 %v10201, %v10433
  %v10499 = vadd.f32 %v10202, %v10438
  %v10500 = vadd.f32 %v10203, %v10443
  %v10501 = vadd.f32 %v10204, %v10448
  %v10502 = vadd.f32 %v10205, %v10453
  %v10503 = vadd.f32 %v10206, %v10458
  %v10504 = vadd.f32 %v10207, %v10463
  %v10505 = vadd.f32 %v10208, %v10468
  %v10506 = vadd.f32 %v10209, %v10473
  %v10507 = vadd.f32 %v10210, %v10478
  %v10508 = vadd.f32 %v10211, %v10483
  %v10509 = vld [vmem:[%s4] sm:$0x1]
  %v10511 = vlaneseq
  %v10512 = vshrl.u32 %v10511, 7
  %v10513 = vsub.s32 0, %v10512
  %v10514 = vrot.slane %v10509, %v10513
  %v10516 = vadd.f32 %v10486, %v10514
  %v10517 = vadd.f32 %v10487, %v10514
  %v10518 = vadd.f32 %v10488, %v10514
  %v10519 = vadd.f32 %v10489, %v10514
  %v10520 = vadd.f32 %v10490, %v10514
  %v10521 = vadd.f32 %v10491, %v10514
  %v10522 = vadd.f32 %v10492, %v10514
  %v10523 = vadd.f32 %v10493, %v10514
  %v10524 = vadd.f32 %v10494, %v10514
  %v10525 = vadd.f32 %v10495, %v10514
  %v10526 = vadd.f32 %v10496, %v10514
  %v10527 = vadd.f32 %v10497, %v10514
  %v10528 = vadd.f32 %v10498, %v10514
  %v10529 = vadd.f32 %v10499, %v10514
  %v10530 = vadd.f32 %v10500, %v10514
  %v10531 = vadd.f32 %v10501, %v10514
  %v10532 = vadd.f32 %v10502, %v10514
  %v10533 = vadd.f32 %v10503, %v10514
  %v10534 = vadd.f32 %v10504, %v10514
  %v10535 = vadd.f32 %v10505, %v10514
  %v10536 = vadd.f32 %v10506, %v10514
  %v10537 = vadd.f32 %v10507, %v10514
  %v10538 = vadd.f32 %v10508, %v10514
  %v10539 = vmax.f32 %v10516, 0.0
  %v10540 = vmax.f32 %v10517, 0.0
  %v10541 = vmax.f32 %v10518, 0.0
  %v10542 = vmax.f32 %v10519, 0.0
  %v10543 = vmax.f32 %v10520, 0.0
  %v10544 = vmax.f32 %v10521, 0.0
  %v10545 = vmax.f32 %v10522, 0.0
  %v10546 = vmax.f32 %v10523, 0.0
  %v10547 = vmax.f32 %v10524, 0.0
  %v10548 = vmax.f32 %v10525, 0.0
  %v10549 = vmax.f32 %v10526, 0.0
  %v10550 = vmax.f32 %v10527, 0.0
  %v10551 = vmax.f32 %v10528, 0.0
  %v10552 = vmax.f32 %v10529, 0.0
  %v10553 = vmax.f32 %v10530, 0.0
  %v10554 = vmax.f32 %v10531, 0.0
  %v10555 = vmax.f32 %v10532, 0.0
  %v10556 = vmax.f32 %v10533, 0.0
  %v10557 = vmax.f32 %v10534, 0.0
  %v10558 = vmax.f32 %v10535, 0.0
  %v10559 = vmax.f32 %v10536, 0.0
  %v10560 = vmax.f32 %v10537, 0.0
  %v10561 = vmax.f32 %v10538, 0.0
  %vm10562 = vcmask 130048
  %10563 = vst.msk [vmem:[#allocation3] sm:$0xff] %vm10562, %v10539
  %10564 = vst.msk [vmem:[#allocation3 + $0x8] sm:$0xff] %vm10562, %v10540
  %10565 = vst.msk [vmem:[#allocation3 + $0x10] sm:$0xff] %vm10562, %v10541
  %10566 = vst.msk [vmem:[#allocation3 + $0x18] sm:$0xff] %vm10562, %v10542
  %10567 = vst.msk [vmem:[#allocation3 + $0x20] sm:$0xff] %vm10562, %v10543
  %10568 = vst.msk [vmem:[#allocation3 + $0x28] sm:$0xff] %vm10562, %v10544
  %10569 = vst.msk [vmem:[#allocation3 + $0x30] sm:$0xff] %vm10562, %v10545
  %10570 = vst.msk [vmem:[#allocation3 + $0x38] sm:$0xff] %vm10562, %v10546
  %10571 = vst.msk [vmem:[#allocation3 + $0x40] sm:$0xff] %vm10562, %v10547
  %10572 = vst.msk [vmem:[#allocation3 + $0x48] sm:$0xff] %vm10562, %v10548
  %10573 = vst.msk [vmem:[#allocation3 + $0x50] sm:$0xff] %vm10562, %v10549
  %10574 = vst.msk [vmem:[#allocation3 + $0x58] sm:$0xff] %vm10562, %v10550
  %10575 = vst.msk [vmem:[#allocation3 + $0x60] sm:$0xff] %vm10562, %v10551
  %10576 = vst.msk [vmem:[#allocation3 + $0x68] sm:$0xff] %vm10562, %v10552
  %10577 = vst.msk [vmem:[#allocation3 + $0x70] sm:$0xff] %vm10562, %v10553
  %10578 = vst.msk [vmem:[#allocation3 + $0x78] sm:$0xff] %vm10562, %v10554
  %10579 = vst.msk [vmem:[#allocation3 + $0x80] sm:$0xff] %vm10562, %v10555
  %10580 = vst.msk [vmem:[#allocation3 + $0x88] sm:$0xff] %vm10562, %v10556
  %10581 = vst.msk [vmem:[#allocation3 + $0x90] sm:$0xff] %vm10562, %v10557
  %10582 = vst.msk [vmem:[#allocation3 + $0x98] sm:$0xff] %vm10562, %v10558
  %10583 = vst.msk [vmem:[#allocation3 + $0xa0] sm:$0xff] %vm10562, %v10559
  %10584 = vst.msk [vmem:[#allocation3 + $0xa8] sm:$0xff] %vm10562, %v10560
  %10585 = vst.msk [vmem:[#allocation3 + $0xb0] sm:$0xff] %vm10562, %v10561
  %v10586 = vld [vmem:[#allocation3] ss:$2 sm:$0xf]
  %s10587 = scalar_lea.vmem [#allocation3], 1
  %v10588 = vld [vmem:[%s10587] ss:$2 sm:$0xf]
  %s10589 = scalar_lea.vmem [#allocation3], 10
  %v10590 = vld [vmem:[%s10589] ss:$2 sm:$0xf]
  %s10591 = scalar_lea.vmem [#allocation3], 11
  %v10592 = vld [vmem:[%s10591] ss:$2 sm:$0xf]
  %v10593 = vmax.f32 %v10586, %v10588
  %v10594 = vmax.f32 %v10590, %v10592
  %v10595 = vmax.f32 %v10593, %v10594
  %vm10596 = vcmask 125952
  %10597 = vst.msk [vmem:[%s5] sm:$0xf] %vm10596, %v10595
  %s10598 = scalar_lea.vmem [#allocation3], 20
  %v10599 = vld [vmem:[%s10598] ss:$2 sm:$0xf]
  %s10600 = scalar_lea.vmem [#allocation3], 21
  %v10601 = vld [vmem:[%s10600] ss:$2 sm:$0xf]
  %s10602 = scalar_lea.vmem [#allocation3], 30
  %v10603 = vld [vmem:[%s10602] ss:$2 sm:$0xf]
  %s10604 = scalar_lea.vmem [#allocation3], 31
  %v10605 = vld [vmem:[%s10604] ss:$2 sm:$0xf]
  %v10606 = vmax.f32 %v10599, %v10601
  %v10607 = vmax.f32 %v10603, %v10605
  %v10608 = vmax.f32 %v10606, %v10607
  %10609 = vst.msk [vmem:[%s5 + $0x4] sm:$0xf] %vm10596, %v10608
  %s10610 = scalar_lea.vmem [#allocation3], 40
  %v10611 = vld [vmem:[%s10610] ss:$2 sm:$0xf]
  %s10612 = scalar_lea.vmem [#allocation3], 41
  %v10613 = vld [vmem:[%s10612] ss:$2 sm:$0xf]
  %s10614 = scalar_lea.vmem [#allocation3], 50
  %v10615 = vld [vmem:[%s10614] ss:$2 sm:$0xf]
  %s10616 = scalar_lea.vmem [#allocation3], 51
  %v10617 = vld [vmem:[%s10616] ss:$2 sm:$0xf]
  %v10618 = vmax.f32 %v10611, %v10613
  %v10619 = vmax.f32 %v10615, %v10617
  %v10620 = vmax.f32 %v10618, %v10619
  %10621 = vst.msk [vmem:[%s5 + $0x8] sm:$0xf] %vm10596, %v10620
  %s10622 = scalar_lea.vmem [#allocation3], 60
  %v10623 = vld [vmem:[%s10622] ss:$2 sm:$0xf]
  %s10624 = scalar_lea.vmem [#allocation3], 61
  %v10625 = vld [vmem:[%s10624] ss:$2 sm:$0xf]
  %s10626 = scalar_lea.vmem [#allocation3], 70
  %v10627 = vld [vmem:[%s10626] ss:$2 sm:$0xf]
  %s10628 = scalar_lea.vmem [#allocation3], 71
  %v10629 = vld [vmem:[%s10628] ss:$2 sm:$0xf]
  %v10630 = vmax.f32 %v10623, %v10625
  %v10631 = vmax.f32 %v10627, %v10629
  %v10632 = vmax.f32 %v10630, %v10631
  %10633 = vst.msk [vmem:[%s5 + $0xc] sm:$0xf] %vm10596, %v10632
  %s10634 = scalar_lea.vmem [#allocation3], 104
  %v10635 = vld [vmem:[%s10634] ss:$2 sm:$0xf]
  %s10636 = scalar_lea.vmem [#allocation3], 105
  %v10637 = vld [vmem:[%s10636] ss:$2 sm:$0xf]
  %s10638 = scalar_lea.vmem [#allocation3], 114
  %v10639 = vld [vmem:[%s10638] ss:$2 sm:$0xf]
  %s10640 = scalar_lea.vmem [#allocation3], 115
  %v10641 = vld [vmem:[%s10640] ss:$2 sm:$0xf]
  %v10642 = vmax.f32 %v10635, %v10637
  %v10643 = vmax.f32 %v10639, %v10641
  %v10644 = vmax.f32 %v10642, %v10643
  %10645 = vst.msk [vmem:[%s5 + $0x10] sm:$0xf] %vm10596, %v10644
  %s10646 = scalar_lea.vmem [#allocation3], 124
  %v10647 = vld [vmem:[%s10646] ss:$2 sm:$0xf]
  %s10648 = scalar_lea.vmem [#allocation3], 125
  %v10649 = vld [vmem:[%s10648] ss:$2 sm:$0xf]
  %s10650 = scalar_lea.vmem [#allocation3], 134
  %v10651 = vld [vmem:[%s10650] ss:$2 sm:$0xf]
  %s10652 = scalar_lea.vmem [#allocation3], 135
  %v10653 = vld [vmem:[%s10652] ss:$2 sm:$0xf]
  %v10654 = vmax.f32 %v10647, %v10649
  %v10655 = vmax.f32 %v10651, %v10653
  %v10656 = vmax.f32 %v10654, %v10655
  %10657 = vst.msk [vmem:[%s5 + $0x14] sm:$0xf] %vm10596, %v10656
  %s10658 = scalar_lea.vmem [#allocation3], 144
  %v10659 = vld [vmem:[%s10658] ss:$2 sm:$0xf]
  %s10660 = scalar_lea.vmem [#allocation3], 145
  %v10661 = vld [vmem:[%s10660] ss:$2 sm:$0xf]
  %s10662 = scalar_lea.vmem [#allocation3], 154
  %v10663 = vld [vmem:[%s10662] ss:$2 sm:$0xf]
  %s10664 = scalar_lea.vmem [#allocation3], 155
  %v10665 = vld [vmem:[%s10664] ss:$2 sm:$0xf]
  %v10666 = vmax.f32 %v10659, %v10661
  %v10667 = vmax.f32 %v10663, %v10665
  %v10668 = vmax.f32 %v10666, %v10667
  %10669 = vst.msk [vmem:[%s5 + $0x18] sm:$0xf] %vm10596, %v10668
  %s10670 = scalar_lea.vmem [#allocation3], 164
  %v10671 = vld [vmem:[%s10670] ss:$2 sm:$0xf]
  %s10672 = scalar_lea.vmem [#allocation3], 165
  %v10673 = vld [vmem:[%s10672] ss:$2 sm:$0xf]
  %s10674 = scalar_lea.vmem [#allocation3], 174
  %v10675 = vld [vmem:[%s10674] ss:$2 sm:$0xf]
  %s10676 = scalar_lea.vmem [#allocation3], 175
  %v10677 = vld [vmem:[%s10676] ss:$2 sm:$0xf]
  %v10678 = vmax.f32 %v10671, %v10673
  %v10679 = vmax.f32 %v10675, %v10677
  %v10680 = vmax.f32 %v10678, %v10679
  %10681 = vst.msk [vmem:[%s5 + $0x1c] sm:$0xf] %vm10596, %v10680
  // Predicated region
  $region22: #{tpu_custom_call.1} parent=0 // pred_check
    _
  $region23: #{tpu_custom_call.1} parent=0 // pred_check_branch
    %10683 = sbr.rel (0) target = $region25
  $region24: #{tpu_custom_call.1} parent=0 // pred_region
    _
  $region25: #{tpu_custom_call.1} parent=0 // pred_fallthru
    _
  // Predicated region
  $region26: #{tpu_custom_call.1} parent=0 // pred_check
    _
  $region27: #{tpu_custom_call.1} parent=0 // pred_check_branch
    %10685 = sbr.rel (0) target = $region29
  $region28: #{tpu_custom_call.1} parent=0 // pred_region
    _
  $region29: #{tpu_custom_call.1} parent=0 // pred_fallthru
    _

</llo_original>
